<compile_context>
chip_gen: v7x
topology: tpu7x:2x2x1
jax: 0.10.0
libtpu: 0.0.40
codegen_flags: <defaults>
</compile_context>

<pallas_src>
import math
from functools import partial

import jax
import jax.numpy as jnp
from jax import lax
from jax.experimental import pallas as pl
from jax.experimental.pallas import tpu as pltpu


def _round_up(x, m):
    return (x + m - 1) // m * m


# ----------------------------------------------------------------------------
# Kernel 1: tiled, pipelined matmul + affine (folded conv-bias + eval BN) + ReLU
# ----------------------------------------------------------------------------
def _matmul_affine_kernel(x_ref, w_ref, scale_ref, shift_ref, o_ref, acc_ref, *, relu):
    @pl.when(pl.program_id(2) == 0)
    def _():
        acc_ref[...] = jnp.zeros_like(acc_ref)

    acc_ref[...] += jnp.dot(x_ref[...], w_ref[...], preferred_element_type=jnp.float32)

    @pl.when(pl.program_id(2) == pl.num_programs(2) - 1)
    def _():
        r = acc_ref[...] * scale_ref[...] + shift_ref[...]
        if relu:
            r = jnp.maximum(r, 0.0)
        o_ref[...] = r.astype(o_ref.dtype)


def matmul_affine(x, w, scale, shift, relu):
    """(M,K)@(K,N) * scale + shift [+ReLU]; bf16 MXU operands, f32 accumulation.

    Operands are zero-padded to (8,128)-legal tile multiples and the result is
    sliced back, so tiny demo dims (K=8, N=1, ...) stay legal and lane-dense.
    """
    M, K = x.shape
    K2, N = w.shape
    assert K == K2
    TM, TN, TK = 256, 512, 512          # fits v7x 64 MiB VMEM with double buffering
    tm = min(TM, _round_up(M, 16))
    tn = min(TN, _round_up(N, 128))
    tk = min(TK, _round_up(K, 128))
    Mp, Np, Kp = _round_up(M, tm), _round_up(N, tn), _round_up(K, tk)

    xp = jnp.pad(x, ((0, Mp - M), (0, Kp - K))).astype(jnp.bfloat16)
    wp = jnp.pad(w, ((0, Kp - K), (0, Np - N))).astype(jnp.bfloat16)
    sp = jnp.pad(scale.reshape(1, N).astype(jnp.float32), ((0, 0), (0, Np - N)))
    hp = jnp.pad(shift.reshape(1, N).astype(jnp.float32), ((0, 0), (0, Np - N)))

    out = pl.pallas_call(
        partial(_matmul_affine_kernel, relu=relu),
        grid=(Mp // tm, Np // tn, Kp // tk),
        in_specs=[
            pl.BlockSpec((tm, tk), lambda i, j, k: (i, k)),
            pl.BlockSpec((tk, tn), lambda i, j, k: (k, j)),
            pl.BlockSpec((1, tn), lambda i, j, k: (0, j)),
            pl.BlockSpec((1, tn), lambda i, j, k: (0, j)),
        ],
        out_specs=pl.BlockSpec((tm, tn), lambda i, j, k: (i, j)),
        out_shape=jax.ShapeDtypeStruct((Mp, Np), jnp.float32),
        scratch_shapes=[pltpu.VMEM((tm, tn), jnp.float32)],
        compiler_params=pltpu.CompilerParams(
            dimension_semantics=("parallel", "parallel", "arbitrary"),
            vmem_limit_bytes=48 * 1024 * 1024),
    )(xp, wp, sp, hp)
    return out[:M, :N]


def conv1d_bn_relu(x_blc, w_pt, scale, shift, K, stride, pad, relu):
    """x_blc: (B, L, C_in); w_pt: PyTorch Conv1d weight (C_out, C_in, K)."""
    B, L, C_in = x_blc.shape
    C_out = w_pt.shape[0]
    xp = jnp.pad(x_blc.astype(jnp.bfloat16), ((0, 0), (pad, pad), (0, 0)))
    Lout = (L + 2 * pad - K) // stride + 1
    # im2col via K cheap strided slices (no gather, no activation transpose); bf16 halves
    # the HBM round trip.  TODO(synk): fuse the shifted accumulation into the matmul kernel.
    cols = [xp[:, k: k + (Lout - 1) * stride + 1: stride, :] for k in range(K)]
    patches = jnp.stack(cols, axis=2).reshape(B * Lout, K * C_in)
    w = jnp.transpose(w_pt, (2, 1, 0)).reshape(K * C_in, C_out)   # (k, c, o)
    out = matmul_affine(patches, w, scale, shift, relu)
    return out.reshape(B, Lout, C_out)


def convT1d_bn_relu(x_blc, w_pt, scale, shift, K, stride, pad, relu):
    """ConvTranspose1d as zero-insertion + correlation. w_pt: (C_in, C_out, K)."""
    B, L, C_in = x_blc.shape
    C_out = w_pt.shape[1]
    x_bf = x_blc.astype(jnp.bfloat16)
    if stride > 1:
        xd = jnp.zeros((B, (L - 1) * stride + 1, C_in), x_bf.dtype)
        xd = xd.at[:, ::stride, :].set(x_bf)
    else:
        xd = x_bf
    p = K - 1 - pad
    xp = jnp.pad(xd, ((0, 0), (p, p), (0, 0)))
    Lout = xp.shape[1] - K + 1                                    # = (L-1)*stride - 2*pad + K
    cols = [xp[:, k: k + Lout, :] for k in range(K)]
    patches = jnp.stack(cols, axis=2).reshape(B * Lout, K * C_in)
    w = jnp.transpose(w_pt[:, :, ::-1], (2, 0, 1)).reshape(K * C_in, C_out)
    out = matmul_affine(patches, w, scale, shift, relu)
    return out.reshape(B, Lout, C_out)


# ----------------------------------------------------------------------------
# Kernel 2: one Mamba Block (add-residual + RMSNorm + Mamba mixer), grid over batch
# ----------------------------------------------------------------------------
def _mamba_block_kernel(hid_ref, res_ref, norm_w_ref, in_w_ref, conv_w_ref,
                        conv_b_ref, xproj_w_ref, dtw_ref, dtb_ref, A_logT_ref,
                        D_ref, outw_ref,
                        mix_out_ref, res_out_ref,
                        dt_sc, dtu_sc, B_sc, C_sc, y_sc, dA_sc, xpad_sc,
                        *, d_inner, d_state, d_conv, dt_rank, eps, chunk):
    x_in = hid_ref[0].astype(jnp.float32)                       # (L, d_model)
    resid = x_in + res_ref[0].astype(jnp.float32)               # Block: residual = h + res
    res_out_ref[0] = resid
    L = resid.shape[0]

    # RMSNorm (eps=1e-5), f32
    var = jnp.mean(resid * resid, axis=-1, keepdims=True)
    normed = resid * lax.rsqrt(var + eps) * norm_w_ref[...]

    # in_proj (bf16 MXU, f32 accumulate) -> x, z
    xz = jnp.dot(normed.astype(jnp.bfloat16), in_w_ref[...],
                 preferred_element_type=jnp.float32)            # (L, 2*d_inner)
    xr = xz[:, :d_inner]
    z = xz[:, d_inner:]

    # causal depthwise conv1d via padded scratch buffer + bias + SiLU
    xpad_sc[pl.ds(0, d_conv - 1), :] = jnp.zeros((d_conv - 1, d_inner), jnp.float32)
    xpad_sc[pl.ds(d_conv - 1, L), :] = xr
    cw = conv_w_ref[...]                                        # (d_conv, d_inner)
    acc = jnp.zeros((L, d_inner), jnp.float32)
    for k in range(d_conv):
        acc = acc + xpad_sc[pl.ds(k, L), :] * cw[k:k + 1, :]
    xc = acc + conv_b_ref[...]
    xc = xc * jax.nn.sigmoid(xc)                                # SiLU; this is `u`

    # fused x_proj (single lane-dense bf16 matmul) -> dt_raw | B | C
    dbc = jnp.dot(xc.astype(jnp.bfloat16), xproj_w_ref[...],
                  preferred_element_type=jnp.float32)           # (L, dt_rank + 2*d_state)
    dt_raw = dbc[:, :dt_rank]
    B_sc[...] = dbc[:, dt_rank:dt_rank + d_state]
    C_sc[...] = dbc[:, dt_rank + d_state:]

    # dt_proj + softplus
    dt = jnp.dot(dt_raw, dtw_ref[...], preferred_element_type=jnp.float32) + dtb_ref[...]
    dt = jax.nn.softplus(dt)                                    # (L, d_inner)
    dt_sc[...] = dt
    dtu_sc[...] = dt * xc

    A_neg = -jnp.exp(A_logT_ref[...])                           # (d_state, d_inner)

    # selective scan: exp(dt*A) hoisted per chunk; per-step body reads single rows via
    # pl.ds from VMEM scratch and writes y rows directly (no one-hot masking, no y carry).
    n_chunks = L // chunk

    def chunk_body(c, h):
        t0 = c * chunk
        dt_c = dt_sc[pl.ds(t0, chunk), :]                       # (chunk, d_inner)
        dA_sc[...] = jnp.exp(dt_c[:, None, :] * A_neg[None, :, :])

        def step(j, h):
            t = t0 + j
            b_t = B_sc[pl.ds(t, 1), :]                          # (1, d_state)
            c_t = C_sc[pl.ds(t, 1), :]                          # (1, d_state)
            dtu_t = dtu_sc[pl.ds(t, 1), :]                      # (1, d_inner)
            dBu = lax.dot_general(b_t, dtu_t, (((0,), (0,)), ((), ())),
                                  preferred_element_type=jnp.float32)  # (d_state, d_inner)
            h = dA_sc[j] * h + dBu
            y_sc[pl.ds(t, 1), :] = jnp.dot(c_t, h, preferred_element_type=jnp.float32)
            return h

        return lax.fori_loop(0, chunk, step, h, unroll=True)

    lax.fori_loop(0, n_chunks, chunk_body,
                  jnp.zeros((d_state, d_inner), jnp.float32))

    y = y_sc[...] + xc * D_ref[...]                             # + u * D
    y = y * (z * jax.nn.sigmoid(z))                             # * SiLU(z)
    mix_out_ref[0] = jnp.dot(y.astype(jnp.bfloat16), outw_ref[...],
                             preferred_element_type=jnp.float32).astype(mix_out_ref.dtype)


def mamba_block(hidden, residual, p):
    B, L, d_model = hidden.shape
    d_state, d_inner = p["A_logT"].shape
    d_conv = p["conv_w"].shape[0]
    dt_rank = p["dt_proj_w"].shape[0]
    chunk = next(c for c in (8, 4, 2, 1) if L % c == 0)

    weights = [p["norm_w"],
               p["in_proj_w"].astype(jnp.bfloat16),
               p["conv_w"], p["conv_b"],
               p["xproj_w"].astype(jnp.bfloat16),
               p["dt_proj_w"], p["dt_proj_b"],
               p["A_logT"], p["D"],
               p["out_proj_w"].astype(jnp.bfloat16)]

    def full_spec(a):
        nd = a.ndim
        return pl.BlockSpec(a.shape, lambda b, _n=nd: (0,) * _n)

    act_spec = pl.BlockSpec((1, L, d_model), lambda b: (b, 0, 0))
    kernel = partial(_mamba_block_kernel, d_inner=d_inner, d_state=d_state,
                     d_conv=d_conv, dt_rank=dt_rank, eps=1e-5, chunk=chunk)
    scratch = [
        pltpu.VMEM((L, d_inner), jnp.float32),                  # dt
        pltpu.VMEM((L, d_inner), jnp.float32),                  # dt * u
        pltpu.VMEM((L, d_state), jnp.float32),                  # B
        pltpu.VMEM((L, d_state), jnp.float32),                  # C
        pltpu.VMEM((L, d_inner), jnp.float32),                  # y (scan output)
        pltpu.VMEM((chunk, d_state, d_inner), jnp.float32),     # exp(dt*A) per chunk
        pltpu.VMEM((L + d_conv - 1, d_inner), jnp.float32),     # padded depthwise-conv input
    ]
    # TODO(synk): at production dims (d_model=4096, d_inner=16384) add an L-chunk grid axis
    # ("arbitrary") carrying the SSM state in scratch so blocks fit v7x's 64 MiB VMEM.
    mix, res = pl.pallas_call(
        kernel,
        grid=(B,),
        in_specs=[act_spec, act_spec] + [full_spec(a) for a in weights],
        out_specs=(act_spec, act_spec),
        out_shape=(jax.ShapeDtypeStruct((B, L, d_model), jnp.float32),
                   jax.ShapeDtypeStruct((B, L, d_model), jnp.float32)),
        scratch_shapes=scratch,
        compiler_params=pltpu.CompilerParams(
            dimension_semantics=("parallel",),
            vmem_limit_bytes=48 * 1024 * 1024),
    )(hidden, residual, *weights)
    return mix, res


# ----------------------------------------------------------------------------
# Full MambaCBlock forward
# ----------------------------------------------------------------------------
ENC_STRIDES = (4, 4, 2)
DEC_STRIDES = (2, 4, 4)


def mamba_c_block_forward(params, x):
    B, T = x.shape
    h = x[:, :, None].astype(jnp.float32) + 1.0                 # unsqueeze + 1 -> (B, T, 1)

    # encoder: Conv1d + BN(eval) + ReLU  x3
    for layer, s in zip(params["encoder"], ENC_STRIDES):
        h = conv1d_bn_relu(h, layer["w"], layer["scale"], layer["shift"],
                           K=8, stride=s, pad=2, relu=True)

    # (transpose(1,2) is implicit — activations are already (B, L, C))
    forward_f = h
    residual = jnp.zeros_like(h)                                # for_residual = None
    for blk in params["blocks"]:
        forward_f, residual = mamba_block(forward_f, residual, blk)
    residual = forward_f + residual
    # TODO(synk): bidirectional=True path (flip + backward_blocks) not exercised; default False.

    # decoder: ConvTranspose1d + BN(eval) + ReLU x2, then ConvTranspose1d
    dec = params["decoder"]
    for i, s in enumerate(DEC_STRIDES):
        residual = convT1d_bn_relu(residual, dec[i]["w"], dec[i]["scale"],
                                   dec[i]["shift"], K=8, stride=s, pad=2,
                                   relu=(i < 2))
    out = residual - 1.0
    return out[:, :, 0]                                         # residual[:, 0, :] in NCW


# ----------------------------------------------------------------------------
# Deterministic parameter initialization (synthetic; shapes per module __init__)
# ----------------------------------------------------------------------------
def init_params(key, enc_channels=(8, 16, 32), expand=4, d_state=16, d_conv=4,
                n_mamba=1):
    C1, C2, C3 = enc_channels
    dim = C3
    d_inner = expand * dim
    dt_rank = math.ceil(dim / 16)
    keys = iter(jax.random.split(key, 128))

    def nrm(shape, scale=0.05):
        return scale * jax.random.normal(next(keys), shape, dtype=jnp.float32)

    # TODO(synk): BatchNorm folded in eval mode with init running stats (mean=0, var=1);
    # training-mode batch statistics are not implemented.
    def conv_layer(cin, cout):
        w = nrm((cout, cin, 8))
        b = nrm((cout,), 0.01)
        gamma = 1.0 + nrm((cout,), 0.05)
        beta = nrm((cout,), 0.05)
        scale_bn = gamma / jnp.sqrt(jnp.ones((cout,), jnp.float32) + 1e-5)
        return {"w": w, "scale": scale_bn, "shift": b * scale_bn + beta}

    def convT_layer(cin, cout, bn=True):
        w = nrm((cin, cout, 8))
        b = nrm((cout,), 0.01)
        if bn:
            gamma = 1.0 + nrm((cout,), 0.05)
            beta = nrm((cout,), 0.05)
            scale_bn = gamma / jnp.sqrt(jnp.ones((cout,), jnp.float32) + 1e-5)
            return {"w": w, "scale": scale_bn, "shift": b * scale_bn + beta}
        return {"w": w, "scale": jnp.ones((cout,), jnp.float32), "shift": b}

    encoder = [conv_layer(1, C1), conv_layer(C1, C2), conv_layer(C2, C3)]
    decoder = [convT_layer(C3, C2), convT_layer(C2, C1), convT_layer(C1, 1, bn=False)]

    blocks = []
    for _ in range(n_mamba):
        A_T = jnp.tile(jnp.arange(1, d_state + 1, dtype=jnp.float32)[:, None],
                       (1, d_inner))                            # A_log^T, S4D-real init
        dt_init = jnp.exp(jax.random.uniform(next(keys), (d_inner,)) *
                          (math.log(0.1) - math.log(1e-3)) + math.log(1e-3))
        dt_bias = dt_init + jnp.log(-jnp.expm1(-dt_init))       # inverse softplus
        blocks.append({
            "norm_w": jnp.ones((1, dim), jnp.float32),
            "in_proj_w": nrm((dim, 2 * d_inner)),               # (d_model, 2*d_inner)
            "conv_w": nrm((d_conv, d_inner), 0.1),              # depthwise kernel
            "conv_b": nrm((1, d_inner), 0.01),
            # x_proj is a single Linear(d_inner, dt_rank + 2*d_state) in Mamba; kept fused.
            "xproj_w": nrm((d_inner, dt_rank + 2 * d_state)),
            "dt_proj_w": nrm((dt_rank, d_inner), 0.5),
            "dt_proj_b": dt_bias.reshape(1, d_inner).astype(jnp.float32),
            "A_logT": jnp.log(A_T),
            "D": jnp.ones((1, d_inner), jnp.float32),
            "out_proj_w": nrm((d_inner, dim)),
        })
    return {"encoder": encoder, "decoder": decoder, "blocks": blocks}


if __name__ == "__main__":
    key = jax.random.PRNGKey(0)
    B, T = 2, 544                 # T=544 -> encoder lengths 136, 34, 16 -> decoder back to 544
    params = init_params(key, enc_channels=(8, 16, 32), expand=4,
                         d_state=16, d_conv=4, n_mamba=1)
    x = jax.random.normal(jax.random.fold_in(key, 123), (B, T), dtype=jnp.float32)

    out = jax.jit(mamba_c_block_forward)(params, x)
    out = jax.block_until_ready(out)

    assert out.shape == (B, T), out.shape
    assert bool(jnp.all(jnp.isfinite(out)))
    print("KERNEL_OK")
</pallas_src>

<mosaic_0001>
module attributes {stable_mosaic.version = 11 : i64} {
  func.func @_matmul_affine_kernel(%arg0: i32, %arg1: i32, %arg2: i32, %arg3: memref<256x128xbf16, #tpu.memory_space<vmem>>, %arg4: memref<128x128xbf16, #tpu.memory_space<vmem>>, %arg5: memref<1x128xf32, #tpu.memory_space<vmem>>, %arg6: memref<1x128xf32, #tpu.memory_space<vmem>>, %arg7: memref<256x128xf32, #tpu.memory_space<vmem>>, %arg8: memref<256x128xf32, #tpu.memory_space<vmem>>) attributes {dimension_semantics = [#tpu.dimension_semantics<parallel>, #tpu.dimension_semantics<parallel>, #tpu.dimension_semantics<arbitrary>], iteration_bounds = array<i64: 2, 1, 1>, scalar_prefetch = 0 : i64, scratch_operands = 1 : i64, tpu.core_type = #tpu.core_type<tc>, window_params = [{transform_indices = @transform_0, window_bounds = array<i64: 256, 128>}, {transform_indices = @transform_1, window_bounds = array<i64: 128, 128>}, {transform_indices = @transform_2, window_bounds = array<i64: 1, 128>}, {transform_indices = @transform_3, window_bounds = array<i64: 1, 128>}, {transform_indices = @transform_4, window_bounds = array<i64: 256, 128>}]} {
    %c0_i32 = arith.constant 0 : i32
    %0 = arith.cmpi eq, %arg2, %c0_i32 : i32
    %1 = arith.extui %0 : i1 to i32
    %c0_i32_0 = arith.constant 0 : i32
    %2 = arith.cmpi ne, %1, %c0_i32_0 : i32
    scf.if %2 {
      %cst_10 = arith.constant 0.000000e+00 : f32
      %12 = vector.broadcast %cst_10 : f32 to vector<256x128xf32>
      %c0_11 = arith.constant 0 : index
      %c0_12 = arith.constant 0 : index
      %13 = vector.load %arg8[%c0_11, %c0_12] : memref<256x128xf32, #tpu.memory_space<vmem>>, vector<256x128xf32>
      tpu.vector_store %arg8[%c0_11, %c0_12], %12 {strides = array<i32>} : memref<256x128xf32, #tpu.memory_space<vmem>>, vector<256x128xf32>,
    } else {
    }
    %c0 = arith.constant 0 : index
    %c0_1 = arith.constant 0 : index
    %3 = vector.load %arg8[%c0, %c0_1] : memref<256x128xf32, #tpu.memory_space<vmem>>, vector<256x128xf32>
    %c0_2 = arith.constant 0 : index
    %c0_3 = arith.constant 0 : index
    %4 = vector.load %arg3[%c0_2, %c0_3] : memref<256x128xbf16, #tpu.memory_space<vmem>>, vector<256x128xbf16>
    %c0_4 = arith.constant 0 : index
    %c0_5 = arith.constant 0 : index
    %5 = vector.load %arg4[%c0_4, %c0_5] : memref<128x128xbf16, #tpu.memory_space<vmem>>, vector<128x128xbf16>
    %cst = arith.constant dense<0.000000e+00> : vector<256x128xf32>
    %6 = tpu.matmul %4, %5, %cst {dimension_numbers = #tpu.dot_dimension_numbers<[1], [0], [0], [1], [0, 0, 1, 1], [], []>} : vector<256x128xbf16>, vector<128x128xbf16>, vector<256x128xf32> -> vector<256x128xf32>
    %7 = arith.addf %3, %6 : vector<256x128xf32>
    %c0_6 = arith.constant 0 : index
    %c0_7 = arith.constant 0 : index
    %8 = vector.load %arg8[%c0_6, %c0_7] : memref<256x128xf32, #tpu.memory_space<vmem>>, vector<256x128xf32>
    tpu.vector_store %arg8[%c0_6, %c0_7], %7 {strides = array<i32>} : memref<256x128xf32, #tpu.memory_space<vmem>>, vector<256x128xf32>,
    %c0_i32_8 = arith.constant 0 : i32
    %9 = arith.cmpi eq, %arg2, %c0_i32_8 : i32
    %10 = arith.extui %9 : i1 to i32
    %c0_i32_9 = arith.constant 0 : i32
    %11 = arith.cmpi ne, %10, %c0_i32_9 : i32
    scf.if %11 {
      %c0_10 = arith.constant 0 : index
      %c0_11 = arith.constant 0 : index
      %12 = vector.load %arg8[%c0_10, %c0_11] : memref<256x128xf32, #tpu.memory_space<vmem>>, vector<256x128xf32>
      %c0_12 = arith.constant 0 : index
      %c0_13 = arith.constant 0 : index
      %13 = vector.load %arg5[%c0_12, %c0_13] : memref<1x128xf32, #tpu.memory_space<vmem>>, vector<1x128xf32>
      %14 = vector.broadcast %13 : vector<1x128xf32> to vector<256x128xf32>
      %15 = arith.mulf %12, %14 : vector<256x128xf32>
      %c0_14 = arith.constant 0 : index
      %c0_15 = arith.constant 0 : index
      %16 = vector.load %arg6[%c0_14, %c0_15] : memref<1x128xf32, #tpu.memory_space<vmem>>, vector<1x128xf32>
      %17 = vector.broadcast %16 : vector<1x128xf32> to vector<256x128xf32>
      %18 = arith.addf %15, %17 : vector<256x128xf32>
      %cst_16 = arith.constant 0.000000e+00 : f32
      %19 = vector.broadcast %cst_16 : f32 to vector<256x128xf32>
      %20 = arith.maximumf %18, %19 : vector<256x128xf32>
      %c0_17 = arith.constant 0 : index
      %c0_18 = arith.constant 0 : index
      %21 = vector.load %arg7[%c0_17, %c0_18] : memref<256x128xf32, #tpu.memory_space<vmem>>, vector<256x128xf32>
      tpu.vector_store %arg7[%c0_17, %c0_18], %20 {strides = array<i32>} : memref<256x128xf32, #tpu.memory_space<vmem>>, vector<256x128xf32>,
    } else {
    }
    return
  }
  func.func @transform_0(%arg0: i32, %arg1: i32, %arg2: i32) -> (i32, i32) {
    %c0_i32 = arith.constant 0 : i32
    return %arg0, %arg2 : i32, i32
  }
  func.func @transform_1(%arg0: i32, %arg1: i32, %arg2: i32) -> (i32, i32) {
    %c0_i32 = arith.constant 0 : i32
    return %arg2, %arg1 : i32, i32
  }
  func.func @transform_2(%arg0: i32, %arg1: i32, %arg2: i32) -> (i32, i32) {
    %c0_i32 = arith.constant 0 : i32
    %c0_i32_0 = arith.constant 0 : i32
    return %c0_i32, %arg1 : i32, i32
  }
  func.func @transform_3(%arg0: i32, %arg1: i32, %arg2: i32) -> (i32, i32) {
    %c0_i32 = arith.constant 0 : i32
    %c0_i32_0 = arith.constant 0 : i32
    return %c0_i32, %arg1 : i32, i32
  }
  func.func @transform_4(%arg0: i32, %arg1: i32, %arg2: i32) -> (i32, i32) {
    %c0_i32 = arith.constant 0 : i32
    return %arg0, %arg1 : i32, i32
  }
}

module attributes {stable_mosaic.version = 11 : i64} {
  func.func @_matmul_affine_kernel(%arg0: i32, %arg1: i32, %arg2: i32, %arg3: memref<80x128xbf16, #tpu.memory_space<vmem>>, %arg4: memref<128x128xbf16, #tpu.memory_space<vmem>>, %arg5: memref<1x128xf32, #tpu.memory_space<vmem>>, %arg6: memref<1x128xf32, #tpu.memory_space<vmem>>, %arg7: memref<80x128xf32, #tpu.memory_space<vmem>>, %arg8: memref<80x128xf32, #tpu.memory_space<vmem>>) attributes {dimension_semantics = [#tpu.dimension_semantics<parallel>, #tpu.dimension_semantics<parallel>, #tpu.dimension_semantics<arbitrary>], iteration_bounds = array<i64: 1, 1, 1>, scalar_prefetch = 0 : i64, scratch_operands = 1 : i64, tpu.core_type = #tpu.core_type<tc>, window_params = [{transform_indices = @transform_0, window_bounds = array<i64: 80, 128>}, {transform_indices = @transform_1, window_bounds = array<i64: 128, 128>}, {transform_indices = @transform_2, window_bounds = array<i64: 1, 128>}, {transform_indices = @transform_3, window_bounds = array<i64: 1, 128>}, {transform_indices = @transform_4, window_bounds = array<i64: 80, 128>}]} {
    %c0_i32 = arith.constant 0 : i32
    %0 = arith.cmpi eq, %arg2, %c0_i32 : i32
    %1 = arith.extui %0 : i1 to i32
    %c0_i32_0 = arith.constant 0 : i32
    %2 = arith.cmpi ne, %1, %c0_i32_0 : i32
    scf.if %2 {
      %cst_10 = arith.constant 0.000000e+00 : f32
      %12 = vector.broadcast %cst_10 : f32 to vector<80x128xf32>
      %c0_11 = arith.constant 0 : index
      %c0_12 = arith.constant 0 : index
      %13 = vector.load %arg8[%c0_11, %c0_12] : memref<80x128xf32, #tpu.memory_space<vmem>>, vector<80x128xf32>
      tpu.vector_store %arg8[%c0_11, %c0_12], %12 {strides = array<i32>} : memref<80x128xf32, #tpu.memory_space<vmem>>, vector<80x128xf32>,
    } else {
    }
    %c0 = arith.constant 0 : index
    %c0_1 = arith.constant 0 : index
    %3 = vector.load %arg8[%c0, %c0_1] : memref<80x128xf32, #tpu.memory_space<vmem>>, vector<80x128xf32>
    %c0_2 = arith.constant 0 : index
    %c0_3 = arith.constant 0 : index
    %4 = vector.load %arg3[%c0_2, %c0_3] : memref<80x128xbf16, #tpu.memory_space<vmem>>, vector<80x128xbf16>
    %c0_4 = arith.constant 0 : index
    %c0_5 = arith.constant 0 : index
    %5 = vector.load %arg4[%c0_4, %c0_5] : memref<128x128xbf16, #tpu.memory_space<vmem>>, vector<128x128xbf16>
    %cst = arith.constant dense<0.000000e+00> : vector<80x128xf32>
    %6 = tpu.matmul %4, %5, %cst {dimension_numbers = #tpu.dot_dimension_numbers<[1], [0], [0], [1], [0, 0, 1, 1], [], []>} : vector<80x128xbf16>, vector<128x128xbf16>, vector<80x128xf32> -> vector<80x128xf32>
    %7 = arith.addf %3, %6 : vector<80x128xf32>
    %c0_6 = arith.constant 0 : index
    %c0_7 = arith.constant 0 : index
    %8 = vector.load %arg8[%c0_6, %c0_7] : memref<80x128xf32, #tpu.memory_space<vmem>>, vector<80x128xf32>
    tpu.vector_store %arg8[%c0_6, %c0_7], %7 {strides = array<i32>} : memref<80x128xf32, #tpu.memory_space<vmem>>, vector<80x128xf32>,
    %c0_i32_8 = arith.constant 0 : i32
    %9 = arith.cmpi eq, %arg2, %c0_i32_8 : i32
    %10 = arith.extui %9 : i1 to i32
    %c0_i32_9 = arith.constant 0 : i32
    %11 = arith.cmpi ne, %10, %c0_i32_9 : i32
    scf.if %11 {
      %c0_10 = arith.constant 0 : index
      %c0_11 = arith.constant 0 : index
      %12 = vector.load %arg8[%c0_10, %c0_11] : memref<80x128xf32, #tpu.memory_space<vmem>>, vector<80x128xf32>
      %c0_12 = arith.constant 0 : index
      %c0_13 = arith.constant 0 : index
      %13 = vector.load %arg5[%c0_12, %c0_13] : memref<1x128xf32, #tpu.memory_space<vmem>>, vector<1x128xf32>
      %14 = vector.broadcast %13 : vector<1x128xf32> to vector<80x128xf32>
      %15 = arith.mulf %12, %14 : vector<80x128xf32>
      %c0_14 = arith.constant 0 : index
      %c0_15 = arith.constant 0 : index
      %16 = vector.load %arg6[%c0_14, %c0_15] : memref<1x128xf32, #tpu.memory_space<vmem>>, vector<1x128xf32>
      %17 = vector.broadcast %16 : vector<1x128xf32> to vector<80x128xf32>
      %18 = arith.addf %15, %17 : vector<80x128xf32>
      %cst_16 = arith.constant 0.000000e+00 : f32
      %19 = vector.broadcast %cst_16 : f32 to vector<80x128xf32>
      %20 = arith.maximumf %18, %19 : vector<80x128xf32>
      %c0_17 = arith.constant 0 : index
      %c0_18 = arith.constant 0 : index
      %21 = vector.load %arg7[%c0_17, %c0_18] : memref<80x128xf32, #tpu.memory_space<vmem>>, vector<80x128xf32>
      tpu.vector_store %arg7[%c0_17, %c0_18], %20 {strides = array<i32>} : memref<80x128xf32, #tpu.memory_space<vmem>>, vector<80x128xf32>,
    } else {
    }
    return
  }
  func.func @transform_0(%arg0: i32, %arg1: i32, %arg2: i32) -> (i32, i32) {
    %c0_i32 = arith.constant 0 : i32
    return %arg0, %arg2 : i32, i32
  }
  func.func @transform_1(%arg0: i32, %arg1: i32, %arg2: i32) -> (i32, i32) {
    %c0_i32 = arith.constant 0 : i32
    return %arg2, %arg1 : i32, i32
  }
  func.func @transform_2(%arg0: i32, %arg1: i32, %arg2: i32) -> (i32, i32) {
    %c0_i32 = arith.constant 0 : i32
    %c0_i32_0 = arith.constant 0 : i32
    return %c0_i32, %arg1 : i32, i32
  }
  func.func @transform_3(%arg0: i32, %arg1: i32, %arg2: i32) -> (i32, i32) {
    %c0_i32 = arith.constant 0 : i32
    %c0_i32_0 = arith.constant 0 : i32
    return %c0_i32, %arg1 : i32, i32
  }
  func.func @transform_4(%arg0: i32, %arg1: i32, %arg2: i32) -> (i32, i32) {
    %c0_i32 = arith.constant 0 : i32
    return %arg0, %arg1 : i32, i32
  }
}

module attributes {stable_mosaic.version = 11 : i64} {
  func.func @_matmul_affine_kernel(%arg0: i32, %arg1: i32, %arg2: i32, %arg3: memref<32x128xbf16, #tpu.memory_space<vmem>>, %arg4: memref<128x128xbf16, #tpu.memory_space<vmem>>, %arg5: memref<1x128xf32, #tpu.memory_space<vmem>>, %arg6: memref<1x128xf32, #tpu.memory_space<vmem>>, %arg7: memref<32x128xf32, #tpu.memory_space<vmem>>, %arg8: memref<32x128xf32, #tpu.memory_space<vmem>>) attributes {dimension_semantics = [#tpu.dimension_semantics<parallel>, #tpu.dimension_semantics<parallel>, #tpu.dimension_semantics<arbitrary>], iteration_bounds = array<i64: 1, 1, 1>, scalar_prefetch = 0 : i64, scratch_operands = 1 : i64, tpu.core_type = #tpu.core_type<tc>, window_params = [{transform_indices = @transform_0, window_bounds = array<i64: 32, 128>}, {transform_indices = @transform_1, window_bounds = array<i64: 128, 128>}, {transform_indices = @transform_2, window_bounds = array<i64: 1, 128>}, {transform_indices = @transform_3, window_bounds = array<i64: 1, 128>}, {transform_indices = @transform_4, window_bounds = array<i64: 32, 128>}]} {
    %c0_i32 = arith.constant 0 : i32
    %0 = arith.cmpi eq, %arg2, %c0_i32 : i32
    %1 = arith.extui %0 : i1 to i32
    %c0_i32_0 = arith.constant 0 : i32
    %2 = arith.cmpi ne, %1, %c0_i32_0 : i32
    scf.if %2 {
      %cst_10 = arith.constant 0.000000e+00 : f32
      %12 = vector.broadcast %cst_10 : f32 to vector<32x128xf32>
      %c0_11 = arith.constant 0 : index
      %c0_12 = arith.constant 0 : index
      %13 = vector.load %arg8[%c0_11, %c0_12] : memref<32x128xf32, #tpu.memory_space<vmem>>, vector<32x128xf32>
      tpu.vector_store %arg8[%c0_11, %c0_12], %12 {strides = array<i32>} : memref<32x128xf32, #tpu.memory_space<vmem>>, vector<32x128xf32>,
    } else {
    }
    %c0 = arith.constant 0 : index
    %c0_1 = arith.constant 0 : index
    %3 = vector.load %arg8[%c0, %c0_1] : memref<32x128xf32, #tpu.memory_space<vmem>>, vector<32x128xf32>
    %c0_2 = arith.constant 0 : index
    %c0_3 = arith.constant 0 : index
    %4 = vector.load %arg3[%c0_2, %c0_3] : memref<32x128xbf16, #tpu.memory_space<vmem>>, vector<32x128xbf16>
    %c0_4 = arith.constant 0 : index
    %c0_5 = arith.constant 0 : index
    %5 = vector.load %arg4[%c0_4, %c0_5] : memref<128x128xbf16, #tpu.memory_space<vmem>>, vector<128x128xbf16>
    %cst = arith.constant dense<0.000000e+00> : vector<32x128xf32>
    %6 = tpu.matmul %4, %5, %cst {dimension_numbers = #tpu.dot_dimension_numbers<[1], [0], [0], [1], [0, 0, 1, 1], [], []>} : vector<32x128xbf16>, vector<128x128xbf16>, vector<32x128xf32> -> vector<32x128xf32>
    %7 = arith.addf %3, %6 : vector<32x128xf32>
    %c0_6 = arith.constant 0 : index
    %c0_7 = arith.constant 0 : index
    %8 = vector.load %arg8[%c0_6, %c0_7] : memref<32x128xf32, #tpu.memory_space<vmem>>, vector<32x128xf32>
    tpu.vector_store %arg8[%c0_6, %c0_7], %7 {strides = array<i32>} : memref<32x128xf32, #tpu.memory_space<vmem>>, vector<32x128xf32>,
    %c0_i32_8 = arith.constant 0 : i32
    %9 = arith.cmpi eq, %arg2, %c0_i32_8 : i32
    %10 = arith.extui %9 : i1 to i32
    %c0_i32_9 = arith.constant 0 : i32
    %11 = arith.cmpi ne, %10, %c0_i32_9 : i32
    scf.if %11 {
      %c0_10 = arith.constant 0 : index
      %c0_11 = arith.constant 0 : index
      %12 = vector.load %arg8[%c0_10, %c0_11] : memref<32x128xf32, #tpu.memory_space<vmem>>, vector<32x128xf32>
      %c0_12 = arith.constant 0 : index
      %c0_13 = arith.constant 0 : index
      %13 = vector.load %arg5[%c0_12, %c0_13] : memref<1x128xf32, #tpu.memory_space<vmem>>, vector<1x128xf32>
      %14 = vector.broadcast %13 : vector<1x128xf32> to vector<32x128xf32>
      %15 = arith.mulf %12, %14 : vector<32x128xf32>
      %c0_14 = arith.constant 0 : index
      %c0_15 = arith.constant 0 : index
      %16 = vector.load %arg6[%c0_14, %c0_15] : memref<1x128xf32, #tpu.memory_space<vmem>>, vector<1x128xf32>
      %17 = vector.broadcast %16 : vector<1x128xf32> to vector<32x128xf32>
      %18 = arith.addf %15, %17 : vector<32x128xf32>
      %cst_16 = arith.constant 0.000000e+00 : f32
      %19 = vector.broadcast %cst_16 : f32 to vector<32x128xf32>
      %20 = arith.maximumf %18, %19 : vector<32x128xf32>
      %c0_17 = arith.constant 0 : index
      %c0_18 = arith.constant 0 : index
      %21 = vector.load %arg7[%c0_17, %c0_18] : memref<32x128xf32, #tpu.memory_space<vmem>>, vector<32x128xf32>
      tpu.vector_store %arg7[%c0_17, %c0_18], %20 {strides = array<i32>} : memref<32x128xf32, #tpu.memory_space<vmem>>, vector<32x128xf32>,
    } else {
    }
    return
  }
  func.func @transform_0(%arg0: i32, %arg1: i32, %arg2: i32) -> (i32, i32) {
    %c0_i32 = arith.constant 0 : i32
    return %arg0, %arg2 : i32, i32
  }
  func.func @transform_1(%arg0: i32, %arg1: i32, %arg2: i32) -> (i32, i32) {
    %c0_i32 = arith.constant 0 : i32
    return %arg2, %arg1 : i32, i32
  }
  func.func @transform_2(%arg0: i32, %arg1: i32, %arg2: i32) -> (i32, i32) {
    %c0_i32 = arith.constant 0 : i32
    %c0_i32_0 = arith.constant 0 : i32
    return %c0_i32, %arg1 : i32, i32
  }
  func.func @transform_3(%arg0: i32, %arg1: i32, %arg2: i32) -> (i32, i32) {
    %c0_i32 = arith.constant 0 : i32
    %c0_i32_0 = arith.constant 0 : i32
    return %c0_i32, %arg1 : i32, i32
  }
  func.func @transform_4(%arg0: i32, %arg1: i32, %arg2: i32) -> (i32, i32) {
    %c0_i32 = arith.constant 0 : i32
    return %arg0, %arg1 : i32, i32
  }
}

module attributes {stable_mosaic.version = 11 : i64} {
  func.func @_mamba_block_kernel(%arg0: i32, %arg1: memref<1x16x32xf32, #tpu.memory_space<vmem>>, %arg2: memref<1x16x32xf32, #tpu.memory_space<vmem>>, %arg3: memref<1x32xf32, #tpu.memory_space<vmem>>, %arg4: memref<32x256xbf16, #tpu.memory_space<vmem>>, %arg5: memref<4x128xf32, #tpu.memory_space<vmem>>, %arg6: memref<1x128xf32, #tpu.memory_space<vmem>>, %arg7: memref<128x34xbf16, #tpu.memory_space<vmem>>, %arg8: memref<2x128xf32, #tpu.memory_space<vmem>>, %arg9: memref<1x128xf32, #tpu.memory_space<vmem>>, %arg10: memref<16x128xf32, #tpu.memory_space<vmem>>, %arg11: memref<1x128xf32, #tpu.memory_space<vmem>>, %arg12: memref<128x32xbf16, #tpu.memory_space<vmem>>, %arg13: memref<1x16x32xf32, #tpu.memory_space<vmem>>, %arg14: memref<1x16x32xf32, #tpu.memory_space<vmem>>, %arg15: memref<16x128xf32, #tpu.memory_space<vmem>>, %arg16: memref<16x128xf32, #tpu.memory_space<vmem>>, %arg17: memref<16x16xf32, #tpu.memory_space<vmem>>, %arg18: memref<16x16xf32, #tpu.memory_space<vmem>>, %arg19: memref<16x128xf32, #tpu.memory_space<vmem>>, %arg20: memref<8x16x128xf32, #tpu.memory_space<vmem>>, %arg21: memref<19x128xf32, #tpu.memory_space<vmem>>) attributes {dimension_semantics = [#tpu.dimension_semantics<parallel>], iteration_bounds = array<i64: 2>, scalar_prefetch = 0 : i64, scratch_operands = 7 : i64, tpu.core_type = #tpu.core_type<tc>, window_params = [{transform_indices = @transform_0, window_bounds = array<i64: 1, 16, 32>}, {transform_indices = @transform_1, window_bounds = array<i64: 1, 16, 32>}, {pipeline_mode = #tpu.pipeline_mode<synchronous>, transform_indices = @transform_2, window_bounds = array<i64: 1, 32>}, {pipeline_mode = #tpu.pipeline_mode<synchronous>, transform_indices = @transform_3, window_bounds = array<i64: 32, 256>}, {pipeline_mode = #tpu.pipeline_mode<synchronous>, transform_indices = @transform_4, window_bounds = array<i64: 4, 128>}, {pipeline_mode = #tpu.pipeline_mode<synchronous>, transform_indices = @transform_5, window_bounds = array<i64: 1, 128>}, {pipeline_mode = #tpu.pipeline_mode<synchronous>, transform_indices = @transform_6, window_bounds = array<i64: 128, 34>}, {pipeline_mode = #tpu.pipeline_mode<synchronous>, transform_indices = @transform_7, window_bounds = array<i64: 2, 128>}, {pipeline_mode = #tpu.pipeline_mode<synchronous>, transform_indices = @transform_8, window_bounds = array<i64: 1, 128>}, {pipeline_mode = #tpu.pipeline_mode<synchronous>, transform_indices = @transform_9, window_bounds = array<i64: 16, 128>}, {pipeline_mode = #tpu.pipeline_mode<synchronous>, transform_indices = @transform_10, window_bounds = array<i64: 1, 128>}, {pipeline_mode = #tpu.pipeline_mode<synchronous>, transform_indices = @transform_11, window_bounds = array<i64: 128, 32>}, {transform_indices = @transform_12, window_bounds = array<i64: 1, 16, 32>}, {transform_indices = @transform_13, window_bounds = array<i64: 1, 16, 32>}]} {
    %c0 = arith.constant 0 : index
    %c0_0 = arith.constant 0 : index
    %c0_1 = arith.constant 0 : index
    %0 = vector.load %arg1[%c0, %c0_0, %c0_1] : memref<1x16x32xf32, #tpu.memory_space<vmem>>, vector<1x16x32xf32>
    %1 = vector.shape_cast %0 : vector<1x16x32xf32> to vector<16x32xf32>
    %c0_2 = arith.constant 0 : index
    %c0_3 = arith.constant 0 : index
    %c0_4 = arith.constant 0 : index
    %2 = vector.load %arg2[%c0_2, %c0_3, %c0_4] : memref<1x16x32xf32, #tpu.memory_space<vmem>>, vector<1x16x32xf32>
    %3 = vector.shape_cast %2 : vector<1x16x32xf32> to vector<16x32xf32>
    %4 = arith.addf %1, %3 : vector<16x32xf32>
    %c0_5 = arith.constant 0 : index
    %c0_6 = arith.constant 0 : index
    %c0_7 = arith.constant 0 : index
    %5 = vector.load %arg14[%c0_5, %c0_6, %c0_7] : memref<1x16x32xf32, #tpu.memory_space<vmem>>, vector<1x16x32xf32>
    %6 = vector.shape_cast %5 : vector<1x16x32xf32> to vector<16x32xf32>
    %7 = vector.shape_cast %4 : vector<16x32xf32> to vector<1x16x32xf32>
    tpu.vector_store %arg14[%c0_5, %c0_6, %c0_7], %7 {strides = array<i32>} : memref<1x16x32xf32, #tpu.memory_space<vmem>>, vector<1x16x32xf32>,
    %8 = arith.mulf %4, %4 : vector<16x32xf32>
    %cst = arith.constant dense<0.000000e+00> : vector<16xf32>
    %9 = vector.multi_reduction <add>, %8, %cst [1] : vector<16x32xf32> to vector<16xf32>
    %10 = vector.shape_cast %9 : vector<16xf32> to vector<16x1xf32>
    %cst_8 = arith.constant 3.200000e+01 : f32
    %11 = vector.broadcast %cst_8 : f32 to vector<16x1xf32>
    %12 = arith.divf %10, %11 : vector<16x1xf32>
    %cst_9 = arith.constant 9.99999974E-6 : f32
    %13 = vector.broadcast %cst_9 : f32 to vector<16x1xf32>
    %14 = arith.addf %12, %13 : vector<16x1xf32>
    %15 = math.rsqrt %14 : vector<16x1xf32>
    %16 = vector.broadcast %15 : vector<16x1xf32> to vector<16x32xf32>
    %17 = arith.mulf %4, %16 : vector<16x32xf32>
    %c0_10 = arith.constant 0 : index
    %c0_11 = arith.constant 0 : index
    %18 = vector.load %arg3[%c0_10, %c0_11] : memref<1x32xf32, #tpu.memory_space<vmem>>, vector<1x32xf32>
    %19 = vector.broadcast %18 : vector<1x32xf32> to vector<16x32xf32>
    %20 = arith.mulf %17, %19 : vector<16x32xf32>
    %21 = arith.truncf %20 : vector<16x32xf32> to vector<16x32xbf16>
    %c0_12 = arith.constant 0 : index
    %c0_13 = arith.constant 0 : index
    %22 = vector.load %arg4[%c0_12, %c0_13] : memref<32x256xbf16, #tpu.memory_space<vmem>>, vector<32x256xbf16>
    %cst_14 = arith.constant dense<0.000000e+00> : vector<16x256xf32>
    %23 = tpu.matmul %21, %22, %cst_14 {dimension_numbers = #tpu.dot_dimension_numbers<[1], [0], [0], [1], [0, 0, 1, 1], [], []>} : vector<16x32xbf16>, vector<32x256xbf16>, vector<16x256xf32> -> vector<16x256xf32>
    %24 = vector.extract_strided_slice %23 {offsets = [0, 0], sizes = [16, 128], strides = [1, 1]} : vector<16x256xf32> to vector<16x128xf32>
    %25 = vector.extract_strided_slice %23 {offsets = [0, 128], sizes = [16, 128], strides = [1, 1]} : vector<16x256xf32> to vector<16x128xf32>
    %cst_15 = arith.constant 0.000000e+00 : f32
    %26 = vector.broadcast %cst_15 : f32 to vector<3x128xf32>
    %c0_16 = arith.constant 0 : index
    %c0_17 = arith.constant 0 : index
    %27 = vector.load %arg21[%c0_16, %c0_17] : memref<19x128xf32, #tpu.memory_space<vmem>>, vector<3x128xf32>
    tpu.vector_store %arg21[%c0_16, %c0_17], %26 {strides = array<i32>} : memref<19x128xf32, #tpu.memory_space<vmem>>, vector<3x128xf32>,
    %c3 = arith.constant 3 : index
    %c0_18 = arith.constant 0 : index
    %28 = vector.load %arg21[%c3, %c0_18] : memref<19x128xf32, #tpu.memory_space<vmem>>, vector<16x128xf32>
    tpu.vector_store %arg21[%c3, %c0_18], %24 {strides = array<i32>} : memref<19x128xf32, #tpu.memory_space<vmem>>, vector<16x128xf32>,
    %c0_19 = arith.constant 0 : index
    %c0_20 = arith.constant 0 : index
    %29 = vector.load %arg5[%c0_19, %c0_20] : memref<4x128xf32, #tpu.memory_space<vmem>>, vector<4x128xf32>
    %cst_21 = arith.constant 0.000000e+00 : f32
    %30 = vector.broadcast %cst_21 : f32 to vector<16x128xf32>
    %c0_22 = arith.constant 0 : index
    %c0_23 = arith.constant 0 : index
    %31 = vector.load %arg21[%c0_22, %c0_23] : memref<19x128xf32, #tpu.memory_space<vmem>>, vector<16x128xf32>
    %32 = vector.extract_strided_slice %29 {offsets = [0, 0], sizes = [1, 128], strides = [1, 1]} : vector<4x128xf32> to vector<1x128xf32>
    %33 = vector.broadcast %32 : vector<1x128xf32> to vector<16x128xf32>
    %34 = arith.mulf %31, %33 : vector<16x128xf32>
    %35 = arith.addf %30, %34 : vector<16x128xf32>
    %c1 = arith.constant 1 : index
    %c0_24 = arith.constant 0 : index
    %36 = vector.load %arg21[%c1, %c0_24] : memref<19x128xf32, #tpu.memory_space<vmem>>, vector<16x128xf32>
    %37 = vector.extract_strided_slice %29 {offsets = [1, 0], sizes = [1, 128], strides = [1, 1]} : vector<4x128xf32> to vector<1x128xf32>
    %38 = vector.broadcast %37 : vector<1x128xf32> to vector<16x128xf32>
    %39 = arith.mulf %36, %38 : vector<16x128xf32>
    %40 = arith.addf %35, %39 : vector<16x128xf32>
    %c2 = arith.constant 2 : index
    %c0_25 = arith.constant 0 : index
    %41 = vector.load %arg21[%c2, %c0_25] : memref<19x128xf32, #tpu.memory_space<vmem>>, vector<16x128xf32>
    %42 = vector.extract_strided_slice %29 {offsets = [2, 0], sizes = [1, 128], strides = [1, 1]} : vector<4x128xf32> to vector<1x128xf32>
    %43 = vector.broadcast %42 : vector<1x128xf32> to vector<16x128xf32>
    %44 = arith.mulf %41, %43 : vector<16x128xf32>
    %45 = arith.addf %40, %44 : vector<16x128xf32>
    %c3_26 = arith.constant 3 : index
    %c0_27 = arith.constant 0 : index
    %46 = vector.load %arg21[%c3_26, %c0_27] : memref<19x128xf32, #tpu.memory_space<vmem>>, vector<16x128xf32>
    %47 = vector.extract_strided_slice %29 {offsets = [3, 0], sizes = [1, 128], strides = [1, 1]} : vector<4x128xf32> to vector<1x128xf32>
    %48 = vector.broadcast %47 : vector<1x128xf32> to vector<16x128xf32>
    %49 = arith.mulf %46, %48 : vector<16x128xf32>
    %50 = arith.addf %45, %49 : vector<16x128xf32>
    %c0_28 = arith.constant 0 : index
    %c0_29 = arith.constant 0 : index
    %51 = vector.load %arg6[%c0_28, %c0_29] : memref<1x128xf32, #tpu.memory_space<vmem>>, vector<1x128xf32>
    %52 = vector.broadcast %51 : vector<1x128xf32> to vector<16x128xf32>
    %53 = arith.addf %50, %52 : vector<16x128xf32>
    %54 = arith.negf %53 : vector<16x128xf32>
    %55 = math.exp %54 : vector<16x128xf32>
    %cst_30 = arith.constant 1.000000e+00 : f32
    %56 = vector.broadcast %cst_30 : f32 to vector<16x128xf32>
    %57 = arith.addf %56, %55 : vector<16x128xf32>
    %58 = arith.divf %56, %57 : vector<16x128xf32>
    %59 = arith.mulf %53, %58 : vector<16x128xf32>
    %60 = arith.truncf %59 : vector<16x128xf32> to vector<16x128xbf16>
    %c0_31 = arith.constant 0 : index
    %c0_32 = arith.constant 0 : index
    %61 = vector.load %arg7[%c0_31, %c0_32] : memref<128x34xbf16, #tpu.memory_space<vmem>>, vector<128x34xbf16>
    %cst_33 = arith.constant dense<0.000000e+00> : vector<16x34xf32>
    %62 = tpu.matmul %60, %61, %cst_33 {dimension_numbers = #tpu.dot_dimension_numbers<[1], [0], [0], [1], [0, 0, 1, 1], [], []>} : vector<16x128xbf16>, vector<128x34xbf16>, vector<16x34xf32> -> vector<16x34xf32>
    %63 = vector.extract_strided_slice %62 {offsets = [0, 0], sizes = [16, 2], strides = [1, 1]} : vector<16x34xf32> to vector<16x2xf32>
    %64 = vector.extract_strided_slice %62 {offsets = [0, 2], sizes = [16, 16], strides = [1, 1]} : vector<16x34xf32> to vector<16x16xf32>
    %c0_34 = arith.constant 0 : index
    %c0_35 = arith.constant 0 : index
    %65 = vector.load %arg17[%c0_34, %c0_35] : memref<16x16xf32, #tpu.memory_space<vmem>>, vector<16x16xf32>
    tpu.vector_store %arg17[%c0_34, %c0_35], %64 {strides = array<i32>} : memref<16x16xf32, #tpu.memory_space<vmem>>, vector<16x16xf32>,
    %66 = vector.extract_strided_slice %62 {offsets = [0, 18], sizes = [16, 16], strides = [1, 1]} : vector<16x34xf32> to vector<16x16xf32>
    %c0_36 = arith.constant 0 : index
    %c0_37 = arith.constant 0 : index
    %67 = vector.load %arg18[%c0_36, %c0_37] : memref<16x16xf32, #tpu.memory_space<vmem>>, vector<16x16xf32>
    tpu.vector_store %arg18[%c0_36, %c0_37], %66 {strides = array<i32>} : memref<16x16xf32, #tpu.memory_space<vmem>>, vector<16x16xf32>,
    %c0_38 = arith.constant 0 : index
    %c0_39 = arith.constant 0 : index
    %68 = vector.load %arg8[%c0_38, %c0_39] : memref<2x128xf32, #tpu.memory_space<vmem>>, vector<2x128xf32>
    %cst_40 = arith.constant dense<0.000000e+00> : vector<16x128xf32>
    %69 = tpu.matmul %63, %68, %cst_40 {dimension_numbers = #tpu.dot_dimension_numbers<[1], [0], [0], [1], [0, 0, 1, 1], [], []>} : vector<16x2xf32>, vector<2x128xf32>, vector<16x128xf32> -> vector<16x128xf32>
    %c0_41 = arith.constant 0 : index
    %c0_42 = arith.constant 0 : index
    %70 = vector.load %arg9[%c0_41, %c0_42] : memref<1x128xf32, #tpu.memory_space<vmem>>, vector<1x128xf32>
    %71 = vector.broadcast %70 : vector<1x128xf32> to vector<16x128xf32>
    %72 = arith.addf %69, %71 : vector<16x128xf32>
    %cst_43 = arith.constant 0.000000e+00 : f32
    %73 = vector.broadcast %cst_43 : f32 to vector<16x128xf32>
    %74 = arith.maximumf %72, %73 : vector<16x128xf32>
    %75 = vector.broadcast %cst_43 : f32 to vector<16x128xf32>
    %76 = arith.subf %72, %75 : vector<16x128xf32>
    %77 = arith.cmpf one, %76, %76 : vector<16x128xf32>
    %78 = vector.broadcast %cst_43 : f32 to vector<16x128xf32>
    %79 = arith.addf %72, %78 : vector<16x128xf32>
    %80 = math.absf %76 : vector<16x128xf32>
    %cst_44 = arith.constant 0.000000e+00 : f32
    %81 = vector.broadcast %cst_44 : f32 to vector<16x128xf32>
    %82 = arith.subf %81, %80 : vector<16x128xf32>
    %83 = math.exp %82 : vector<16x128xf32>
    %84 = math.log1p %83 : vector<16x128xf32>
    %85 = arith.addf %74, %84 : vector<16x128xf32>
    %86 = arith.select %77, %79, %85 : vector<16x128xi1>, vector<16x128xf32>
    %c0_45 = arith.constant 0 : index
    %c0_46 = arith.constant 0 : index
    %87 = vector.load %arg15[%c0_45, %c0_46] : memref<16x128xf32, #tpu.memory_space<vmem>>, vector<16x128xf32>
    tpu.vector_store %arg15[%c0_45, %c0_46], %86 {strides = array<i32>} : memref<16x128xf32, #tpu.memory_space<vmem>>, vector<16x128xf32>,
    %88 = arith.mulf %86, %59 : vector<16x128xf32>
    %c0_47 = arith.constant 0 : index
    %c0_48 = arith.constant 0 : index
    %89 = vector.load %arg16[%c0_47, %c0_48] : memref<16x128xf32, #tpu.memory_space<vmem>>, vector<16x128xf32>
    tpu.vector_store %arg16[%c0_47, %c0_48], %88 {strides = array<i32>} : memref<16x128xf32, #tpu.memory_space<vmem>>, vector<16x128xf32>,
    %c0_49 = arith.constant 0 : index
    %c0_50 = arith.constant 0 : index
    %90 = vector.load %arg10[%c0_49, %c0_50] : memref<16x128xf32, #tpu.memory_space<vmem>>, vector<16x128xf32>
    %91 = math.exp %90 : vector<16x128xf32>
    %cst_51 = arith.constant 0.000000e+00 : f32
    %92 = vector.broadcast %cst_51 : f32 to vector<16x128xf32>
    %93 = arith.subf %92, %91 : vector<16x128xf32>
    %cst_52 = arith.constant 0.000000e+00 : f32
    %94 = vector.broadcast %cst_52 : f32 to vector<16x128xf32>
    %c0_i32 = arith.constant 0 : i32
    %c2_i32 = arith.constant 2 : i32
    %95 = arith.addi %c0_i32, %c2_i32 : i32
    %c1_i32 = arith.constant 1 : i32
    %96 = scf.for %arg22 = %c0_i32 to %95 step %c1_i32 iter_args(%arg23 = %94) -> (vector<16x128xf32>)  : i32 {
      %c8_i32 = arith.constant 8 : i32
      %115 = arith.muli %arg22, %c8_i32 : i32
      %116 = arith.index_cast %115 : i32 to index
      %c0_65 = arith.constant 0 : index
      %117 = vector.load %arg15[%116, %c0_65] : memref<16x128xf32, #tpu.memory_space<vmem>>, vector<8x128xf32>
      %118 = vector.shape_cast %117 : vector<8x128xf32> to vector<8x1x128xf32>
      %119 = vector.shape_cast %93 : vector<16x128xf32> to vector<1x16x128xf32>
      %120 = vector.broadcast %118 : vector<8x1x128xf32> to vector<8x16x128xf32>
      %121 = vector.broadcast %119 : vector<1x16x128xf32> to vector<8x16x128xf32>
      %122 = arith.mulf %120, %121 : vector<8x16x128xf32>
      %123 = math.exp %122 : vector<8x16x128xf32>
      %c0_66 = arith.constant 0 : index
      %c0_67 = arith.constant 0 : index
      %c0_68 = arith.constant 0 : index
      %124 = vector.load %arg20[%c0_66, %c0_67, %c0_68] : memref<8x16x128xf32, #tpu.memory_space<vmem>>, vector<8x16x128xf32>
      tpu.vector_store %arg20[%c0_66, %c0_67, %c0_68], %123 {strides = array<i32>} : memref<8x16x128xf32, #tpu.memory_space<vmem>>, vector<8x16x128xf32>,
      %c0_i32_69 = arith.constant 0 : i32
      %125 = arith.addi %115, %c0_i32_69 : i32
      %126 = arith.index_cast %125 : i32 to index
      %c0_70 = arith.constant 0 : index
      %127 = vector.load %arg17[%126, %c0_70] : memref<16x16xf32, #tpu.memory_space<vmem>>, vector<1x16xf32>
      %128 = arith.index_cast %125 : i32 to index
      %c0_71 = arith.constant 0 : index
      %129 = vector.load %arg18[%128, %c0_71] : memref<16x16xf32, #tpu.memory_space<vmem>>, vector<1x16xf32>
      %130 = arith.index_cast %125 : i32 to index
      %c0_72 = arith.constant 0 : index
      %131 = vector.load %arg16[%130, %c0_72] : memref<16x128xf32, #tpu.memory_space<vmem>>, vector<1x128xf32>
      %cst_73 = arith.constant dense<0.000000e+00> : vector<16x128xf32>
      %132 = tpu.matmul %127, %131, %cst_73 {dimension_numbers = #tpu.dot_dimension_numbers<[0], [0], [1], [1], [0, 1, 1, 1], [], []>} : vector<1x16xf32>, vector<1x128xf32>, vector<16x128xf32> -> vector<16x128xf32>
      %133 = arith.index_cast %c0_i32_69 : i32 to index
      %c0_74 = arith.constant 0 : index
      %c0_75 = arith.constant 0 : index
      %134 = vector.load %arg20[%133, %c0_74, %c0_75] : memref<8x16x128xf32, #tpu.memory_space<vmem>>, vector<1x16x128xf32>
      %135 = vector.shape_cast %134 : vector<1x16x128xf32> to vector<16x128xf32>
      %136 = arith.mulf %135, %arg23 : vector<16x128xf32>
      %137 = arith.addf %136, %132 : vector<16x128xf32>
      %cst_76 = arith.constant dense<0.000000e+00> : vector<1x128xf32>
      %138 = tpu.matmul %129, %137, %cst_76 {dimension_numbers = #tpu.dot_dimension_numbers<[1], [0], [0], [1], [0, 0, 1, 1], [], []>} : vector<1x16xf32>, vector<16x128xf32>, vector<1x128xf32> -> vector<1x128xf32>
      %139 = arith.index_cast %125 : i32 to index
      %c0_77 = arith.constant 0 : index
      %140 = vector.load %arg19[%139, %c0_77] : memref<16x128xf32, #tpu.memory_space<vmem>>, vector<1x128xf32>
      tpu.vector_store %arg19[%139, %c0_77], %138 {strides = array<i32>} : memref<16x128xf32, #tpu.memory_space<vmem>>, vector<1x128xf32>,
      %c1_i32_78 = arith.constant 1 : i32
      %141 = arith.addi %115, %c1_i32_78 : i32
      %142 = arith.index_cast %141 : i32 to index
      %c0_79 = arith.constant 0 : index
      %143 = vector.load %arg17[%142, %c0_79] : memref<16x16xf32, #tpu.memory_space<vmem>>, vector<1x16xf32>
      %144 = arith.index_cast %141 : i32 to index
      %c0_80 = arith.constant 0 : index
      %145 = vector.load %arg18[%144, %c0_80] : memref<16x16xf32, #tpu.memory_space<vmem>>, vector<1x16xf32>
      %146 = arith.index_cast %141 : i32 to index
      %c0_81 = arith.constant 0 : index
      %147 = vector.load %arg16[%146, %c0_81] : memref<16x128xf32, #tpu.memory_space<vmem>>, vector<1x128xf32>
      %cst_82 = arith.constant dense<0.000000e+00> : vector<16x128xf32>
      %148 = tpu.matmul %143, %147, %cst_82 {dimension_numbers = #tpu.dot_dimension_numbers<[0], [0], [1], [1], [0, 1, 1, 1], [], []>} : vector<1x16xf32>, vector<1x128xf32>, vector<16x128xf32> -> vector<16x128xf32>
      %149 = arith.index_cast %c1_i32_78 : i32 to index
      %c0_83 = arith.constant 0 : index
      %c0_84 = arith.constant 0 : index
      %150 = vector.load %arg20[%149, %c0_83, %c0_84] : memref<8x16x128xf32, #tpu.memory_space<vmem>>, vector<1x16x128xf32>
      %151 = vector.shape_cast %150 : vector<1x16x128xf32> to vector<16x128xf32>
      %152 = arith.mulf %151, %137 : vector<16x128xf32>
      %153 = arith.addf %152, %148 : vector<16x128xf32>
      %cst_85 = arith.constant dense<0.000000e+00> : vector<1x128xf32>
      %154 = tpu.matmul %145, %153, %cst_85 {dimension_numbers = #tpu.dot_dimension_numbers<[1], [0], [0], [1], [0, 0, 1, 1], [], []>} : vector<1x16xf32>, vector<16x128xf32>, vector<1x128xf32> -> vector<1x128xf32>
      %155 = arith.index_cast %141 : i32 to index
      %c0_86 = arith.constant 0 : index
      %156 = vector.load %arg19[%155, %c0_86] : memref<16x128xf32, #tpu.memory_space<vmem>>, vector<1x128xf32>
      tpu.vector_store %arg19[%155, %c0_86], %154 {strides = array<i32>} : memref<16x128xf32, #tpu.memory_space<vmem>>, vector<1x128xf32>,
      %c2_i32_87 = arith.constant 2 : i32
      %157 = arith.addi %115, %c2_i32_87 : i32
      %158 = arith.index_cast %157 : i32 to index
      %c0_88 = arith.constant 0 : index
      %159 = vector.load %arg17[%158, %c0_88] : memref<16x16xf32, #tpu.memory_space<vmem>>, vector<1x16xf32>
      %160 = arith.index_cast %157 : i32 to index
      %c0_89 = arith.constant 0 : index
      %161 = vector.load %arg18[%160, %c0_89] : memref<16x16xf32, #tpu.memory_space<vmem>>, vector<1x16xf32>
      %162 = arith.index_cast %157 : i32 to index
      %c0_90 = arith.constant 0 : index
      %163 = vector.load %arg16[%162, %c0_90] : memref<16x128xf32, #tpu.memory_space<vmem>>, vector<1x128xf32>
      %cst_91 = arith.constant dense<0.000000e+00> : vector<16x128xf32>
      %164 = tpu.matmul %159, %163, %cst_91 {dimension_numbers = #tpu.dot_dimension_numbers<[0], [0], [1], [1], [0, 1, 1, 1], [], []>} : vector<1x16xf32>, vector<1x128xf32>, vector<16x128xf32> -> vector<16x128xf32>
      %165 = arith.index_cast %c2_i32_87 : i32 to index
      %c0_92 = arith.constant 0 : index
      %c0_93 = arith.constant 0 : index
      %166 = vector.load %arg20[%165, %c0_92, %c0_93] : memref<8x16x128xf32, #tpu.memory_space<vmem>>, vector<1x16x128xf32>
      %167 = vector.shape_cast %166 : vector<1x16x128xf32> to vector<16x128xf32>
      %168 = arith.mulf %167, %153 : vector<16x128xf32>
      %169 = arith.addf %168, %164 : vector<16x128xf32>
      %cst_94 = arith.constant dense<0.000000e+00> : vector<1x128xf32>
      %170 = tpu.matmul %161, %169, %cst_94 {dimension_numbers = #tpu.dot_dimension_numbers<[1], [0], [0], [1], [0, 0, 1, 1], [], []>} : vector<1x16xf32>, vector<16x128xf32>, vector<1x128xf32> -> vector<1x128xf32>
      %171 = arith.index_cast %157 : i32 to index
      %c0_95 = arith.constant 0 : index
      %172 = vector.load %arg19[%171, %c0_95] : memref<16x128xf32, #tpu.memory_space<vmem>>, vector<1x128xf32>
      tpu.vector_store %arg19[%171, %c0_95], %170 {strides = array<i32>} : memref<16x128xf32, #tpu.memory_space<vmem>>, vector<1x128xf32>,
      %c3_i32 = arith.constant 3 : i32
      %173 = arith.addi %115, %c3_i32 : i32
      %174 = arith.index_cast %173 : i32 to index
      %c0_96 = arith.constant 0 : index
      %175 = vector.load %arg17[%174, %c0_96] : memref<16x16xf32, #tpu.memory_space<vmem>>, vector<1x16xf32>
      %176 = arith.index_cast %173 : i32 to index
      %c0_97 = arith.constant 0 : index
      %177 = vector.load %arg18[%176, %c0_97] : memref<16x16xf32, #tpu.memory_space<vmem>>, vector<1x16xf32>
      %178 = arith.index_cast %173 : i32 to index
      %c0_98 = arith.constant 0 : index
      %179 = vector.load %arg16[%178, %c0_98] : memref<16x128xf32, #tpu.memory_space<vmem>>, vector<1x128xf32>
      %cst_99 = arith.constant dense<0.000000e+00> : vector<16x128xf32>
      %180 = tpu.matmul %175, %179, %cst_99 {dimension_numbers = #tpu.dot_dimension_numbers<[0], [0], [1], [1], [0, 1, 1, 1], [], []>} : vector<1x16xf32>, vector<1x128xf32>, vector<16x128xf32> -> vector<16x128xf32>
      %181 = arith.index_cast %c3_i32 : i32 to index
      %c0_100 = arith.constant 0 : index
      %c0_101 = arith.constant 0 : index
      %182 = vector.load %arg20[%181, %c0_100, %c0_101] : memref<8x16x128xf32, #tpu.memory_space<vmem>>, vector<1x16x128xf32>
      %183 = vector.shape_cast %182 : vector<1x16x128xf32> to vector<16x128xf32>
      %184 = arith.mulf %183, %169 : vector<16x128xf32>
      %185 = arith.addf %184, %180 : vector<16x128xf32>
      %cst_102 = arith.constant dense<0.000000e+00> : vector<1x128xf32>
      %186 = tpu.matmul %177, %185, %cst_102 {dimension_numbers = #tpu.dot_dimension_numbers<[1], [0], [0], [1], [0, 0, 1, 1], [], []>} : vector<1x16xf32>, vector<16x128xf32>, vector<1x128xf32> -> vector<1x128xf32>
      %187 = arith.index_cast %173 : i32 to index
      %c0_103 = arith.constant 0 : index
      %188 = vector.load %arg19[%187, %c0_103] : memref<16x128xf32, #tpu.memory_space<vmem>>, vector<1x128xf32>
      tpu.vector_store %arg19[%187, %c0_103], %186 {strides = array<i32>} : memref<16x128xf32, #tpu.memory_space<vmem>>, vector<1x128xf32>,
      %c4_i32 = arith.constant 4 : i32
      %189 = arith.addi %115, %c4_i32 : i32
      %190 = arith.index_cast %189 : i32 to index
      %c0_104 = arith.constant 0 : index
      %191 = vector.load %arg17[%190, %c0_104] : memref<16x16xf32, #tpu.memory_space<vmem>>, vector<1x16xf32>
      %192 = arith.index_cast %189 : i32 to index
      %c0_105 = arith.constant 0 : index
      %193 = vector.load %arg18[%192, %c0_105] : memref<16x16xf32, #tpu.memory_space<vmem>>, vector<1x16xf32>
      %194 = arith.index_cast %189 : i32 to index
      %c0_106 = arith.constant 0 : index
      %195 = vector.load %arg16[%194, %c0_106] : memref<16x128xf32, #tpu.memory_space<vmem>>, vector<1x128xf32>
      %cst_107 = arith.constant dense<0.000000e+00> : vector<16x128xf32>
      %196 = tpu.matmul %191, %195, %cst_107 {dimension_numbers = #tpu.dot_dimension_numbers<[0], [0], [1], [1], [0, 1, 1, 1], [], []>} : vector<1x16xf32>, vector<1x128xf32>, vector<16x128xf32> -> vector<16x128xf32>
      %197 = arith.index_cast %c4_i32 : i32 to index
      %c0_108 = arith.constant 0 : index
      %c0_109 = arith.constant 0 : index
      %198 = vector.load %arg20[%197, %c0_108, %c0_109] : memref<8x16x128xf32, #tpu.memory_space<vmem>>, vector<1x16x128xf32>
      %199 = vector.shape_cast %198 : vector<1x16x128xf32> to vector<16x128xf32>
      %200 = arith.mulf %199, %185 : vector<16x128xf32>
      %201 = arith.addf %200, %196 : vector<16x128xf32>
      %cst_110 = arith.constant dense<0.000000e+00> : vector<1x128xf32>
      %202 = tpu.matmul %193, %201, %cst_110 {dimension_numbers = #tpu.dot_dimension_numbers<[1], [0], [0], [1], [0, 0, 1, 1], [], []>} : vector<1x16xf32>, vector<16x128xf32>, vector<1x128xf32> -> vector<1x128xf32>
      %203 = arith.index_cast %189 : i32 to index
      %c0_111 = arith.constant 0 : index
      %204 = vector.load %arg19[%203, %c0_111] : memref<16x128xf32, #tpu.memory_space<vmem>>, vector<1x128xf32>
      tpu.vector_store %arg19[%203, %c0_111], %202 {strides = array<i32>} : memref<16x128xf32, #tpu.memory_space<vmem>>, vector<1x128xf32>,
      %c5_i32 = arith.constant 5 : i32
      %205 = arith.addi %115, %c5_i32 : i32
      %206 = arith.index_cast %205 : i32 to index
      %c0_112 = arith.constant 0 : index
      %207 = vector.load %arg17[%206, %c0_112] : memref<16x16xf32, #tpu.memory_space<vmem>>, vector<1x16xf32>
      %208 = arith.index_cast %205 : i32 to index
      %c0_113 = arith.constant 0 : index
      %209 = vector.load %arg18[%208, %c0_113] : memref<16x16xf32, #tpu.memory_space<vmem>>, vector<1x16xf32>
      %210 = arith.index_cast %205 : i32 to index
      %c0_114 = arith.constant 0 : index
      %211 = vector.load %arg16[%210, %c0_114] : memref<16x128xf32, #tpu.memory_space<vmem>>, vector<1x128xf32>
      %cst_115 = arith.constant dense<0.000000e+00> : vector<16x128xf32>
      %212 = tpu.matmul %207, %211, %cst_115 {dimension_numbers = #tpu.dot_dimension_numbers<[0], [0], [1], [1], [0, 1, 1, 1], [], []>} : vector<1x16xf32>, vector<1x128xf32>, vector<16x128xf32> -> vector<16x128xf32>
      %213 = arith.index_cast %c5_i32 : i32 to index
      %c0_116 = arith.constant 0 : index
      %c0_117 = arith.constant 0 : index
      %214 = vector.load %arg20[%213, %c0_116, %c0_117] : memref<8x16x128xf32, #tpu.memory_space<vmem>>, vector<1x16x128xf32>
      %215 = vector.shape_cast %214 : vector<1x16x128xf32> to vector<16x128xf32>
      %216 = arith.mulf %215, %201 : vector<16x128xf32>
      %217 = arith.addf %216, %212 : vector<16x128xf32>
      %cst_118 = arith.constant dense<0.000000e+00> : vector<1x128xf32>
      %218 = tpu.matmul %209, %217, %cst_118 {dimension_numbers = #tpu.dot_dimension_numbers<[1], [0], [0], [1], [0, 0, 1, 1], [], []>} : vector<1x16xf32>, vector<16x128xf32>, vector<1x128xf32> -> vector<1x128xf32>
      %219 = arith.index_cast %205 : i32 to index
      %c0_119 = arith.constant 0 : index
      %220 = vector.load %arg19[%219, %c0_119] : memref<16x128xf32, #tpu.memory_space<vmem>>, vector<1x128xf32>
      tpu.vector_store %arg19[%219, %c0_119], %218 {strides = array<i32>} : memref<16x128xf32, #tpu.memory_space<vmem>>, vector<1x128xf32>,
      %c6_i32 = arith.constant 6 : i32
      %221 = arith.addi %115, %c6_i32 : i32
      %222 = arith.index_cast %221 : i32 to index
      %c0_120 = arith.constant 0 : index
      %223 = vector.load %arg17[%222, %c0_120] : memref<16x16xf32, #tpu.memory_space<vmem>>, vector<1x16xf32>
      %224 = arith.index_cast %221 : i32 to index
      %c0_121 = arith.constant 0 : index
      %225 = vector.load %arg18[%224, %c0_121] : memref<16x16xf32, #tpu.memory_space<vmem>>, vector<1x16xf32>
      %226 = arith.index_cast %221 : i32 to index
      %c0_122 = arith.constant 0 : index
      %227 = vector.load %arg16[%226, %c0_122] : memref<16x128xf32, #tpu.memory_space<vmem>>, vector<1x128xf32>
      %cst_123 = arith.constant dense<0.000000e+00> : vector<16x128xf32>
      %228 = tpu.matmul %223, %227, %cst_123 {dimension_numbers = #tpu.dot_dimension_numbers<[0], [0], [1], [1], [0, 1, 1, 1], [], []>} : vector<1x16xf32>, vector<1x128xf32>, vector<16x128xf32> -> vector<16x128xf32>
      %229 = arith.index_cast %c6_i32 : i32 to index
      %c0_124 = arith.constant 0 : index
      %c0_125 = arith.constant 0 : index
      %230 = vector.load %arg20[%229, %c0_124, %c0_125] : memref<8x16x128xf32, #tpu.memory_space<vmem>>, vector<1x16x128xf32>
      %231 = vector.shape_cast %230 : vector<1x16x128xf32> to vector<16x128xf32>
      %232 = arith.mulf %231, %217 : vector<16x128xf32>
      %233 = arith.addf %232, %228 : vector<16x128xf32>
      %cst_126 = arith.constant dense<0.000000e+00> : vector<1x128xf32>
      %234 = tpu.matmul %225, %233, %cst_126 {dimension_numbers = #tpu.dot_dimension_numbers<[1], [0], [0], [1], [0, 0, 1, 1], [], []>} : vector<1x16xf32>, vector<16x128xf32>, vector<1x128xf32> -> vector<1x128xf32>
      %235 = arith.index_cast %221 : i32 to index
      %c0_127 = arith.constant 0 : index
      %236 = vector.load %arg19[%235, %c0_127] : memref<16x128xf32, #tpu.memory_space<vmem>>, vector<1x128xf32>
      tpu.vector_store %arg19[%235, %c0_127], %234 {strides = array<i32>} : memref<16x128xf32, #tpu.memory_space<vmem>>, vector<1x128xf32>,
      %c7_i32 = arith.constant 7 : i32
      %237 = arith.addi %115, %c7_i32 : i32
      %238 = arith.index_cast %237 : i32 to index
      %c0_128 = arith.constant 0 : index
      %239 = vector.load %arg17[%238, %c0_128] : memref<16x16xf32, #tpu.memory_space<vmem>>, vector<1x16xf32>
      %240 = arith.index_cast %237 : i32 to index
      %c0_129 = arith.constant 0 : index
      %241 = vector.load %arg18[%240, %c0_129] : memref<16x16xf32, #tpu.memory_space<vmem>>, vector<1x16xf32>
      %242 = arith.index_cast %237 : i32 to index
      %c0_130 = arith.constant 0 : index
      %243 = vector.load %arg16[%242, %c0_130] : memref<16x128xf32, #tpu.memory_space<vmem>>, vector<1x128xf32>
      %cst_131 = arith.constant dense<0.000000e+00> : vector<16x128xf32>
      %244 = tpu.matmul %239, %243, %cst_131 {dimension_numbers = #tpu.dot_dimension_numbers<[0], [0], [1], [1], [0, 1, 1, 1], [], []>} : vector<1x16xf32>, vector<1x128xf32>, vector<16x128xf32> -> vector<16x128xf32>
      %245 = arith.index_cast %c7_i32 : i32 to index
      %c0_132 = arith.constant 0 : index
      %c0_133 = arith.constant 0 : index
      %246 = vector.load %arg20[%245, %c0_132, %c0_133] : memref<8x16x128xf32, #tpu.memory_space<vmem>>, vector<1x16x128xf32>
      %247 = vector.shape_cast %246 : vector<1x16x128xf32> to vector<16x128xf32>
      %248 = arith.mulf %247, %233 : vector<16x128xf32>
      %249 = arith.addf %248, %244 : vector<16x128xf32>
      %cst_134 = arith.constant dense<0.000000e+00> : vector<1x128xf32>
      %250 = tpu.matmul %241, %249, %cst_134 {dimension_numbers = #tpu.dot_dimension_numbers<[1], [0], [0], [1], [0, 0, 1, 1], [], []>} : vector<1x16xf32>, vector<16x128xf32>, vector<1x128xf32> -> vector<1x128xf32>
      %251 = arith.index_cast %237 : i32 to index
      %c0_135 = arith.constant 0 : index
      %252 = vector.load %arg19[%251, %c0_135] : memref<16x128xf32, #tpu.memory_space<vmem>>, vector<1x128xf32>
      tpu.vector_store %arg19[%251, %c0_135], %250 {strides = array<i32>} : memref<16x128xf32, #tpu.memory_space<vmem>>, vector<1x128xf32>,
      %c8_i32_136 = arith.constant 8 : i32
      scf.yield %249 : vector<16x128xf32>
    }
    %c2_i32_53 = arith.constant 2 : i32
    %c0_54 = arith.constant 0 : index
    %c0_55 = arith.constant 0 : index
    %97 = vector.load %arg19[%c0_54, %c0_55] : memref<16x128xf32, #tpu.memory_space<vmem>>, vector<16x128xf32>
    %c0_56 = arith.constant 0 : index
    %c0_57 = arith.constant 0 : index
    %98 = vector.load %arg11[%c0_56, %c0_57] : memref<1x128xf32, #tpu.memory_space<vmem>>, vector<1x128xf32>
    %99 = vector.broadcast %98 : vector<1x128xf32> to vector<16x128xf32>
    %100 = arith.mulf %59, %99 : vector<16x128xf32>
    %101 = arith.addf %97, %100 : vector<16x128xf32>
    %102 = arith.negf %25 : vector<16x128xf32>
    %103 = math.exp %102 : vector<16x128xf32>
    %cst_58 = arith.constant 1.000000e+00 : f32
    %104 = vector.broadcast %cst_58 : f32 to vector<16x128xf32>
    %105 = arith.addf %104, %103 : vector<16x128xf32>
    %106 = arith.divf %104, %105 : vector<16x128xf32>
    %107 = arith.mulf %25, %106 : vector<16x128xf32>
    %108 = arith.mulf %101, %107 : vector<16x128xf32>
    %109 = arith.truncf %108 : vector<16x128xf32> to vector<16x128xbf16>
    %c0_59 = arith.constant 0 : index
    %c0_60 = arith.constant 0 : index
    %110 = vector.load %arg12[%c0_59, %c0_60] : memref<128x32xbf16, #tpu.memory_space<vmem>>, vector<128x32xbf16>
    %cst_61 = arith.constant dense<0.000000e+00> : vector<16x32xf32>
    %111 = tpu.matmul %109, %110, %cst_61 {dimension_numbers = #tpu.dot_dimension_numbers<[1], [0], [0], [1], [0, 0, 1, 1], [], []>} : vector<16x128xbf16>, vector<128x32xbf16>, vector<16x32xf32> -> vector<16x32xf32>
    %c0_62 = arith.constant 0 : index
    %c0_63 = arith.constant 0 : index
    %c0_64 = arith.constant 0 : index
    %112 = vector.load %arg13[%c0_62, %c0_63, %c0_64] : memref<1x16x32xf32, #tpu.memory_space<vmem>>, vector<1x16x32xf32>
    %113 = vector.shape_cast %112 : vector<1x16x32xf32> to vector<16x32xf32>
    %114 = vector.shape_cast %111 : vector<16x32xf32> to vector<1x16x32xf32>
    tpu.vector_store %arg13[%c0_62, %c0_63, %c0_64], %114 {strides = array<i32>} : memref<1x16x32xf32, #tpu.memory_space<vmem>>, vector<1x16x32xf32>,
    return
  }
  func.func @transform_0(%arg0: i32) -> (i32, i32, i32) {
    %c0_i32 = arith.constant 0 : i32
    %c0_i32_0 = arith.constant 0 : i32
    %c0_i32_1 = arith.constant 0 : i32
    return %arg0, %c0_i32, %c0_i32_0 : i32, i32, i32
  }
  func.func @transform_1(%arg0: i32) -> (i32, i32, i32) {
    %c0_i32 = arith.constant 0 : i32
    %c0_i32_0 = arith.constant 0 : i32
    %c0_i32_1 = arith.constant 0 : i32
    return %arg0, %c0_i32, %c0_i32_0 : i32, i32, i32
  }
  func.func @transform_2(%arg0: i32) -> (i32, i32) {
    %c0_i32 = arith.constant 0 : i32
    %c0_i32_0 = arith.constant 0 : i32
    %c0_i32_1 = arith.constant 0 : i32
    return %c0_i32, %c0_i32_0 : i32, i32
  }
  func.func @transform_3(%arg0: i32) -> (i32, i32) {
    %c0_i32 = arith.constant 0 : i32
    %c0_i32_0 = arith.constant 0 : i32
    %c0_i32_1 = arith.constant 0 : i32
    return %c0_i32, %c0_i32_0 : i32, i32
  }
  func.func @transform_4(%arg0: i32) -> (i32, i32) {
    %c0_i32 = arith.constant 0 : i32
    %c0_i32_0 = arith.constant 0 : i32
    %c0_i32_1 = arith.constant 0 : i32
    return %c0_i32, %c0_i32_0 : i32, i32
  }
  func.func @transform_5(%arg0: i32) -> (i32, i32) {
    %c0_i32 = arith.constant 0 : i32
    %c0_i32_0 = arith.constant 0 : i32
    %c0_i32_1 = arith.constant 0 : i32
    return %c0_i32, %c0_i32_0 : i32, i32
  }
  func.func @transform_6(%arg0: i32) -> (i32, i32) {
    %c0_i32 = arith.constant 0 : i32
    %c0_i32_0 = arith.constant 0 : i32
    %c0_i32_1 = arith.constant 0 : i32
    return %c0_i32, %c0_i32_0 : i32, i32
  }
  func.func @transform_7(%arg0: i32) -> (i32, i32) {
    %c0_i32 = arith.constant 0 : i32
    %c0_i32_0 = arith.constant 0 : i32
    %c0_i32_1 = arith.constant 0 : i32
    return %c0_i32, %c0_i32_0 : i32, i32
  }
  func.func @transform_8(%arg0: i32) -> (i32, i32) {
    %c0_i32 = arith.constant 0 : i32
    %c0_i32_0 = arith.constant 0 : i32
    %c0_i32_1 = arith.constant 0 : i32
    return %c0_i32, %c0_i32_0 : i32, i32
  }
  func.func @transform_9(%arg0: i32) -> (i32, i32) {
    %c0_i32 = arith.constant 0 : i32
    %c0_i32_0 = arith.constant 0 : i32
    %c0_i32_1 = arith.constant 0 : i32
    return %c0_i32, %c0_i32_0 : i32, i32
  }
  func.func @transform_10(%arg0: i32) -> (i32, i32) {
    %c0_i32 = arith.constant 0 : i32
    %c0_i32_0 = arith.constant 0 : i32
    %c0_i32_1 = arith.constant 0 : i32
    return %c0_i32, %c0_i32_0 : i32, i32
  }
  func.func @transform_11(%arg0: i32) -> (i32, i32) {
    %c0_i32 = arith.constant 0 : i32
    %c0_i32_0 = arith.constant 0 : i32
    %c0_i32_1 = arith.constant 0 : i32
    return %c0_i32, %c0_i32_0 : i32, i32
  }
  func.func @transform_12(%arg0: i32) -> (i32, i32, i32) {
    %c0_i32 = arith.constant 0 : i32
    %c0_i32_0 = arith.constant 0 : i32
    %c0_i32_1 = arith.constant 0 : i32
    return %arg0, %c0_i32, %c0_i32_0 : i32, i32, i32
  }
  func.func @transform_13(%arg0: i32) -> (i32, i32, i32) {
    %c0_i32 = arith.constant 0 : i32
    %c0_i32_0 = arith.constant 0 : i32
    %c0_i32_1 = arith.constant 0 : i32
    return %arg0, %c0_i32, %c0_i32_0 : i32, i32, i32
  }
}

module attributes {stable_mosaic.version = 11 : i64} {
  func.func @_matmul_affine_kernel(%arg0: i32, %arg1: i32, %arg2: i32, %arg3: memref<80x256xbf16, #tpu.memory_space<vmem>>, %arg4: memref<256x128xbf16, #tpu.memory_space<vmem>>, %arg5: memref<1x128xf32, #tpu.memory_space<vmem>>, %arg6: memref<1x128xf32, #tpu.memory_space<vmem>>, %arg7: memref<80x128xf32, #tpu.memory_space<vmem>>, %arg8: memref<80x128xf32, #tpu.memory_space<vmem>>) attributes {dimension_semantics = [#tpu.dimension_semantics<parallel>, #tpu.dimension_semantics<parallel>, #tpu.dimension_semantics<arbitrary>], iteration_bounds = array<i64: 1, 1, 1>, scalar_prefetch = 0 : i64, scratch_operands = 1 : i64, tpu.core_type = #tpu.core_type<tc>, window_params = [{transform_indices = @transform_0, window_bounds = array<i64: 80, 256>}, {transform_indices = @transform_1, window_bounds = array<i64: 256, 128>}, {transform_indices = @transform_2, window_bounds = array<i64: 1, 128>}, {transform_indices = @transform_3, window_bounds = array<i64: 1, 128>}, {transform_indices = @transform_4, window_bounds = array<i64: 80, 128>}]} {
    %c0_i32 = arith.constant 0 : i32
    %0 = arith.cmpi eq, %arg2, %c0_i32 : i32
    %1 = arith.extui %0 : i1 to i32
    %c0_i32_0 = arith.constant 0 : i32
    %2 = arith.cmpi ne, %1, %c0_i32_0 : i32
    scf.if %2 {
      %cst_10 = arith.constant 0.000000e+00 : f32
      %12 = vector.broadcast %cst_10 : f32 to vector<80x128xf32>
      %c0_11 = arith.constant 0 : index
      %c0_12 = arith.constant 0 : index
      %13 = vector.load %arg8[%c0_11, %c0_12] : memref<80x128xf32, #tpu.memory_space<vmem>>, vector<80x128xf32>
      tpu.vector_store %arg8[%c0_11, %c0_12], %12 {strides = array<i32>} : memref<80x128xf32, #tpu.memory_space<vmem>>, vector<80x128xf32>,
    } else {
    }
    %c0 = arith.constant 0 : index
    %c0_1 = arith.constant 0 : index
    %3 = vector.load %arg8[%c0, %c0_1] : memref<80x128xf32, #tpu.memory_space<vmem>>, vector<80x128xf32>
    %c0_2 = arith.constant 0 : index
    %c0_3 = arith.constant 0 : index
    %4 = vector.load %arg3[%c0_2, %c0_3] : memref<80x256xbf16, #tpu.memory_space<vmem>>, vector<80x256xbf16>
    %c0_4 = arith.constant 0 : index
    %c0_5 = arith.constant 0 : index
    %5 = vector.load %arg4[%c0_4, %c0_5] : memref<256x128xbf16, #tpu.memory_space<vmem>>, vector<256x128xbf16>
    %cst = arith.constant dense<0.000000e+00> : vector<80x128xf32>
    %6 = tpu.matmul %4, %5, %cst {dimension_numbers = #tpu.dot_dimension_numbers<[1], [0], [0], [1], [0, 0, 1, 1], [], []>} : vector<80x256xbf16>, vector<256x128xbf16>, vector<80x128xf32> -> vector<80x128xf32>
    %7 = arith.addf %3, %6 : vector<80x128xf32>
    %c0_6 = arith.constant 0 : index
    %c0_7 = arith.constant 0 : index
    %8 = vector.load %arg8[%c0_6, %c0_7] : memref<80x128xf32, #tpu.memory_space<vmem>>, vector<80x128xf32>
    tpu.vector_store %arg8[%c0_6, %c0_7], %7 {strides = array<i32>} : memref<80x128xf32, #tpu.memory_space<vmem>>, vector<80x128xf32>,
    %c0_i32_8 = arith.constant 0 : i32
    %9 = arith.cmpi eq, %arg2, %c0_i32_8 : i32
    %10 = arith.extui %9 : i1 to i32
    %c0_i32_9 = arith.constant 0 : i32
    %11 = arith.cmpi ne, %10, %c0_i32_9 : i32
    scf.if %11 {
      %c0_10 = arith.constant 0 : index
      %c0_11 = arith.constant 0 : index
      %12 = vector.load %arg8[%c0_10, %c0_11] : memref<80x128xf32, #tpu.memory_space<vmem>>, vector<80x128xf32>
      %c0_12 = arith.constant 0 : index
      %c0_13 = arith.constant 0 : index
      %13 = vector.load %arg5[%c0_12, %c0_13] : memref<1x128xf32, #tpu.memory_space<vmem>>, vector<1x128xf32>
      %14 = vector.broadcast %13 : vector<1x128xf32> to vector<80x128xf32>
      %15 = arith.mulf %12, %14 : vector<80x128xf32>
      %c0_14 = arith.constant 0 : index
      %c0_15 = arith.constant 0 : index
      %16 = vector.load %arg6[%c0_14, %c0_15] : memref<1x128xf32, #tpu.memory_space<vmem>>, vector<1x128xf32>
      %17 = vector.broadcast %16 : vector<1x128xf32> to vector<80x128xf32>
      %18 = arith.addf %15, %17 : vector<80x128xf32>
      %cst_16 = arith.constant 0.000000e+00 : f32
      %19 = vector.broadcast %cst_16 : f32 to vector<80x128xf32>
      %20 = arith.maximumf %18, %19 : vector<80x128xf32>
      %c0_17 = arith.constant 0 : index
      %c0_18 = arith.constant 0 : index
      %21 = vector.load %arg7[%c0_17, %c0_18] : memref<80x128xf32, #tpu.memory_space<vmem>>, vector<80x128xf32>
      tpu.vector_store %arg7[%c0_17, %c0_18], %20 {strides = array<i32>} : memref<80x128xf32, #tpu.memory_space<vmem>>, vector<80x128xf32>,
    } else {
    }
    return
  }
  func.func @transform_0(%arg0: i32, %arg1: i32, %arg2: i32) -> (i32, i32) {
    %c0_i32 = arith.constant 0 : i32
    return %arg0, %arg2 : i32, i32
  }
  func.func @transform_1(%arg0: i32, %arg1: i32, %arg2: i32) -> (i32, i32) {
    %c0_i32 = arith.constant 0 : i32
    return %arg2, %arg1 : i32, i32
  }
  func.func @transform_2(%arg0: i32, %arg1: i32, %arg2: i32) -> (i32, i32) {
    %c0_i32 = arith.constant 0 : i32
    %c0_i32_0 = arith.constant 0 : i32
    return %c0_i32, %arg1 : i32, i32
  }
  func.func @transform_3(%arg0: i32, %arg1: i32, %arg2: i32) -> (i32, i32) {
    %c0_i32 = arith.constant 0 : i32
    %c0_i32_0 = arith.constant 0 : i32
    return %c0_i32, %arg1 : i32, i32
  }
  func.func @transform_4(%arg0: i32, %arg1: i32, %arg2: i32) -> (i32, i32) {
    %c0_i32 = arith.constant 0 : i32
    return %arg0, %arg1 : i32, i32
  }
}

module attributes {stable_mosaic.version = 11 : i64} {
  func.func @_matmul_affine_kernel(%arg0: i32, %arg1: i32, %arg2: i32, %arg3: memref<256x128xbf16, #tpu.memory_space<vmem>>, %arg4: memref<128x128xbf16, #tpu.memory_space<vmem>>, %arg5: memref<1x128xf32, #tpu.memory_space<vmem>>, %arg6: memref<1x128xf32, #tpu.memory_space<vmem>>, %arg7: memref<256x128xf32, #tpu.memory_space<vmem>>, %arg8: memref<256x128xf32, #tpu.memory_space<vmem>>) attributes {dimension_semantics = [#tpu.dimension_semantics<parallel>, #tpu.dimension_semantics<parallel>, #tpu.dimension_semantics<arbitrary>], iteration_bounds = array<i64: 5, 1, 1>, scalar_prefetch = 0 : i64, scratch_operands = 1 : i64, tpu.core_type = #tpu.core_type<tc>, window_params = [{transform_indices = @transform_0, window_bounds = array<i64: 256, 128>}, {transform_indices = @transform_1, window_bounds = array<i64: 128, 128>}, {transform_indices = @transform_2, window_bounds = array<i64: 1, 128>}, {transform_indices = @transform_3, window_bounds = array<i64: 1, 128>}, {transform_indices = @transform_4, window_bounds = array<i64: 256, 128>}]} {
    %c0_i32 = arith.constant 0 : i32
    %0 = arith.cmpi eq, %arg2, %c0_i32 : i32
    %1 = arith.extui %0 : i1 to i32
    %c0_i32_0 = arith.constant 0 : i32
    %2 = arith.cmpi ne, %1, %c0_i32_0 : i32
    scf.if %2 {
      %cst_10 = arith.constant 0.000000e+00 : f32
      %12 = vector.broadcast %cst_10 : f32 to vector<256x128xf32>
      %c0_11 = arith.constant 0 : index
      %c0_12 = arith.constant 0 : index
      %13 = vector.load %arg8[%c0_11, %c0_12] : memref<256x128xf32, #tpu.memory_space<vmem>>, vector<256x128xf32>
      tpu.vector_store %arg8[%c0_11, %c0_12], %12 {strides = array<i32>} : memref<256x128xf32, #tpu.memory_space<vmem>>, vector<256x128xf32>,
    } else {
    }
    %c0 = arith.constant 0 : index
    %c0_1 = arith.constant 0 : index
    %3 = vector.load %arg8[%c0, %c0_1] : memref<256x128xf32, #tpu.memory_space<vmem>>, vector<256x128xf32>
    %c0_2 = arith.constant 0 : index
    %c0_3 = arith.constant 0 : index
    %4 = vector.load %arg3[%c0_2, %c0_3] : memref<256x128xbf16, #tpu.memory_space<vmem>>, vector<256x128xbf16>
    %c0_4 = arith.constant 0 : index
    %c0_5 = arith.constant 0 : index
    %5 = vector.load %arg4[%c0_4, %c0_5] : memref<128x128xbf16, #tpu.memory_space<vmem>>, vector<128x128xbf16>
    %cst = arith.constant dense<0.000000e+00> : vector<256x128xf32>
    %6 = tpu.matmul %4, %5, %cst {dimension_numbers = #tpu.dot_dimension_numbers<[1], [0], [0], [1], [0, 0, 1, 1], [], []>} : vector<256x128xbf16>, vector<128x128xbf16>, vector<256x128xf32> -> vector<256x128xf32>
    %7 = arith.addf %3, %6 : vector<256x128xf32>
    %c0_6 = arith.constant 0 : index
    %c0_7 = arith.constant 0 : index
    %8 = vector.load %arg8[%c0_6, %c0_7] : memref<256x128xf32, #tpu.memory_space<vmem>>, vector<256x128xf32>
    tpu.vector_store %arg8[%c0_6, %c0_7], %7 {strides = array<i32>} : memref<256x128xf32, #tpu.memory_space<vmem>>, vector<256x128xf32>,
    %c0_i32_8 = arith.constant 0 : i32
    %9 = arith.cmpi eq, %arg2, %c0_i32_8 : i32
    %10 = arith.extui %9 : i1 to i32
    %c0_i32_9 = arith.constant 0 : i32
    %11 = arith.cmpi ne, %10, %c0_i32_9 : i32
    scf.if %11 {
      %c0_10 = arith.constant 0 : index
      %c0_11 = arith.constant 0 : index
      %12 = vector.load %arg8[%c0_10, %c0_11] : memref<256x128xf32, #tpu.memory_space<vmem>>, vector<256x128xf32>
      %c0_12 = arith.constant 0 : index
      %c0_13 = arith.constant 0 : index
      %13 = vector.load %arg5[%c0_12, %c0_13] : memref<1x128xf32, #tpu.memory_space<vmem>>, vector<1x128xf32>
      %14 = vector.broadcast %13 : vector<1x128xf32> to vector<256x128xf32>
      %15 = arith.mulf %12, %14 : vector<256x128xf32>
      %c0_14 = arith.constant 0 : index
      %c0_15 = arith.constant 0 : index
      %16 = vector.load %arg6[%c0_14, %c0_15] : memref<1x128xf32, #tpu.memory_space<vmem>>, vector<1x128xf32>
      %17 = vector.broadcast %16 : vector<1x128xf32> to vector<256x128xf32>
      %18 = arith.addf %15, %17 : vector<256x128xf32>
      %c0_16 = arith.constant 0 : index
      %c0_17 = arith.constant 0 : index
      %19 = vector.load %arg7[%c0_16, %c0_17] : memref<256x128xf32, #tpu.memory_space<vmem>>, vector<256x128xf32>
      tpu.vector_store %arg7[%c0_16, %c0_17], %18 {strides = array<i32>} : memref<256x128xf32, #tpu.memory_space<vmem>>, vector<256x128xf32>,
    } else {
    }
    return
  }
  func.func @transform_0(%arg0: i32, %arg1: i32, %arg2: i32) -> (i32, i32) {
    %c0_i32 = arith.constant 0 : i32
    return %arg0, %arg2 : i32, i32
  }
  func.func @transform_1(%arg0: i32, %arg1: i32, %arg2: i32) -> (i32, i32) {
    %c0_i32 = arith.constant 0 : i32
    return %arg2, %arg1 : i32, i32
  }
  func.func @transform_2(%arg0: i32, %arg1: i32, %arg2: i32) -> (i32, i32) {
    %c0_i32 = arith.constant 0 : i32
    %c0_i32_0 = arith.constant 0 : i32
    return %c0_i32, %arg1 : i32, i32
  }
  func.func @transform_3(%arg0: i32, %arg1: i32, %arg2: i32) -> (i32, i32) {
    %c0_i32 = arith.constant 0 : i32
    %c0_i32_0 = arith.constant 0 : i32
    return %c0_i32, %arg1 : i32, i32
  }
  func.func @transform_4(%arg0: i32, %arg1: i32, %arg2: i32) -> (i32, i32) {
    %c0_i32 = arith.constant 0 : i32
    return %arg0, %arg1 : i32, i32
  }
}

</mosaic_0001>

<llo_original>
// kernel: mamba_c_block_forward.7
$region0: #{mamba_c_block_forward.7}
  #allocation0 [shape = 'u32[]', space=smem, size = 0x4, offset = 0x4, fixed_abs, tag = 'smem constant byte address 0x4 - core index']
  #allocation1 [shape = 'u32[144,128]{1,0:T(1,128)}', space=vmem, size = 0x12000, scoped, tag = 'internal scratch']
  #allocation2 [shape = 'f32[256,128]{1,0:T(8,128)}', space=vmem, size = 0x20000, scoped, tag = 'scratch operand']
  %s0 = inlined_call_operand.vmem [shape: bf16[512,128], index: 0, kind: input, shape index: {}]
  %s1 = inlined_call_operand.vmem [shape: bf16[128,128], index: 1, kind: input, shape index: {}]
  %s2 = inlined_call_operand.vmem [shape: f32[1,128], index: 2, kind: input, shape index: {}]
  %s3 = inlined_call_operand.vmem [shape: f32[1,128], index: 3, kind: input, shape index: {}]
  %s4 = inlined_call_operand.vmem [shape: f32[512,128], index: 4, kind: output, shape index: {}]
  %s5 = sld [smem:[#allocation0]]
  $region57: #{mamba_c_block_forward.7} parent=0
    _
  %s7 = ssub.s32 1, %s5
  %s8 = scalar_select 0, %s7, %s5
  loop: start=0, step=1, limit=4
  $region2: #{mamba_c_block_forward.7} parent=0 // loop_pre_header
    _
  $region3: #{mamba_c_block_forward.7} parent=0 // loop_header
    %s10 = sphi 0, %s14
    %p11 = scmp.ge.s32.totalorder %s10, 4
    %s17 = sphi 0, %s36
    %s18 = sphi 0, %s32
    %s19 = sphi 0, %s28
    %s20 = sphi 0, %s17
    %s21 = sphi 0, %s18
    %s22 = sphi 0, %s19
    %s23 = sphi 0, %s20
    %s24 = sphi 0, %s21
    %s25 = sphi 0, %s22
    %s41 = sphi 0, %s43
    %s44 = sphi 0, %s41
    %s45 = sphi 0, %s44
    %s61 = sphi 0, %s45
    %s69 = sphi 0, %s71
    %s72 = sphi 0, %s69
    %s73 = sphi 0, %s72
    %s89 = sphi 0, %s73
    %s95 = sphi 0, %s97
    %s98 = sphi 0, %s95
    %s99 = sphi 0, %s98
    %s115 = sphi 0, %s99
    %s121 = sphi 0, %s123
    %s124 = sphi 0, %s121
    %s125 = sphi 0, %s124
    %s141 = sphi 0, %s125
    %s149 = sphi 0, %s151
    %s152 = sphi 0, %s149
    %s153 = sphi 0, %s152
    %s169 = sphi 0, %s153
  $region4: #{mamba_c_block_forward.7} parent=0 // loop_header_branch
    %13 = sbr.rel (%p11) target = $region8
  $region5: #{mamba_c_block_forward.7} parent=0 // loop_body
    %s15 = ssub.s32 %s10, 1
    %s16 = ssub.s32 %s10, 2
    %s26 = sadd.s32 1, %s19
    %p27 = scmp.ge.s32.totalorder %s26, 1
    %s28 = scalar_select %p27, 0, %s26
    %s29 = sadd.s32 1, %s18
    %s30 = scalar_select %p27, %s29, %s18
    %p31 = scmp.ge.s32.totalorder %s30, 1
    %s32 = scalar_select %p31, 0, %s30
    %s33 = sadd.s32 1, %s17
    %s34 = scalar_select %p31, %s33, %s17
    %p35 = scmp.ge.s32.totalorder %s34, 2
    %s36 = scalar_select %p35, 0, %s34
    %s37 = ssub.s32 %s17, %s36
    %s38 = ssub.s32 %s19, %s28
    %s39 = sor.u32 %s37, %s38
    %p40 = scmp.eq.s32.totalorder %s39, 0
    %s42 = sadd.s32 %s41, 1
    %s43 = scalar_select %p40, %s41, %s42
    %p46 = pneg %p40
    %p47 = scmp.eq.s32.totalorder %s10, 1
    %p48 = por %p46, %p47
    %p49 = scmp.ne.s32.totalorder %s41, %s44
    %p50 = scmp.eq.s32.totalorder %s10, 0
    %p51 = por %p49, %p50
    %p52 = scmp.ne.s32.totalorder %s41, %s44
    %p53 = scmp.eq.s32.totalorder %s15, 1
    %p54 = por %p52, %p53
    %p55 = scmp.ne.s32.totalorder %s44, %s45
    %p56 = scmp.eq.s32.totalorder %s15, 0
    %p57 = por %p55, %p56
    %p58 = scmp.ne.s32.totalorder %s44, %s45
    %p59 = scmp.eq.s32.totalorder %s16, 1
    %p60 = por %p58, %p59
    %p62 = scmp.ne.s32.totalorder %s45, %s61
    %p63 = scmp.eq.s32.totalorder %s16, 0
    %p64 = por %p62, %p63
    %s65 = ssub.s32 %s19, %s28
    %s66 = ssub.s32 %s18, %s32
    %s67 = sor.u32 %s65, %s66
    %p68 = scmp.eq.s32.totalorder %s67, 0
    %s70 = sadd.s32 %s69, 1
    %s71 = scalar_select %p68, %s69, %s70
    %p74 = pneg %p68
    %p75 = scmp.eq.s32.totalorder %s10, 1
    %p76 = por %p74, %p75
    %p77 = scmp.ne.s32.totalorder %s69, %s72
    %p78 = scmp.eq.s32.totalorder %s10, 0
    %p79 = por %p77, %p78
    %p80 = scmp.ne.s32.totalorder %s69, %s72
    %p81 = scmp.eq.s32.totalorder %s15, 1
    %p82 = por %p80, %p81
    %p83 = scmp.ne.s32.totalorder %s72, %s73
    %p84 = scmp.eq.s32.totalorder %s15, 0
    %p85 = por %p83, %p84
    %p86 = scmp.ne.s32.totalorder %s72, %s73
    %p87 = scmp.eq.s32.totalorder %s16, 1
    %p88 = por %p86, %p87
    %p90 = scmp.ne.s32.totalorder %s73, %s89
    %p91 = scmp.eq.s32.totalorder %s16, 0
    %p92 = por %p90, %p91
    %s93 = ssub.s32 %s18, %s32
    %p94 = scmp.eq.s32.totalorder %s93, 0
    %s96 = sadd.s32 %s95, 1
    %s97 = scalar_select %p94, %s95, %s96
    %p100 = pneg %p94
    %p101 = scmp.eq.s32.totalorder %s10, 1
    %p102 = por %p100, %p101
    %p103 = scmp.ne.s32.totalorder %s95, %s98
    %p104 = scmp.eq.s32.totalorder %s10, 0
    %p105 = por %p103, %p104
    %p106 = scmp.ne.s32.totalorder %s95, %s98
    %p107 = scmp.eq.s32.totalorder %s15, 1
    %p108 = por %p106, %p107
    %p109 = scmp.ne.s32.totalorder %s98, %s99
    %p110 = scmp.eq.s32.totalorder %s15, 0
    %p111 = por %p109, %p110
    %p112 = scmp.ne.s32.totalorder %s98, %s99
    %p113 = scmp.eq.s32.totalorder %s16, 1
    %p114 = por %p112, %p113
    %p116 = scmp.ne.s32.totalorder %s99, %s115
    %p117 = scmp.eq.s32.totalorder %s16, 0
    %p118 = por %p116, %p117
    %s119 = ssub.s32 %s18, %s32
    %p120 = scmp.eq.s32.totalorder %s119, 0
    %s122 = sadd.s32 %s121, 1
    %s123 = scalar_select %p120, %s121, %s122
    %p126 = pneg %p120
    %p127 = scmp.eq.s32.totalorder %s10, 1
    %p128 = por %p126, %p127
    %p129 = scmp.ne.s32.totalorder %s121, %s124
    %p130 = scmp.eq.s32.totalorder %s10, 0
    %p131 = por %p129, %p130
    %p132 = scmp.ne.s32.totalorder %s121, %s124
    %p133 = scmp.eq.s32.totalorder %s15, 1
    %p134 = por %p132, %p133
    %p135 = scmp.ne.s32.totalorder %s124, %s125
    %p136 = scmp.eq.s32.totalorder %s15, 0
    %p137 = por %p135, %p136
    %p138 = scmp.ne.s32.totalorder %s124, %s125
    %p139 = scmp.eq.s32.totalorder %s16, 1
    %p140 = por %p138, %p139
    %p142 = scmp.ne.s32.totalorder %s125, %s141
    %p143 = scmp.eq.s32.totalorder %s16, 0
    %p144 = por %p142, %p143
    %s145 = ssub.s32 %s17, %s36
    %s146 = ssub.s32 %s18, %s32
    %s147 = sor.u32 %s145, %s146
    %p148 = scmp.eq.s32.totalorder %s147, 0
    %s150 = sadd.s32 %s149, 1
    %s151 = scalar_select %p148, %s149, %s150
    %p154 = pneg %p148
    %p155 = scmp.eq.s32.totalorder %s10, 1
    %p156 = por %p154, %p155
    %p157 = scmp.ne.s32.totalorder %s149, %s152
    %p158 = scmp.eq.s32.totalorder %s10, 0
    %p159 = por %p157, %p158
    %p160 = scmp.ne.s32.totalorder %s149, %s152
    %p161 = scmp.eq.s32.totalorder %s15, 1
    %p162 = por %p160, %p161
    %p163 = scmp.ne.s32.totalorder %s152, %s153
    %p164 = scmp.eq.s32.totalorder %s15, 0
    %p165 = por %p163, %p164
    %p166 = scmp.ne.s32.totalorder %s152, %s153
    %p167 = scmp.eq.s32.totalorder %s16, 1
    %p168 = por %p166, %p167
    %p170 = scmp.ne.s32.totalorder %s153, %s169
    %p171 = scmp.eq.s32.totalorder %s16, 0
    %p172 = por %p170, %p171
    %p173 = scmp.le.s32.totalorder 1, %s10
    %p174 = scmp.lt.s32.totalorder %s10, 3
    %p175 = pnand %p173, %p174
    %p176 = pneg %p175
    // Predicated region
    $region9: #{mamba_c_block_forward.7} parent=5 // pred_check
      _
    $region10: #{mamba_c_block_forward.7} parent=5 // pred_check_branch
      %178 = sbr.rel (%p175) target = $region12
    $region11: #{mamba_c_block_forward.7} parent=5 // pred_region
      %s179 = ssub.s32 %s10, 1
      // Predicated region
      $region13: #{mamba_c_block_forward.7} parent=11 // pred_check
        %p180 = pneg %p85
      $region14: #{mamba_c_block_forward.7} parent=11 // pred_check_branch
        %182 = sbr.rel (%p180) target = $region16
      $region15: #{mamba_c_block_forward.7} parent=11 // pred_region
        %s183 = smul.u32 16, %s22
        %p184 = scmp.lt.s32.totalorder %s183, 15
        %s185 = scalar_select %p184, %s183, 15
        %p186 = scmp.lt.s32.totalorder %s21, 0
        %s187 = scalar_select %p186, %s21, 0
        %s188 = sadd.s32 %s187, %s185
        %s189 = smul.addr %s188, 4
        %s190 = scalar_lea.vmem %s1, %s189
        %s191 = smul.u32 16, %s22
      $region16: #{mamba_c_block_forward.7} parent=11 // pred_fallthru
        _
      // Predicated region
      $region17: #{mamba_c_block_forward.7} parent=11 // pred_check
        %p192 = pneg %p111
      $region18: #{mamba_c_block_forward.7} parent=11 // pred_check_branch
        %194 = sbr.rel (%p192) target = $region20
      $region19: #{mamba_c_block_forward.7} parent=11 // pred_region
        %p195 = scmp.lt.s32.totalorder %s21, 0
        %s196 = scalar_select %p195, %s21, 0
        %s197 = scalar_lea.vmem %s2, %s196
      $region20: #{mamba_c_block_forward.7} parent=11 // pred_fallthru
        _
      // Predicated region
      $region21: #{mamba_c_block_forward.7} parent=11 // pred_check
        %p198 = pneg %p137
      $region22: #{mamba_c_block_forward.7} parent=11 // pred_check_branch
        %200 = sbr.rel (%p198) target = $region24
      $region23: #{mamba_c_block_forward.7} parent=11 // pred_region
        %p201 = scmp.lt.s32.totalorder %s21, 0
        %s202 = scalar_select %p201, %s21, 0
        %s203 = scalar_lea.vmem %s3, %s202
      $region24: #{mamba_c_block_forward.7} parent=11 // pred_fallthru
        _
    $region12: #{mamba_c_block_forward.7} parent=5 // pred_fallthru
      _
    %p204 = scmp.lt.s32.totalorder %s10, 2
    // Predicated region
    $region25: #{mamba_c_block_forward.7} parent=5 // pred_check
      %p205 = pneg %p204
    $region26: #{mamba_c_block_forward.7} parent=5 // pred_check_branch
      %207 = sbr.rel (%p205) target = $region28
    $region27: #{mamba_c_block_forward.7} parent=5 // pred_region
      // Predicated region
      $region29: #{mamba_c_block_forward.7} parent=27 // pred_check
        %p208 = pneg %p51
      $region30: #{mamba_c_block_forward.7} parent=27 // pred_check_branch
        %210 = sbr.rel (%p208) target = $region32
      $region31: #{mamba_c_block_forward.7} parent=27 // pred_region
        %s211 = smul.u32 32, %s17
        %p212 = scmp.lt.s32.totalorder %s211, 63
        %s213 = scalar_select %p212, %s211, 63
        %p214 = scmp.lt.s32.totalorder %s19, 0
        %s215 = scalar_select %p214, %s19, 0
        %s216 = sadd.s32 %s215, %s213
        %s217 = smul.addr %s216, 4
        %s218 = scalar_lea.vmem %s0, %s217
        %s219 = smul.u32 32, %s17
      $region32: #{mamba_c_block_forward.7} parent=27 // pred_fallthru
        _
    $region28: #{mamba_c_block_forward.7} parent=5 // pred_fallthru
      _
    %p220 = scmp.le.s32.totalorder 1, %s10
    %p221 = scmp.lt.s32.totalorder %s10, 3
    %p222 = pnand %p220, %p221
    %p223 = pneg %p222
    // Predicated region
    $region33: #{mamba_c_block_forward.7} parent=5 // pred_check
      _
    $region34: #{mamba_c_block_forward.7} parent=5 // pred_check_branch
      %225 = sbr.rel (%p222) target = $region36
    $region35: #{mamba_c_block_forward.7} parent=5 // pred_region
      %s226 = ssub.s32 %s10, 1
      %s227 = smul.u32 32, %s20
      %p228 = scmp.lt.s32.totalorder %s227, 63
      %s229 = scalar_select %p228, %s227, 63
      %p230 = scmp.lt.s32.totalorder %s22, 0
      %s231 = scalar_select %p230, %s22, 0
      %s232 = sadd.s32 %s231, %s229
      %s233 = smul.addr %s232, 4
      %s234 = scalar_lea.vmem %s0, %s233
      %p235 = pneg %p57
      %p236 = pneg %p54
      %s237 = smul.u32 16, %s22
      %p238 = scmp.lt.s32.totalorder %s237, 15
      %s239 = scalar_select %p238, %s237, 15
      %p240 = scmp.lt.s32.totalorder %s21, 0
      %s241 = scalar_select %p240, %s21, 0
      %s242 = sadd.s32 %s241, %s239
      %s243 = smul.addr %s242, 4
      %s244 = scalar_lea.vmem %s1, %s243
      %p245 = pneg %p85
      %p246 = pneg %p82
      %p247 = scmp.lt.s32.totalorder %s21, 0
      %s248 = scalar_select %p247, %s21, 0
      %s249 = scalar_lea.vmem %s2, %s248
      %p250 = pneg %p111
      %p251 = pneg %p108
      %p252 = scmp.lt.s32.totalorder %s21, 0
      %s253 = scalar_select %p252, %s21, 0
      %s254 = scalar_lea.vmem %s3, %s253
      %p255 = pneg %p137
      %p256 = pneg %p134
      %p257 = pneg %p165
      %p258 = pneg %p162
      %s259 = smul.u32 32, %s20
      %p260 = scmp.lt.s32.totalorder %s259, 63
      %s261 = scalar_select %p260, %s259, 63
      %p262 = scmp.lt.s32.totalorder %s21, 0
      %s263 = scalar_select %p262, %s21, 0
      %s264 = sadd.s32 %s263, %s261
      %s265 = smul.addr %s264, 8
      %s266 = scalar_lea.vmem %s4, %s265
      %s267 = smul.u32 32, %s20
      %p268 = scmp.lt.s32.totalorder %s267, 63
      %s269 = scalar_select %p268, %s267, 63
      %p270 = scmp.lt.s32.totalorder %s22, 0
      %s271 = scalar_select %p270, %s22, 0
      %s272 = sadd.s32 %s271, %s269
      %s273 = smul.addr %s272, 4
      %s274 = scalar_lea.vmem %s0, %s273
      %s275 = smul.u32 32, %s20
      %s276 = smul.u32 16, %s22
      %p277 = scmp.lt.s32.totalorder %s276, 15
      %s278 = scalar_select %p277, %s276, 15
      %p279 = scmp.lt.s32.totalorder %s21, 0
      %s280 = scalar_select %p279, %s21, 0
      %s281 = sadd.s32 %s280, %s278
      %s282 = smul.addr %s281, 4
      %s283 = scalar_lea.vmem %s1, %s282
      %s284 = smul.u32 16, %s22
      %p285 = scmp.lt.s32.totalorder %s21, 0
      %s286 = scalar_select %p285, %s21, 0
      %s287 = scalar_lea.vmem %s2, %s286
      %p288 = scmp.lt.s32.totalorder %s21, 0
      %s289 = scalar_select %p288, %s21, 0
      %s290 = scalar_lea.vmem %s3, %s289
      %s291 = smul.u32 32, %s20
      %p292 = scmp.lt.s32.totalorder %s291, 63
      %s293 = scalar_select %p292, %s291, 63
      %p294 = scmp.lt.s32.totalorder %s21, 0
      %s295 = scalar_select %p294, %s21, 0
      %s296 = sadd.s32 %s295, %s293
      %s297 = smul.addr %s296, 8
      %s298 = scalar_lea.vmem %s4, %s297
      %s299 = smul.u32 32, %s20
      %p301 = scmp.eq.s32.totalorder %s22, 0
      // Predicated region
      $region37: #{mamba_c_block_forward.7} parent=35 // pred_check
        %p302 = pneg %p301
      $region38: #{mamba_c_block_forward.7} parent=35 // pred_check_branch
        %304 = sbr.rel (%p302) target = $region40
      $region39: #{mamba_c_block_forward.7} parent=35 // pred_region
        %305 = vst [vmem:[#allocation2] sm:$0xff] 0.0
        %306 = vst [vmem:[#allocation2 + $0x8] sm:$0xff] 0.0
        %307 = vst [vmem:[#allocation2 + $0x10] sm:$0xff] 0.0
        %308 = vst [vmem:[#allocation2 + $0x18] sm:$0xff] 0.0
        %309 = vst [vmem:[#allocation2 + $0x20] sm:$0xff] 0.0
        %310 = vst [vmem:[#allocation2 + $0x28] sm:$0xff] 0.0
        %311 = vst [vmem:[#allocation2 + $0x30] sm:$0xff] 0.0
        %312 = vst [vmem:[#allocation2 + $0x38] sm:$0xff] 0.0
        %313 = vst [vmem:[#allocation2 + $0x40] sm:$0xff] 0.0
        %314 = vst [vmem:[#allocation2 + $0x48] sm:$0xff] 0.0
        %315 = vst [vmem:[#allocation2 + $0x50] sm:$0xff] 0.0
        %316 = vst [vmem:[#allocation2 + $0x58] sm:$0xff] 0.0
        %317 = vst [vmem:[#allocation2 + $0x60] sm:$0xff] 0.0
        %318 = vst [vmem:[#allocation2 + $0x68] sm:$0xff] 0.0
        %319 = vst [vmem:[#allocation2 + $0x70] sm:$0xff] 0.0
        %320 = vst [vmem:[#allocation2 + $0x78] sm:$0xff] 0.0
        %321 = vst [vmem:[#allocation2 + $0x80] sm:$0xff] 0.0
        %322 = vst [vmem:[#allocation2 + $0x88] sm:$0xff] 0.0
        %323 = vst [vmem:[#allocation2 + $0x90] sm:$0xff] 0.0
        %324 = vst [vmem:[#allocation2 + $0x98] sm:$0xff] 0.0
        %325 = vst [vmem:[#allocation2 + $0xa0] sm:$0xff] 0.0
        %326 = vst [vmem:[#allocation2 + $0xa8] sm:$0xff] 0.0
        %327 = vst [vmem:[#allocation2 + $0xb0] sm:$0xff] 0.0
        %328 = vst [vmem:[#allocation2 + $0xb8] sm:$0xff] 0.0
        %329 = vst [vmem:[#allocation2 + $0xc0] sm:$0xff] 0.0
        %330 = vst [vmem:[#allocation2 + $0xc8] sm:$0xff] 0.0
        %331 = vst [vmem:[#allocation2 + $0xd0] sm:$0xff] 0.0
        %332 = vst [vmem:[#allocation2 + $0xd8] sm:$0xff] 0.0
        %333 = vst [vmem:[#allocation2 + $0xe0] sm:$0xff] 0.0
        %334 = vst [vmem:[#allocation2 + $0xe8] sm:$0xff] 0.0
        %335 = vst [vmem:[#allocation2 + $0xf0] sm:$0xff] 0.0
        %336 = vst [vmem:[#allocation2 + $0xf8] sm:$0xff] 0.0
      $region40: #{mamba_c_block_forward.7} parent=35 // pred_fallthru
        _
      %v337 = vld [vmem:[#allocation2] sm:$0xff]
      %v338 = vld [vmem:[#allocation2 + $0x8] sm:$0xff]
      %v339 = vld [vmem:[#allocation2 + $0x10] sm:$0xff]
      %v340 = vld [vmem:[#allocation2 + $0x18] sm:$0xff]
      %v341 = vld [vmem:[#allocation2 + $0x20] sm:$0xff]
      %v342 = vld [vmem:[#allocation2 + $0x28] sm:$0xff]
      %v343 = vld [vmem:[#allocation2 + $0x30] sm:$0xff]
      %v344 = vld [vmem:[#allocation2 + $0x38] sm:$0xff]
      %v345 = vld [vmem:[#allocation2 + $0x40] sm:$0xff]
      %v346 = vld [vmem:[#allocation2 + $0x48] sm:$0xff]
      %v347 = vld [vmem:[#allocation2 + $0x50] sm:$0xff]
      %v348 = vld [vmem:[#allocation2 + $0x58] sm:$0xff]
      %v349 = vld [vmem:[#allocation2 + $0x60] sm:$0xff]
      %v350 = vld [vmem:[#allocation2 + $0x68] sm:$0xff]
      %v351 = vld [vmem:[#allocation2 + $0x70] sm:$0xff]
      %v352 = vld [vmem:[#allocation2 + $0x78] sm:$0xff]
      %v353 = vld [vmem:[#allocation2 + $0x80] sm:$0xff]
      %v354 = vld [vmem:[#allocation2 + $0x88] sm:$0xff]
      %v355 = vld [vmem:[#allocation2 + $0x90] sm:$0xff]
      %v356 = vld [vmem:[#allocation2 + $0x98] sm:$0xff]
      %v357 = vld [vmem:[#allocation2 + $0xa0] sm:$0xff]
      %v358 = vld [vmem:[#allocation2 + $0xa8] sm:$0xff]
      %v359 = vld [vmem:[#allocation2 + $0xb0] sm:$0xff]
      %v360 = vld [vmem:[#allocation2 + $0xb8] sm:$0xff]
      %v361 = vld [vmem:[#allocation2 + $0xc0] sm:$0xff]
      %v362 = vld [vmem:[#allocation2 + $0xc8] sm:$0xff]
      %v363 = vld [vmem:[#allocation2 + $0xd0] sm:$0xff]
      %v364 = vld [vmem:[#allocation2 + $0xd8] sm:$0xff]
      %v365 = vld [vmem:[#allocation2 + $0xe0] sm:$0xff]
      %v366 = vld [vmem:[#allocation2 + $0xe8] sm:$0xff]
      %v367 = vld [vmem:[#allocation2 + $0xf0] sm:$0xff]
      %v368 = vld [vmem:[#allocation2 + $0xf8] sm:$0xff]
      %v369 = vld [vmem:[%s274] sm:$0xf]
      %v370 = vld [vmem:[%s274 + $0x4] sm:$0xf]
      %v371 = vld [vmem:[%s274 + $0x8] sm:$0xf]
      %v372 = vld [vmem:[%s274 + $0xc] sm:$0xf]
      %v373 = vld [vmem:[%s274 + $0x10] sm:$0xf]
      %v374 = vld [vmem:[%s274 + $0x14] sm:$0xf]
      %v375 = vld [vmem:[%s274 + $0x18] sm:$0xf]
      %v376 = vld [vmem:[%s274 + $0x1c] sm:$0xf]
      %v377 = vld [vmem:[%s274 + $0x20] sm:$0xf]
      %v378 = vld [vmem:[%s274 + $0x24] sm:$0xf]
      %v379 = vld [vmem:[%s274 + $0x28] sm:$0xf]
      %v380 = vld [vmem:[%s274 + $0x2c] sm:$0xf]
      %v381 = vld [vmem:[%s274 + $0x30] sm:$0xf]
      %v382 = vld [vmem:[%s274 + $0x34] sm:$0xf]
      %v383 = vld [vmem:[%s274 + $0x38] sm:$0xf]
      %v384 = vld [vmem:[%s274 + $0x3c] sm:$0xf]
      %v385 = vld [vmem:[%s274 + $0x40] sm:$0xf]
      %v386 = vld [vmem:[%s274 + $0x44] sm:$0xf]
      %v387 = vld [vmem:[%s274 + $0x48] sm:$0xf]
      %v388 = vld [vmem:[%s274 + $0x4c] sm:$0xf]
      %v389 = vld [vmem:[%s274 + $0x50] sm:$0xf]
      %v390 = vld [vmem:[%s274 + $0x54] sm:$0xf]
      %v391 = vld [vmem:[%s274 + $0x58] sm:$0xf]
      %v392 = vld [vmem:[%s274 + $0x5c] sm:$0xf]
      %v393 = vld [vmem:[%s274 + $0x60] sm:$0xf]
      %v394 = vld [vmem:[%s274 + $0x64] sm:$0xf]
      %v395 = vld [vmem:[%s274 + $0x68] sm:$0xf]
      %v396 = vld [vmem:[%s274 + $0x6c] sm:$0xf]
      %v397 = vld [vmem:[%s274 + $0x70] sm:$0xf]
      %v398 = vld [vmem:[%s274 + $0x74] sm:$0xf]
      %v399 = vld [vmem:[%s274 + $0x78] sm:$0xf]
      %v400 = vld [vmem:[%s274 + $0x7c] sm:$0xf]
      %v401 = vld [vmem:[%s283] sm:$0xf]
      %v402 = vld [vmem:[%s283 + $0x4] sm:$0xf]
      %v403 = vld [vmem:[%s283 + $0x8] sm:$0xf]
      %v404 = vld [vmem:[%s283 + $0xc] sm:$0xf]
      %v405 = vld [vmem:[%s283 + $0x10] sm:$0xf]
      %v406 = vld [vmem:[%s283 + $0x14] sm:$0xf]
      %v407 = vld [vmem:[%s283 + $0x18] sm:$0xf]
      %v408 = vld [vmem:[%s283 + $0x1c] sm:$0xf]
      %v409 = vld [vmem:[%s283 + $0x20] sm:$0xf]
      %v410 = vld [vmem:[%s283 + $0x24] sm:$0xf]
      %v411 = vld [vmem:[%s283 + $0x28] sm:$0xf]
      %v412 = vld [vmem:[%s283 + $0x2c] sm:$0xf]
      %v413 = vld [vmem:[%s283 + $0x30] sm:$0xf]
      %v414 = vld [vmem:[%s283 + $0x34] sm:$0xf]
      %v415 = vld [vmem:[%s283 + $0x38] sm:$0xf]
      %v416 = vld [vmem:[%s283 + $0x3c] sm:$0xf]
      %v449 = vunpack.c.l.b16 %v369
      %v450 = vunpack.c.l.b16 %v370
      %v451 = vunpack.c.l.b16 %v371
      %v452 = vunpack.c.l.b16 %v372
      %v453 = vunpack.c.l.b16 %v373
      %v454 = vunpack.c.l.b16 %v374
      %v455 = vunpack.c.l.b16 %v375
      %v456 = vunpack.c.l.b16 %v376
      %v457 = vunpack.c.l.b16 %v377
      %v458 = vunpack.c.l.b16 %v378
      %v459 = vunpack.c.l.b16 %v379
      %v460 = vunpack.c.l.b16 %v380
      %v461 = vunpack.c.l.b16 %v381
      %v462 = vunpack.c.l.b16 %v382
      %v463 = vunpack.c.l.b16 %v383
      %v464 = vunpack.c.l.b16 %v384
      %v465 = vunpack.c.l.b16 %v385
      %v466 = vunpack.c.l.b16 %v386
      %v467 = vunpack.c.l.b16 %v387
      %v468 = vunpack.c.l.b16 %v388
      %v469 = vunpack.c.l.b16 %v389
      %v470 = vunpack.c.l.b16 %v390
      %v471 = vunpack.c.l.b16 %v391
      %v472 = vunpack.c.l.b16 %v392
      %v473 = vunpack.c.l.b16 %v393
      %v474 = vunpack.c.l.b16 %v394
      %v475 = vunpack.c.l.b16 %v395
      %v476 = vunpack.c.l.b16 %v396
      %v477 = vunpack.c.l.b16 %v397
      %v478 = vunpack.c.l.b16 %v398
      %v479 = vunpack.c.l.b16 %v399
      %v480 = vunpack.c.l.b16 %v400
      %v481 = vpack.c.b16 %v450, %v449
      %v482 = vpack.c.b16 %v452, %v451
      %v483 = vpack.c.b16 %v454, %v453
      %v484 = vpack.c.b16 %v456, %v455
      %v485 = vpack.c.b16 %v458, %v457
      %v486 = vpack.c.b16 %v460, %v459
      %v487 = vpack.c.b16 %v462, %v461
      %v488 = vpack.c.b16 %v464, %v463
      %v489 = vpack.c.b16 %v466, %v465
      %v490 = vpack.c.b16 %v468, %v467
      %v491 = vpack.c.b16 %v470, %v469
      %v492 = vpack.c.b16 %v472, %v471
      %v493 = vpack.c.b16 %v474, %v473
      %v494 = vpack.c.b16 %v476, %v475
      %v495 = vpack.c.b16 %v478, %v477
      %v496 = vpack.c.b16 %v480, %v479
      %v529 = vunpack.c.l.b16 %v401
      %v530 = vunpack.c.l.b16 %v402
      %v531 = vunpack.c.l.b16 %v403
      %v532 = vunpack.c.l.b16 %v404
      %v533 = vunpack.c.l.b16 %v405
      %v534 = vunpack.c.l.b16 %v406
      %v535 = vunpack.c.l.b16 %v407
      %v536 = vunpack.c.l.b16 %v408
      %v537 = vunpack.c.l.b16 %v409
      %v538 = vunpack.c.l.b16 %v410
      %v539 = vunpack.c.l.b16 %v411
      %v540 = vunpack.c.l.b16 %v412
      %v541 = vunpack.c.l.b16 %v413
      %v542 = vunpack.c.l.b16 %v414
      %v543 = vunpack.c.l.b16 %v415
      %v544 = vunpack.c.l.b16 %v416
      %v545 = vpack.c.b16 %v530, %v529
      %v546 = vpack.c.b16 %v532, %v531
      %v547 = vpack.c.b16 %v534, %v533
      %v548 = vpack.c.b16 %v536, %v535
      %v549 = vpack.c.b16 %v538, %v537
      %v550 = vpack.c.b16 %v540, %v539
      %v551 = vpack.c.b16 %v542, %v541
      %v552 = vpack.c.b16 %v544, %v543
      %561 = vmatprep.subr.bf16.mxu0 0
      %562 = vmatpush1.bf16.msra.mxu0 %v545
      %563 = vmatprep.subr.bf16.mxu0 0
      %564 = vmatpush1.bf16.msra.mxu0 %v546
      %565 = vmatprep.subr.bf16.mxu0 0
      %566 = vmatpush1.bf16.msra.mxu0 %v547
      %567 = vmatprep.subr.bf16.mxu0 0
      %568 = vmatpush1.bf16.msra.mxu0 %v548
      %569 = vmatprep.subr.bf16.mxu0 0
      %570 = vmatpush1.bf16.msra.mxu0 %v549
      %571 = vmatprep.subr.bf16.mxu0 0
      %572 = vmatpush1.bf16.msra.mxu0 %v550
      %573 = vmatprep.subr.bf16.mxu0 0
      %574 = vmatpush1.bf16.msra.mxu0 %v551
      %575 = vmatprep.subr.bf16.mxu0 0
      %576 = vmatpush1.bf16.msra.mxu0 %v552
      %577 = vmatprep.subr.bf16.mxu0 0
      %578 = vmatpush1.bf16.msra.mxu0 0
      %579 = vmatprep.subr.bf16.mxu0 0
      %580 = vmatpush1.bf16.msra.mxu0 0
      %581 = vmatprep.subr.bf16.mxu0 0
      %582 = vmatpush1.bf16.msra.mxu0 0
      %583 = vmatprep.subr.bf16.mxu0 0
      %584 = vmatpush1.bf16.msra.mxu0 0
      %585 = vmatprep.subr.bf16.mxu0 0
      %586 = vmatpush1.bf16.msra.mxu0 0
      %587 = vmatprep.subr.bf16.mxu0 0
      %588 = vmatpush1.bf16.msra.mxu0 0
      %589 = vmatprep.subr.bf16.mxu0 0
      %590 = vmatpush1.bf16.msra.mxu0 0
      %591 = vmatprep.subr.bf16.mxu0 0
      %592 = vmatpush1.bf16.msra.mxu0 0
      %593 = vmatprep.mubr.bf16.mxu0 0
      %594 = vmatmul.mubr.bf16.gmra.mrb[0].mxu0 %v481
      %v595 = vpop.f32.mrb[0].mxu0
      %v596 = vadd.f32 0.0, %v595
      %v597 = vpop.f32.mrb[0].mxu0
      %v598 = vpop.f32.mrb[0].mxu0
      %v599 = vadd.f32 0.0, %v598
      %v600 = vpop.f32.mrb[0].mxu0
      %601 = vmatprep.mubr.bf16.mxu0 0
      %602 = vmatmul.mubr.bf16.gmra.mrb[0].mxu0 %v482
      %v603 = vpop.f32.mrb[0].mxu0
      %v604 = vadd.f32 0.0, %v603
      %v605 = vpop.f32.mrb[0].mxu0
      %v606 = vpop.f32.mrb[0].mxu0
      %v607 = vadd.f32 0.0, %v606
      %v608 = vpop.f32.mrb[0].mxu0
      %609 = vmatprep.mubr.bf16.mxu0 0
      %610 = vmatmul.mubr.bf16.gmra.mrb[0].mxu0 %v483
      %v611 = vpop.f32.mrb[0].mxu0
      %v612 = vadd.f32 0.0, %v611
      %v613 = vpop.f32.mrb[0].mxu0
      %v614 = vpop.f32.mrb[0].mxu0
      %v615 = vadd.f32 0.0, %v614
      %v616 = vpop.f32.mrb[0].mxu0
      %617 = vmatprep.mubr.bf16.mxu0 0
      %618 = vmatmul.mubr.bf16.gmra.mrb[0].mxu0 %v484
      %v619 = vpop.f32.mrb[0].mxu0
      %v620 = vadd.f32 0.0, %v619
      %v621 = vpop.f32.mrb[0].mxu0
      %v622 = vpop.f32.mrb[0].mxu0
      %v623 = vadd.f32 0.0, %v622
      %v624 = vpop.f32.mrb[0].mxu0
      %625 = vmatprep.mubr.bf16.mxu0 0
      %626 = vmatmul.mubr.bf16.gmra.mrb[0].mxu0 %v485
      %v627 = vpop.f32.mrb[0].mxu0
      %v628 = vadd.f32 0.0, %v627
      %v629 = vpop.f32.mrb[0].mxu0
      %v630 = vpop.f32.mrb[0].mxu0
      %v631 = vadd.f32 0.0, %v630
      %v632 = vpop.f32.mrb[0].mxu0
      %633 = vmatprep.mubr.bf16.mxu0 0
      %634 = vmatmul.mubr.bf16.gmra.mrb[0].mxu0 %v486
      %v635 = vpop.f32.mrb[0].mxu0
      %v636 = vadd.f32 0.0, %v635
      %v637 = vpop.f32.mrb[0].mxu0
      %v638 = vpop.f32.mrb[0].mxu0
      %v639 = vadd.f32 0.0, %v638
      %v640 = vpop.f32.mrb[0].mxu0
      %641 = vmatprep.mubr.bf16.mxu0 0
      %642 = vmatmul.mubr.bf16.gmra.mrb[0].mxu0 %v487
      %v643 = vpop.f32.mrb[0].mxu0
      %v644 = vadd.f32 0.0, %v643
      %v645 = vpop.f32.mrb[0].mxu0
      %v646 = vpop.f32.mrb[0].mxu0
      %v647 = vadd.f32 0.0, %v646
      %v648 = vpop.f32.mrb[0].mxu0
      %649 = vmatprep.mubr.bf16.mxu0 0
      %650 = vmatmul.mubr.bf16.gmra.mrb[0].mxu0 %v488
      %v651 = vpop.f32.mrb[0].mxu0
      %v652 = vadd.f32 0.0, %v651
      %v653 = vpop.f32.mrb[0].mxu0
      %v654 = vpop.f32.mrb[0].mxu0
      %v655 = vadd.f32 0.0, %v654
      %v656 = vpop.f32.mrb[0].mxu0
      %657 = vmatprep.mubr.bf16.mxu0 0
      %658 = vmatmul.mubr.bf16.gmra.mrb[0].mxu0 %v489
      %v659 = vpop.f32.mrb[0].mxu0
      %v660 = vadd.f32 0.0, %v659
      %v661 = vpop.f32.mrb[0].mxu0
      %v662 = vpop.f32.mrb[0].mxu0
      %v663 = vadd.f32 0.0, %v662
      %v664 = vpop.f32.mrb[0].mxu0
      %665 = vmatprep.mubr.bf16.mxu0 0
      %666 = vmatmul.mubr.bf16.gmra.mrb[0].mxu0 %v490
      %v667 = vpop.f32.mrb[0].mxu0
      %v668 = vadd.f32 0.0, %v667
      %v669 = vpop.f32.mrb[0].mxu0
      %v670 = vpop.f32.mrb[0].mxu0
      %v671 = vadd.f32 0.0, %v670
      %v672 = vpop.f32.mrb[0].mxu0
      %673 = vmatprep.mubr.bf16.mxu0 0
      %674 = vmatmul.mubr.bf16.gmra.mrb[0].mxu0 %v491
      %v675 = vpop.f32.mrb[0].mxu0
      %v676 = vadd.f32 0.0, %v675
      %v677 = vpop.f32.mrb[0].mxu0
      %v678 = vpop.f32.mrb[0].mxu0
      %v679 = vadd.f32 0.0, %v678
      %v680 = vpop.f32.mrb[0].mxu0
      %681 = vmatprep.mubr.bf16.mxu0 0
      %682 = vmatmul.mubr.bf16.gmra.mrb[0].mxu0 %v492
      %v683 = vpop.f32.mrb[0].mxu0
      %v684 = vadd.f32 0.0, %v683
      %v685 = vpop.f32.mrb[0].mxu0
      %v686 = vpop.f32.mrb[0].mxu0
      %v687 = vadd.f32 0.0, %v686
      %v688 = vpop.f32.mrb[0].mxu0
      %689 = vmatprep.mubr.bf16.mxu0 0
      %690 = vmatmul.mubr.bf16.gmra.mrb[0].mxu0 %v493
      %v691 = vpop.f32.mrb[0].mxu0
      %v692 = vadd.f32 0.0, %v691
      %v693 = vpop.f32.mrb[0].mxu0
      %v694 = vpop.f32.mrb[0].mxu0
      %v695 = vadd.f32 0.0, %v694
      %v696 = vpop.f32.mrb[0].mxu0
      %697 = vmatprep.mubr.bf16.mxu0 0
      %698 = vmatmul.mubr.bf16.gmra.mrb[0].mxu0 %v494
      %v699 = vpop.f32.mrb[0].mxu0
      %v700 = vadd.f32 0.0, %v699
      %v701 = vpop.f32.mrb[0].mxu0
      %v702 = vpop.f32.mrb[0].mxu0
      %v703 = vadd.f32 0.0, %v702
      %v704 = vpop.f32.mrb[0].mxu0
      %705 = vmatprep.mubr.bf16.mxu0 0
      %706 = vmatmul.mubr.bf16.gmra.mrb[0].mxu0 %v495
      %v707 = vpop.f32.mrb[0].mxu0
      %v708 = vadd.f32 0.0, %v707
      %v709 = vpop.f32.mrb[0].mxu0
      %v710 = vpop.f32.mrb[0].mxu0
      %v711 = vadd.f32 0.0, %v710
      %v712 = vpop.f32.mrb[0].mxu0
      %713 = vmatprep.mubr.bf16.mxu0 0
      %714 = vmatmul.mubr.bf16.gmra.mrb[0].mxu0 %v496
      %v715 = vpop.f32.mrb[0].mxu0
      %v716 = vadd.f32 0.0, %v715
      %v717 = vpop.f32.mrb[0].mxu0
      %v718 = vpop.f32.mrb[0].mxu0
      %v719 = vadd.f32 0.0, %v718
      %v720 = vpop.f32.mrb[0].mxu0
      %721 = vdwg.mxu0
      %v722 = vadd.f32 %v337, %v596
      %v723 = vadd.f32 %v338, %v599
      %v724 = vadd.f32 %v339, %v604
      %v725 = vadd.f32 %v340, %v607
      %v726 = vadd.f32 %v341, %v612
      %v727 = vadd.f32 %v342, %v615
      %v728 = vadd.f32 %v343, %v620
      %v729 = vadd.f32 %v344, %v623
      %v730 = vadd.f32 %v345, %v628
      %v731 = vadd.f32 %v346, %v631
      %v732 = vadd.f32 %v347, %v636
      %v733 = vadd.f32 %v348, %v639
      %v734 = vadd.f32 %v349, %v644
      %v735 = vadd.f32 %v350, %v647
      %v736 = vadd.f32 %v351, %v652
      %v737 = vadd.f32 %v352, %v655
      %v738 = vadd.f32 %v353, %v660
      %v739 = vadd.f32 %v354, %v663
      %v740 = vadd.f32 %v355, %v668
      %v741 = vadd.f32 %v356, %v671
      %v742 = vadd.f32 %v357, %v676
      %v743 = vadd.f32 %v358, %v679
      %v744 = vadd.f32 %v359, %v684
      %v745 = vadd.f32 %v360, %v687
      %v746 = vadd.f32 %v361, %v692
      %v747 = vadd.f32 %v362, %v695
      %v748 = vadd.f32 %v363, %v700
      %v749 = vadd.f32 %v364, %v703
      %v750 = vadd.f32 %v365, %v708
      %v751 = vadd.f32 %v366, %v711
      %v752 = vadd.f32 %v367, %v716
      %v753 = vadd.f32 %v368, %v719
      %754 = vst [vmem:[#allocation2] sm:$0xff] %v722
      %755 = vst [vmem:[#allocation2 + $0x8] sm:$0xff] %v723
      %756 = vst [vmem:[#allocation2 + $0x10] sm:$0xff] %v724
      %757 = vst [vmem:[#allocation2 + $0x18] sm:$0xff] %v725
      %758 = vst [vmem:[#allocation2 + $0x20] sm:$0xff] %v726
      %759 = vst [vmem:[#allocation2 + $0x28] sm:$0xff] %v727
      %760 = vst [vmem:[#allocation2 + $0x30] sm:$0xff] %v728
      %761 = vst [vmem:[#allocation2 + $0x38] sm:$0xff] %v729
      %762 = vst [vmem:[#allocation2 + $0x40] sm:$0xff] %v730
      %763 = vst [vmem:[#allocation2 + $0x48] sm:$0xff] %v731
      %764 = vst [vmem:[#allocation2 + $0x50] sm:$0xff] %v732
      %765 = vst [vmem:[#allocation2 + $0x58] sm:$0xff] %v733
      %766 = vst [vmem:[#allocation2 + $0x60] sm:$0xff] %v734
      %767 = vst [vmem:[#allocation2 + $0x68] sm:$0xff] %v735
      %768 = vst [vmem:[#allocation2 + $0x70] sm:$0xff] %v736
      %769 = vst [vmem:[#allocation2 + $0x78] sm:$0xff] %v737
      %770 = vst [vmem:[#allocation2 + $0x80] sm:$0xff] %v738
      %771 = vst [vmem:[#allocation2 + $0x88] sm:$0xff] %v739
      %772 = vst [vmem:[#allocation2 + $0x90] sm:$0xff] %v740
      %773 = vst [vmem:[#allocation2 + $0x98] sm:$0xff] %v741
      %774 = vst [vmem:[#allocation2 + $0xa0] sm:$0xff] %v742
      %775 = vst [vmem:[#allocation2 + $0xa8] sm:$0xff] %v743
      %776 = vst [vmem:[#allocation2 + $0xb0] sm:$0xff] %v744
      %777 = vst [vmem:[#allocation2 + $0xb8] sm:$0xff] %v745
      %778 = vst [vmem:[#allocation2 + $0xc0] sm:$0xff] %v746
      %779 = vst [vmem:[#allocation2 + $0xc8] sm:$0xff] %v747
      %780 = vst [vmem:[#allocation2 + $0xd0] sm:$0xff] %v748
      %781 = vst [vmem:[#allocation2 + $0xd8] sm:$0xff] %v749
      %782 = vst [vmem:[#allocation2 + $0xe0] sm:$0xff] %v750
      %783 = vst [vmem:[#allocation2 + $0xe8] sm:$0xff] %v751
      %784 = vst [vmem:[#allocation2 + $0xf0] sm:$0xff] %v752
      %785 = vst [vmem:[#allocation2 + $0xf8] sm:$0xff] %v753
      // Predicated region
      $region41: #{mamba_c_block_forward.7} parent=35 // pred_check
        %p786 = pneg %p301
      $region42: #{mamba_c_block_forward.7} parent=35 // pred_check_branch
        %788 = sbr.rel (%p786) target = $region44
      $region43: #{mamba_c_block_forward.7} parent=35 // pred_region
        %v789 = vld [vmem:[#allocation2] sm:$0xff]
        %v790 = vld [vmem:[#allocation2 + $0x8] sm:$0xff]
        %v791 = vld [vmem:[#allocation2 + $0x10] sm:$0xff]
        %v792 = vld [vmem:[#allocation2 + $0x18] sm:$0xff]
        %v793 = vld [vmem:[#allocation2 + $0x20] sm:$0xff]
        %v794 = vld [vmem:[#allocation2 + $0x28] sm:$0xff]
        %v795 = vld [vmem:[#allocation2 + $0x30] sm:$0xff]
        %v796 = vld [vmem:[#allocation2 + $0x38] sm:$0xff]
        %v797 = vld [vmem:[#allocation2 + $0x40] sm:$0xff]
        %v798 = vld [vmem:[#allocation2 + $0x48] sm:$0xff]
        %v799 = vld [vmem:[#allocation2 + $0x50] sm:$0xff]
        %v800 = vld [vmem:[#allocation2 + $0x58] sm:$0xff]
        %v801 = vld [vmem:[#allocation2 + $0x60] sm:$0xff]
        %v802 = vld [vmem:[#allocation2 + $0x68] sm:$0xff]
        %v803 = vld [vmem:[#allocation2 + $0x70] sm:$0xff]
        %v804 = vld [vmem:[#allocation2 + $0x78] sm:$0xff]
        %v805 = vld [vmem:[#allocation2 + $0x80] sm:$0xff]
        %v806 = vld [vmem:[#allocation2 + $0x88] sm:$0xff]
        %v807 = vld [vmem:[#allocation2 + $0x90] sm:$0xff]
        %v808 = vld [vmem:[#allocation2 + $0x98] sm:$0xff]
        %v809 = vld [vmem:[#allocation2 + $0xa0] sm:$0xff]
        %v810 = vld [vmem:[#allocation2 + $0xa8] sm:$0xff]
        %v811 = vld [vmem:[#allocation2 + $0xb0] sm:$0xff]
        %v812 = vld [vmem:[#allocation2 + $0xb8] sm:$0xff]
        %v813 = vld [vmem:[#allocation2 + $0xc0] sm:$0xff]
        %v814 = vld [vmem:[#allocation2 + $0xc8] sm:$0xff]
        %v815 = vld [vmem:[#allocation2 + $0xd0] sm:$0xff]
        %v816 = vld [vmem:[#allocation2 + $0xd8] sm:$0xff]
        %v817 = vld [vmem:[#allocation2 + $0xe0] sm:$0xff]
        %v818 = vld [vmem:[#allocation2 + $0xe8] sm:$0xff]
        %v819 = vld [vmem:[#allocation2 + $0xf0] sm:$0xff]
        %v820 = vld [vmem:[#allocation2 + $0xf8] sm:$0xff]
        %v821 = vld [vmem:[%s287] sm:$0x1]
        %v823 = vlaneseq
        %v824 = vshrl.u32 %v823, 7
        %v825 = vsub.s32 0, %v824
        %v826 = vrot.slane %v821, %v825
        %v828 = vmul.f32 %v789, %v826
        %v829 = vmul.f32 %v790, %v826
        %v830 = vmul.f32 %v791, %v826
        %v831 = vmul.f32 %v792, %v826
        %v832 = vmul.f32 %v793, %v826
        %v833 = vmul.f32 %v794, %v826
        %v834 = vmul.f32 %v795, %v826
        %v835 = vmul.f32 %v796, %v826
        %v836 = vmul.f32 %v797, %v826
        %v837 = vmul.f32 %v798, %v826
        %v838 = vmul.f32 %v799, %v826
        %v839 = vmul.f32 %v800, %v826
        %v840 = vmul.f32 %v801, %v826
        %v841 = vmul.f32 %v802, %v826
        %v842 = vmul.f32 %v803, %v826
        %v843 = vmul.f32 %v804, %v826
        %v844 = vmul.f32 %v805, %v826
        %v845 = vmul.f32 %v806, %v826
        %v846 = vmul.f32 %v807, %v826
        %v847 = vmul.f32 %v808, %v826
        %v848 = vmul.f32 %v809, %v826
        %v849 = vmul.f32 %v810, %v826
        %v850 = vmul.f32 %v811, %v826
        %v851 = vmul.f32 %v812, %v826
        %v852 = vmul.f32 %v813, %v826
        %v853 = vmul.f32 %v814, %v826
        %v854 = vmul.f32 %v815, %v826
        %v855 = vmul.f32 %v816, %v826
        %v856 = vmul.f32 %v817, %v826
        %v857 = vmul.f32 %v818, %v826
        %v858 = vmul.f32 %v819, %v826
        %v859 = vmul.f32 %v820, %v826
        %v860 = vld [vmem:[%s290] sm:$0x1]
        %v862 = vlaneseq
        %v863 = vshrl.u32 %v862, 7
        %v864 = vsub.s32 0, %v863
        %v865 = vrot.slane %v860, %v864
        %v867 = vadd.f32 %v828, %v865
        %v868 = vadd.f32 %v829, %v865
        %v869 = vadd.f32 %v830, %v865
        %v870 = vadd.f32 %v831, %v865
        %v871 = vadd.f32 %v832, %v865
        %v872 = vadd.f32 %v833, %v865
        %v873 = vadd.f32 %v834, %v865
        %v874 = vadd.f32 %v835, %v865
        %v875 = vadd.f32 %v836, %v865
        %v876 = vadd.f32 %v837, %v865
        %v877 = vadd.f32 %v838, %v865
        %v878 = vadd.f32 %v839, %v865
        %v879 = vadd.f32 %v840, %v865
        %v880 = vadd.f32 %v841, %v865
        %v881 = vadd.f32 %v842, %v865
        %v882 = vadd.f32 %v843, %v865
        %v883 = vadd.f32 %v844, %v865
        %v884 = vadd.f32 %v845, %v865
        %v885 = vadd.f32 %v846, %v865
        %v886 = vadd.f32 %v847, %v865
        %v887 = vadd.f32 %v848, %v865
        %v888 = vadd.f32 %v849, %v865
        %v889 = vadd.f32 %v850, %v865
        %v890 = vadd.f32 %v851, %v865
        %v891 = vadd.f32 %v852, %v865
        %v892 = vadd.f32 %v853, %v865
        %v893 = vadd.f32 %v854, %v865
        %v894 = vadd.f32 %v855, %v865
        %v895 = vadd.f32 %v856, %v865
        %v896 = vadd.f32 %v857, %v865
        %v897 = vadd.f32 %v858, %v865
        %v898 = vadd.f32 %v859, %v865
        %v899 = vmax.f32 %v867, 0.0
        %v900 = vmax.f32 %v868, 0.0
        %v901 = vmax.f32 %v869, 0.0
        %v902 = vmax.f32 %v870, 0.0
        %v903 = vmax.f32 %v871, 0.0
        %v904 = vmax.f32 %v872, 0.0
        %v905 = vmax.f32 %v873, 0.0
        %v906 = vmax.f32 %v874, 0.0
        %v907 = vmax.f32 %v875, 0.0
        %v908 = vmax.f32 %v876, 0.0
        %v909 = vmax.f32 %v877, 0.0
        %v910 = vmax.f32 %v878, 0.0
        %v911 = vmax.f32 %v879, 0.0
        %v912 = vmax.f32 %v880, 0.0
        %v913 = vmax.f32 %v881, 0.0
        %v914 = vmax.f32 %v882, 0.0
        %v915 = vmax.f32 %v883, 0.0
        %v916 = vmax.f32 %v884, 0.0
        %v917 = vmax.f32 %v885, 0.0
        %v918 = vmax.f32 %v886, 0.0
        %v919 = vmax.f32 %v887, 0.0
        %v920 = vmax.f32 %v888, 0.0
        %v921 = vmax.f32 %v889, 0.0
        %v922 = vmax.f32 %v890, 0.0
        %v923 = vmax.f32 %v891, 0.0
        %v924 = vmax.f32 %v892, 0.0
        %v925 = vmax.f32 %v893, 0.0
        %v926 = vmax.f32 %v894, 0.0
        %v927 = vmax.f32 %v895, 0.0
        %v928 = vmax.f32 %v896, 0.0
        %v929 = vmax.f32 %v897, 0.0
        %v930 = vmax.f32 %v898, 0.0
        %931 = vst [vmem:[%s298] sm:$0xff] %v899
        %932 = vst [vmem:[%s298 + $0x8] sm:$0xff] %v900
        %933 = vst [vmem:[%s298 + $0x10] sm:$0xff] %v901
        %934 = vst [vmem:[%s298 + $0x18] sm:$0xff] %v902
        %935 = vst [vmem:[%s298 + $0x20] sm:$0xff] %v903
        %936 = vst [vmem:[%s298 + $0x28] sm:$0xff] %v904
        %937 = vst [vmem:[%s298 + $0x30] sm:$0xff] %v905
        %938 = vst [vmem:[%s298 + $0x38] sm:$0xff] %v906
        %939 = vst [vmem:[%s298 + $0x40] sm:$0xff] %v907
        %940 = vst [vmem:[%s298 + $0x48] sm:$0xff] %v908
        %941 = vst [vmem:[%s298 + $0x50] sm:$0xff] %v909
        %942 = vst [vmem:[%s298 + $0x58] sm:$0xff] %v910
        %943 = vst [vmem:[%s298 + $0x60] sm:$0xff] %v911
        %944 = vst [vmem:[%s298 + $0x68] sm:$0xff] %v912
        %945 = vst [vmem:[%s298 + $0x70] sm:$0xff] %v913
        %946 = vst [vmem:[%s298 + $0x78] sm:$0xff] %v914
        %947 = vst [vmem:[%s298 + $0x80] sm:$0xff] %v915
        %948 = vst [vmem:[%s298 + $0x88] sm:$0xff] %v916
        %949 = vst [vmem:[%s298 + $0x90] sm:$0xff] %v917
        %950 = vst [vmem:[%s298 + $0x98] sm:$0xff] %v918
        %951 = vst [vmem:[%s298 + $0xa0] sm:$0xff] %v919
        %952 = vst [vmem:[%s298 + $0xa8] sm:$0xff] %v920
        %953 = vst [vmem:[%s298 + $0xb0] sm:$0xff] %v921
        %954 = vst [vmem:[%s298 + $0xb8] sm:$0xff] %v922
        %955 = vst [vmem:[%s298 + $0xc0] sm:$0xff] %v923
        %956 = vst [vmem:[%s298 + $0xc8] sm:$0xff] %v924
        %957 = vst [vmem:[%s298 + $0xd0] sm:$0xff] %v925
        %958 = vst [vmem:[%s298 + $0xd8] sm:$0xff] %v926
        %959 = vst [vmem:[%s298 + $0xe0] sm:$0xff] %v927
        %960 = vst [vmem:[%s298 + $0xe8] sm:$0xff] %v928
        %961 = vst [vmem:[%s298 + $0xf0] sm:$0xff] %v929
        %962 = vst [vmem:[%s298 + $0xf8] sm:$0xff] %v930
      $region44: #{mamba_c_block_forward.7} parent=35 // pred_fallthru
        _
      %s963 = smul.u32 32, %s20
      %p964 = scmp.lt.s32.totalorder %s963, 63
      %s965 = scalar_select %p964, %s963, 63
      %p966 = scmp.lt.s32.totalorder %s21, 0
      %s967 = scalar_select %p966, %s21, 0
      %s968 = sadd.s32 %s967, %s965
      %s969 = smul.addr %s968, 8
      %s970 = scalar_lea.vmem %s4, %s969
      // Predicated region
      $region45: #{mamba_c_block_forward.7} parent=35 // pred_check
        %p971 = pneg %p162
      $region46: #{mamba_c_block_forward.7} parent=35 // pred_check_branch
        %973 = sbr.rel (%p971) target = $region48
      $region47: #{mamba_c_block_forward.7} parent=35 // pred_region
        %s974 = smul.u32 32, %s20
      $region48: #{mamba_c_block_forward.7} parent=35 // pred_fallthru
        _
    $region36: #{mamba_c_block_forward.7} parent=5 // pred_fallthru
      _
    %p975 = scmp.le.s32.totalorder 2, %s10
    // Predicated region
    $region49: #{mamba_c_block_forward.7} parent=5 // pred_check
      %p976 = pneg %p975
    $region50: #{mamba_c_block_forward.7} parent=5 // pred_check_branch
      %978 = sbr.rel (%p976) target = $region52
    $region51: #{mamba_c_block_forward.7} parent=5 // pred_region
      %s979 = ssub.s32 %s10, 2
      // Predicated region
      $region53: #{mamba_c_block_forward.7} parent=51 // pred_check
        %p980 = pneg %p168
      $region54: #{mamba_c_block_forward.7} parent=51 // pred_check_branch
        %982 = sbr.rel (%p980) target = $region56
      $region55: #{mamba_c_block_forward.7} parent=51 // pred_region
        %s983 = smul.u32 32, %s23
        %p984 = scmp.lt.s32.totalorder %s983, 63
        %s985 = scalar_select %p984, %s983, 63
        %p986 = scmp.lt.s32.totalorder %s24, 0
        %s987 = scalar_select %p986, %s24, 0
        %s988 = sadd.s32 %s987, %s985
        %s989 = smul.addr %s988, 8
        %s990 = scalar_lea.vmem %s4, %s989
      $region56: #{mamba_c_block_forward.7} parent=51 // pred_fallthru
        _
    $region52: #{mamba_c_block_forward.7} parent=5 // pred_fallthru
      _
  $region6: #{mamba_c_block_forward.7} parent=0 // loop_footer
    %s14 = sadd.s32 1, %s10
  $region7: #{mamba_c_block_forward.7} parent=0 // loop_footer_branch
    %9 = sbr.rel target = $region3
  $region8: #{mamba_c_block_forward.7} parent=0 // loop_exit
    _

// kernel: mamba_c_block_forward.8
$region0: #{mamba_c_block_forward.8}
  #allocation0 [shape = 'u32[]', space=smem, size = 0x4, offset = 0x4, fixed_abs, tag = 'smem constant byte address 0x4 - core index']
  #allocation1 [shape = 'u32[144,128]{1,0:T(1,128)}', space=vmem, size = 0x12000, scoped, tag = 'internal scratch']
  #allocation2 [shape = 'f32[80,128]{1,0:T(8,128)}', space=vmem, size = 0xa000, scoped, tag = 'scratch operand']
  %s0 = inlined_call_operand.vmem [shape: bf16[80,128], index: 0, kind: input, shape index: {}]
  %s1 = inlined_call_operand.vmem [shape: bf16[128,128], index: 1, kind: input, shape index: {}]
  %s2 = inlined_call_operand.vmem [shape: f32[1,128], index: 2, kind: input, shape index: {}]
  %s3 = inlined_call_operand.vmem [shape: f32[1,128], index: 3, kind: input, shape index: {}]
  %s4 = inlined_call_operand.vmem [shape: f32[80,128], index: 4, kind: output, shape index: {}]
  %s5 = sld [smem:[#allocation0]]
  $region34: #{mamba_c_block_forward.8} parent=0
    _
  %s7 = ssub.s32 1, %s5
  %s8 = scalar_select 0, %s7, %s5
  // Predicated region
  $region2: #{mamba_c_block_forward.8} parent=0 // pred_check
    _
  $region3: #{mamba_c_block_forward.8} parent=0 // pred_check_branch
    %10 = sbr.rel (0) target = $region5
  $region4: #{mamba_c_block_forward.8} parent=0 // pred_region
    _
  $region5: #{mamba_c_block_forward.8} parent=0 // pred_fallthru
    _
  // Predicated region
  $region6: #{mamba_c_block_forward.8} parent=0 // pred_check
    _
  $region7: #{mamba_c_block_forward.8} parent=0 // pred_check_branch
    %12 = sbr.rel (0) target = $region9
  $region8: #{mamba_c_block_forward.8} parent=0 // pred_region
    _
  $region9: #{mamba_c_block_forward.8} parent=0 // pred_fallthru
    _
  // Predicated region
  $region10: #{mamba_c_block_forward.8} parent=0 // pred_check
    _
  $region11: #{mamba_c_block_forward.8} parent=0 // pred_check_branch
    %14 = sbr.rel (0) target = $region13
  $region12: #{mamba_c_block_forward.8} parent=0 // pred_region
    _
  $region13: #{mamba_c_block_forward.8} parent=0 // pred_fallthru
    _
  // Predicated region
  $region14: #{mamba_c_block_forward.8} parent=0 // pred_check
    _
  $region15: #{mamba_c_block_forward.8} parent=0 // pred_check_branch
    %16 = sbr.rel (0) target = $region17
  $region16: #{mamba_c_block_forward.8} parent=0 // pred_region
    _
  $region17: #{mamba_c_block_forward.8} parent=0 // pred_fallthru
    _
  %p18 = scmp.eq.s32.totalorder 0, 0
  // Predicated region
  $region18: #{mamba_c_block_forward.8} parent=0 // pred_check
    %p19 = pneg %p18
  $region19: #{mamba_c_block_forward.8} parent=0 // pred_check_branch
    %21 = sbr.rel (%p19) target = $region21
  $region20: #{mamba_c_block_forward.8} parent=0 // pred_region
    %22 = vst [vmem:[#allocation2] sm:$0xff] 0.0
    %23 = vst [vmem:[#allocation2 + $0x8] sm:$0xff] 0.0
    %24 = vst [vmem:[#allocation2 + $0x10] sm:$0xff] 0.0
    %25 = vst [vmem:[#allocation2 + $0x18] sm:$0xff] 0.0
    %26 = vst [vmem:[#allocation2 + $0x20] sm:$0xff] 0.0
    %27 = vst [vmem:[#allocation2 + $0x28] sm:$0xff] 0.0
    %28 = vst [vmem:[#allocation2 + $0x30] sm:$0xff] 0.0
    %29 = vst [vmem:[#allocation2 + $0x38] sm:$0xff] 0.0
    %30 = vst [vmem:[#allocation2 + $0x40] sm:$0xff] 0.0
    %31 = vst [vmem:[#allocation2 + $0x48] sm:$0xff] 0.0
  $region21: #{mamba_c_block_forward.8} parent=0 // pred_fallthru
    _
  %v32 = vld [vmem:[#allocation2] sm:$0xff]
  %v33 = vld [vmem:[#allocation2 + $0x8] sm:$0xff]
  %v34 = vld [vmem:[#allocation2 + $0x10] sm:$0xff]
  %v35 = vld [vmem:[#allocation2 + $0x18] sm:$0xff]
  %v36 = vld [vmem:[#allocation2 + $0x20] sm:$0xff]
  %v37 = vld [vmem:[#allocation2 + $0x28] sm:$0xff]
  %v38 = vld [vmem:[#allocation2 + $0x30] sm:$0xff]
  %v39 = vld [vmem:[#allocation2 + $0x38] sm:$0xff]
  %v40 = vld [vmem:[#allocation2 + $0x40] sm:$0xff]
  %v41 = vld [vmem:[#allocation2 + $0x48] sm:$0xff]
  %v42 = vld [vmem:[%s0] sm:$0xf]
  %v43 = vld [vmem:[%s0 + $0x4] sm:$0xf]
  %v44 = vld [vmem:[%s0 + $0x8] sm:$0xf]
  %v45 = vld [vmem:[%s0 + $0xc] sm:$0xf]
  %v46 = vld [vmem:[%s0 + $0x10] sm:$0xf]
  %v47 = vld [vmem:[%s0 + $0x14] sm:$0xf]
  %v48 = vld [vmem:[%s0 + $0x18] sm:$0xf]
  %v49 = vld [vmem:[%s0 + $0x1c] sm:$0xf]
  %v50 = vld [vmem:[%s0 + $0x20] sm:$0xf]
  %v51 = vld [vmem:[%s0 + $0x24] sm:$0xf]
  %v52 = vld [vmem:[%s1] sm:$0xf]
  %v53 = vld [vmem:[%s1 + $0x4] sm:$0xf]
  %v54 = vld [vmem:[%s1 + $0x8] sm:$0xf]
  %v55 = vld [vmem:[%s1 + $0xc] sm:$0xf]
  %v56 = vld [vmem:[%s1 + $0x10] sm:$0xf]
  %v57 = vld [vmem:[%s1 + $0x14] sm:$0xf]
  %v58 = vld [vmem:[%s1 + $0x18] sm:$0xf]
  %v59 = vld [vmem:[%s1 + $0x1c] sm:$0xf]
  %v60 = vld [vmem:[%s1 + $0x20] sm:$0xf]
  %v61 = vld [vmem:[%s1 + $0x24] sm:$0xf]
  %v62 = vld [vmem:[%s1 + $0x28] sm:$0xf]
  %v63 = vld [vmem:[%s1 + $0x2c] sm:$0xf]
  %v64 = vld [vmem:[%s1 + $0x30] sm:$0xf]
  %v65 = vld [vmem:[%s1 + $0x34] sm:$0xf]
  %v66 = vld [vmem:[%s1 + $0x38] sm:$0xf]
  %v67 = vld [vmem:[%s1 + $0x3c] sm:$0xf]
  %v78 = vunpack.c.l.b16 %v42
  %v79 = vunpack.c.l.b16 %v43
  %v80 = vunpack.c.l.b16 %v44
  %v81 = vunpack.c.l.b16 %v45
  %v82 = vunpack.c.l.b16 %v46
  %v83 = vunpack.c.l.b16 %v47
  %v84 = vunpack.c.l.b16 %v48
  %v85 = vunpack.c.l.b16 %v49
  %v86 = vunpack.c.l.b16 %v50
  %v87 = vunpack.c.l.b16 %v51
  %v88 = vpack.c.b16 %v79, %v78
  %v89 = vpack.c.b16 %v81, %v80
  %v90 = vpack.c.b16 %v83, %v82
  %v91 = vpack.c.b16 %v85, %v84
  %v92 = vpack.c.b16 %v87, %v86
  %v114 = vunpack.c.l.b16 %v52
  %v115 = vunpack.c.l.b16 %v53
  %v116 = vunpack.c.l.b16 %v54
  %v117 = vunpack.c.l.b16 %v55
  %v118 = vunpack.c.l.b16 %v56
  %v119 = vunpack.c.l.b16 %v57
  %v120 = vunpack.c.l.b16 %v58
  %v121 = vunpack.c.l.b16 %v59
  %v122 = vunpack.c.l.b16 %v60
  %v123 = vunpack.c.l.b16 %v61
  %v124 = vunpack.c.l.b16 %v62
  %v125 = vunpack.c.l.b16 %v63
  %v126 = vunpack.c.l.b16 %v64
  %v127 = vunpack.c.l.b16 %v65
  %v128 = vunpack.c.l.b16 %v66
  %v129 = vunpack.c.l.b16 %v67
  %v130 = vpack.c.b16 %v115, %v114
  %v131 = vpack.c.b16 %v117, %v116
  %v132 = vpack.c.b16 %v119, %v118
  %v133 = vpack.c.b16 %v121, %v120
  %v134 = vpack.c.b16 %v123, %v122
  %v135 = vpack.c.b16 %v125, %v124
  %v136 = vpack.c.b16 %v127, %v126
  %v137 = vpack.c.b16 %v129, %v128
  %146 = vmatprep.subr.bf16.mxu0 0
  %147 = vmatpush1.bf16.msra.mxu0 %v130
  %148 = vmatprep.subr.bf16.mxu0 0
  %149 = vmatpush1.bf16.msra.mxu0 %v131
  %150 = vmatprep.subr.bf16.mxu0 0
  %151 = vmatpush1.bf16.msra.mxu0 %v132
  %152 = vmatprep.subr.bf16.mxu0 0
  %153 = vmatpush1.bf16.msra.mxu0 %v133
  %154 = vmatprep.subr.bf16.mxu0 0
  %155 = vmatpush1.bf16.msra.mxu0 %v134
  %156 = vmatprep.subr.bf16.mxu0 0
  %157 = vmatpush1.bf16.msra.mxu0 %v135
  %158 = vmatprep.subr.bf16.mxu0 0
  %159 = vmatpush1.bf16.msra.mxu0 %v136
  %160 = vmatprep.subr.bf16.mxu0 0
  %161 = vmatpush1.bf16.msra.mxu0 %v137
  %162 = vmatprep.subr.bf16.mxu0 0
  %163 = vmatpush1.bf16.msra.mxu0 0
  %164 = vmatprep.subr.bf16.mxu0 0
  %165 = vmatpush1.bf16.msra.mxu0 0
  %166 = vmatprep.subr.bf16.mxu0 0
  %167 = vmatpush1.bf16.msra.mxu0 0
  %168 = vmatprep.subr.bf16.mxu0 0
  %169 = vmatpush1.bf16.msra.mxu0 0
  %170 = vmatprep.subr.bf16.mxu0 0
  %171 = vmatpush1.bf16.msra.mxu0 0
  %172 = vmatprep.subr.bf16.mxu0 0
  %173 = vmatpush1.bf16.msra.mxu0 0
  %174 = vmatprep.subr.bf16.mxu0 0
  %175 = vmatpush1.bf16.msra.mxu0 0
  %176 = vmatprep.subr.bf16.mxu0 0
  %177 = vmatpush1.bf16.msra.mxu0 0
  %178 = vmatprep.mubr.bf16.mxu0 0
  %179 = vmatmul.mubr.bf16.gmra.mrb[0].mxu0 %v88
  %v180 = vpop.f32.mrb[0].mxu0
  %v181 = vadd.f32 0.0, %v180
  %v182 = vpop.f32.mrb[0].mxu0
  %v183 = vpop.f32.mrb[0].mxu0
  %v184 = vadd.f32 0.0, %v183
  %v185 = vpop.f32.mrb[0].mxu0
  %186 = vmatprep.mubr.bf16.mxu0 0
  %187 = vmatmul.mubr.bf16.gmra.mrb[0].mxu0 %v89
  %v188 = vpop.f32.mrb[0].mxu0
  %v189 = vadd.f32 0.0, %v188
  %v190 = vpop.f32.mrb[0].mxu0
  %v191 = vpop.f32.mrb[0].mxu0
  %v192 = vadd.f32 0.0, %v191
  %v193 = vpop.f32.mrb[0].mxu0
  %194 = vmatprep.mubr.bf16.mxu0 0
  %195 = vmatmul.mubr.bf16.gmra.mrb[0].mxu0 %v90
  %v196 = vpop.f32.mrb[0].mxu0
  %v197 = vadd.f32 0.0, %v196
  %v198 = vpop.f32.mrb[0].mxu0
  %v199 = vpop.f32.mrb[0].mxu0
  %v200 = vadd.f32 0.0, %v199
  %v201 = vpop.f32.mrb[0].mxu0
  %202 = vmatprep.mubr.bf16.mxu0 0
  %203 = vmatmul.mubr.bf16.gmra.mrb[0].mxu0 %v91
  %v204 = vpop.f32.mrb[0].mxu0
  %v205 = vadd.f32 0.0, %v204
  %v206 = vpop.f32.mrb[0].mxu0
  %v207 = vpop.f32.mrb[0].mxu0
  %v208 = vadd.f32 0.0, %v207
  %v209 = vpop.f32.mrb[0].mxu0
  %210 = vmatprep.mubr.bf16.mxu0 0
  %211 = vmatmul.mubr.bf16.gmra.mrb[0].mxu0 %v92
  %v212 = vpop.f32.mrb[0].mxu0
  %v213 = vadd.f32 0.0, %v212
  %v214 = vpop.f32.mrb[0].mxu0
  %v215 = vpop.f32.mrb[0].mxu0
  %v216 = vadd.f32 0.0, %v215
  %v217 = vpop.f32.mrb[0].mxu0
  %218 = vdwg.mxu0
  %v219 = vadd.f32 %v32, %v181
  %v220 = vadd.f32 %v33, %v184
  %v221 = vadd.f32 %v34, %v189
  %v222 = vadd.f32 %v35, %v192
  %v223 = vadd.f32 %v36, %v197
  %v224 = vadd.f32 %v37, %v200
  %v225 = vadd.f32 %v38, %v205
  %v226 = vadd.f32 %v39, %v208
  %v227 = vadd.f32 %v40, %v213
  %v228 = vadd.f32 %v41, %v216
  %229 = vst [vmem:[#allocation2] sm:$0xff] %v219
  %230 = vst [vmem:[#allocation2 + $0x8] sm:$0xff] %v220
  %231 = vst [vmem:[#allocation2 + $0x10] sm:$0xff] %v221
  %232 = vst [vmem:[#allocation2 + $0x18] sm:$0xff] %v222
  %233 = vst [vmem:[#allocation2 + $0x20] sm:$0xff] %v223
  %234 = vst [vmem:[#allocation2 + $0x28] sm:$0xff] %v224
  %235 = vst [vmem:[#allocation2 + $0x30] sm:$0xff] %v225
  %236 = vst [vmem:[#allocation2 + $0x38] sm:$0xff] %v226
  %237 = vst [vmem:[#allocation2 + $0x40] sm:$0xff] %v227
  %238 = vst [vmem:[#allocation2 + $0x48] sm:$0xff] %v228
  // Predicated region
  $region22: #{mamba_c_block_forward.8} parent=0 // pred_check
    %p239 = pneg %p18
  $region23: #{mamba_c_block_forward.8} parent=0 // pred_check_branch
    %241 = sbr.rel (%p239) target = $region25
  $region24: #{mamba_c_block_forward.8} parent=0 // pred_region
    %v242 = vld [vmem:[#allocation2] sm:$0xff]
    %v243 = vld [vmem:[#allocation2 + $0x8] sm:$0xff]
    %v244 = vld [vmem:[#allocation2 + $0x10] sm:$0xff]
    %v245 = vld [vmem:[#allocation2 + $0x18] sm:$0xff]
    %v246 = vld [vmem:[#allocation2 + $0x20] sm:$0xff]
    %v247 = vld [vmem:[#allocation2 + $0x28] sm:$0xff]
    %v248 = vld [vmem:[#allocation2 + $0x30] sm:$0xff]
    %v249 = vld [vmem:[#allocation2 + $0x38] sm:$0xff]
    %v250 = vld [vmem:[#allocation2 + $0x40] sm:$0xff]
    %v251 = vld [vmem:[#allocation2 + $0x48] sm:$0xff]
    %v252 = vld [vmem:[%s2] sm:$0x1]
    %v254 = vlaneseq
    %v255 = vshrl.u32 %v254, 7
    %v256 = vsub.s32 0, %v255
    %v257 = vrot.slane %v252, %v256
    %v259 = vmul.f32 %v242, %v257
    %v260 = vmul.f32 %v243, %v257
    %v261 = vmul.f32 %v244, %v257
    %v262 = vmul.f32 %v245, %v257
    %v263 = vmul.f32 %v246, %v257
    %v264 = vmul.f32 %v247, %v257
    %v265 = vmul.f32 %v248, %v257
    %v266 = vmul.f32 %v249, %v257
    %v267 = vmul.f32 %v250, %v257
    %v268 = vmul.f32 %v251, %v257
    %v269 = vld [vmem:[%s3] sm:$0x1]
    %v271 = vlaneseq
    %v272 = vshrl.u32 %v271, 7
    %v273 = vsub.s32 0, %v272
    %v274 = vrot.slane %v269, %v273
    %v276 = vadd.f32 %v259, %v274
    %v277 = vadd.f32 %v260, %v274
    %v278 = vadd.f32 %v261, %v274
    %v279 = vadd.f32 %v262, %v274
    %v280 = vadd.f32 %v263, %v274
    %v281 = vadd.f32 %v264, %v274
    %v282 = vadd.f32 %v265, %v274
    %v283 = vadd.f32 %v266, %v274
    %v284 = vadd.f32 %v267, %v274
    %v285 = vadd.f32 %v268, %v274
    %v286 = vmax.f32 %v276, 0.0
    %v287 = vmax.f32 %v277, 0.0
    %v288 = vmax.f32 %v278, 0.0
    %v289 = vmax.f32 %v279, 0.0
    %v290 = vmax.f32 %v280, 0.0
    %v291 = vmax.f32 %v281, 0.0
    %v292 = vmax.f32 %v282, 0.0
    %v293 = vmax.f32 %v283, 0.0
    %v294 = vmax.f32 %v284, 0.0
    %v295 = vmax.f32 %v285, 0.0
    %296 = vst [vmem:[%s4] sm:$0xff] %v286
    %297 = vst [vmem:[%s4 + $0x8] sm:$0xff] %v287
    %298 = vst [vmem:[%s4 + $0x10] sm:$0xff] %v288
    %299 = vst [vmem:[%s4 + $0x18] sm:$0xff] %v289
    %300 = vst [vmem:[%s4 + $0x20] sm:$0xff] %v290
    %301 = vst [vmem:[%s4 + $0x28] sm:$0xff] %v291
    %302 = vst [vmem:[%s4 + $0x30] sm:$0xff] %v292
    %303 = vst [vmem:[%s4 + $0x38] sm:$0xff] %v293
    %304 = vst [vmem:[%s4 + $0x40] sm:$0xff] %v294
    %305 = vst [vmem:[%s4 + $0x48] sm:$0xff] %v295
  $region25: #{mamba_c_block_forward.8} parent=0 // pred_fallthru
    _
  // Predicated region
  $region26: #{mamba_c_block_forward.8} parent=0 // pred_check
    _
  $region27: #{mamba_c_block_forward.8} parent=0 // pred_check_branch
    %307 = sbr.rel (0) target = $region29
  $region28: #{mamba_c_block_forward.8} parent=0 // pred_region
    _
  $region29: #{mamba_c_block_forward.8} parent=0 // pred_fallthru
    _
  // Predicated region
  $region30: #{mamba_c_block_forward.8} parent=0 // pred_check
    _
  $region31: #{mamba_c_block_forward.8} parent=0 // pred_check_branch
    %309 = sbr.rel (0) target = $region33
  $region32: #{mamba_c_block_forward.8} parent=0 // pred_region
    _
  $region33: #{mamba_c_block_forward.8} parent=0 // pred_fallthru
    _

// kernel: mamba_c_block_forward.9
$region0: #{mamba_c_block_forward.9}
  #allocation0 [shape = 'u32[]', space=smem, size = 0x4, offset = 0x4, fixed_abs, tag = 'smem constant byte address 0x4 - core index']
  #allocation1 [shape = 'u32[144,128]{1,0:T(1,128)}', space=vmem, size = 0x12000, scoped, tag = 'internal scratch']
  #allocation2 [shape = 'f32[32,128]{1,0:T(8,128)}', space=vmem, size = 0x4000, scoped, tag = 'scratch operand']
  %s0 = inlined_call_operand.vmem [shape: bf16[32,128], index: 0, kind: input, shape index: {}]
  %s1 = inlined_call_operand.vmem [shape: bf16[128,128], index: 1, kind: input, shape index: {}]
  %s2 = inlined_call_operand.vmem [shape: f32[1,128], index: 2, kind: input, shape index: {}]
  %s3 = inlined_call_operand.vmem [shape: f32[1,128], index: 3, kind: input, shape index: {}]
  %s4 = inlined_call_operand.vmem [shape: f32[32,128], index: 4, kind: output, shape index: {}]
  %s5 = sld [smem:[#allocation0]]
  $region34: #{mamba_c_block_forward.9} parent=0
    _
  %s7 = ssub.s32 1, %s5
  %s8 = scalar_select 0, %s7, %s5
  // Predicated region
  $region2: #{mamba_c_block_forward.9} parent=0 // pred_check
    _
  $region3: #{mamba_c_block_forward.9} parent=0 // pred_check_branch
    %10 = sbr.rel (0) target = $region5
  $region4: #{mamba_c_block_forward.9} parent=0 // pred_region
    _
  $region5: #{mamba_c_block_forward.9} parent=0 // pred_fallthru
    _
  // Predicated region
  $region6: #{mamba_c_block_forward.9} parent=0 // pred_check
    _
  $region7: #{mamba_c_block_forward.9} parent=0 // pred_check_branch
    %12 = sbr.rel (0) target = $region9
  $region8: #{mamba_c_block_forward.9} parent=0 // pred_region
    _
  $region9: #{mamba_c_block_forward.9} parent=0 // pred_fallthru
    _
  // Predicated region
  $region10: #{mamba_c_block_forward.9} parent=0 // pred_check
    _
  $region11: #{mamba_c_block_forward.9} parent=0 // pred_check_branch
    %14 = sbr.rel (0) target = $region13
  $region12: #{mamba_c_block_forward.9} parent=0 // pred_region
    _
  $region13: #{mamba_c_block_forward.9} parent=0 // pred_fallthru
    _
  // Predicated region
  $region14: #{mamba_c_block_forward.9} parent=0 // pred_check
    _
  $region15: #{mamba_c_block_forward.9} parent=0 // pred_check_branch
    %16 = sbr.rel (0) target = $region17
  $region16: #{mamba_c_block_forward.9} parent=0 // pred_region
    _
  $region17: #{mamba_c_block_forward.9} parent=0 // pred_fallthru
    _
  %p18 = scmp.eq.s32.totalorder 0, 0
  // Predicated region
  $region18: #{mamba_c_block_forward.9} parent=0 // pred_check
    %p19 = pneg %p18
  $region19: #{mamba_c_block_forward.9} parent=0 // pred_check_branch
    %21 = sbr.rel (%p19) target = $region21
  $region20: #{mamba_c_block_forward.9} parent=0 // pred_region
    %22 = vst [vmem:[#allocation2] sm:$0xff] 0.0
    %23 = vst [vmem:[#allocation2 + $0x8] sm:$0xff] 0.0
    %24 = vst [vmem:[#allocation2 + $0x10] sm:$0xff] 0.0
    %25 = vst [vmem:[#allocation2 + $0x18] sm:$0xff] 0.0
  $region21: #{mamba_c_block_forward.9} parent=0 // pred_fallthru
    _
  %v26 = vld [vmem:[#allocation2] sm:$0xff]
  %v27 = vld [vmem:[#allocation2 + $0x8] sm:$0xff]
  %v28 = vld [vmem:[#allocation2 + $0x10] sm:$0xff]
  %v29 = vld [vmem:[#allocation2 + $0x18] sm:$0xff]
  %v30 = vld [vmem:[%s0] sm:$0xf]
  %v31 = vld [vmem:[%s0 + $0x4] sm:$0xf]
  %v32 = vld [vmem:[%s0 + $0x8] sm:$0xf]
  %v33 = vld [vmem:[%s0 + $0xc] sm:$0xf]
  %v34 = vld [vmem:[%s1] sm:$0xf]
  %v35 = vld [vmem:[%s1 + $0x4] sm:$0xf]
  %v36 = vld [vmem:[%s1 + $0x8] sm:$0xf]
  %v37 = vld [vmem:[%s1 + $0xc] sm:$0xf]
  %v38 = vld [vmem:[%s1 + $0x10] sm:$0xf]
  %v39 = vld [vmem:[%s1 + $0x14] sm:$0xf]
  %v40 = vld [vmem:[%s1 + $0x18] sm:$0xf]
  %v41 = vld [vmem:[%s1 + $0x1c] sm:$0xf]
  %v42 = vld [vmem:[%s1 + $0x20] sm:$0xf]
  %v43 = vld [vmem:[%s1 + $0x24] sm:$0xf]
  %v44 = vld [vmem:[%s1 + $0x28] sm:$0xf]
  %v45 = vld [vmem:[%s1 + $0x2c] sm:$0xf]
  %v46 = vld [vmem:[%s1 + $0x30] sm:$0xf]
  %v47 = vld [vmem:[%s1 + $0x34] sm:$0xf]
  %v48 = vld [vmem:[%s1 + $0x38] sm:$0xf]
  %v49 = vld [vmem:[%s1 + $0x3c] sm:$0xf]
  %v54 = vunpack.c.l.b16 %v30
  %v55 = vunpack.c.l.b16 %v31
  %v56 = vunpack.c.l.b16 %v32
  %v57 = vunpack.c.l.b16 %v33
  %v58 = vpack.c.b16 %v55, %v54
  %v59 = vpack.c.b16 %v57, %v56
  %v78 = vunpack.c.l.b16 %v34
  %v79 = vunpack.c.l.b16 %v35
  %v80 = vunpack.c.l.b16 %v36
  %v81 = vunpack.c.l.b16 %v37
  %v82 = vunpack.c.l.b16 %v38
  %v83 = vunpack.c.l.b16 %v39
  %v84 = vunpack.c.l.b16 %v40
  %v85 = vunpack.c.l.b16 %v41
  %v86 = vunpack.c.l.b16 %v42
  %v87 = vunpack.c.l.b16 %v43
  %v88 = vunpack.c.l.b16 %v44
  %v89 = vunpack.c.l.b16 %v45
  %v90 = vunpack.c.l.b16 %v46
  %v91 = vunpack.c.l.b16 %v47
  %v92 = vunpack.c.l.b16 %v48
  %v93 = vunpack.c.l.b16 %v49
  %v94 = vpack.c.b16 %v79, %v78
  %v95 = vpack.c.b16 %v81, %v80
  %v96 = vpack.c.b16 %v83, %v82
  %v97 = vpack.c.b16 %v85, %v84
  %v98 = vpack.c.b16 %v87, %v86
  %v99 = vpack.c.b16 %v89, %v88
  %v100 = vpack.c.b16 %v91, %v90
  %v101 = vpack.c.b16 %v93, %v92
  %110 = vmatprep.subr.bf16.mxu0 0
  %111 = vmatpush1.bf16.msra.mxu0 %v94
  %112 = vmatprep.subr.bf16.mxu0 0
  %113 = vmatpush1.bf16.msra.mxu0 %v95
  %114 = vmatprep.subr.bf16.mxu0 0
  %115 = vmatpush1.bf16.msra.mxu0 %v96
  %116 = vmatprep.subr.bf16.mxu0 0
  %117 = vmatpush1.bf16.msra.mxu0 %v97
  %118 = vmatprep.subr.bf16.mxu0 0
  %119 = vmatpush1.bf16.msra.mxu0 %v98
  %120 = vmatprep.subr.bf16.mxu0 0
  %121 = vmatpush1.bf16.msra.mxu0 %v99
  %122 = vmatprep.subr.bf16.mxu0 0
  %123 = vmatpush1.bf16.msra.mxu0 %v100
  %124 = vmatprep.subr.bf16.mxu0 0
  %125 = vmatpush1.bf16.msra.mxu0 %v101
  %126 = vmatprep.subr.bf16.mxu0 0
  %127 = vmatpush1.bf16.msra.mxu0 0
  %128 = vmatprep.subr.bf16.mxu0 0
  %129 = vmatpush1.bf16.msra.mxu0 0
  %130 = vmatprep.subr.bf16.mxu0 0
  %131 = vmatpush1.bf16.msra.mxu0 0
  %132 = vmatprep.subr.bf16.mxu0 0
  %133 = vmatpush1.bf16.msra.mxu0 0
  %134 = vmatprep.subr.bf16.mxu0 0
  %135 = vmatpush1.bf16.msra.mxu0 0
  %136 = vmatprep.subr.bf16.mxu0 0
  %137 = vmatpush1.bf16.msra.mxu0 0
  %138 = vmatprep.subr.bf16.mxu0 0
  %139 = vmatpush1.bf16.msra.mxu0 0
  %140 = vmatprep.subr.bf16.mxu0 0
  %141 = vmatpush1.bf16.msra.mxu0 0
  %142 = vmatprep.mubr.bf16.mxu0 0
  %143 = vmatmul.mubr.bf16.gmra.mrb[0].mxu0 %v58
  %v144 = vpop.f32.mrb[0].mxu0
  %v145 = vadd.f32 0.0, %v144
  %v146 = vpop.f32.mrb[0].mxu0
  %v147 = vpop.f32.mrb[0].mxu0
  %v148 = vadd.f32 0.0, %v147
  %v149 = vpop.f32.mrb[0].mxu0
  %150 = vmatprep.mubr.bf16.mxu0 0
  %151 = vmatmul.mubr.bf16.gmra.mrb[0].mxu0 %v59
  %v152 = vpop.f32.mrb[0].mxu0
  %v153 = vadd.f32 0.0, %v152
  %v154 = vpop.f32.mrb[0].mxu0
  %v155 = vpop.f32.mrb[0].mxu0
  %v156 = vadd.f32 0.0, %v155
  %v157 = vpop.f32.mrb[0].mxu0
  %158 = vdwg.mxu0
  %v159 = vadd.f32 %v26, %v145
  %v160 = vadd.f32 %v27, %v148
  %v161 = vadd.f32 %v28, %v153
  %v162 = vadd.f32 %v29, %v156
  %163 = vst [vmem:[#allocation2] sm:$0xff] %v159
  %164 = vst [vmem:[#allocation2 + $0x8] sm:$0xff] %v160
  %165 = vst [vmem:[#allocation2 + $0x10] sm:$0xff] %v161
  %166 = vst [vmem:[#allocation2 + $0x18] sm:$0xff] %v162
  // Predicated region
  $region22: #{mamba_c_block_forward.9} parent=0 // pred_check
    %p167 = pneg %p18
  $region23: #{mamba_c_block_forward.9} parent=0 // pred_check_branch
    %169 = sbr.rel (%p167) target = $region25
  $region24: #{mamba_c_block_forward.9} parent=0 // pred_region
    %v170 = vld [vmem:[#allocation2] sm:$0xff]
    %v171 = vld [vmem:[#allocation2 + $0x8] sm:$0xff]
    %v172 = vld [vmem:[#allocation2 + $0x10] sm:$0xff]
    %v173 = vld [vmem:[#allocation2 + $0x18] sm:$0xff]
    %v174 = vld [vmem:[%s2] sm:$0x1]
    %v176 = vlaneseq
    %v177 = vshrl.u32 %v176, 7
    %v178 = vsub.s32 0, %v177
    %v179 = vrot.slane %v174, %v178
    %v181 = vmul.f32 %v170, %v179
    %v182 = vmul.f32 %v171, %v179
    %v183 = vmul.f32 %v172, %v179
    %v184 = vmul.f32 %v173, %v179
    %v185 = vld [vmem:[%s3] sm:$0x1]
    %v187 = vlaneseq
    %v188 = vshrl.u32 %v187, 7
    %v189 = vsub.s32 0, %v188
    %v190 = vrot.slane %v185, %v189
    %v192 = vadd.f32 %v181, %v190
    %v193 = vadd.f32 %v182, %v190
    %v194 = vadd.f32 %v183, %v190
    %v195 = vadd.f32 %v184, %v190
    %v196 = vmax.f32 %v192, 0.0
    %v197 = vmax.f32 %v193, 0.0
    %v198 = vmax.f32 %v194, 0.0
    %v199 = vmax.f32 %v195, 0.0
    %200 = vst [vmem:[%s4] sm:$0xff] %v196
    %201 = vst [vmem:[%s4 + $0x8] sm:$0xff] %v197
    %202 = vst [vmem:[%s4 + $0x10] sm:$0xff] %v198
    %203 = vst [vmem:[%s4 + $0x18] sm:$0xff] %v199
  $region25: #{mamba_c_block_forward.9} parent=0 // pred_fallthru
    _
  // Predicated region
  $region26: #{mamba_c_block_forward.9} parent=0 // pred_check
    _
  $region27: #{mamba_c_block_forward.9} parent=0 // pred_check_branch
    %205 = sbr.rel (0) target = $region29
  $region28: #{mamba_c_block_forward.9} parent=0 // pred_region
    _
  $region29: #{mamba_c_block_forward.9} parent=0 // pred_fallthru
    _
  // Predicated region
  $region30: #{mamba_c_block_forward.9} parent=0 // pred_check
    _
  $region31: #{mamba_c_block_forward.9} parent=0 // pred_check_branch
    %207 = sbr.rel (0) target = $region33
  $region32: #{mamba_c_block_forward.9} parent=0 // pred_region
    _
  $region33: #{mamba_c_block_forward.9} parent=0 // pred_fallthru
    _

// kernel: mamba_c_block_forward.10
$region0: #{mamba_c_block_forward.10}
  #allocation0 [shape = 'u32[]', space=smem, size = 0x4, offset = 0x4, fixed_abs, tag = 'smem constant byte address 0x4 - core index']
  #allocation1 [shape = 'u32[144,128]{1,0:T(1,128)}', space=vmem, size = 0x12000, scoped, tag = 'internal scratch']
  #allocation2 [shape = 'f32[16,128]{1,0:T(8,128)}', space=vmem, size = 0x2000, scoped, tag = 'scratch operand']
  #allocation3 [shape = 'f32[16,128]{1,0:T(8,128)}', space=vmem, size = 0x2000, scoped, tag = 'scratch operand']
  #allocation4 [shape = 'f32[16,16]{1,0:T(8,128)}', space=vmem, size = 0x2000, scoped, tag = 'scratch operand']
  #allocation5 [shape = 'f32[16,16]{1,0:T(8,128)}', space=vmem, size = 0x2000, scoped, tag = 'scratch operand']
  #allocation6 [shape = 'f32[16,128]{1,0:T(8,128)}', space=vmem, size = 0x2000, scoped, tag = 'scratch operand']
  #allocation7 [shape = 'f32[8,16,128]{2,1,0:T(8,128)}', space=vmem, size = 0x10000, scoped, tag = 'scratch operand']
  #allocation8 [shape = 'f32[19,128]{1,0:T(8,128)}', space=vmem, size = 0x3000, scoped, tag = 'scratch operand']
  %s0 = inlined_call_operand.vmem [shape: f32[2,16,32], index: 0, kind: input, shape index: {}]
  %s1 = inlined_call_operand.vmem [shape: f32[2,16,32], index: 1, kind: input, shape index: {}]
  %s2 = inlined_call_operand.vmem [shape: f32[1,32], index: 2, kind: input, shape index: {}]
  %s3 = inlined_call_operand.vmem [shape: bf16[32,256], index: 3, kind: input, shape index: {}]
  %s4 = inlined_call_operand.vmem [shape: f32[4,128], index: 4, kind: input, shape index: {}]
  %s5 = inlined_call_operand.vmem [shape: f32[1,128], index: 5, kind: input, shape index: {}]
  %s6 = inlined_call_operand.vmem [shape: bf16[128,34], index: 6, kind: input, shape index: {}]
  %s7 = inlined_call_operand.vmem [shape: f32[2,128], index: 7, kind: input, shape index: {}]
  %s8 = inlined_call_operand.vmem [shape: f32[1,128], index: 8, kind: input, shape index: {}]
  %s9 = inlined_call_operand.vmem [shape: f32[16,128], index: 9, kind: input, shape index: {}]
  %s10 = inlined_call_operand.vmem [shape: f32[1,128], index: 10, kind: input, shape index: {}]
  %s11 = inlined_call_operand.vmem [shape: bf16[128,32], index: 11, kind: input, shape index: {}]
  %s12 = inlined_call_operand.vmem [shape: f32[2,16,32], index: 12, kind: output, shape index: {0}]
  %s13 = inlined_call_operand.vmem [shape: f32[2,16,32], index: 13, kind: output, shape index: {1}]
  %14 = xla_tuple %s12, %s13
  %s15 = sld [smem:[#allocation0]]
  $region96: #{mamba_c_block_forward.10} parent=0
    _
  %s17 = ssub.s32 1, %s15
  %s18 = scalar_select 0, %s17, %s15
  loop: start=0, step=1, limit=4
  $region2: #{mamba_c_block_forward.10} parent=0 // loop_pre_header
    _
  $region3: #{mamba_c_block_forward.10} parent=0 // loop_header
    %s20 = sphi 0, %s24
    %p21 = scmp.ge.s32.totalorder %s20, 4
    %s30 = sphi 0, %s32
    %s33 = sphi 0, %s30
    %s34 = sphi 0, %s33
    %s50 = sphi 0, %s34
    %s56 = sphi 0, %s58
    %s59 = sphi 0, %s56
    %s60 = sphi 0, %s59
    %s76 = sphi 0, %s60
    %s80 = sphi 0, %s80
    %s82 = sphi 0, %s80
    %s83 = sphi 0, %s82
    %s97 = sphi 0, %s83
    %s101 = sphi 0, %s101
    %s103 = sphi 0, %s101
    %s104 = sphi 0, %s103
    %s118 = sphi 0, %s104
    %s122 = sphi 0, %s122
    %s124 = sphi 0, %s122
    %s125 = sphi 0, %s124
    %s139 = sphi 0, %s125
    %s143 = sphi 0, %s143
    %s145 = sphi 0, %s143
    %s146 = sphi 0, %s145
    %s160 = sphi 0, %s146
    %s164 = sphi 0, %s164
    %s166 = sphi 0, %s164
    %s167 = sphi 0, %s166
    %s181 = sphi 0, %s167
    %s185 = sphi 0, %s185
    %s187 = sphi 0, %s185
    %s188 = sphi 0, %s187
    %s202 = sphi 0, %s188
    %s206 = sphi 0, %s206
    %s208 = sphi 0, %s206
    %s209 = sphi 0, %s208
    %s223 = sphi 0, %s209
    %s227 = sphi 0, %s227
    %s229 = sphi 0, %s227
    %s230 = sphi 0, %s229
    %s244 = sphi 0, %s230
    %s248 = sphi 0, %s248
    %s250 = sphi 0, %s248
    %s251 = sphi 0, %s250
    %s265 = sphi 0, %s251
    %s269 = sphi 0, %s269
    %s271 = sphi 0, %s269
    %s272 = sphi 0, %s271
    %s286 = sphi 0, %s272
    %s292 = sphi 0, %s294
    %s295 = sphi 0, %s292
    %s296 = sphi 0, %s295
    %s312 = sphi 0, %s296
    %s318 = sphi 0, %s320
    %s321 = sphi 0, %s318
    %s322 = sphi 0, %s321
    %s338 = sphi 0, %s322
  $region4: #{mamba_c_block_forward.10} parent=0 // loop_header_branch
    %23 = sbr.rel (%p21) target = $region8
  $region5: #{mamba_c_block_forward.10} parent=0 // loop_body
    %s25 = ssub.s32 %s20, 1
    %s26 = ssub.s32 %s20, 2
    %s27 = sadd.s32 %s20, 1
    %s28 = ssub.s32 %s20, %s27
    %p29 = scmp.eq.s32.totalorder %s28, 0
    %s31 = sadd.s32 %s30, 1
    %s32 = scalar_select %p29, %s30, %s31
    %p35 = pneg %p29
    %p36 = scmp.eq.s32.totalorder %s20, 1
    %p37 = por %p35, %p36
    %p38 = scmp.ne.s32.totalorder %s30, %s33
    %p39 = scmp.eq.s32.totalorder %s20, 0
    %p40 = por %p38, %p39
    %p41 = scmp.ne.s32.totalorder %s30, %s33
    %p42 = scmp.eq.s32.totalorder %s25, 1
    %p43 = por %p41, %p42
    %p44 = scmp.ne.s32.totalorder %s33, %s34
    %p45 = scmp.eq.s32.totalorder %s25, 0
    %p46 = por %p44, %p45
    %p47 = scmp.ne.s32.totalorder %s33, %s34
    %p48 = scmp.eq.s32.totalorder %s26, 1
    %p49 = por %p47, %p48
    %p51 = scmp.ne.s32.totalorder %s34, %s50
    %p52 = scmp.eq.s32.totalorder %s26, 0
    %p53 = por %p51, %p52
    %s54 = ssub.s32 %s20, %s27
    %p55 = scmp.eq.s32.totalorder %s54, 0
    %s57 = sadd.s32 %s56, 1
    %s58 = scalar_select %p55, %s56, %s57
    %p61 = pneg %p55
    %p62 = scmp.eq.s32.totalorder %s20, 1
    %p63 = por %p61, %p62
    %p64 = scmp.ne.s32.totalorder %s56, %s59
    %p65 = scmp.eq.s32.totalorder %s20, 0
    %p66 = por %p64, %p65
    %p67 = scmp.ne.s32.totalorder %s56, %s59
    %p68 = scmp.eq.s32.totalorder %s25, 1
    %p69 = por %p67, %p68
    %p70 = scmp.ne.s32.totalorder %s59, %s60
    %p71 = scmp.eq.s32.totalorder %s25, 0
    %p72 = por %p70, %p71
    %p73 = scmp.ne.s32.totalorder %s59, %s60
    %p74 = scmp.eq.s32.totalorder %s26, 1
    %p75 = por %p73, %p74
    %p77 = scmp.ne.s32.totalorder %s60, %s76
    %p78 = scmp.eq.s32.totalorder %s26, 0
    %p79 = por %p77, %p78
    %s81 = sadd.s32 %s80, 1
    %p84 = scmp.eq.s32.totalorder %s20, 1
    %p85 = scmp.ne.s32.totalorder %s80, %s82
    %p86 = scmp.eq.s32.totalorder %s20, 0
    %p87 = por %p85, %p86
    %p88 = scmp.ne.s32.totalorder %s80, %s82
    %p89 = scmp.eq.s32.totalorder %s25, 1
    %p90 = por %p88, %p89
    %p91 = scmp.ne.s32.totalorder %s82, %s83
    %p92 = scmp.eq.s32.totalorder %s25, 0
    %p93 = por %p91, %p92
    %p94 = scmp.ne.s32.totalorder %s82, %s83
    %p95 = scmp.eq.s32.totalorder %s26, 1
    %p96 = por %p94, %p95
    %p98 = scmp.ne.s32.totalorder %s83, %s97
    %p99 = scmp.eq.s32.totalorder %s26, 0
    %p100 = por %p98, %p99
    %s102 = sadd.s32 %s101, 1
    %p105 = scmp.eq.s32.totalorder %s20, 1
    %p106 = scmp.ne.s32.totalorder %s101, %s103
    %p107 = scmp.eq.s32.totalorder %s20, 0
    %p108 = por %p106, %p107
    %p109 = scmp.ne.s32.totalorder %s101, %s103
    %p110 = scmp.eq.s32.totalorder %s25, 1
    %p111 = por %p109, %p110
    %p112 = scmp.ne.s32.totalorder %s103, %s104
    %p113 = scmp.eq.s32.totalorder %s25, 0
    %p114 = por %p112, %p113
    %p115 = scmp.ne.s32.totalorder %s103, %s104
    %p116 = scmp.eq.s32.totalorder %s26, 1
    %p117 = por %p115, %p116
    %p119 = scmp.ne.s32.totalorder %s104, %s118
    %p120 = scmp.eq.s32.totalorder %s26, 0
    %p121 = por %p119, %p120
    %s123 = sadd.s32 %s122, 1
    %p126 = scmp.eq.s32.totalorder %s20, 1
    %p127 = scmp.ne.s32.totalorder %s122, %s124
    %p128 = scmp.eq.s32.totalorder %s20, 0
    %p129 = por %p127, %p128
    %p130 = scmp.ne.s32.totalorder %s122, %s124
    %p131 = scmp.eq.s32.totalorder %s25, 1
    %p132 = por %p130, %p131
    %p133 = scmp.ne.s32.totalorder %s124, %s125
    %p134 = scmp.eq.s32.totalorder %s25, 0
    %p135 = por %p133, %p134
    %p136 = scmp.ne.s32.totalorder %s124, %s125
    %p137 = scmp.eq.s32.totalorder %s26, 1
    %p138 = por %p136, %p137
    %p140 = scmp.ne.s32.totalorder %s125, %s139
    %p141 = scmp.eq.s32.totalorder %s26, 0
    %p142 = por %p140, %p141
    %s144 = sadd.s32 %s143, 1
    %p147 = scmp.eq.s32.totalorder %s20, 1
    %p148 = scmp.ne.s32.totalorder %s143, %s145
    %p149 = scmp.eq.s32.totalorder %s20, 0
    %p150 = por %p148, %p149
    %p151 = scmp.ne.s32.totalorder %s143, %s145
    %p152 = scmp.eq.s32.totalorder %s25, 1
    %p153 = por %p151, %p152
    %p154 = scmp.ne.s32.totalorder %s145, %s146
    %p155 = scmp.eq.s32.totalorder %s25, 0
    %p156 = por %p154, %p155
    %p157 = scmp.ne.s32.totalorder %s145, %s146
    %p158 = scmp.eq.s32.totalorder %s26, 1
    %p159 = por %p157, %p158
    %p161 = scmp.ne.s32.totalorder %s146, %s160
    %p162 = scmp.eq.s32.totalorder %s26, 0
    %p163 = por %p161, %p162
    %s165 = sadd.s32 %s164, 1
    %p168 = scmp.eq.s32.totalorder %s20, 1
    %p169 = scmp.ne.s32.totalorder %s164, %s166
    %p170 = scmp.eq.s32.totalorder %s20, 0
    %p171 = por %p169, %p170
    %p172 = scmp.ne.s32.totalorder %s164, %s166
    %p173 = scmp.eq.s32.totalorder %s25, 1
    %p174 = por %p172, %p173
    %p175 = scmp.ne.s32.totalorder %s166, %s167
    %p176 = scmp.eq.s32.totalorder %s25, 0
    %p177 = por %p175, %p176
    %p178 = scmp.ne.s32.totalorder %s166, %s167
    %p179 = scmp.eq.s32.totalorder %s26, 1
    %p180 = por %p178, %p179
    %p182 = scmp.ne.s32.totalorder %s167, %s181
    %p183 = scmp.eq.s32.totalorder %s26, 0
    %p184 = por %p182, %p183
    %s186 = sadd.s32 %s185, 1
    %p189 = scmp.eq.s32.totalorder %s20, 1
    %p190 = scmp.ne.s32.totalorder %s185, %s187
    %p191 = scmp.eq.s32.totalorder %s20, 0
    %p192 = por %p190, %p191
    %p193 = scmp.ne.s32.totalorder %s185, %s187
    %p194 = scmp.eq.s32.totalorder %s25, 1
    %p195 = por %p193, %p194
    %p196 = scmp.ne.s32.totalorder %s187, %s188
    %p197 = scmp.eq.s32.totalorder %s25, 0
    %p198 = por %p196, %p197
    %p199 = scmp.ne.s32.totalorder %s187, %s188
    %p200 = scmp.eq.s32.totalorder %s26, 1
    %p201 = por %p199, %p200
    %p203 = scmp.ne.s32.totalorder %s188, %s202
    %p204 = scmp.eq.s32.totalorder %s26, 0
    %p205 = por %p203, %p204
    %s207 = sadd.s32 %s206, 1
    %p210 = scmp.eq.s32.totalorder %s20, 1
    %p211 = scmp.ne.s32.totalorder %s206, %s208
    %p212 = scmp.eq.s32.totalorder %s20, 0
    %p213 = por %p211, %p212
    %p214 = scmp.ne.s32.totalorder %s206, %s208
    %p215 = scmp.eq.s32.totalorder %s25, 1
    %p216 = por %p214, %p215
    %p217 = scmp.ne.s32.totalorder %s208, %s209
    %p218 = scmp.eq.s32.totalorder %s25, 0
    %p219 = por %p217, %p218
    %p220 = scmp.ne.s32.totalorder %s208, %s209
    %p221 = scmp.eq.s32.totalorder %s26, 1
    %p222 = por %p220, %p221
    %p224 = scmp.ne.s32.totalorder %s209, %s223
    %p225 = scmp.eq.s32.totalorder %s26, 0
    %p226 = por %p224, %p225
    %s228 = sadd.s32 %s227, 1
    %p231 = scmp.eq.s32.totalorder %s20, 1
    %p232 = scmp.ne.s32.totalorder %s227, %s229
    %p233 = scmp.eq.s32.totalorder %s20, 0
    %p234 = por %p232, %p233
    %p235 = scmp.ne.s32.totalorder %s227, %s229
    %p236 = scmp.eq.s32.totalorder %s25, 1
    %p237 = por %p235, %p236
    %p238 = scmp.ne.s32.totalorder %s229, %s230
    %p239 = scmp.eq.s32.totalorder %s25, 0
    %p240 = por %p238, %p239
    %p241 = scmp.ne.s32.totalorder %s229, %s230
    %p242 = scmp.eq.s32.totalorder %s26, 1
    %p243 = por %p241, %p242
    %p245 = scmp.ne.s32.totalorder %s230, %s244
    %p246 = scmp.eq.s32.totalorder %s26, 0
    %p247 = por %p245, %p246
    %s249 = sadd.s32 %s248, 1
    %p252 = scmp.eq.s32.totalorder %s20, 1
    %p253 = scmp.ne.s32.totalorder %s248, %s250
    %p254 = scmp.eq.s32.totalorder %s20, 0
    %p255 = por %p253, %p254
    %p256 = scmp.ne.s32.totalorder %s248, %s250
    %p257 = scmp.eq.s32.totalorder %s25, 1
    %p258 = por %p256, %p257
    %p259 = scmp.ne.s32.totalorder %s250, %s251
    %p260 = scmp.eq.s32.totalorder %s25, 0
    %p261 = por %p259, %p260
    %p262 = scmp.ne.s32.totalorder %s250, %s251
    %p263 = scmp.eq.s32.totalorder %s26, 1
    %p264 = por %p262, %p263
    %p266 = scmp.ne.s32.totalorder %s251, %s265
    %p267 = scmp.eq.s32.totalorder %s26, 0
    %p268 = por %p266, %p267
    %s270 = sadd.s32 %s269, 1
    %p273 = scmp.eq.s32.totalorder %s20, 1
    %p274 = scmp.ne.s32.totalorder %s269, %s271
    %p275 = scmp.eq.s32.totalorder %s20, 0
    %p276 = por %p274, %p275
    %p277 = scmp.ne.s32.totalorder %s269, %s271
    %p278 = scmp.eq.s32.totalorder %s25, 1
    %p279 = por %p277, %p278
    %p280 = scmp.ne.s32.totalorder %s271, %s272
    %p281 = scmp.eq.s32.totalorder %s25, 0
    %p282 = por %p280, %p281
    %p283 = scmp.ne.s32.totalorder %s271, %s272
    %p284 = scmp.eq.s32.totalorder %s26, 1
    %p285 = por %p283, %p284
    %p287 = scmp.ne.s32.totalorder %s272, %s286
    %p288 = scmp.eq.s32.totalorder %s26, 0
    %p289 = por %p287, %p288
    %s290 = ssub.s32 %s20, %s27
    %p291 = scmp.eq.s32.totalorder %s290, 0
    %s293 = sadd.s32 %s292, 1
    %s294 = scalar_select %p291, %s292, %s293
    %p297 = pneg %p291
    %p298 = scmp.eq.s32.totalorder %s20, 1
    %p299 = por %p297, %p298
    %p300 = scmp.ne.s32.totalorder %s292, %s295
    %p301 = scmp.eq.s32.totalorder %s20, 0
    %p302 = por %p300, %p301
    %p303 = scmp.ne.s32.totalorder %s292, %s295
    %p304 = scmp.eq.s32.totalorder %s25, 1
    %p305 = por %p303, %p304
    %p306 = scmp.ne.s32.totalorder %s295, %s296
    %p307 = scmp.eq.s32.totalorder %s25, 0
    %p308 = por %p306, %p307
    %p309 = scmp.ne.s32.totalorder %s295, %s296
    %p310 = scmp.eq.s32.totalorder %s26, 1
    %p311 = por %p309, %p310
    %p313 = scmp.ne.s32.totalorder %s296, %s312
    %p314 = scmp.eq.s32.totalorder %s26, 0
    %p315 = por %p313, %p314
    %s316 = ssub.s32 %s20, %s27
    %p317 = scmp.eq.s32.totalorder %s316, 0
    %s319 = sadd.s32 %s318, 1
    %s320 = scalar_select %p317, %s318, %s319
    %p323 = pneg %p317
    %p324 = scmp.eq.s32.totalorder %s20, 1
    %p325 = por %p323, %p324
    %p326 = scmp.ne.s32.totalorder %s318, %s321
    %p327 = scmp.eq.s32.totalorder %s20, 0
    %p328 = por %p326, %p327
    %p329 = scmp.ne.s32.totalorder %s318, %s321
    %p330 = scmp.eq.s32.totalorder %s25, 1
    %p331 = por %p329, %p330
    %p332 = scmp.ne.s32.totalorder %s321, %s322
    %p333 = scmp.eq.s32.totalorder %s25, 0
    %p334 = por %p332, %p333
    %p335 = scmp.ne.s32.totalorder %s321, %s322
    %p336 = scmp.eq.s32.totalorder %s26, 1
    %p337 = por %p335, %p336
    %p339 = scmp.ne.s32.totalorder %s322, %s338
    %p340 = scmp.eq.s32.totalorder %s26, 0
    %p341 = por %p339, %p340
    %p342 = scmp.le.s32.totalorder 1, %s20
    %p343 = scmp.lt.s32.totalorder %s20, 3
    %p344 = pnand %p342, %p343
    %p345 = pneg %p344
    // Predicated region
    $region9: #{mamba_c_block_forward.10} parent=5 // pred_check
      _
    $region10: #{mamba_c_block_forward.10} parent=5 // pred_check_branch
      %347 = sbr.rel (%p344) target = $region12
    $region11: #{mamba_c_block_forward.10} parent=5 // pred_region
      %s348 = ssub.s32 %s20, 1
      // Predicated region
      $region13: #{mamba_c_block_forward.10} parent=11 // pred_check
        %p349 = pneg %p93
      $region14: #{mamba_c_block_forward.10} parent=11 // pred_check_branch
        %351 = sbr.rel (%p349) target = $region16
      $region15: #{mamba_c_block_forward.10} parent=11 // pred_region
        _
      $region16: #{mamba_c_block_forward.10} parent=11 // pred_fallthru
        _
      // Predicated region
      $region17: #{mamba_c_block_forward.10} parent=11 // pred_check
        %p352 = pneg %p114
      $region18: #{mamba_c_block_forward.10} parent=11 // pred_check_branch
        %354 = sbr.rel (%p352) target = $region20
      $region19: #{mamba_c_block_forward.10} parent=11 // pred_region
        _
      $region20: #{mamba_c_block_forward.10} parent=11 // pred_fallthru
        _
      // Predicated region
      $region21: #{mamba_c_block_forward.10} parent=11 // pred_check
        %p355 = pneg %p135
      $region22: #{mamba_c_block_forward.10} parent=11 // pred_check_branch
        %357 = sbr.rel (%p355) target = $region24
      $region23: #{mamba_c_block_forward.10} parent=11 // pred_region
        _
      $region24: #{mamba_c_block_forward.10} parent=11 // pred_fallthru
        _
      // Predicated region
      $region25: #{mamba_c_block_forward.10} parent=11 // pred_check
        %p358 = pneg %p156
      $region26: #{mamba_c_block_forward.10} parent=11 // pred_check_branch
        %360 = sbr.rel (%p358) target = $region28
      $region27: #{mamba_c_block_forward.10} parent=11 // pred_region
        _
      $region28: #{mamba_c_block_forward.10} parent=11 // pred_fallthru
        _
      // Predicated region
      $region29: #{mamba_c_block_forward.10} parent=11 // pred_check
        %p361 = pneg %p177
      $region30: #{mamba_c_block_forward.10} parent=11 // pred_check_branch
        %363 = sbr.rel (%p361) target = $region32
      $region31: #{mamba_c_block_forward.10} parent=11 // pred_region
        _
      $region32: #{mamba_c_block_forward.10} parent=11 // pred_fallthru
        _
      // Predicated region
      $region33: #{mamba_c_block_forward.10} parent=11 // pred_check
        %p364 = pneg %p198
      $region34: #{mamba_c_block_forward.10} parent=11 // pred_check_branch
        %366 = sbr.rel (%p364) target = $region36
      $region35: #{mamba_c_block_forward.10} parent=11 // pred_region
        _
      $region36: #{mamba_c_block_forward.10} parent=11 // pred_fallthru
        _
      // Predicated region
      $region37: #{mamba_c_block_forward.10} parent=11 // pred_check
        %p367 = pneg %p219
      $region38: #{mamba_c_block_forward.10} parent=11 // pred_check_branch
        %369 = sbr.rel (%p367) target = $region40
      $region39: #{mamba_c_block_forward.10} parent=11 // pred_region
        _
      $region40: #{mamba_c_block_forward.10} parent=11 // pred_fallthru
        _
      // Predicated region
      $region41: #{mamba_c_block_forward.10} parent=11 // pred_check
        %p370 = pneg %p240
      $region42: #{mamba_c_block_forward.10} parent=11 // pred_check_branch
        %372 = sbr.rel (%p370) target = $region44
      $region43: #{mamba_c_block_forward.10} parent=11 // pred_region
        _
      $region44: #{mamba_c_block_forward.10} parent=11 // pred_fallthru
        _
      // Predicated region
      $region45: #{mamba_c_block_forward.10} parent=11 // pred_check
        %p373 = pneg %p261
      $region46: #{mamba_c_block_forward.10} parent=11 // pred_check_branch
        %375 = sbr.rel (%p373) target = $region48
      $region47: #{mamba_c_block_forward.10} parent=11 // pred_region
        _
      $region48: #{mamba_c_block_forward.10} parent=11 // pred_fallthru
        _
      // Predicated region
      $region49: #{mamba_c_block_forward.10} parent=11 // pred_check
        %p376 = pneg %p282
      $region50: #{mamba_c_block_forward.10} parent=11 // pred_check_branch
        %378 = sbr.rel (%p376) target = $region52
      $region51: #{mamba_c_block_forward.10} parent=11 // pred_region
        _
      $region52: #{mamba_c_block_forward.10} parent=11 // pred_fallthru
        _
    $region12: #{mamba_c_block_forward.10} parent=5 // pred_fallthru
      _
    %p379 = scmp.lt.s32.totalorder %s20, 2
    // Predicated region
    $region53: #{mamba_c_block_forward.10} parent=5 // pred_check
      %p380 = pneg %p379
    $region54: #{mamba_c_block_forward.10} parent=5 // pred_check_branch
      %382 = sbr.rel (%p380) target = $region56
    $region55: #{mamba_c_block_forward.10} parent=5 // pred_region
      // Predicated region
      $region57: #{mamba_c_block_forward.10} parent=55 // pred_check
        %p383 = pneg %p40
      $region58: #{mamba_c_block_forward.10} parent=55 // pred_check_branch
        %385 = sbr.rel (%p383) target = $region60
      $region59: #{mamba_c_block_forward.10} parent=55 // pred_region
        %p386 = scmp.lt.s32.totalorder %s20, 1
        %s387 = scalar_select %p386, %s20, 1
        %s388 = smul.addr %s387, 2
        %s389 = smul.addr %s388, 8
        %s390 = scalar_lea.vmem %s0, %s389
      $region60: #{mamba_c_block_forward.10} parent=55 // pred_fallthru
        _
      // Predicated region
      $region61: #{mamba_c_block_forward.10} parent=55 // pred_check
        %p391 = pneg %p66
      $region62: #{mamba_c_block_forward.10} parent=55 // pred_check_branch
        %393 = sbr.rel (%p391) target = $region64
      $region63: #{mamba_c_block_forward.10} parent=55 // pred_region
        %p394 = scmp.lt.s32.totalorder %s20, 1
        %s395 = scalar_select %p394, %s20, 1
        %s396 = smul.addr %s395, 2
        %s397 = smul.addr %s396, 8
        %s398 = scalar_lea.vmem %s1, %s397
      $region64: #{mamba_c_block_forward.10} parent=55 // pred_fallthru
        _
    $region56: #{mamba_c_block_forward.10} parent=5 // pred_fallthru
      _
    %p399 = scmp.le.s32.totalorder 1, %s20
    %p400 = scmp.lt.s32.totalorder %s20, 3
    %p401 = pnand %p399, %p400
    %p402 = pneg %p401
    // Predicated region
    $region65: #{mamba_c_block_forward.10} parent=5 // pred_check
      _
    $region66: #{mamba_c_block_forward.10} parent=5 // pred_check_branch
      %404 = sbr.rel (%p401) target = $region68
    $region67: #{mamba_c_block_forward.10} parent=5 // pred_region
      %s405 = ssub.s32 %s20, 1
      %p406 = scmp.lt.s32.totalorder %s25, 1
      %s407 = scalar_select %p406, %s25, 1
      %s408 = smul.addr %s407, 2
      %s409 = smul.addr %s408, 8
      %s410 = scalar_lea.vmem %s0, %s409
      %p411 = pneg %p46
      %p412 = pneg %p43
      %p413 = scmp.lt.s32.totalorder %s25, 1
      %s414 = scalar_select %p413, %s25, 1
      %s415 = smul.addr %s414, 2
      %s416 = smul.addr %s415, 8
      %s417 = scalar_lea.vmem %s1, %s416
      %p418 = pneg %p72
      %p419 = pneg %p69
      %p420 = pneg %p93
      %p421 = pneg %p90
      %p422 = pneg %p114
      %p423 = pneg %p111
      %p424 = pneg %p135
      %p425 = pneg %p132
      %p426 = pneg %p156
      %p427 = pneg %p153
      %p428 = pneg %p177
      %p429 = pneg %p174
      %p430 = pneg %p198
      %p431 = pneg %p195
      %p432 = pneg %p219
      %p433 = pneg %p216
      %p434 = pneg %p240
      %p435 = pneg %p237
      %p436 = pneg %p261
      %p437 = pneg %p258
      %p438 = pneg %p282
      %p439 = pneg %p279
      %p440 = pneg %p308
      %p441 = pneg %p305
      %p442 = scmp.lt.s32.totalorder %s25, 1
      %s443 = scalar_select %p442, %s25, 1
      %s444 = smul.addr %s443, 2
      %s445 = smul.addr %s444, 8
      %s446 = scalar_lea.vmem %s12, %s445
      %p447 = pneg %p334
      %p448 = pneg %p331
      %p449 = scmp.lt.s32.totalorder %s25, 1
      %s450 = scalar_select %p449, %s25, 1
      %s451 = smul.addr %s450, 2
      %s452 = smul.addr %s451, 8
      %s453 = scalar_lea.vmem %s13, %s452
      %p454 = scmp.lt.s32.totalorder %s25, 1
      %s455 = scalar_select %p454, %s25, 1
      %s456 = smul.addr %s455, 2
      %s457 = smul.addr %s456, 8
      %s458 = scalar_lea.vmem %s0, %s457
      %p459 = scmp.lt.s32.totalorder %s25, 1
      %s460 = scalar_select %p459, %s25, 1
      %s461 = smul.addr %s460, 2
      %s462 = smul.addr %s461, 8
      %s463 = scalar_lea.vmem %s1, %s462
      %p464 = scmp.lt.s32.totalorder %s25, 1
      %s465 = scalar_select %p464, %s25, 1
      %s466 = smul.addr %s465, 2
      %s467 = smul.addr %s466, 8
      %s468 = scalar_lea.vmem %s12, %s467
      %p469 = scmp.lt.s32.totalorder %s25, 1
      %s470 = scalar_select %p469, %s25, 1
      %s471 = smul.addr %s470, 2
      %s472 = smul.addr %s471, 8
      %s473 = scalar_lea.vmem %s13, %s472
      %v475 = vld [vmem:[%s458] sm:$0xff]
      %v476 = vld [vmem:[%s458 + $0x8] sm:$0xff]
      %v477 = vld [vmem:[%s463] sm:$0xff]
      %v478 = vld [vmem:[%s463 + $0x8] sm:$0xff]
      %v479 = vadd.f32 %v475, %v477
      %v480 = vadd.f32 %v476, %v478
      %vm481 = vcmask 261120
      %482 = vst.msk [vmem:[%s473] sm:$0xff] %vm481, %v479
      %483 = vst.msk [vmem:[%s473 + $0x8] sm:$0xff] %vm481, %v480
      %v484 = vmul.f32 %v479, %v479
      %v485 = vmul.f32 %v480, %v480
      %v486 = vsel %vm481, %v484, 0.0
      %487 = vadd.xlane.f32.xlu0 %v486
      %v488 = vpop.xlane.xlu0 %487
      %v489 = vsel %vm481, %v485, 0.0
      %490 = vadd.xlane.f32.xlu0 %v489
      %v491 = vpop.xlane.xlu0 %490
      %v492 = vrcp.pop 32.0
      %v493 = vmul.f32 %v488, %v492
      %v494 = vmul.f32 %v491, %v492
      %v495 = vadd.f32 %v493, 1e-05
      %v496 = vadd.f32 %v494, 1e-05
      %v497 = vrsqrt.pop %v495
      %v498 = vrsqrt.pop %v496
      %v499 = vmul.f32 %v479, %v497
      %v500 = vmul.f32 %v480, %v498
      %v501 = vld [vmem:[%s2] sm:$0x1]
      %v503 = vlaneseq
      %v504 = vshrl.u32 %v503, 7
      %v505 = vsub.s32 0, %v504
      %v506 = vrot.slane %v501, %v505
      %v508 = vmul.f32 %v499, %v506
      %v509 = vmul.f32 %v500, %v506
      %v510 = vpack.c.bf16 %v509, %v508
      %v511 = vld [vmem:[%s3] sm:$0xff]
      %v512 = vld [vmem:[%s3 + $0x8] sm:$0xff]
      %v513 = vld [vmem:[%s3 + $0x10] sm:$0xff]
      %v514 = vld [vmem:[%s3 + $0x18] sm:$0xff]
      %v519 = vunpack.c.l.b16 %v511
      %v520 = vunpack.c.h.b16 %v511
      %v521 = vunpack.c.l.b16 %v512
      %v522 = vunpack.c.h.b16 %v512
      %v523 = vunpack.c.l.b16 %v513
      %v524 = vunpack.c.h.b16 %v513
      %v525 = vunpack.c.l.b16 %v514
      %v526 = vunpack.c.h.b16 %v514
      %v527 = vpack.c.b16 %v521, %v519
      %v528 = vpack.c.b16 %v522, %v520
      %v529 = vpack.c.b16 %v525, %v523
      %v530 = vpack.c.b16 %v526, %v524
      %v536 = vsel %vm481, %v510, 0
      %538 = vmatprep.subr.bf16.mxu0 %v528
      %539 = vmatpush1.bf16.msra.mxu0 %v527
      %540 = vmatprep.subr.bf16.mxu0 %v530
      %541 = vmatpush1.bf16.msra.mxu0 %v529
      %542 = vmatprep.subr.bf16.mxu0 0
      %543 = vmatpush1.bf16.msra.mxu0 0
      %544 = vmatprep.subr.bf16.mxu0 0
      %545 = vmatpush1.bf16.msra.mxu0 0
      %546 = vmatprep.subr.bf16.mxu0 0
      %547 = vmatpush1.bf16.msra.mxu0 0
      %548 = vmatprep.subr.bf16.mxu0 0
      %549 = vmatpush1.bf16.msra.mxu0 0
      %550 = vmatprep.subr.bf16.mxu0 0
      %551 = vmatpush1.bf16.msra.mxu0 0
      %552 = vmatprep.subr.bf16.mxu0 0
      %553 = vmatpush1.bf16.msra.mxu0 0
      %554 = vmatprep.subr.bf16.mxu0 0
      %555 = vmatpush1.bf16.msra.mxu0 0
      %556 = vmatprep.subr.bf16.mxu0 0
      %557 = vmatpush1.bf16.msra.mxu0 0
      %558 = vmatprep.subr.bf16.mxu0 0
      %559 = vmatpush1.bf16.msra.mxu0 0
      %560 = vmatprep.subr.bf16.mxu0 0
      %561 = vmatpush1.bf16.msra.mxu0 0
      %562 = vmatprep.subr.bf16.mxu0 0
      %563 = vmatpush1.bf16.msra.mxu0 0
      %564 = vmatprep.subr.bf16.mxu0 0
      %565 = vmatpush1.bf16.msra.mxu0 0
      %566 = vmatprep.subr.bf16.mxu0 0
      %567 = vmatpush1.bf16.msra.mxu0 0
      %568 = vmatprep.subr.bf16.mxu0 0
      %569 = vmatpush1.bf16.msra.mxu0 0
      %570 = vmatprep.mubr.bf16.mxu0 0
      %571 = vmatmul.mubr.bf16.gmra.mrb[0].mxu0 %v536
      %v572 = vpop.f32.mrb[0].mxu0
      %v573 = vadd.f32 0.0, %v572
      %v574 = vpop.f32.mrb[0].mxu0
      %v575 = vadd.f32 0.0, %v574
      %v576 = vpop.f32.mrb[0].mxu0
      %v577 = vadd.f32 0.0, %v576
      %v578 = vpop.f32.mrb[0].mxu0
      %v579 = vadd.f32 0.0, %v578
      %580 = vdwg.mxu0
      %581 = vst [vmem:[#allocation8] sm:$0x7] 0.0
      %582 = vst [vmem:[#allocation8 + $0x3] sm:$0xff] %v573
      %583 = vst [vmem:[#allocation8 + $0xb] sm:$0xff] %v577
      %v584 = vld [vmem:[%s4] sm:$0xf]
      %v585 = vld [vmem:[#allocation8] sm:$0xff]
      %v586 = vld [vmem:[#allocation8 + $0x8] sm:$0xff]
      %v587 = vlaneseq
      %v588 = vshrl.u32 %v587, 7
      %v589 = vsub.s32 0, %v588
      %v590 = vrot.slane %v584, %v589
      %v591 = vmul.f32 %v585, %v590
      %v592 = vmul.f32 %v586, %v590
      %v593 = vadd.f32 %v591, 0.0
      %v594 = vadd.f32 %v592, 0.0
      %v595 = vld [vmem:[#allocation8 + $0x1] sm:$0xff]
      %v596 = vld [vmem:[#allocation8 + $0x9] sm:$0xff]
      %v597 = vlaneseq
      %v598 = vshrl.u32 %v597, 7
      %v599 = vsub.s32 1, %v598
      %v600 = vrot.slane %v584, %v599
      %v601 = vmul.f32 %v595, %v600
      %v602 = vmul.f32 %v596, %v600
      %v603 = vadd.f32 %v593, %v601
      %v604 = vadd.f32 %v594, %v602
      %v605 = vld [vmem:[#allocation8 + $0x2] sm:$0xff]
      %v606 = vld [vmem:[#allocation8 + $0xa] sm:$0xff]
      %v607 = vlaneseq
      %v608 = vshrl.u32 %v607, 7
      %v609 = vsub.s32 2, %v608
      %v610 = vrot.slane %v584, %v609
      %v611 = vmul.f32 %v605, %v610
      %v612 = vmul.f32 %v606, %v610
      %v613 = vadd.f32 %v603, %v611
      %v614 = vadd.f32 %v604, %v612
      %v615 = vld [vmem:[#allocation8 + $0x3] sm:$0xff]
      %v616 = vld [vmem:[#allocation8 + $0xb] sm:$0xff]
      %v617 = vlaneseq
      %v618 = vshrl.u32 %v617, 7
      %v619 = vsub.s32 3, %v618
      %v620 = vrot.slane %v584, %v619
      %v621 = vmul.f32 %v615, %v620
      %v622 = vmul.f32 %v616, %v620
      %v623 = vadd.f32 %v613, %v621
      %v624 = vadd.f32 %v614, %v622
      %v625 = vld [vmem:[%s5] sm:$0x1]
      %v627 = vlaneseq
      %v628 = vshrl.u32 %v627, 7
      %v629 = vsub.s32 0, %v628
      %v630 = vrot.slane %v625, %v629
      %v632 = vadd.f32 %v623, %v630
      %v633 = vadd.f32 %v624, %v630
      %v634 = vxor.u32 %v632, 2147483648
      %v635 = vxor.u32 %v633, 2147483648
      %v636 = vmul.f32 %v634, 1.442695
      %v637 = vpow.pop %v636
      %v638 = vmul.f32 %v635, 1.442695
      %v639 = vpow.pop %v638
      %v640 = vadd.f32 %v637, 1.0
      %v641 = vadd.f32 %v639, 1.0
      %v642 = vrcp.pop %v640
      %v643 = vmul.f32 1.0, %v642
      %v644 = vrcp.pop %v641
      %v645 = vmul.f32 1.0, %v644
      %v646 = vmul.f32 %v632, %v643
      %v647 = vmul.f32 %v633, %v645
      %v648 = vpack.c.bf16 %v647, %v646
      %v649 = vld [vmem:[%s6] sm:$0xf]
      %v650 = vld [vmem:[%s6 + $0x4] sm:$0xf]
      %v651 = vld [vmem:[%s6 + $0x8] sm:$0xf]
      %v652 = vld [vmem:[%s6 + $0xc] sm:$0xf]
      %v653 = vld [vmem:[%s6 + $0x10] sm:$0xf]
      %v654 = vld [vmem:[%s6 + $0x14] sm:$0xf]
      %v655 = vld [vmem:[%s6 + $0x18] sm:$0xf]
      %v656 = vld [vmem:[%s6 + $0x1c] sm:$0xf]
      %v657 = vld [vmem:[%s6 + $0x20] sm:$0xf]
      %v658 = vld [vmem:[%s6 + $0x24] sm:$0xf]
      %v659 = vld [vmem:[%s6 + $0x28] sm:$0xf]
      %v660 = vld [vmem:[%s6 + $0x2c] sm:$0xf]
      %v661 = vld [vmem:[%s6 + $0x30] sm:$0xf]
      %v662 = vld [vmem:[%s6 + $0x34] sm:$0xf]
      %v663 = vld [vmem:[%s6 + $0x38] sm:$0xf]
      %v664 = vld [vmem:[%s6 + $0x3c] sm:$0xf]
      %v681 = vunpack.c.l.b16 %v649
      %v682 = vunpack.c.l.b16 %v650
      %v683 = vunpack.c.l.b16 %v651
      %v684 = vunpack.c.l.b16 %v652
      %v685 = vunpack.c.l.b16 %v653
      %v686 = vunpack.c.l.b16 %v654
      %v687 = vunpack.c.l.b16 %v655
      %v688 = vunpack.c.l.b16 %v656
      %v689 = vunpack.c.l.b16 %v657
      %v690 = vunpack.c.l.b16 %v658
      %v691 = vunpack.c.l.b16 %v659
      %v692 = vunpack.c.l.b16 %v660
      %v693 = vunpack.c.l.b16 %v661
      %v694 = vunpack.c.l.b16 %v662
      %v695 = vunpack.c.l.b16 %v663
      %v696 = vunpack.c.l.b16 %v664
      %v697 = vpack.c.b16 %v682, %v681
      %v698 = vpack.c.b16 %v684, %v683
      %v699 = vpack.c.b16 %v686, %v685
      %v700 = vpack.c.b16 %v688, %v687
      %v701 = vpack.c.b16 %v690, %v689
      %v702 = vpack.c.b16 %v692, %v691
      %v703 = vpack.c.b16 %v694, %v693
      %v704 = vpack.c.b16 %v696, %v695
      %713 = vmatprep.subr.bf16.mxu0 0
      %714 = vmatpush1.bf16.msra.mxu0 %v697
      %715 = vmatprep.subr.bf16.mxu0 0
      %716 = vmatpush1.bf16.msra.mxu0 %v698
      %717 = vmatprep.subr.bf16.mxu0 0
      %718 = vmatpush1.bf16.msra.mxu0 %v699
      %719 = vmatprep.subr.bf16.mxu0 0
      %720 = vmatpush1.bf16.msra.mxu0 %v700
      %721 = vmatprep.subr.bf16.mxu0 0
      %722 = vmatpush1.bf16.msra.mxu0 %v701
      %723 = vmatprep.subr.bf16.mxu0 0
      %724 = vmatpush1.bf16.msra.mxu0 %v702
      %725 = vmatprep.subr.bf16.mxu0 0
      %726 = vmatpush1.bf16.msra.mxu0 %v703
      %727 = vmatprep.subr.bf16.mxu0 0
      %728 = vmatpush1.bf16.msra.mxu0 %v704
      %729 = vmatprep.subr.bf16.mxu0 0
      %730 = vmatpush1.bf16.msra.mxu0 0
      %731 = vmatprep.subr.bf16.mxu0 0
      %732 = vmatpush1.bf16.msra.mxu0 0
      %733 = vmatprep.subr.bf16.mxu0 0
      %734 = vmatpush1.bf16.msra.mxu0 0
      %735 = vmatprep.subr.bf16.mxu0 0
      %736 = vmatpush1.bf16.msra.mxu0 0
      %737 = vmatprep.subr.bf16.mxu0 0
      %738 = vmatpush1.bf16.msra.mxu0 0
      %739 = vmatprep.subr.bf16.mxu0 0
      %740 = vmatpush1.bf16.msra.mxu0 0
      %741 = vmatprep.subr.bf16.mxu0 0
      %742 = vmatpush1.bf16.msra.mxu0 0
      %743 = vmatprep.subr.bf16.mxu0 0
      %744 = vmatpush1.bf16.msra.mxu0 0
      %745 = vmatprep.mubr.bf16.mxu0 0
      %746 = vmatmul.mubr.bf16.gmra.mrb[0].mxu0 %v648
      %v747 = vpop.f32.mrb[0].mxu0
      %v748 = vadd.f32 0.0, %v747
      %v749 = vpop.f32.mrb[0].mxu0
      %v750 = vpop.f32.mrb[0].mxu0
      %v751 = vadd.f32 0.0, %v750
      %v752 = vpop.f32.mrb[0].mxu0
      %753 = vdwg.mxu0
      %756 = vrot.lane.b32.xlu0 %v748, 126
      %v757 = vpop.permute.xlu0 %756
      %758 = vrot.lane.b32.xlu0 %v751, 126
      %v759 = vpop.permute.xlu0 %758
      %vm762 = vcmask 130048
      %763 = vst.msk [vmem:[#allocation4] sm:$0xff] %vm762, %v757
      %764 = vst.msk [vmem:[#allocation4 + $0x8] sm:$0xff] %vm762, %v759
      %765 = vrot.lane.b32.xlu0 %v748, 110
      %v766 = vpop.permute.xlu0 %765
      %767 = vrot.lane.b32.xlu0 %v751, 110
      %v768 = vpop.permute.xlu0 %767
      %771 = vst.msk [vmem:[#allocation5] sm:$0xff] %vm762, %v766
      %772 = vst.msk [vmem:[#allocation5 + $0x8] sm:$0xff] %vm762, %v768
      %v773 = vld [vmem:[%s7] sm:$0x3]
      %v774 = vld [vmem:[%s8] sm:$0x1]
      %v776 = vlaneseq
      %v777 = vshrl.u32 %v776, 7
      %v778 = vsub.s32 0, %v777
      %v779 = vrot.slane %v774, %v778
      %vm781 = vcmask 15360
      %v782 = vsel %vm781, %v748, 0
      %v784 = vsel %vm781, %v751, 0
      %vm786 = vcmask 1041408
      %v788 = vsel %vm786, %v773, 0
      %790 = vmatprep.subr.mxu0 0.0
      %791 = vmatpush1.msra.mxu0 %v788
      %792 = vmatprep.subr.mxu0 0.0
      %793 = vmatpush1.msra.mxu0 0.0
      %794 = vmatprep.subr.mxu0 0.0
      %795 = vmatpush1.msra.mxu0 0.0
      %796 = vmatprep.subr.mxu0 0.0
      %797 = vmatpush1.msra.mxu0 0.0
      %798 = vmatprep.subr.mxu0 0.0
      %799 = vmatpush1.msra.mxu0 0.0
      %800 = vmatprep.subr.mxu0 0.0
      %801 = vmatpush1.msra.mxu0 0.0
      %802 = vmatprep.subr.mxu0 0.0
      %803 = vmatpush1.msra.mxu0 0.0
      %804 = vmatprep.subr.mxu0 0.0
      %805 = vmatpush1.msra.mxu0 0.0
      %806 = vmatprep.subr.mxu0 0.0
      %807 = vmatpush1.msra.mxu0 0.0
      %808 = vmatprep.subr.mxu0 0.0
      %809 = vmatpush1.msra.mxu0 0.0
      %810 = vmatprep.subr.mxu0 0.0
      %811 = vmatpush1.msra.mxu0 0.0
      %812 = vmatprep.subr.mxu0 0.0
      %813 = vmatpush1.msra.mxu0 0.0
      %814 = vmatprep.subr.mxu0 0.0
      %815 = vmatpush1.msra.mxu0 0.0
      %816 = vmatprep.subr.mxu0 0.0
      %817 = vmatpush1.msra.mxu0 0.0
      %818 = vmatprep.subr.mxu0 0.0
      %819 = vmatpush1.msra.mxu0 0.0
      %820 = vmatprep.subr.mxu0 0.0
      %821 = vmatpush1.msra.mxu0 0.0
      %822 = vmatprep.subr.mxu0 0.0
      %823 = vmatpush1.msra.mxu0 0.0
      %824 = vmatprep.subr.mxu0 0.0
      %825 = vmatpush1.msra.mxu0 0.0
      %826 = vmatprep.subr.mxu0 0.0
      %827 = vmatpush1.msra.mxu0 0.0
      %828 = vmatprep.subr.mxu0 0.0
      %829 = vmatpush1.msra.mxu0 0.0
      %830 = vmatprep.subr.mxu0 0.0
      %831 = vmatpush1.msra.mxu0 0.0
      %832 = vmatprep.subr.mxu0 0.0
      %833 = vmatpush1.msra.mxu0 0.0
      %834 = vmatprep.subr.mxu0 0.0
      %835 = vmatpush1.msra.mxu0 0.0
      %836 = vmatprep.subr.mxu0 0.0
      %837 = vmatpush1.msra.mxu0 0.0
      %838 = vmatprep.subr.mxu0 0.0
      %839 = vmatpush1.msra.mxu0 0.0
      %840 = vmatprep.subr.mxu0 0.0
      %841 = vmatpush1.msra.mxu0 0.0
      %842 = vmatprep.subr.mxu0 0.0
      %843 = vmatpush1.msra.mxu0 0.0
      %844 = vmatprep.subr.mxu0 0.0
      %845 = vmatpush1.msra.mxu0 0.0
      %846 = vmatprep.subr.mxu0 0.0
      %847 = vmatpush1.msra.mxu0 0.0
      %848 = vmatprep.subr.mxu0 0.0
      %849 = vmatpush1.msra.mxu0 0.0
      %850 = vmatprep.subr.mxu0 0.0
      %851 = vmatpush1.msra.mxu0 0.0
      %852 = vmatprep.subr.mxu0 0.0
      %853 = vmatpush1.msra.mxu0 0.0
      %854 = vmatprep.mubr.f32.mxu0 0.0
      %855 = vmatmul.mubr.f32.gmra.mrb[0].mxu0 %v782
      %v856 = vpop.f32.mrb[0].mxu0
      %v857 = vadd.f32 %v779, %v856
      %v858 = vpop.f32.mrb[0].mxu0
      %859 = vmatprep.mubr.f32.mxu0 0.0
      %860 = vmatmul.mubr.f32.gmra.mrb[0].mxu0 %v784
      %v861 = vpop.f32.mrb[0].mxu0
      %v862 = vadd.f32 %v779, %v861
      %v863 = vpop.f32.mrb[0].mxu0
      %864 = vdwg.mxu0
      %v865 = vmax.f32 %v857, 0.0
      %v866 = vmax.f32 %v862, 0.0
      %vm867 = vcmp.ne.f32.partialorder %v857, %v857
      %vm868 = vcmp.ne.f32.partialorder %v862, %v862
      %v869 = vadd.f32 %v857, 0.0
      %v870 = vadd.f32 %v862, 0.0
      %v871 = vand.u32 2147483647, %v857
      %v872 = vand.u32 2147483647, %v862
      %v873 = vsub.f32 0.0, %v871
      %v874 = vsub.f32 0.0, %v872
      %v875 = vmul.f32 %v873, 1.442695
      %v876 = vpow.pop %v875
      %v877 = vmul.f32 %v874, 1.442695
      %v878 = vpow.pop %v877
      %v879 = vadd.f32 %v876, 1.0
      %v880 = vlog2.pop %v879
      %v881 = vmul.f32 %v880, 0.6931472
      %v882 = vmul.f32 -0.5, %v876
      %v883 = vadd.f32 %v882, 1.0
      %v884 = vmul.f32 %v883, %v876
      %v885 = vand.u32 2147483647, %v876
      %vm886 = vcmp.lt.f32.partialorder %v885, 0.0004427343
      %v887 = vsel %vm886, %v884, %v881
      %v888 = vadd.f32 %v878, 1.0
      %v889 = vlog2.pop %v888
      %v890 = vmul.f32 %v889, 0.6931472
      %v891 = vmul.f32 -0.5, %v878
      %v892 = vadd.f32 %v891, 1.0
      %v893 = vmul.f32 %v892, %v878
      %v894 = vand.u32 2147483647, %v878
      %vm895 = vcmp.lt.f32.partialorder %v894, 0.0004427343
      %v896 = vsel %vm895, %v893, %v890
      %v897 = vadd.f32 %v865, %v887
      %v898 = vadd.f32 %v866, %v896
      %v899 = vsel %vm867, %v869, %v897
      %v900 = vsel %vm868, %v870, %v898
      %901 = vst [vmem:[#allocation2] sm:$0xff] %v899
      %902 = vst [vmem:[#allocation2 + $0x8] sm:$0xff] %v900
      %v903 = vmul.f32 %v899, %v646
      %v904 = vmul.f32 %v900, %v647
      %905 = vst [vmem:[#allocation3] sm:$0xff] %v903
      %906 = vst [vmem:[#allocation3 + $0x8] sm:$0xff] %v904
      %v907 = vld [vmem:[%s9] sm:$0xff]
      %v908 = vld [vmem:[%s9 + $0x8] sm:$0xff]
      %v909 = vmul.f32 %v907, 1.442695
      %v910 = vpow.pop %v909
      %v911 = vmul.f32 %v908, 1.442695
      %v912 = vpow.pop %v911
      %v913 = vsub.f32 0.0, %v910
      %v914 = vsub.f32 0.0, %v912
      loop: start=0, step=1, limit=2
      $region69: #{mamba_c_block_forward.10} parent=67 // loop_pre_header
        _
      $region70: #{mamba_c_block_forward.10} parent=67 // loop_header
        %s916 = sphi 0, %s920
        %p917 = scmp.ge.s32.totalorder %s916, 2
        %v921 = vphi 0.0, %v2643
        %v922 = vphi 0.0, %v2644
      $region71: #{mamba_c_block_forward.10} parent=67 // loop_header_branch
        %919 = sbr.rel (%p917) target = $region75
      $region72: #{mamba_c_block_forward.10} parent=67 // loop_body
        %s923 = smul.u32 %s916, 8
        %s924 = scalar_lea.vmem [#allocation2], %s923
        %v925 = vld [vmem:[%s924] sm:$0xff]
        %v927 = vcombine.high %v925, %v925
        %v929 = vunpack.c.l.s4 1966171168
        %v930 = vunpack.c.0.s8 %v929
        %v931 = vlaneseq
        %v932 = vshrl.u32 %v931, 7
        %v933 = vsub.s32 %v930, %v932
        %v934 = vrot.slane %v925, %v933
        %v936 = vunpack.c.l.s4 1966171168
        %v937 = vunpack.c.0.s8 %v936
        %v938 = vlaneseq
        %v939 = vshrl.u32 %v938, 7
        %v940 = vsub.s32 %v937, %v939
        %v941 = vrot.slane %v927, %v940
        %v942 = vcombine.high %v934, %v934
        %v943 = vcombine.high %v941, %v941
        %v945 = vunpack.c.l.s4 1966171168
        %v946 = vunpack.c.0.s8 %v945
        %v947 = vlaneseq
        %v948 = vshrl.u32 %v947, 7
        %v949 = vsub.s32 %v946, %v948
        %v950 = vrot.slane %v934, %v949
        %v952 = vunpack.c.l.s4 1966171168
        %v953 = vunpack.c.0.s8 %v952
        %v954 = vlaneseq
        %v955 = vshrl.u32 %v954, 7
        %v956 = vsub.s32 %v953, %v955
        %v957 = vrot.slane %v941, %v956
        %v959 = vunpack.c.l.s4 1966171168
        %v960 = vunpack.c.0.s8 %v959
        %v961 = vlaneseq
        %v962 = vshrl.u32 %v961, 7
        %v963 = vsub.s32 %v960, %v962
        %v964 = vrot.slane %v942, %v963
        %v966 = vunpack.c.l.s4 1966171168
        %v967 = vunpack.c.0.s8 %v966
        %v968 = vlaneseq
        %v969 = vshrl.u32 %v968, 7
        %v970 = vsub.s32 %v967, %v969
        %v971 = vrot.slane %v943, %v970
        %v972 = vcombine.high %v950, %v950
        %v973 = vcombine.high %v957, %v957
        %v974 = vcombine.high %v964, %v964
        %v975 = vcombine.high %v971, %v971
        %v976 = vlaneseq
        %v977 = vshrl.u32 %v976, 7
        %v978 = vsub.s32 0, %v977
        %v979 = vrot.slane %v950, %v978
        %v980 = vlaneseq
        %v981 = vshrl.u32 %v980, 7
        %v982 = vsub.s32 0, %v981
        %v983 = vrot.slane %v964, %v982
        %v984 = vlaneseq
        %v985 = vshrl.u32 %v984, 7
        %v986 = vsub.s32 0, %v985
        %v987 = vrot.slane %v972, %v986
        %v988 = vlaneseq
        %v989 = vshrl.u32 %v988, 7
        %v990 = vsub.s32 0, %v989
        %v991 = vrot.slane %v974, %v990
        %v992 = vlaneseq
        %v993 = vshrl.u32 %v992, 7
        %v994 = vsub.s32 0, %v993
        %v995 = vrot.slane %v957, %v994
        %v996 = vlaneseq
        %v997 = vshrl.u32 %v996, 7
        %v998 = vsub.s32 0, %v997
        %v999 = vrot.slane %v971, %v998
        %v1000 = vlaneseq
        %v1001 = vshrl.u32 %v1000, 7
        %v1002 = vsub.s32 0, %v1001
        %v1003 = vrot.slane %v973, %v1002
        %v1004 = vlaneseq
        %v1005 = vshrl.u32 %v1004, 7
        %v1006 = vsub.s32 0, %v1005
        %v1007 = vrot.slane %v975, %v1006
        %v1016 = vmul.f32 %v979, %v913
        %v1017 = vmul.f32 %v979, %v914
        %v1018 = vmul.f32 %v983, %v913
        %v1019 = vmul.f32 %v983, %v914
        %v1020 = vmul.f32 %v987, %v913
        %v1021 = vmul.f32 %v987, %v914
        %v1022 = vmul.f32 %v991, %v913
        %v1023 = vmul.f32 %v991, %v914
        %v1024 = vmul.f32 %v995, %v913
        %v1025 = vmul.f32 %v995, %v914
        %v1026 = vmul.f32 %v999, %v913
        %v1027 = vmul.f32 %v999, %v914
        %v1028 = vmul.f32 %v1003, %v913
        %v1029 = vmul.f32 %v1003, %v914
        %v1030 = vmul.f32 %v1007, %v913
        %v1031 = vmul.f32 %v1007, %v914
        %v1032 = vmul.f32 %v1016, 1.442695
        %v1033 = vpow.pop %v1032
        %v1034 = vmul.f32 %v1017, 1.442695
        %v1035 = vpow.pop %v1034
        %v1036 = vmul.f32 %v1018, 1.442695
        %v1037 = vpow.pop %v1036
        %v1038 = vmul.f32 %v1019, 1.442695
        %v1039 = vpow.pop %v1038
        %v1040 = vmul.f32 %v1020, 1.442695
        %v1041 = vpow.pop %v1040
        %v1042 = vmul.f32 %v1021, 1.442695
        %v1043 = vpow.pop %v1042
        %v1044 = vmul.f32 %v1022, 1.442695
        %v1045 = vpow.pop %v1044
        %v1046 = vmul.f32 %v1023, 1.442695
        %v1047 = vpow.pop %v1046
        %v1048 = vmul.f32 %v1024, 1.442695
        %v1049 = vpow.pop %v1048
        %v1050 = vmul.f32 %v1025, 1.442695
        %v1051 = vpow.pop %v1050
        %v1052 = vmul.f32 %v1026, 1.442695
        %v1053 = vpow.pop %v1052
        %v1054 = vmul.f32 %v1027, 1.442695
        %v1055 = vpow.pop %v1054
        %v1056 = vmul.f32 %v1028, 1.442695
        %v1057 = vpow.pop %v1056
        %v1058 = vmul.f32 %v1029, 1.442695
        %v1059 = vpow.pop %v1058
        %v1060 = vmul.f32 %v1030, 1.442695
        %v1061 = vpow.pop %v1060
        %v1062 = vmul.f32 %v1031, 1.442695
        %v1063 = vpow.pop %v1062
        %1064 = vst [vmem:[#allocation7] sm:$0xff] %v1033
        %1065 = vst [vmem:[#allocation7 + $0x8] sm:$0xff] %v1035
        %1066 = vst [vmem:[#allocation7 + $0x10] sm:$0xff] %v1037
        %1067 = vst [vmem:[#allocation7 + $0x18] sm:$0xff] %v1039
        %1068 = vst [vmem:[#allocation7 + $0x20] sm:$0xff] %v1041
        %1069 = vst [vmem:[#allocation7 + $0x28] sm:$0xff] %v1043
        %1070 = vst [vmem:[#allocation7 + $0x30] sm:$0xff] %v1045
        %1071 = vst [vmem:[#allocation7 + $0x38] sm:$0xff] %v1047
        %1072 = vst [vmem:[#allocation7 + $0x40] sm:$0xff] %v1049
        %1073 = vst [vmem:[#allocation7 + $0x48] sm:$0xff] %v1051
        %1074 = vst [vmem:[#allocation7 + $0x50] sm:$0xff] %v1053
        %1075 = vst [vmem:[#allocation7 + $0x58] sm:$0xff] %v1055
        %1076 = vst [vmem:[#allocation7 + $0x60] sm:$0xff] %v1057
        %1077 = vst [vmem:[#allocation7 + $0x68] sm:$0xff] %v1059
        %1078 = vst [vmem:[#allocation7 + $0x70] sm:$0xff] %v1061
        %1079 = vst [vmem:[#allocation7 + $0x78] sm:$0xff] %v1063
        %s1080 = scalar_lea.vmem [#allocation4], %s923
        %v1081 = vld [vmem:[%s1080] sm:$0x1]
        %s1082 = scalar_lea.vmem [#allocation5], %s923
        %v1083 = vld [vmem:[%s1082] sm:$0x1]
        %s1084 = scalar_lea.vmem [#allocation3], %s923
        %v1085 = vld [vmem:[%s1084] sm:$0x1]
        %1086 = vxpose.xlu0.b32.start [1/16] %v1081, 128
        %1087 = vxpose.xlu0.b32.cont [2/16] 0.0, 128
        %1088 = vxpose.xlu0.b32.cont [3/16] 0.0, 128
        %1089 = vxpose.xlu0.b32.cont [4/16] 0.0, 128
        %1090 = vxpose.xlu0.b32.cont [5/16] 0.0, 128
        %1091 = vxpose.xlu0.b32.cont [6/16] 0.0, 128
        %1092 = vxpose.xlu0.b32.cont [7/16] 0.0, 128
        %1093 = vxpose.xlu0.b32.cont [8/16] 0.0, 128
        %1094 = vxpose.xlu0.b32.cont [9/16] 0.0, 128
        %1095 = vxpose.xlu0.b32.cont [10/16] 0.0, 128
        %1096 = vxpose.xlu0.b32.cont [11/16] 0.0, 128
        %1097 = vxpose.xlu0.b32.cont [12/16] 0.0, 128
        %1098 = vxpose.xlu0.b32.cont [13/16] 0.0, 128
        %1099 = vxpose.xlu0.b32.cont [14/16] 0.0, 128
        %1100 = vxpose.xlu0.b32.cont [15/16] 0.0, 128
        %1101 = vxpose.xlu0.b32.end [16/16] 0.0, 128
        %v1102 = vpop.trf.xlu0
        %v1103 = vpop.trf.xlu0
        %v1104 = vpop.trf.xlu0
        %v1105 = vpop.trf.xlu0
        %v1106 = vpop.trf.xlu0
        %v1107 = vpop.trf.xlu0
        %v1108 = vpop.trf.xlu0
        %v1109 = vpop.trf.xlu0
        %v1110 = vpop.trf.xlu0
        %v1111 = vpop.trf.xlu0
        %v1112 = vpop.trf.xlu0
        %v1113 = vpop.trf.xlu0
        %v1114 = vpop.trf.xlu0
        %v1115 = vpop.trf.xlu0
        %v1116 = vpop.trf.xlu0
        %v1117 = vpop.trf.xlu0
        %vm1118 = vcmask 7168
        %v1120 = vsel %vm1118, %v1102, 0
        %v1123 = vsel %vm1118, %v1103, 0
        %vm1125 = vcmask 1040384
        %v1127 = vsel %vm1125, %v1085, 0
        %1129 = vmatprep.subr.mxu0 0.0
        %1130 = vmatpush1.msra.mxu0 %v1127
        %1131 = vmatprep.subr.mxu0 0.0
        %1132 = vmatpush1.msra.mxu0 0.0
        %1133 = vmatprep.subr.mxu0 0.0
        %1134 = vmatpush1.msra.mxu0 0.0
        %1135 = vmatprep.subr.mxu0 0.0
        %1136 = vmatpush1.msra.mxu0 0.0
        %1137 = vmatprep.subr.mxu0 0.0
        %1138 = vmatpush1.msra.mxu0 0.0
        %1139 = vmatprep.subr.mxu0 0.0
        %1140 = vmatpush1.msra.mxu0 0.0
        %1141 = vmatprep.subr.mxu0 0.0
        %1142 = vmatpush1.msra.mxu0 0.0
        %1143 = vmatprep.subr.mxu0 0.0
        %1144 = vmatpush1.msra.mxu0 0.0
        %1145 = vmatprep.subr.mxu0 0.0
        %1146 = vmatpush1.msra.mxu0 0.0
        %1147 = vmatprep.subr.mxu0 0.0
        %1148 = vmatpush1.msra.mxu0 0.0
        %1149 = vmatprep.subr.mxu0 0.0
        %1150 = vmatpush1.msra.mxu0 0.0
        %1151 = vmatprep.subr.mxu0 0.0
        %1152 = vmatpush1.msra.mxu0 0.0
        %1153 = vmatprep.subr.mxu0 0.0
        %1154 = vmatpush1.msra.mxu0 0.0
        %1155 = vmatprep.subr.mxu0 0.0
        %1156 = vmatpush1.msra.mxu0 0.0
        %1157 = vmatprep.subr.mxu0 0.0
        %1158 = vmatpush1.msra.mxu0 0.0
        %1159 = vmatprep.subr.mxu0 0.0
        %1160 = vmatpush1.msra.mxu0 0.0
        %1161 = vmatprep.subr.mxu0 0.0
        %1162 = vmatpush1.msra.mxu0 0.0
        %1163 = vmatprep.subr.mxu0 0.0
        %1164 = vmatpush1.msra.mxu0 0.0
        %1165 = vmatprep.subr.mxu0 0.0
        %1166 = vmatpush1.msra.mxu0 0.0
        %1167 = vmatprep.subr.mxu0 0.0
        %1168 = vmatpush1.msra.mxu0 0.0
        %1169 = vmatprep.subr.mxu0 0.0
        %1170 = vmatpush1.msra.mxu0 0.0
        %1171 = vmatprep.subr.mxu0 0.0
        %1172 = vmatpush1.msra.mxu0 0.0
        %1173 = vmatprep.subr.mxu0 0.0
        %1174 = vmatpush1.msra.mxu0 0.0
        %1175 = vmatprep.subr.mxu0 0.0
        %1176 = vmatpush1.msra.mxu0 0.0
        %1177 = vmatprep.subr.mxu0 0.0
        %1178 = vmatpush1.msra.mxu0 0.0
        %1179 = vmatprep.subr.mxu0 0.0
        %1180 = vmatpush1.msra.mxu0 0.0
        %1181 = vmatprep.subr.mxu0 0.0
        %1182 = vmatpush1.msra.mxu0 0.0
        %1183 = vmatprep.subr.mxu0 0.0
        %1184 = vmatpush1.msra.mxu0 0.0
        %1185 = vmatprep.subr.mxu0 0.0
        %1186 = vmatpush1.msra.mxu0 0.0
        %1187 = vmatprep.subr.mxu0 0.0
        %1188 = vmatpush1.msra.mxu0 0.0
        %1189 = vmatprep.subr.mxu0 0.0
        %1190 = vmatpush1.msra.mxu0 0.0
        %1191 = vmatprep.subr.mxu0 0.0
        %1192 = vmatpush1.msra.mxu0 0.0
        %1193 = vmatprep.mubr.f32.mxu0 0.0
        %1194 = vmatmul.mubr.f32.gmra.mrb[0].mxu0 %v1120
        %v1195 = vpop.f32.mrb[0].mxu0
        %v1196 = vadd.f32 0.0, %v1195
        %v1197 = vpop.f32.mrb[0].mxu0
        %1198 = vmatprep.mubr.f32.mxu0 0.0
        %1199 = vmatmul.mubr.f32.gmra.mrb[0].mxu0 %v1123
        %v1200 = vpop.f32.mrb[0].mxu0
        %v1201 = vadd.f32 0.0, %v1200
        %v1202 = vpop.f32.mrb[0].mxu0
        %1203 = vdwg.mxu0
        %v1204 = vld [vmem:[#allocation7] sm:$0xff]
        %v1205 = vld [vmem:[#allocation7 + $0x8] sm:$0xff]
        %v1206 = vmul.f32 %v1204, %v921
        %v1207 = vmul.f32 %v1205, %v922
        %v1208 = vadd.f32 %v1206, %v1196
        %v1209 = vadd.f32 %v1207, %v1201
        %v1211 = vsel %vm762, %v1083, 0
        %1213 = vmatprep.subr.mxu0 0.0
        %1214 = vmatpush1.msra.mxu0 %v1208
        %1215 = vmatprep.subr.mxu0 0.0
        %1216 = vmatpush1.msra.mxu0 %v1209
        %1217 = vmatprep.subr.mxu0 0.0
        %1218 = vmatpush1.msra.mxu0 0.0
        %1219 = vmatprep.subr.mxu0 0.0
        %1220 = vmatpush1.msra.mxu0 0.0
        %1221 = vmatprep.subr.mxu0 0.0
        %1222 = vmatpush1.msra.mxu0 0.0
        %1223 = vmatprep.subr.mxu0 0.0
        %1224 = vmatpush1.msra.mxu0 0.0
        %1225 = vmatprep.subr.mxu0 0.0
        %1226 = vmatpush1.msra.mxu0 0.0
        %1227 = vmatprep.subr.mxu0 0.0
        %1228 = vmatpush1.msra.mxu0 0.0
        %1229 = vmatprep.subr.mxu0 0.0
        %1230 = vmatpush1.msra.mxu0 0.0
        %1231 = vmatprep.subr.mxu0 0.0
        %1232 = vmatpush1.msra.mxu0 0.0
        %1233 = vmatprep.subr.mxu0 0.0
        %1234 = vmatpush1.msra.mxu0 0.0
        %1235 = vmatprep.subr.mxu0 0.0
        %1236 = vmatpush1.msra.mxu0 0.0
        %1237 = vmatprep.subr.mxu0 0.0
        %1238 = vmatpush1.msra.mxu0 0.0
        %1239 = vmatprep.subr.mxu0 0.0
        %1240 = vmatpush1.msra.mxu0 0.0
        %1241 = vmatprep.subr.mxu0 0.0
        %1242 = vmatpush1.msra.mxu0 0.0
        %1243 = vmatprep.subr.mxu0 0.0
        %1244 = vmatpush1.msra.mxu0 0.0
        %1245 = vmatprep.subr.mxu0 0.0
        %1246 = vmatpush1.msra.mxu0 0.0
        %1247 = vmatprep.subr.mxu0 0.0
        %1248 = vmatpush1.msra.mxu0 0.0
        %1249 = vmatprep.subr.mxu0 0.0
        %1250 = vmatpush1.msra.mxu0 0.0
        %1251 = vmatprep.subr.mxu0 0.0
        %1252 = vmatpush1.msra.mxu0 0.0
        %1253 = vmatprep.subr.mxu0 0.0
        %1254 = vmatpush1.msra.mxu0 0.0
        %1255 = vmatprep.subr.mxu0 0.0
        %1256 = vmatpush1.msra.mxu0 0.0
        %1257 = vmatprep.subr.mxu0 0.0
        %1258 = vmatpush1.msra.mxu0 0.0
        %1259 = vmatprep.subr.mxu0 0.0
        %1260 = vmatpush1.msra.mxu0 0.0
        %1261 = vmatprep.subr.mxu0 0.0
        %1262 = vmatpush1.msra.mxu0 0.0
        %1263 = vmatprep.subr.mxu0 0.0
        %1264 = vmatpush1.msra.mxu0 0.0
        %1265 = vmatprep.subr.mxu0 0.0
        %1266 = vmatpush1.msra.mxu0 0.0
        %1267 = vmatprep.subr.mxu0 0.0
        %1268 = vmatpush1.msra.mxu0 0.0
        %1269 = vmatprep.subr.mxu0 0.0
        %1270 = vmatpush1.msra.mxu0 0.0
        %1271 = vmatprep.subr.mxu0 0.0
        %1272 = vmatpush1.msra.mxu0 0.0
        %1273 = vmatprep.subr.mxu0 0.0
        %1274 = vmatpush1.msra.mxu0 0.0
        %1275 = vmatprep.subr.mxu0 0.0
        %1276 = vmatpush1.msra.mxu0 0.0
        %1277 = vmatprep.mubr.f32.mxu0 0.0
        %1278 = vmatmul.mubr.f32.gmra.mrb[0].mxu0 %v1211
        %v1279 = vpop.f32.mrb[0].mxu0
        %v1280 = vadd.f32 0.0, %v1279
        %v1281 = vpop.f32.mrb[0].mxu0
        %1282 = vdwg.mxu0
        %s1283 = scalar_lea.vmem [#allocation6], %s923
        %1284 = vst [vmem:[%s1283] sm:$0x1] %v1280
        %s1285 = sadd.s32 %s923, 1
        %s1286 = scalar_lea.vmem [#allocation4], %s1285
        %v1287 = vld [vmem:[%s1286] sm:$0x1]
        %s1288 = scalar_lea.vmem [#allocation5], %s1285
        %v1289 = vld [vmem:[%s1288] sm:$0x1]
        %s1290 = scalar_lea.vmem [#allocation3], %s1285
        %v1291 = vld [vmem:[%s1290] sm:$0x1]
        %1292 = vxpose.xlu0.b32.start [1/16] %v1287, 128
        %1293 = vxpose.xlu0.b32.cont [2/16] 0.0, 128
        %1294 = vxpose.xlu0.b32.cont [3/16] 0.0, 128
        %1295 = vxpose.xlu0.b32.cont [4/16] 0.0, 128
        %1296 = vxpose.xlu0.b32.cont [5/16] 0.0, 128
        %1297 = vxpose.xlu0.b32.cont [6/16] 0.0, 128
        %1298 = vxpose.xlu0.b32.cont [7/16] 0.0, 128
        %1299 = vxpose.xlu0.b32.cont [8/16] 0.0, 128
        %1300 = vxpose.xlu0.b32.cont [9/16] 0.0, 128
        %1301 = vxpose.xlu0.b32.cont [10/16] 0.0, 128
        %1302 = vxpose.xlu0.b32.cont [11/16] 0.0, 128
        %1303 = vxpose.xlu0.b32.cont [12/16] 0.0, 128
        %1304 = vxpose.xlu0.b32.cont [13/16] 0.0, 128
        %1305 = vxpose.xlu0.b32.cont [14/16] 0.0, 128
        %1306 = vxpose.xlu0.b32.cont [15/16] 0.0, 128
        %1307 = vxpose.xlu0.b32.end [16/16] 0.0, 128
        %v1308 = vpop.trf.xlu0
        %v1309 = vpop.trf.xlu0
        %v1310 = vpop.trf.xlu0
        %v1311 = vpop.trf.xlu0
        %v1312 = vpop.trf.xlu0
        %v1313 = vpop.trf.xlu0
        %v1314 = vpop.trf.xlu0
        %v1315 = vpop.trf.xlu0
        %v1316 = vpop.trf.xlu0
        %v1317 = vpop.trf.xlu0
        %v1318 = vpop.trf.xlu0
        %v1319 = vpop.trf.xlu0
        %v1320 = vpop.trf.xlu0
        %v1321 = vpop.trf.xlu0
        %v1322 = vpop.trf.xlu0
        %v1323 = vpop.trf.xlu0
        %v1325 = vsel %vm1118, %v1308, 0
        %v1328 = vsel %vm1118, %v1309, 0
        %v1331 = vsel %vm1125, %v1291, 0
        %1333 = vmatprep.subr.mxu0 0.0
        %1334 = vmatpush1.msra.mxu0 %v1331
        %1335 = vmatprep.subr.mxu0 0.0
        %1336 = vmatpush1.msra.mxu0 0.0
        %1337 = vmatprep.subr.mxu0 0.0
        %1338 = vmatpush1.msra.mxu0 0.0
        %1339 = vmatprep.subr.mxu0 0.0
        %1340 = vmatpush1.msra.mxu0 0.0
        %1341 = vmatprep.subr.mxu0 0.0
        %1342 = vmatpush1.msra.mxu0 0.0
        %1343 = vmatprep.subr.mxu0 0.0
        %1344 = vmatpush1.msra.mxu0 0.0
        %1345 = vmatprep.subr.mxu0 0.0
        %1346 = vmatpush1.msra.mxu0 0.0
        %1347 = vmatprep.subr.mxu0 0.0
        %1348 = vmatpush1.msra.mxu0 0.0
        %1349 = vmatprep.subr.mxu0 0.0
        %1350 = vmatpush1.msra.mxu0 0.0
        %1351 = vmatprep.subr.mxu0 0.0
        %1352 = vmatpush1.msra.mxu0 0.0
        %1353 = vmatprep.subr.mxu0 0.0
        %1354 = vmatpush1.msra.mxu0 0.0
        %1355 = vmatprep.subr.mxu0 0.0
        %1356 = vmatpush1.msra.mxu0 0.0
        %1357 = vmatprep.subr.mxu0 0.0
        %1358 = vmatpush1.msra.mxu0 0.0
        %1359 = vmatprep.subr.mxu0 0.0
        %1360 = vmatpush1.msra.mxu0 0.0
        %1361 = vmatprep.subr.mxu0 0.0
        %1362 = vmatpush1.msra.mxu0 0.0
        %1363 = vmatprep.subr.mxu0 0.0
        %1364 = vmatpush1.msra.mxu0 0.0
        %1365 = vmatprep.subr.mxu0 0.0
        %1366 = vmatpush1.msra.mxu0 0.0
        %1367 = vmatprep.subr.mxu0 0.0
        %1368 = vmatpush1.msra.mxu0 0.0
        %1369 = vmatprep.subr.mxu0 0.0
        %1370 = vmatpush1.msra.mxu0 0.0
        %1371 = vmatprep.subr.mxu0 0.0
        %1372 = vmatpush1.msra.mxu0 0.0
        %1373 = vmatprep.subr.mxu0 0.0
        %1374 = vmatpush1.msra.mxu0 0.0
        %1375 = vmatprep.subr.mxu0 0.0
        %1376 = vmatpush1.msra.mxu0 0.0
        %1377 = vmatprep.subr.mxu0 0.0
        %1378 = vmatpush1.msra.mxu0 0.0
        %1379 = vmatprep.subr.mxu0 0.0
        %1380 = vmatpush1.msra.mxu0 0.0
        %1381 = vmatprep.subr.mxu0 0.0
        %1382 = vmatpush1.msra.mxu0 0.0
        %1383 = vmatprep.subr.mxu0 0.0
        %1384 = vmatpush1.msra.mxu0 0.0
        %1385 = vmatprep.subr.mxu0 0.0
        %1386 = vmatpush1.msra.mxu0 0.0
        %1387 = vmatprep.subr.mxu0 0.0
        %1388 = vmatpush1.msra.mxu0 0.0
        %1389 = vmatprep.subr.mxu0 0.0
        %1390 = vmatpush1.msra.mxu0 0.0
        %1391 = vmatprep.subr.mxu0 0.0
        %1392 = vmatpush1.msra.mxu0 0.0
        %1393 = vmatprep.subr.mxu0 0.0
        %1394 = vmatpush1.msra.mxu0 0.0
        %1395 = vmatprep.subr.mxu0 0.0
        %1396 = vmatpush1.msra.mxu0 0.0
        %1397 = vmatprep.mubr.f32.mxu0 0.0
        %1398 = vmatmul.mubr.f32.gmra.mrb[0].mxu0 %v1325
        %v1399 = vpop.f32.mrb[0].mxu0
        %v1400 = vadd.f32 0.0, %v1399
        %v1401 = vpop.f32.mrb[0].mxu0
        %1402 = vmatprep.mubr.f32.mxu0 0.0
        %1403 = vmatmul.mubr.f32.gmra.mrb[0].mxu0 %v1328
        %v1404 = vpop.f32.mrb[0].mxu0
        %v1405 = vadd.f32 0.0, %v1404
        %v1406 = vpop.f32.mrb[0].mxu0
        %1407 = vdwg.mxu0
        %s1408 = scalar_lea.vmem [#allocation7], 16
        %v1409 = vld [vmem:[%s1408] sm:$0xff]
        %v1410 = vld [vmem:[%s1408 + $0x8] sm:$0xff]
        %v1411 = vmul.f32 %v1409, %v1208
        %v1412 = vmul.f32 %v1410, %v1209
        %v1413 = vadd.f32 %v1411, %v1400
        %v1414 = vadd.f32 %v1412, %v1405
        %v1416 = vsel %vm762, %v1289, 0
        %1418 = vmatprep.subr.mxu0 0.0
        %1419 = vmatpush1.msra.mxu0 %v1413
        %1420 = vmatprep.subr.mxu0 0.0
        %1421 = vmatpush1.msra.mxu0 %v1414
        %1422 = vmatprep.subr.mxu0 0.0
        %1423 = vmatpush1.msra.mxu0 0.0
        %1424 = vmatprep.subr.mxu0 0.0
        %1425 = vmatpush1.msra.mxu0 0.0
        %1426 = vmatprep.subr.mxu0 0.0
        %1427 = vmatpush1.msra.mxu0 0.0
        %1428 = vmatprep.subr.mxu0 0.0
        %1429 = vmatpush1.msra.mxu0 0.0
        %1430 = vmatprep.subr.mxu0 0.0
        %1431 = vmatpush1.msra.mxu0 0.0
        %1432 = vmatprep.subr.mxu0 0.0
        %1433 = vmatpush1.msra.mxu0 0.0
        %1434 = vmatprep.subr.mxu0 0.0
        %1435 = vmatpush1.msra.mxu0 0.0
        %1436 = vmatprep.subr.mxu0 0.0
        %1437 = vmatpush1.msra.mxu0 0.0
        %1438 = vmatprep.subr.mxu0 0.0
        %1439 = vmatpush1.msra.mxu0 0.0
        %1440 = vmatprep.subr.mxu0 0.0
        %1441 = vmatpush1.msra.mxu0 0.0
        %1442 = vmatprep.subr.mxu0 0.0
        %1443 = vmatpush1.msra.mxu0 0.0
        %1444 = vmatprep.subr.mxu0 0.0
        %1445 = vmatpush1.msra.mxu0 0.0
        %1446 = vmatprep.subr.mxu0 0.0
        %1447 = vmatpush1.msra.mxu0 0.0
        %1448 = vmatprep.subr.mxu0 0.0
        %1449 = vmatpush1.msra.mxu0 0.0
        %1450 = vmatprep.subr.mxu0 0.0
        %1451 = vmatpush1.msra.mxu0 0.0
        %1452 = vmatprep.subr.mxu0 0.0
        %1453 = vmatpush1.msra.mxu0 0.0
        %1454 = vmatprep.subr.mxu0 0.0
        %1455 = vmatpush1.msra.mxu0 0.0
        %1456 = vmatprep.subr.mxu0 0.0
        %1457 = vmatpush1.msra.mxu0 0.0
        %1458 = vmatprep.subr.mxu0 0.0
        %1459 = vmatpush1.msra.mxu0 0.0
        %1460 = vmatprep.subr.mxu0 0.0
        %1461 = vmatpush1.msra.mxu0 0.0
        %1462 = vmatprep.subr.mxu0 0.0
        %1463 = vmatpush1.msra.mxu0 0.0
        %1464 = vmatprep.subr.mxu0 0.0
        %1465 = vmatpush1.msra.mxu0 0.0
        %1466 = vmatprep.subr.mxu0 0.0
        %1467 = vmatpush1.msra.mxu0 0.0
        %1468 = vmatprep.subr.mxu0 0.0
        %1469 = vmatpush1.msra.mxu0 0.0
        %1470 = vmatprep.subr.mxu0 0.0
        %1471 = vmatpush1.msra.mxu0 0.0
        %1472 = vmatprep.subr.mxu0 0.0
        %1473 = vmatpush1.msra.mxu0 0.0
        %1474 = vmatprep.subr.mxu0 0.0
        %1475 = vmatpush1.msra.mxu0 0.0
        %1476 = vmatprep.subr.mxu0 0.0
        %1477 = vmatpush1.msra.mxu0 0.0
        %1478 = vmatprep.subr.mxu0 0.0
        %1479 = vmatpush1.msra.mxu0 0.0
        %1480 = vmatprep.subr.mxu0 0.0
        %1481 = vmatpush1.msra.mxu0 0.0
        %1482 = vmatprep.mubr.f32.mxu0 0.0
        %1483 = vmatmul.mubr.f32.gmra.mrb[0].mxu0 %v1416
        %v1484 = vpop.f32.mrb[0].mxu0
        %v1485 = vadd.f32 0.0, %v1484
        %v1486 = vpop.f32.mrb[0].mxu0
        %1487 = vdwg.mxu0
        %s1488 = scalar_lea.vmem [#allocation6], %s1285
        %1489 = vst [vmem:[%s1488] sm:$0x1] %v1485
        %s1490 = sadd.s32 %s923, 2
        %s1491 = scalar_lea.vmem [#allocation4], %s1490
        %v1492 = vld [vmem:[%s1491] sm:$0x1]
        %s1493 = scalar_lea.vmem [#allocation5], %s1490
        %v1494 = vld [vmem:[%s1493] sm:$0x1]
        %s1495 = scalar_lea.vmem [#allocation3], %s1490
        %v1496 = vld [vmem:[%s1495] sm:$0x1]
        %1497 = vxpose.xlu0.b32.start [1/16] %v1492, 128
        %1498 = vxpose.xlu0.b32.cont [2/16] 0.0, 128
        %1499 = vxpose.xlu0.b32.cont [3/16] 0.0, 128
        %1500 = vxpose.xlu0.b32.cont [4/16] 0.0, 128
        %1501 = vxpose.xlu0.b32.cont [5/16] 0.0, 128
        %1502 = vxpose.xlu0.b32.cont [6/16] 0.0, 128
        %1503 = vxpose.xlu0.b32.cont [7/16] 0.0, 128
        %1504 = vxpose.xlu0.b32.cont [8/16] 0.0, 128
        %1505 = vxpose.xlu0.b32.cont [9/16] 0.0, 128
        %1506 = vxpose.xlu0.b32.cont [10/16] 0.0, 128
        %1507 = vxpose.xlu0.b32.cont [11/16] 0.0, 128
        %1508 = vxpose.xlu0.b32.cont [12/16] 0.0, 128
        %1509 = vxpose.xlu0.b32.cont [13/16] 0.0, 128
        %1510 = vxpose.xlu0.b32.cont [14/16] 0.0, 128
        %1511 = vxpose.xlu0.b32.cont [15/16] 0.0, 128
        %1512 = vxpose.xlu0.b32.end [16/16] 0.0, 128
        %v1513 = vpop.trf.xlu0
        %v1514 = vpop.trf.xlu0
        %v1515 = vpop.trf.xlu0
        %v1516 = vpop.trf.xlu0
        %v1517 = vpop.trf.xlu0
        %v1518 = vpop.trf.xlu0
        %v1519 = vpop.trf.xlu0
        %v1520 = vpop.trf.xlu0
        %v1521 = vpop.trf.xlu0
        %v1522 = vpop.trf.xlu0
        %v1523 = vpop.trf.xlu0
        %v1524 = vpop.trf.xlu0
        %v1525 = vpop.trf.xlu0
        %v1526 = vpop.trf.xlu0
        %v1527 = vpop.trf.xlu0
        %v1528 = vpop.trf.xlu0
        %v1530 = vsel %vm1118, %v1513, 0
        %v1533 = vsel %vm1118, %v1514, 0
        %v1536 = vsel %vm1125, %v1496, 0
        %1538 = vmatprep.subr.mxu0 0.0
        %1539 = vmatpush1.msra.mxu0 %v1536
        %1540 = vmatprep.subr.mxu0 0.0
        %1541 = vmatpush1.msra.mxu0 0.0
        %1542 = vmatprep.subr.mxu0 0.0
        %1543 = vmatpush1.msra.mxu0 0.0
        %1544 = vmatprep.subr.mxu0 0.0
        %1545 = vmatpush1.msra.mxu0 0.0
        %1546 = vmatprep.subr.mxu0 0.0
        %1547 = vmatpush1.msra.mxu0 0.0
        %1548 = vmatprep.subr.mxu0 0.0
        %1549 = vmatpush1.msra.mxu0 0.0
        %1550 = vmatprep.subr.mxu0 0.0
        %1551 = vmatpush1.msra.mxu0 0.0
        %1552 = vmatprep.subr.mxu0 0.0
        %1553 = vmatpush1.msra.mxu0 0.0
        %1554 = vmatprep.subr.mxu0 0.0
        %1555 = vmatpush1.msra.mxu0 0.0
        %1556 = vmatprep.subr.mxu0 0.0
        %1557 = vmatpush1.msra.mxu0 0.0
        %1558 = vmatprep.subr.mxu0 0.0
        %1559 = vmatpush1.msra.mxu0 0.0
        %1560 = vmatprep.subr.mxu0 0.0
        %1561 = vmatpush1.msra.mxu0 0.0
        %1562 = vmatprep.subr.mxu0 0.0
        %1563 = vmatpush1.msra.mxu0 0.0
        %1564 = vmatprep.subr.mxu0 0.0
        %1565 = vmatpush1.msra.mxu0 0.0
        %1566 = vmatprep.subr.mxu0 0.0
        %1567 = vmatpush1.msra.mxu0 0.0
        %1568 = vmatprep.subr.mxu0 0.0
        %1569 = vmatpush1.msra.mxu0 0.0
        %1570 = vmatprep.subr.mxu0 0.0
        %1571 = vmatpush1.msra.mxu0 0.0
        %1572 = vmatprep.subr.mxu0 0.0
        %1573 = vmatpush1.msra.mxu0 0.0
        %1574 = vmatprep.subr.mxu0 0.0
        %1575 = vmatpush1.msra.mxu0 0.0
        %1576 = vmatprep.subr.mxu0 0.0
        %1577 = vmatpush1.msra.mxu0 0.0
        %1578 = vmatprep.subr.mxu0 0.0
        %1579 = vmatpush1.msra.mxu0 0.0
        %1580 = vmatprep.subr.mxu0 0.0
        %1581 = vmatpush1.msra.mxu0 0.0
        %1582 = vmatprep.subr.mxu0 0.0
        %1583 = vmatpush1.msra.mxu0 0.0
        %1584 = vmatprep.subr.mxu0 0.0
        %1585 = vmatpush1.msra.mxu0 0.0
        %1586 = vmatprep.subr.mxu0 0.0
        %1587 = vmatpush1.msra.mxu0 0.0
        %1588 = vmatprep.subr.mxu0 0.0
        %1589 = vmatpush1.msra.mxu0 0.0
        %1590 = vmatprep.subr.mxu0 0.0
        %1591 = vmatpush1.msra.mxu0 0.0
        %1592 = vmatprep.subr.mxu0 0.0
        %1593 = vmatpush1.msra.mxu0 0.0
        %1594 = vmatprep.subr.mxu0 0.0
        %1595 = vmatpush1.msra.mxu0 0.0
        %1596 = vmatprep.subr.mxu0 0.0
        %1597 = vmatpush1.msra.mxu0 0.0
        %1598 = vmatprep.subr.mxu0 0.0
        %1599 = vmatpush1.msra.mxu0 0.0
        %1600 = vmatprep.subr.mxu0 0.0
        %1601 = vmatpush1.msra.mxu0 0.0
        %1602 = vmatprep.mubr.f32.mxu0 0.0
        %1603 = vmatmul.mubr.f32.gmra.mrb[0].mxu0 %v1530
        %v1604 = vpop.f32.mrb[0].mxu0
        %v1605 = vadd.f32 0.0, %v1604
        %v1606 = vpop.f32.mrb[0].mxu0
        %1607 = vmatprep.mubr.f32.mxu0 0.0
        %1608 = vmatmul.mubr.f32.gmra.mrb[0].mxu0 %v1533
        %v1609 = vpop.f32.mrb[0].mxu0
        %v1610 = vadd.f32 0.0, %v1609
        %v1611 = vpop.f32.mrb[0].mxu0
        %1612 = vdwg.mxu0
        %s1613 = scalar_lea.vmem [#allocation7], 32
        %v1614 = vld [vmem:[%s1613] sm:$0xff]
        %v1615 = vld [vmem:[%s1613 + $0x8] sm:$0xff]
        %v1616 = vmul.f32 %v1614, %v1413
        %v1617 = vmul.f32 %v1615, %v1414
        %v1618 = vadd.f32 %v1616, %v1605
        %v1619 = vadd.f32 %v1617, %v1610
        %v1621 = vsel %vm762, %v1494, 0
        %1623 = vmatprep.subr.mxu0 0.0
        %1624 = vmatpush1.msra.mxu0 %v1618
        %1625 = vmatprep.subr.mxu0 0.0
        %1626 = vmatpush1.msra.mxu0 %v1619
        %1627 = vmatprep.subr.mxu0 0.0
        %1628 = vmatpush1.msra.mxu0 0.0
        %1629 = vmatprep.subr.mxu0 0.0
        %1630 = vmatpush1.msra.mxu0 0.0
        %1631 = vmatprep.subr.mxu0 0.0
        %1632 = vmatpush1.msra.mxu0 0.0
        %1633 = vmatprep.subr.mxu0 0.0
        %1634 = vmatpush1.msra.mxu0 0.0
        %1635 = vmatprep.subr.mxu0 0.0
        %1636 = vmatpush1.msra.mxu0 0.0
        %1637 = vmatprep.subr.mxu0 0.0
        %1638 = vmatpush1.msra.mxu0 0.0
        %1639 = vmatprep.subr.mxu0 0.0
        %1640 = vmatpush1.msra.mxu0 0.0
        %1641 = vmatprep.subr.mxu0 0.0
        %1642 = vmatpush1.msra.mxu0 0.0
        %1643 = vmatprep.subr.mxu0 0.0
        %1644 = vmatpush1.msra.mxu0 0.0
        %1645 = vmatprep.subr.mxu0 0.0
        %1646 = vmatpush1.msra.mxu0 0.0
        %1647 = vmatprep.subr.mxu0 0.0
        %1648 = vmatpush1.msra.mxu0 0.0
        %1649 = vmatprep.subr.mxu0 0.0
        %1650 = vmatpush1.msra.mxu0 0.0
        %1651 = vmatprep.subr.mxu0 0.0
        %1652 = vmatpush1.msra.mxu0 0.0
        %1653 = vmatprep.subr.mxu0 0.0
        %1654 = vmatpush1.msra.mxu0 0.0
        %1655 = vmatprep.subr.mxu0 0.0
        %1656 = vmatpush1.msra.mxu0 0.0
        %1657 = vmatprep.subr.mxu0 0.0
        %1658 = vmatpush1.msra.mxu0 0.0
        %1659 = vmatprep.subr.mxu0 0.0
        %1660 = vmatpush1.msra.mxu0 0.0
        %1661 = vmatprep.subr.mxu0 0.0
        %1662 = vmatpush1.msra.mxu0 0.0
        %1663 = vmatprep.subr.mxu0 0.0
        %1664 = vmatpush1.msra.mxu0 0.0
        %1665 = vmatprep.subr.mxu0 0.0
        %1666 = vmatpush1.msra.mxu0 0.0
        %1667 = vmatprep.subr.mxu0 0.0
        %1668 = vmatpush1.msra.mxu0 0.0
        %1669 = vmatprep.subr.mxu0 0.0
        %1670 = vmatpush1.msra.mxu0 0.0
        %1671 = vmatprep.subr.mxu0 0.0
        %1672 = vmatpush1.msra.mxu0 0.0
        %1673 = vmatprep.subr.mxu0 0.0
        %1674 = vmatpush1.msra.mxu0 0.0
        %1675 = vmatprep.subr.mxu0 0.0
        %1676 = vmatpush1.msra.mxu0 0.0
        %1677 = vmatprep.subr.mxu0 0.0
        %1678 = vmatpush1.msra.mxu0 0.0
        %1679 = vmatprep.subr.mxu0 0.0
        %1680 = vmatpush1.msra.mxu0 0.0
        %1681 = vmatprep.subr.mxu0 0.0
        %1682 = vmatpush1.msra.mxu0 0.0
        %1683 = vmatprep.subr.mxu0 0.0
        %1684 = vmatpush1.msra.mxu0 0.0
        %1685 = vmatprep.subr.mxu0 0.0
        %1686 = vmatpush1.msra.mxu0 0.0
        %1687 = vmatprep.mubr.f32.mxu0 0.0
        %1688 = vmatmul.mubr.f32.gmra.mrb[0].mxu0 %v1621
        %v1689 = vpop.f32.mrb[0].mxu0
        %v1690 = vadd.f32 0.0, %v1689
        %v1691 = vpop.f32.mrb[0].mxu0
        %1692 = vdwg.mxu0
        %s1693 = scalar_lea.vmem [#allocation6], %s1490
        %1694 = vst [vmem:[%s1693] sm:$0x1] %v1690
        %s1695 = sadd.s32 %s923, 3
        %s1696 = scalar_lea.vmem [#allocation4], %s1695
        %v1697 = vld [vmem:[%s1696] sm:$0x1]
        %s1698 = scalar_lea.vmem [#allocation5], %s1695
        %v1699 = vld [vmem:[%s1698] sm:$0x1]
        %s1700 = scalar_lea.vmem [#allocation3], %s1695
        %v1701 = vld [vmem:[%s1700] sm:$0x1]
        %1702 = vxpose.xlu0.b32.start [1/16] %v1697, 128
        %1703 = vxpose.xlu0.b32.cont [2/16] 0.0, 128
        %1704 = vxpose.xlu0.b32.cont [3/16] 0.0, 128
        %1705 = vxpose.xlu0.b32.cont [4/16] 0.0, 128
        %1706 = vxpose.xlu0.b32.cont [5/16] 0.0, 128
        %1707 = vxpose.xlu0.b32.cont [6/16] 0.0, 128
        %1708 = vxpose.xlu0.b32.cont [7/16] 0.0, 128
        %1709 = vxpose.xlu0.b32.cont [8/16] 0.0, 128
        %1710 = vxpose.xlu0.b32.cont [9/16] 0.0, 128
        %1711 = vxpose.xlu0.b32.cont [10/16] 0.0, 128
        %1712 = vxpose.xlu0.b32.cont [11/16] 0.0, 128
        %1713 = vxpose.xlu0.b32.cont [12/16] 0.0, 128
        %1714 = vxpose.xlu0.b32.cont [13/16] 0.0, 128
        %1715 = vxpose.xlu0.b32.cont [14/16] 0.0, 128
        %1716 = vxpose.xlu0.b32.cont [15/16] 0.0, 128
        %1717 = vxpose.xlu0.b32.end [16/16] 0.0, 128
        %v1718 = vpop.trf.xlu0
        %v1719 = vpop.trf.xlu0
        %v1720 = vpop.trf.xlu0
        %v1721 = vpop.trf.xlu0
        %v1722 = vpop.trf.xlu0
        %v1723 = vpop.trf.xlu0
        %v1724 = vpop.trf.xlu0
        %v1725 = vpop.trf.xlu0
        %v1726 = vpop.trf.xlu0
        %v1727 = vpop.trf.xlu0
        %v1728 = vpop.trf.xlu0
        %v1729 = vpop.trf.xlu0
        %v1730 = vpop.trf.xlu0
        %v1731 = vpop.trf.xlu0
        %v1732 = vpop.trf.xlu0
        %v1733 = vpop.trf.xlu0
        %v1735 = vsel %vm1118, %v1718, 0
        %v1738 = vsel %vm1118, %v1719, 0
        %v1741 = vsel %vm1125, %v1701, 0
        %1743 = vmatprep.subr.mxu0 0.0
        %1744 = vmatpush1.msra.mxu0 %v1741
        %1745 = vmatprep.subr.mxu0 0.0
        %1746 = vmatpush1.msra.mxu0 0.0
        %1747 = vmatprep.subr.mxu0 0.0
        %1748 = vmatpush1.msra.mxu0 0.0
        %1749 = vmatprep.subr.mxu0 0.0
        %1750 = vmatpush1.msra.mxu0 0.0
        %1751 = vmatprep.subr.mxu0 0.0
        %1752 = vmatpush1.msra.mxu0 0.0
        %1753 = vmatprep.subr.mxu0 0.0
        %1754 = vmatpush1.msra.mxu0 0.0
        %1755 = vmatprep.subr.mxu0 0.0
        %1756 = vmatpush1.msra.mxu0 0.0
        %1757 = vmatprep.subr.mxu0 0.0
        %1758 = vmatpush1.msra.mxu0 0.0
        %1759 = vmatprep.subr.mxu0 0.0
        %1760 = vmatpush1.msra.mxu0 0.0
        %1761 = vmatprep.subr.mxu0 0.0
        %1762 = vmatpush1.msra.mxu0 0.0
        %1763 = vmatprep.subr.mxu0 0.0
        %1764 = vmatpush1.msra.mxu0 0.0
        %1765 = vmatprep.subr.mxu0 0.0
        %1766 = vmatpush1.msra.mxu0 0.0
        %1767 = vmatprep.subr.mxu0 0.0
        %1768 = vmatpush1.msra.mxu0 0.0
        %1769 = vmatprep.subr.mxu0 0.0
        %1770 = vmatpush1.msra.mxu0 0.0
        %1771 = vmatprep.subr.mxu0 0.0
        %1772 = vmatpush1.msra.mxu0 0.0
        %1773 = vmatprep.subr.mxu0 0.0
        %1774 = vmatpush1.msra.mxu0 0.0
        %1775 = vmatprep.subr.mxu0 0.0
        %1776 = vmatpush1.msra.mxu0 0.0
        %1777 = vmatprep.subr.mxu0 0.0
        %1778 = vmatpush1.msra.mxu0 0.0
        %1779 = vmatprep.subr.mxu0 0.0
        %1780 = vmatpush1.msra.mxu0 0.0
        %1781 = vmatprep.subr.mxu0 0.0
        %1782 = vmatpush1.msra.mxu0 0.0
        %1783 = vmatprep.subr.mxu0 0.0
        %1784 = vmatpush1.msra.mxu0 0.0
        %1785 = vmatprep.subr.mxu0 0.0
        %1786 = vmatpush1.msra.mxu0 0.0
        %1787 = vmatprep.subr.mxu0 0.0
        %1788 = vmatpush1.msra.mxu0 0.0
        %1789 = vmatprep.subr.mxu0 0.0
        %1790 = vmatpush1.msra.mxu0 0.0
        %1791 = vmatprep.subr.mxu0 0.0
        %1792 = vmatpush1.msra.mxu0 0.0
        %1793 = vmatprep.subr.mxu0 0.0
        %1794 = vmatpush1.msra.mxu0 0.0
        %1795 = vmatprep.subr.mxu0 0.0
        %1796 = vmatpush1.msra.mxu0 0.0
        %1797 = vmatprep.subr.mxu0 0.0
        %1798 = vmatpush1.msra.mxu0 0.0
        %1799 = vmatprep.subr.mxu0 0.0
        %1800 = vmatpush1.msra.mxu0 0.0
        %1801 = vmatprep.subr.mxu0 0.0
        %1802 = vmatpush1.msra.mxu0 0.0
        %1803 = vmatprep.subr.mxu0 0.0
        %1804 = vmatpush1.msra.mxu0 0.0
        %1805 = vmatprep.subr.mxu0 0.0
        %1806 = vmatpush1.msra.mxu0 0.0
        %1807 = vmatprep.mubr.f32.mxu0 0.0
        %1808 = vmatmul.mubr.f32.gmra.mrb[0].mxu0 %v1735
        %v1809 = vpop.f32.mrb[0].mxu0
        %v1810 = vadd.f32 0.0, %v1809
        %v1811 = vpop.f32.mrb[0].mxu0
        %1812 = vmatprep.mubr.f32.mxu0 0.0
        %1813 = vmatmul.mubr.f32.gmra.mrb[0].mxu0 %v1738
        %v1814 = vpop.f32.mrb[0].mxu0
        %v1815 = vadd.f32 0.0, %v1814
        %v1816 = vpop.f32.mrb[0].mxu0
        %1817 = vdwg.mxu0
        %s1818 = scalar_lea.vmem [#allocation7], 48
        %v1819 = vld [vmem:[%s1818] sm:$0xff]
        %v1820 = vld [vmem:[%s1818 + $0x8] sm:$0xff]
        %v1821 = vmul.f32 %v1819, %v1618
        %v1822 = vmul.f32 %v1820, %v1619
        %v1823 = vadd.f32 %v1821, %v1810
        %v1824 = vadd.f32 %v1822, %v1815
        %v1826 = vsel %vm762, %v1699, 0
        %1828 = vmatprep.subr.mxu0 0.0
        %1829 = vmatpush1.msra.mxu0 %v1823
        %1830 = vmatprep.subr.mxu0 0.0
        %1831 = vmatpush1.msra.mxu0 %v1824
        %1832 = vmatprep.subr.mxu0 0.0
        %1833 = vmatpush1.msra.mxu0 0.0
        %1834 = vmatprep.subr.mxu0 0.0
        %1835 = vmatpush1.msra.mxu0 0.0
        %1836 = vmatprep.subr.mxu0 0.0
        %1837 = vmatpush1.msra.mxu0 0.0
        %1838 = vmatprep.subr.mxu0 0.0
        %1839 = vmatpush1.msra.mxu0 0.0
        %1840 = vmatprep.subr.mxu0 0.0
        %1841 = vmatpush1.msra.mxu0 0.0
        %1842 = vmatprep.subr.mxu0 0.0
        %1843 = vmatpush1.msra.mxu0 0.0
        %1844 = vmatprep.subr.mxu0 0.0
        %1845 = vmatpush1.msra.mxu0 0.0
        %1846 = vmatprep.subr.mxu0 0.0
        %1847 = vmatpush1.msra.mxu0 0.0
        %1848 = vmatprep.subr.mxu0 0.0
        %1849 = vmatpush1.msra.mxu0 0.0
        %1850 = vmatprep.subr.mxu0 0.0
        %1851 = vmatpush1.msra.mxu0 0.0
        %1852 = vmatprep.subr.mxu0 0.0
        %1853 = vmatpush1.msra.mxu0 0.0
        %1854 = vmatprep.subr.mxu0 0.0
        %1855 = vmatpush1.msra.mxu0 0.0
        %1856 = vmatprep.subr.mxu0 0.0
        %1857 = vmatpush1.msra.mxu0 0.0
        %1858 = vmatprep.subr.mxu0 0.0
        %1859 = vmatpush1.msra.mxu0 0.0
        %1860 = vmatprep.subr.mxu0 0.0
        %1861 = vmatpush1.msra.mxu0 0.0
        %1862 = vmatprep.subr.mxu0 0.0
        %1863 = vmatpush1.msra.mxu0 0.0
        %1864 = vmatprep.subr.mxu0 0.0
        %1865 = vmatpush1.msra.mxu0 0.0
        %1866 = vmatprep.subr.mxu0 0.0
        %1867 = vmatpush1.msra.mxu0 0.0
        %1868 = vmatprep.subr.mxu0 0.0
        %1869 = vmatpush1.msra.mxu0 0.0
        %1870 = vmatprep.subr.mxu0 0.0
        %1871 = vmatpush1.msra.mxu0 0.0
        %1872 = vmatprep.subr.mxu0 0.0
        %1873 = vmatpush1.msra.mxu0 0.0
        %1874 = vmatprep.subr.mxu0 0.0
        %1875 = vmatpush1.msra.mxu0 0.0
        %1876 = vmatprep.subr.mxu0 0.0
        %1877 = vmatpush1.msra.mxu0 0.0
        %1878 = vmatprep.subr.mxu0 0.0
        %1879 = vmatpush1.msra.mxu0 0.0
        %1880 = vmatprep.subr.mxu0 0.0
        %1881 = vmatpush1.msra.mxu0 0.0
        %1882 = vmatprep.subr.mxu0 0.0
        %1883 = vmatpush1.msra.mxu0 0.0
        %1884 = vmatprep.subr.mxu0 0.0
        %1885 = vmatpush1.msra.mxu0 0.0
        %1886 = vmatprep.subr.mxu0 0.0
        %1887 = vmatpush1.msra.mxu0 0.0
        %1888 = vmatprep.subr.mxu0 0.0
        %1889 = vmatpush1.msra.mxu0 0.0
        %1890 = vmatprep.subr.mxu0 0.0
        %1891 = vmatpush1.msra.mxu0 0.0
        %1892 = vmatprep.mubr.f32.mxu0 0.0
        %1893 = vmatmul.mubr.f32.gmra.mrb[0].mxu0 %v1826
        %v1894 = vpop.f32.mrb[0].mxu0
        %v1895 = vadd.f32 0.0, %v1894
        %v1896 = vpop.f32.mrb[0].mxu0
        %1897 = vdwg.mxu0
        %s1898 = scalar_lea.vmem [#allocation6], %s1695
        %1899 = vst [vmem:[%s1898] sm:$0x1] %v1895
        %s1900 = sadd.s32 %s923, 4
        %s1901 = scalar_lea.vmem [#allocation4], %s1900
        %v1902 = vld [vmem:[%s1901] sm:$0x1]
        %s1903 = scalar_lea.vmem [#allocation5], %s1900
        %v1904 = vld [vmem:[%s1903] sm:$0x1]
        %s1905 = scalar_lea.vmem [#allocation3], %s1900
        %v1906 = vld [vmem:[%s1905] sm:$0x1]
        %1907 = vxpose.xlu0.b32.start [1/16] %v1902, 128
        %1908 = vxpose.xlu0.b32.cont [2/16] 0.0, 128
        %1909 = vxpose.xlu0.b32.cont [3/16] 0.0, 128
        %1910 = vxpose.xlu0.b32.cont [4/16] 0.0, 128
        %1911 = vxpose.xlu0.b32.cont [5/16] 0.0, 128
        %1912 = vxpose.xlu0.b32.cont [6/16] 0.0, 128
        %1913 = vxpose.xlu0.b32.cont [7/16] 0.0, 128
        %1914 = vxpose.xlu0.b32.cont [8/16] 0.0, 128
        %1915 = vxpose.xlu0.b32.cont [9/16] 0.0, 128
        %1916 = vxpose.xlu0.b32.cont [10/16] 0.0, 128
        %1917 = vxpose.xlu0.b32.cont [11/16] 0.0, 128
        %1918 = vxpose.xlu0.b32.cont [12/16] 0.0, 128
        %1919 = vxpose.xlu0.b32.cont [13/16] 0.0, 128
        %1920 = vxpose.xlu0.b32.cont [14/16] 0.0, 128
        %1921 = vxpose.xlu0.b32.cont [15/16] 0.0, 128
        %1922 = vxpose.xlu0.b32.end [16/16] 0.0, 128
        %v1923 = vpop.trf.xlu0
        %v1924 = vpop.trf.xlu0
        %v1925 = vpop.trf.xlu0
        %v1926 = vpop.trf.xlu0
        %v1927 = vpop.trf.xlu0
        %v1928 = vpop.trf.xlu0
        %v1929 = vpop.trf.xlu0
        %v1930 = vpop.trf.xlu0
        %v1931 = vpop.trf.xlu0
        %v1932 = vpop.trf.xlu0
        %v1933 = vpop.trf.xlu0
        %v1934 = vpop.trf.xlu0
        %v1935 = vpop.trf.xlu0
        %v1936 = vpop.trf.xlu0
        %v1937 = vpop.trf.xlu0
        %v1938 = vpop.trf.xlu0
        %v1940 = vsel %vm1118, %v1923, 0
        %v1943 = vsel %vm1118, %v1924, 0
        %v1946 = vsel %vm1125, %v1906, 0
        %1948 = vmatprep.subr.mxu0 0.0
        %1949 = vmatpush1.msra.mxu0 %v1946
        %1950 = vmatprep.subr.mxu0 0.0
        %1951 = vmatpush1.msra.mxu0 0.0
        %1952 = vmatprep.subr.mxu0 0.0
        %1953 = vmatpush1.msra.mxu0 0.0
        %1954 = vmatprep.subr.mxu0 0.0
        %1955 = vmatpush1.msra.mxu0 0.0
        %1956 = vmatprep.subr.mxu0 0.0
        %1957 = vmatpush1.msra.mxu0 0.0
        %1958 = vmatprep.subr.mxu0 0.0
        %1959 = vmatpush1.msra.mxu0 0.0
        %1960 = vmatprep.subr.mxu0 0.0
        %1961 = vmatpush1.msra.mxu0 0.0
        %1962 = vmatprep.subr.mxu0 0.0
        %1963 = vmatpush1.msra.mxu0 0.0
        %1964 = vmatprep.subr.mxu0 0.0
        %1965 = vmatpush1.msra.mxu0 0.0
        %1966 = vmatprep.subr.mxu0 0.0
        %1967 = vmatpush1.msra.mxu0 0.0
        %1968 = vmatprep.subr.mxu0 0.0
        %1969 = vmatpush1.msra.mxu0 0.0
        %1970 = vmatprep.subr.mxu0 0.0
        %1971 = vmatpush1.msra.mxu0 0.0
        %1972 = vmatprep.subr.mxu0 0.0
        %1973 = vmatpush1.msra.mxu0 0.0
        %1974 = vmatprep.subr.mxu0 0.0
        %1975 = vmatpush1.msra.mxu0 0.0
        %1976 = vmatprep.subr.mxu0 0.0
        %1977 = vmatpush1.msra.mxu0 0.0
        %1978 = vmatprep.subr.mxu0 0.0
        %1979 = vmatpush1.msra.mxu0 0.0
        %1980 = vmatprep.subr.mxu0 0.0
        %1981 = vmatpush1.msra.mxu0 0.0
        %1982 = vmatprep.subr.mxu0 0.0
        %1983 = vmatpush1.msra.mxu0 0.0
        %1984 = vmatprep.subr.mxu0 0.0
        %1985 = vmatpush1.msra.mxu0 0.0
        %1986 = vmatprep.subr.mxu0 0.0
        %1987 = vmatpush1.msra.mxu0 0.0
        %1988 = vmatprep.subr.mxu0 0.0
        %1989 = vmatpush1.msra.mxu0 0.0
        %1990 = vmatprep.subr.mxu0 0.0
        %1991 = vmatpush1.msra.mxu0 0.0
        %1992 = vmatprep.subr.mxu0 0.0
        %1993 = vmatpush1.msra.mxu0 0.0
        %1994 = vmatprep.subr.mxu0 0.0
        %1995 = vmatpush1.msra.mxu0 0.0
        %1996 = vmatprep.subr.mxu0 0.0
        %1997 = vmatpush1.msra.mxu0 0.0
        %1998 = vmatprep.subr.mxu0 0.0
        %1999 = vmatpush1.msra.mxu0 0.0
        %2000 = vmatprep.subr.mxu0 0.0
        %2001 = vmatpush1.msra.mxu0 0.0
        %2002 = vmatprep.subr.mxu0 0.0
        %2003 = vmatpush1.msra.mxu0 0.0
        %2004 = vmatprep.subr.mxu0 0.0
        %2005 = vmatpush1.msra.mxu0 0.0
        %2006 = vmatprep.subr.mxu0 0.0
        %2007 = vmatpush1.msra.mxu0 0.0
        %2008 = vmatprep.subr.mxu0 0.0
        %2009 = vmatpush1.msra.mxu0 0.0
        %2010 = vmatprep.subr.mxu0 0.0
        %2011 = vmatpush1.msra.mxu0 0.0
        %2012 = vmatprep.mubr.f32.mxu0 0.0
        %2013 = vmatmul.mubr.f32.gmra.mrb[0].mxu0 %v1940
        %v2014 = vpop.f32.mrb[0].mxu0
        %v2015 = vadd.f32 0.0, %v2014
        %v2016 = vpop.f32.mrb[0].mxu0
        %2017 = vmatprep.mubr.f32.mxu0 0.0
        %2018 = vmatmul.mubr.f32.gmra.mrb[0].mxu0 %v1943
        %v2019 = vpop.f32.mrb[0].mxu0
        %v2020 = vadd.f32 0.0, %v2019
        %v2021 = vpop.f32.mrb[0].mxu0
        %2022 = vdwg.mxu0
        %s2023 = scalar_lea.vmem [#allocation7], 64
        %v2024 = vld [vmem:[%s2023] sm:$0xff]
        %v2025 = vld [vmem:[%s2023 + $0x8] sm:$0xff]
        %v2026 = vmul.f32 %v2024, %v1823
        %v2027 = vmul.f32 %v2025, %v1824
        %v2028 = vadd.f32 %v2026, %v2015
        %v2029 = vadd.f32 %v2027, %v2020
        %v2031 = vsel %vm762, %v1904, 0
        %2033 = vmatprep.subr.mxu0 0.0
        %2034 = vmatpush1.msra.mxu0 %v2028
        %2035 = vmatprep.subr.mxu0 0.0
        %2036 = vmatpush1.msra.mxu0 %v2029
        %2037 = vmatprep.subr.mxu0 0.0
        %2038 = vmatpush1.msra.mxu0 0.0
        %2039 = vmatprep.subr.mxu0 0.0
        %2040 = vmatpush1.msra.mxu0 0.0
        %2041 = vmatprep.subr.mxu0 0.0
        %2042 = vmatpush1.msra.mxu0 0.0
        %2043 = vmatprep.subr.mxu0 0.0
        %2044 = vmatpush1.msra.mxu0 0.0
        %2045 = vmatprep.subr.mxu0 0.0
        %2046 = vmatpush1.msra.mxu0 0.0
        %2047 = vmatprep.subr.mxu0 0.0
        %2048 = vmatpush1.msra.mxu0 0.0
        %2049 = vmatprep.subr.mxu0 0.0
        %2050 = vmatpush1.msra.mxu0 0.0
        %2051 = vmatprep.subr.mxu0 0.0
        %2052 = vmatpush1.msra.mxu0 0.0
        %2053 = vmatprep.subr.mxu0 0.0
        %2054 = vmatpush1.msra.mxu0 0.0
        %2055 = vmatprep.subr.mxu0 0.0
        %2056 = vmatpush1.msra.mxu0 0.0
        %2057 = vmatprep.subr.mxu0 0.0
        %2058 = vmatpush1.msra.mxu0 0.0
        %2059 = vmatprep.subr.mxu0 0.0
        %2060 = vmatpush1.msra.mxu0 0.0
        %2061 = vmatprep.subr.mxu0 0.0
        %2062 = vmatpush1.msra.mxu0 0.0
        %2063 = vmatprep.subr.mxu0 0.0
        %2064 = vmatpush1.msra.mxu0 0.0
        %2065 = vmatprep.subr.mxu0 0.0
        %2066 = vmatpush1.msra.mxu0 0.0
        %2067 = vmatprep.subr.mxu0 0.0
        %2068 = vmatpush1.msra.mxu0 0.0
        %2069 = vmatprep.subr.mxu0 0.0
        %2070 = vmatpush1.msra.mxu0 0.0
        %2071 = vmatprep.subr.mxu0 0.0
        %2072 = vmatpush1.msra.mxu0 0.0
        %2073 = vmatprep.subr.mxu0 0.0
        %2074 = vmatpush1.msra.mxu0 0.0
        %2075 = vmatprep.subr.mxu0 0.0
        %2076 = vmatpush1.msra.mxu0 0.0
        %2077 = vmatprep.subr.mxu0 0.0
        %2078 = vmatpush1.msra.mxu0 0.0
        %2079 = vmatprep.subr.mxu0 0.0
        %2080 = vmatpush1.msra.mxu0 0.0
        %2081 = vmatprep.subr.mxu0 0.0
        %2082 = vmatpush1.msra.mxu0 0.0
        %2083 = vmatprep.subr.mxu0 0.0
        %2084 = vmatpush1.msra.mxu0 0.0
        %2085 = vmatprep.subr.mxu0 0.0
        %2086 = vmatpush1.msra.mxu0 0.0
        %2087 = vmatprep.subr.mxu0 0.0
        %2088 = vmatpush1.msra.mxu0 0.0
        %2089 = vmatprep.subr.mxu0 0.0
        %2090 = vmatpush1.msra.mxu0 0.0
        %2091 = vmatprep.subr.mxu0 0.0
        %2092 = vmatpush1.msra.mxu0 0.0
        %2093 = vmatprep.subr.mxu0 0.0
        %2094 = vmatpush1.msra.mxu0 0.0
        %2095 = vmatprep.subr.mxu0 0.0
        %2096 = vmatpush1.msra.mxu0 0.0
        %2097 = vmatprep.mubr.f32.mxu0 0.0
        %2098 = vmatmul.mubr.f32.gmra.mrb[0].mxu0 %v2031
        %v2099 = vpop.f32.mrb[0].mxu0
        %v2100 = vadd.f32 0.0, %v2099
        %v2101 = vpop.f32.mrb[0].mxu0
        %2102 = vdwg.mxu0
        %s2103 = scalar_lea.vmem [#allocation6], %s1900
        %2104 = vst [vmem:[%s2103] sm:$0x1] %v2100
        %s2105 = sadd.s32 %s923, 5
        %s2106 = scalar_lea.vmem [#allocation4], %s2105
        %v2107 = vld [vmem:[%s2106] sm:$0x1]
        %s2108 = scalar_lea.vmem [#allocation5], %s2105
        %v2109 = vld [vmem:[%s2108] sm:$0x1]
        %s2110 = scalar_lea.vmem [#allocation3], %s2105
        %v2111 = vld [vmem:[%s2110] sm:$0x1]
        %2112 = vxpose.xlu0.b32.start [1/16] %v2107, 128
        %2113 = vxpose.xlu0.b32.cont [2/16] 0.0, 128
        %2114 = vxpose.xlu0.b32.cont [3/16] 0.0, 128
        %2115 = vxpose.xlu0.b32.cont [4/16] 0.0, 128
        %2116 = vxpose.xlu0.b32.cont [5/16] 0.0, 128
        %2117 = vxpose.xlu0.b32.cont [6/16] 0.0, 128
        %2118 = vxpose.xlu0.b32.cont [7/16] 0.0, 128
        %2119 = vxpose.xlu0.b32.cont [8/16] 0.0, 128
        %2120 = vxpose.xlu0.b32.cont [9/16] 0.0, 128
        %2121 = vxpose.xlu0.b32.cont [10/16] 0.0, 128
        %2122 = vxpose.xlu0.b32.cont [11/16] 0.0, 128
        %2123 = vxpose.xlu0.b32.cont [12/16] 0.0, 128
        %2124 = vxpose.xlu0.b32.cont [13/16] 0.0, 128
        %2125 = vxpose.xlu0.b32.cont [14/16] 0.0, 128
        %2126 = vxpose.xlu0.b32.cont [15/16] 0.0, 128
        %2127 = vxpose.xlu0.b32.end [16/16] 0.0, 128
        %v2128 = vpop.trf.xlu0
        %v2129 = vpop.trf.xlu0
        %v2130 = vpop.trf.xlu0
        %v2131 = vpop.trf.xlu0
        %v2132 = vpop.trf.xlu0
        %v2133 = vpop.trf.xlu0
        %v2134 = vpop.trf.xlu0
        %v2135 = vpop.trf.xlu0
        %v2136 = vpop.trf.xlu0
        %v2137 = vpop.trf.xlu0
        %v2138 = vpop.trf.xlu0
        %v2139 = vpop.trf.xlu0
        %v2140 = vpop.trf.xlu0
        %v2141 = vpop.trf.xlu0
        %v2142 = vpop.trf.xlu0
        %v2143 = vpop.trf.xlu0
        %v2145 = vsel %vm1118, %v2128, 0
        %v2148 = vsel %vm1118, %v2129, 0
        %v2151 = vsel %vm1125, %v2111, 0
        %2153 = vmatprep.subr.mxu0 0.0
        %2154 = vmatpush1.msra.mxu0 %v2151
        %2155 = vmatprep.subr.mxu0 0.0
        %2156 = vmatpush1.msra.mxu0 0.0
        %2157 = vmatprep.subr.mxu0 0.0
        %2158 = vmatpush1.msra.mxu0 0.0
        %2159 = vmatprep.subr.mxu0 0.0
        %2160 = vmatpush1.msra.mxu0 0.0
        %2161 = vmatprep.subr.mxu0 0.0
        %2162 = vmatpush1.msra.mxu0 0.0
        %2163 = vmatprep.subr.mxu0 0.0
        %2164 = vmatpush1.msra.mxu0 0.0
        %2165 = vmatprep.subr.mxu0 0.0
        %2166 = vmatpush1.msra.mxu0 0.0
        %2167 = vmatprep.subr.mxu0 0.0
        %2168 = vmatpush1.msra.mxu0 0.0
        %2169 = vmatprep.subr.mxu0 0.0
        %2170 = vmatpush1.msra.mxu0 0.0
        %2171 = vmatprep.subr.mxu0 0.0
        %2172 = vmatpush1.msra.mxu0 0.0
        %2173 = vmatprep.subr.mxu0 0.0
        %2174 = vmatpush1.msra.mxu0 0.0
        %2175 = vmatprep.subr.mxu0 0.0
        %2176 = vmatpush1.msra.mxu0 0.0
        %2177 = vmatprep.subr.mxu0 0.0
        %2178 = vmatpush1.msra.mxu0 0.0
        %2179 = vmatprep.subr.mxu0 0.0
        %2180 = vmatpush1.msra.mxu0 0.0
        %2181 = vmatprep.subr.mxu0 0.0
        %2182 = vmatpush1.msra.mxu0 0.0
        %2183 = vmatprep.subr.mxu0 0.0
        %2184 = vmatpush1.msra.mxu0 0.0
        %2185 = vmatprep.subr.mxu0 0.0
        %2186 = vmatpush1.msra.mxu0 0.0
        %2187 = vmatprep.subr.mxu0 0.0
        %2188 = vmatpush1.msra.mxu0 0.0
        %2189 = vmatprep.subr.mxu0 0.0
        %2190 = vmatpush1.msra.mxu0 0.0
        %2191 = vmatprep.subr.mxu0 0.0
        %2192 = vmatpush1.msra.mxu0 0.0
        %2193 = vmatprep.subr.mxu0 0.0
        %2194 = vmatpush1.msra.mxu0 0.0
        %2195 = vmatprep.subr.mxu0 0.0
        %2196 = vmatpush1.msra.mxu0 0.0
        %2197 = vmatprep.subr.mxu0 0.0
        %2198 = vmatpush1.msra.mxu0 0.0
        %2199 = vmatprep.subr.mxu0 0.0
        %2200 = vmatpush1.msra.mxu0 0.0
        %2201 = vmatprep.subr.mxu0 0.0
        %2202 = vmatpush1.msra.mxu0 0.0
        %2203 = vmatprep.subr.mxu0 0.0
        %2204 = vmatpush1.msra.mxu0 0.0
        %2205 = vmatprep.subr.mxu0 0.0
        %2206 = vmatpush1.msra.mxu0 0.0
        %2207 = vmatprep.subr.mxu0 0.0
        %2208 = vmatpush1.msra.mxu0 0.0
        %2209 = vmatprep.subr.mxu0 0.0
        %2210 = vmatpush1.msra.mxu0 0.0
        %2211 = vmatprep.subr.mxu0 0.0
        %2212 = vmatpush1.msra.mxu0 0.0
        %2213 = vmatprep.subr.mxu0 0.0
        %2214 = vmatpush1.msra.mxu0 0.0
        %2215 = vmatprep.subr.mxu0 0.0
        %2216 = vmatpush1.msra.mxu0 0.0
        %2217 = vmatprep.mubr.f32.mxu0 0.0
        %2218 = vmatmul.mubr.f32.gmra.mrb[0].mxu0 %v2145
        %v2219 = vpop.f32.mrb[0].mxu0
        %v2220 = vadd.f32 0.0, %v2219
        %v2221 = vpop.f32.mrb[0].mxu0
        %2222 = vmatprep.mubr.f32.mxu0 0.0
        %2223 = vmatmul.mubr.f32.gmra.mrb[0].mxu0 %v2148
        %v2224 = vpop.f32.mrb[0].mxu0
        %v2225 = vadd.f32 0.0, %v2224
        %v2226 = vpop.f32.mrb[0].mxu0
        %2227 = vdwg.mxu0
        %s2228 = scalar_lea.vmem [#allocation7], 80
        %v2229 = vld [vmem:[%s2228] sm:$0xff]
        %v2230 = vld [vmem:[%s2228 + $0x8] sm:$0xff]
        %v2231 = vmul.f32 %v2229, %v2028
        %v2232 = vmul.f32 %v2230, %v2029
        %v2233 = vadd.f32 %v2231, %v2220
        %v2234 = vadd.f32 %v2232, %v2225
        %v2236 = vsel %vm762, %v2109, 0
        %2238 = vmatprep.subr.mxu0 0.0
        %2239 = vmatpush1.msra.mxu0 %v2233
        %2240 = vmatprep.subr.mxu0 0.0
        %2241 = vmatpush1.msra.mxu0 %v2234
        %2242 = vmatprep.subr.mxu0 0.0
        %2243 = vmatpush1.msra.mxu0 0.0
        %2244 = vmatprep.subr.mxu0 0.0
        %2245 = vmatpush1.msra.mxu0 0.0
        %2246 = vmatprep.subr.mxu0 0.0
        %2247 = vmatpush1.msra.mxu0 0.0
        %2248 = vmatprep.subr.mxu0 0.0
        %2249 = vmatpush1.msra.mxu0 0.0
        %2250 = vmatprep.subr.mxu0 0.0
        %2251 = vmatpush1.msra.mxu0 0.0
        %2252 = vmatprep.subr.mxu0 0.0
        %2253 = vmatpush1.msra.mxu0 0.0
        %2254 = vmatprep.subr.mxu0 0.0
        %2255 = vmatpush1.msra.mxu0 0.0
        %2256 = vmatprep.subr.mxu0 0.0
        %2257 = vmatpush1.msra.mxu0 0.0
        %2258 = vmatprep.subr.mxu0 0.0
        %2259 = vmatpush1.msra.mxu0 0.0
        %2260 = vmatprep.subr.mxu0 0.0
        %2261 = vmatpush1.msra.mxu0 0.0
        %2262 = vmatprep.subr.mxu0 0.0
        %2263 = vmatpush1.msra.mxu0 0.0
        %2264 = vmatprep.subr.mxu0 0.0
        %2265 = vmatpush1.msra.mxu0 0.0
        %2266 = vmatprep.subr.mxu0 0.0
        %2267 = vmatpush1.msra.mxu0 0.0
        %2268 = vmatprep.subr.mxu0 0.0
        %2269 = vmatpush1.msra.mxu0 0.0
        %2270 = vmatprep.subr.mxu0 0.0
        %2271 = vmatpush1.msra.mxu0 0.0
        %2272 = vmatprep.subr.mxu0 0.0
        %2273 = vmatpush1.msra.mxu0 0.0
        %2274 = vmatprep.subr.mxu0 0.0
        %2275 = vmatpush1.msra.mxu0 0.0
        %2276 = vmatprep.subr.mxu0 0.0
        %2277 = vmatpush1.msra.mxu0 0.0
        %2278 = vmatprep.subr.mxu0 0.0
        %2279 = vmatpush1.msra.mxu0 0.0
        %2280 = vmatprep.subr.mxu0 0.0
        %2281 = vmatpush1.msra.mxu0 0.0
        %2282 = vmatprep.subr.mxu0 0.0
        %2283 = vmatpush1.msra.mxu0 0.0
        %2284 = vmatprep.subr.mxu0 0.0
        %2285 = vmatpush1.msra.mxu0 0.0
        %2286 = vmatprep.subr.mxu0 0.0
        %2287 = vmatpush1.msra.mxu0 0.0
        %2288 = vmatprep.subr.mxu0 0.0
        %2289 = vmatpush1.msra.mxu0 0.0
        %2290 = vmatprep.subr.mxu0 0.0
        %2291 = vmatpush1.msra.mxu0 0.0
        %2292 = vmatprep.subr.mxu0 0.0
        %2293 = vmatpush1.msra.mxu0 0.0
        %2294 = vmatprep.subr.mxu0 0.0
        %2295 = vmatpush1.msra.mxu0 0.0
        %2296 = vmatprep.subr.mxu0 0.0
        %2297 = vmatpush1.msra.mxu0 0.0
        %2298 = vmatprep.subr.mxu0 0.0
        %2299 = vmatpush1.msra.mxu0 0.0
        %2300 = vmatprep.subr.mxu0 0.0
        %2301 = vmatpush1.msra.mxu0 0.0
        %2302 = vmatprep.mubr.f32.mxu0 0.0
        %2303 = vmatmul.mubr.f32.gmra.mrb[0].mxu0 %v2236
        %v2304 = vpop.f32.mrb[0].mxu0
        %v2305 = vadd.f32 0.0, %v2304
        %v2306 = vpop.f32.mrb[0].mxu0
        %2307 = vdwg.mxu0
        %s2308 = scalar_lea.vmem [#allocation6], %s2105
        %2309 = vst [vmem:[%s2308] sm:$0x1] %v2305
        %s2310 = sadd.s32 %s923, 6
        %s2311 = scalar_lea.vmem [#allocation4], %s2310
        %v2312 = vld [vmem:[%s2311] sm:$0x1]
        %s2313 = scalar_lea.vmem [#allocation5], %s2310
        %v2314 = vld [vmem:[%s2313] sm:$0x1]
        %s2315 = scalar_lea.vmem [#allocation3], %s2310
        %v2316 = vld [vmem:[%s2315] sm:$0x1]
        %2317 = vxpose.xlu0.b32.start [1/16] %v2312, 128
        %2318 = vxpose.xlu0.b32.cont [2/16] 0.0, 128
        %2319 = vxpose.xlu0.b32.cont [3/16] 0.0, 128
        %2320 = vxpose.xlu0.b32.cont [4/16] 0.0, 128
        %2321 = vxpose.xlu0.b32.cont [5/16] 0.0, 128
        %2322 = vxpose.xlu0.b32.cont [6/16] 0.0, 128
        %2323 = vxpose.xlu0.b32.cont [7/16] 0.0, 128
        %2324 = vxpose.xlu0.b32.cont [8/16] 0.0, 128
        %2325 = vxpose.xlu0.b32.cont [9/16] 0.0, 128
        %2326 = vxpose.xlu0.b32.cont [10/16] 0.0, 128
        %2327 = vxpose.xlu0.b32.cont [11/16] 0.0, 128
        %2328 = vxpose.xlu0.b32.cont [12/16] 0.0, 128
        %2329 = vxpose.xlu0.b32.cont [13/16] 0.0, 128
        %2330 = vxpose.xlu0.b32.cont [14/16] 0.0, 128
        %2331 = vxpose.xlu0.b32.cont [15/16] 0.0, 128
        %2332 = vxpose.xlu0.b32.end [16/16] 0.0, 128
        %v2333 = vpop.trf.xlu0
        %v2334 = vpop.trf.xlu0
        %v2335 = vpop.trf.xlu0
        %v2336 = vpop.trf.xlu0
        %v2337 = vpop.trf.xlu0
        %v2338 = vpop.trf.xlu0
        %v2339 = vpop.trf.xlu0
        %v2340 = vpop.trf.xlu0
        %v2341 = vpop.trf.xlu0
        %v2342 = vpop.trf.xlu0
        %v2343 = vpop.trf.xlu0
        %v2344 = vpop.trf.xlu0
        %v2345 = vpop.trf.xlu0
        %v2346 = vpop.trf.xlu0
        %v2347 = vpop.trf.xlu0
        %v2348 = vpop.trf.xlu0
        %v2350 = vsel %vm1118, %v2333, 0
        %v2353 = vsel %vm1118, %v2334, 0
        %v2356 = vsel %vm1125, %v2316, 0
        %2358 = vmatprep.subr.mxu0 0.0
        %2359 = vmatpush1.msra.mxu0 %v2356
        %2360 = vmatprep.subr.mxu0 0.0
        %2361 = vmatpush1.msra.mxu0 0.0
        %2362 = vmatprep.subr.mxu0 0.0
        %2363 = vmatpush1.msra.mxu0 0.0
        %2364 = vmatprep.subr.mxu0 0.0
        %2365 = vmatpush1.msra.mxu0 0.0
        %2366 = vmatprep.subr.mxu0 0.0
        %2367 = vmatpush1.msra.mxu0 0.0
        %2368 = vmatprep.subr.mxu0 0.0
        %2369 = vmatpush1.msra.mxu0 0.0
        %2370 = vmatprep.subr.mxu0 0.0
        %2371 = vmatpush1.msra.mxu0 0.0
        %2372 = vmatprep.subr.mxu0 0.0
        %2373 = vmatpush1.msra.mxu0 0.0
        %2374 = vmatprep.subr.mxu0 0.0
        %2375 = vmatpush1.msra.mxu0 0.0
        %2376 = vmatprep.subr.mxu0 0.0
        %2377 = vmatpush1.msra.mxu0 0.0
        %2378 = vmatprep.subr.mxu0 0.0
        %2379 = vmatpush1.msra.mxu0 0.0
        %2380 = vmatprep.subr.mxu0 0.0
        %2381 = vmatpush1.msra.mxu0 0.0
        %2382 = vmatprep.subr.mxu0 0.0
        %2383 = vmatpush1.msra.mxu0 0.0
        %2384 = vmatprep.subr.mxu0 0.0
        %2385 = vmatpush1.msra.mxu0 0.0
        %2386 = vmatprep.subr.mxu0 0.0
        %2387 = vmatpush1.msra.mxu0 0.0
        %2388 = vmatprep.subr.mxu0 0.0
        %2389 = vmatpush1.msra.mxu0 0.0
        %2390 = vmatprep.subr.mxu0 0.0
        %2391 = vmatpush1.msra.mxu0 0.0
        %2392 = vmatprep.subr.mxu0 0.0
        %2393 = vmatpush1.msra.mxu0 0.0
        %2394 = vmatprep.subr.mxu0 0.0
        %2395 = vmatpush1.msra.mxu0 0.0
        %2396 = vmatprep.subr.mxu0 0.0
        %2397 = vmatpush1.msra.mxu0 0.0
        %2398 = vmatprep.subr.mxu0 0.0
        %2399 = vmatpush1.msra.mxu0 0.0
        %2400 = vmatprep.subr.mxu0 0.0
        %2401 = vmatpush1.msra.mxu0 0.0
        %2402 = vmatprep.subr.mxu0 0.0
        %2403 = vmatpush1.msra.mxu0 0.0
        %2404 = vmatprep.subr.mxu0 0.0
        %2405 = vmatpush1.msra.mxu0 0.0
        %2406 = vmatprep.subr.mxu0 0.0
        %2407 = vmatpush1.msra.mxu0 0.0
        %2408 = vmatprep.subr.mxu0 0.0
        %2409 = vmatpush1.msra.mxu0 0.0
        %2410 = vmatprep.subr.mxu0 0.0
        %2411 = vmatpush1.msra.mxu0 0.0
        %2412 = vmatprep.subr.mxu0 0.0
        %2413 = vmatpush1.msra.mxu0 0.0
        %2414 = vmatprep.subr.mxu0 0.0
        %2415 = vmatpush1.msra.mxu0 0.0
        %2416 = vmatprep.subr.mxu0 0.0
        %2417 = vmatpush1.msra.mxu0 0.0
        %2418 = vmatprep.subr.mxu0 0.0
        %2419 = vmatpush1.msra.mxu0 0.0
        %2420 = vmatprep.subr.mxu0 0.0
        %2421 = vmatpush1.msra.mxu0 0.0
        %2422 = vmatprep.mubr.f32.mxu0 0.0
        %2423 = vmatmul.mubr.f32.gmra.mrb[0].mxu0 %v2350
        %v2424 = vpop.f32.mrb[0].mxu0
        %v2425 = vadd.f32 0.0, %v2424
        %v2426 = vpop.f32.mrb[0].mxu0
        %2427 = vmatprep.mubr.f32.mxu0 0.0
        %2428 = vmatmul.mubr.f32.gmra.mrb[0].mxu0 %v2353
        %v2429 = vpop.f32.mrb[0].mxu0
        %v2430 = vadd.f32 0.0, %v2429
        %v2431 = vpop.f32.mrb[0].mxu0
        %2432 = vdwg.mxu0
        %s2433 = scalar_lea.vmem [#allocation7], 96
        %v2434 = vld [vmem:[%s2433] sm:$0xff]
        %v2435 = vld [vmem:[%s2433 + $0x8] sm:$0xff]
        %v2436 = vmul.f32 %v2434, %v2233
        %v2437 = vmul.f32 %v2435, %v2234
        %v2438 = vadd.f32 %v2436, %v2425
        %v2439 = vadd.f32 %v2437, %v2430
        %v2441 = vsel %vm762, %v2314, 0
        %2443 = vmatprep.subr.mxu0 0.0
        %2444 = vmatpush1.msra.mxu0 %v2438
        %2445 = vmatprep.subr.mxu0 0.0
        %2446 = vmatpush1.msra.mxu0 %v2439
        %2447 = vmatprep.subr.mxu0 0.0
        %2448 = vmatpush1.msra.mxu0 0.0
        %2449 = vmatprep.subr.mxu0 0.0
        %2450 = vmatpush1.msra.mxu0 0.0
        %2451 = vmatprep.subr.mxu0 0.0
        %2452 = vmatpush1.msra.mxu0 0.0
        %2453 = vmatprep.subr.mxu0 0.0
        %2454 = vmatpush1.msra.mxu0 0.0
        %2455 = vmatprep.subr.mxu0 0.0
        %2456 = vmatpush1.msra.mxu0 0.0
        %2457 = vmatprep.subr.mxu0 0.0
        %2458 = vmatpush1.msra.mxu0 0.0
        %2459 = vmatprep.subr.mxu0 0.0
        %2460 = vmatpush1.msra.mxu0 0.0
        %2461 = vmatprep.subr.mxu0 0.0
        %2462 = vmatpush1.msra.mxu0 0.0
        %2463 = vmatprep.subr.mxu0 0.0
        %2464 = vmatpush1.msra.mxu0 0.0
        %2465 = vmatprep.subr.mxu0 0.0
        %2466 = vmatpush1.msra.mxu0 0.0
        %2467 = vmatprep.subr.mxu0 0.0
        %2468 = vmatpush1.msra.mxu0 0.0
        %2469 = vmatprep.subr.mxu0 0.0
        %2470 = vmatpush1.msra.mxu0 0.0
        %2471 = vmatprep.subr.mxu0 0.0
        %2472 = vmatpush1.msra.mxu0 0.0
        %2473 = vmatprep.subr.mxu0 0.0
        %2474 = vmatpush1.msra.mxu0 0.0
        %2475 = vmatprep.subr.mxu0 0.0
        %2476 = vmatpush1.msra.mxu0 0.0
        %2477 = vmatprep.subr.mxu0 0.0
        %2478 = vmatpush1.msra.mxu0 0.0
        %2479 = vmatprep.subr.mxu0 0.0
        %2480 = vmatpush1.msra.mxu0 0.0
        %2481 = vmatprep.subr.mxu0 0.0
        %2482 = vmatpush1.msra.mxu0 0.0
        %2483 = vmatprep.subr.mxu0 0.0
        %2484 = vmatpush1.msra.mxu0 0.0
        %2485 = vmatprep.subr.mxu0 0.0
        %2486 = vmatpush1.msra.mxu0 0.0
        %2487 = vmatprep.subr.mxu0 0.0
        %2488 = vmatpush1.msra.mxu0 0.0
        %2489 = vmatprep.subr.mxu0 0.0
        %2490 = vmatpush1.msra.mxu0 0.0
        %2491 = vmatprep.subr.mxu0 0.0
        %2492 = vmatpush1.msra.mxu0 0.0
        %2493 = vmatprep.subr.mxu0 0.0
        %2494 = vmatpush1.msra.mxu0 0.0
        %2495 = vmatprep.subr.mxu0 0.0
        %2496 = vmatpush1.msra.mxu0 0.0
        %2497 = vmatprep.subr.mxu0 0.0
        %2498 = vmatpush1.msra.mxu0 0.0
        %2499 = vmatprep.subr.mxu0 0.0
        %2500 = vmatpush1.msra.mxu0 0.0
        %2501 = vmatprep.subr.mxu0 0.0
        %2502 = vmatpush1.msra.mxu0 0.0
        %2503 = vmatprep.subr.mxu0 0.0
        %2504 = vmatpush1.msra.mxu0 0.0
        %2505 = vmatprep.subr.mxu0 0.0
        %2506 = vmatpush1.msra.mxu0 0.0
        %2507 = vmatprep.mubr.f32.mxu0 0.0
        %2508 = vmatmul.mubr.f32.gmra.mrb[0].mxu0 %v2441
        %v2509 = vpop.f32.mrb[0].mxu0
        %v2510 = vadd.f32 0.0, %v2509
        %v2511 = vpop.f32.mrb[0].mxu0
        %2512 = vdwg.mxu0
        %s2513 = scalar_lea.vmem [#allocation6], %s2310
        %2514 = vst [vmem:[%s2513] sm:$0x1] %v2510
        %s2515 = sadd.s32 %s923, 7
        %s2516 = scalar_lea.vmem [#allocation4], %s2515
        %v2517 = vld [vmem:[%s2516] sm:$0x1]
        %s2518 = scalar_lea.vmem [#allocation5], %s2515
        %v2519 = vld [vmem:[%s2518] sm:$0x1]
        %s2520 = scalar_lea.vmem [#allocation3], %s2515
        %v2521 = vld [vmem:[%s2520] sm:$0x1]
        %2522 = vxpose.xlu0.b32.start [1/16] %v2517, 128
        %2523 = vxpose.xlu0.b32.cont [2/16] 0.0, 128
        %2524 = vxpose.xlu0.b32.cont [3/16] 0.0, 128
        %2525 = vxpose.xlu0.b32.cont [4/16] 0.0, 128
        %2526 = vxpose.xlu0.b32.cont [5/16] 0.0, 128
        %2527 = vxpose.xlu0.b32.cont [6/16] 0.0, 128
        %2528 = vxpose.xlu0.b32.cont [7/16] 0.0, 128
        %2529 = vxpose.xlu0.b32.cont [8/16] 0.0, 128
        %2530 = vxpose.xlu0.b32.cont [9/16] 0.0, 128
        %2531 = vxpose.xlu0.b32.cont [10/16] 0.0, 128
        %2532 = vxpose.xlu0.b32.cont [11/16] 0.0, 128
        %2533 = vxpose.xlu0.b32.cont [12/16] 0.0, 128
        %2534 = vxpose.xlu0.b32.cont [13/16] 0.0, 128
        %2535 = vxpose.xlu0.b32.cont [14/16] 0.0, 128
        %2536 = vxpose.xlu0.b32.cont [15/16] 0.0, 128
        %2537 = vxpose.xlu0.b32.end [16/16] 0.0, 128
        %v2538 = vpop.trf.xlu0
        %v2539 = vpop.trf.xlu0
        %v2540 = vpop.trf.xlu0
        %v2541 = vpop.trf.xlu0
        %v2542 = vpop.trf.xlu0
        %v2543 = vpop.trf.xlu0
        %v2544 = vpop.trf.xlu0
        %v2545 = vpop.trf.xlu0
        %v2546 = vpop.trf.xlu0
        %v2547 = vpop.trf.xlu0
        %v2548 = vpop.trf.xlu0
        %v2549 = vpop.trf.xlu0
        %v2550 = vpop.trf.xlu0
        %v2551 = vpop.trf.xlu0
        %v2552 = vpop.trf.xlu0
        %v2553 = vpop.trf.xlu0
        %v2555 = vsel %vm1118, %v2538, 0
        %v2558 = vsel %vm1118, %v2539, 0
        %v2561 = vsel %vm1125, %v2521, 0
        %2563 = vmatprep.subr.mxu0 0.0
        %2564 = vmatpush1.msra.mxu0 %v2561
        %2565 = vmatprep.subr.mxu0 0.0
        %2566 = vmatpush1.msra.mxu0 0.0
        %2567 = vmatprep.subr.mxu0 0.0
        %2568 = vmatpush1.msra.mxu0 0.0
        %2569 = vmatprep.subr.mxu0 0.0
        %2570 = vmatpush1.msra.mxu0 0.0
        %2571 = vmatprep.subr.mxu0 0.0
        %2572 = vmatpush1.msra.mxu0 0.0
        %2573 = vmatprep.subr.mxu0 0.0
        %2574 = vmatpush1.msra.mxu0 0.0
        %2575 = vmatprep.subr.mxu0 0.0
        %2576 = vmatpush1.msra.mxu0 0.0
        %2577 = vmatprep.subr.mxu0 0.0
        %2578 = vmatpush1.msra.mxu0 0.0
        %2579 = vmatprep.subr.mxu0 0.0
        %2580 = vmatpush1.msra.mxu0 0.0
        %2581 = vmatprep.subr.mxu0 0.0
        %2582 = vmatpush1.msra.mxu0 0.0
        %2583 = vmatprep.subr.mxu0 0.0
        %2584 = vmatpush1.msra.mxu0 0.0
        %2585 = vmatprep.subr.mxu0 0.0
        %2586 = vmatpush1.msra.mxu0 0.0
        %2587 = vmatprep.subr.mxu0 0.0
        %2588 = vmatpush1.msra.mxu0 0.0
        %2589 = vmatprep.subr.mxu0 0.0
        %2590 = vmatpush1.msra.mxu0 0.0
        %2591 = vmatprep.subr.mxu0 0.0
        %2592 = vmatpush1.msra.mxu0 0.0
        %2593 = vmatprep.subr.mxu0 0.0
        %2594 = vmatpush1.msra.mxu0 0.0
        %2595 = vmatprep.subr.mxu0 0.0
        %2596 = vmatpush1.msra.mxu0 0.0
        %2597 = vmatprep.subr.mxu0 0.0
        %2598 = vmatpush1.msra.mxu0 0.0
        %2599 = vmatprep.subr.mxu0 0.0
        %2600 = vmatpush1.msra.mxu0 0.0
        %2601 = vmatprep.subr.mxu0 0.0
        %2602 = vmatpush1.msra.mxu0 0.0
        %2603 = vmatprep.subr.mxu0 0.0
        %2604 = vmatpush1.msra.mxu0 0.0
        %2605 = vmatprep.subr.mxu0 0.0
        %2606 = vmatpush1.msra.mxu0 0.0
        %2607 = vmatprep.subr.mxu0 0.0
        %2608 = vmatpush1.msra.mxu0 0.0
        %2609 = vmatprep.subr.mxu0 0.0
        %2610 = vmatpush1.msra.mxu0 0.0
        %2611 = vmatprep.subr.mxu0 0.0
        %2612 = vmatpush1.msra.mxu0 0.0
        %2613 = vmatprep.subr.mxu0 0.0
        %2614 = vmatpush1.msra.mxu0 0.0
        %2615 = vmatprep.subr.mxu0 0.0
        %2616 = vmatpush1.msra.mxu0 0.0
        %2617 = vmatprep.subr.mxu0 0.0
        %2618 = vmatpush1.msra.mxu0 0.0
        %2619 = vmatprep.subr.mxu0 0.0
        %2620 = vmatpush1.msra.mxu0 0.0
        %2621 = vmatprep.subr.mxu0 0.0
        %2622 = vmatpush1.msra.mxu0 0.0
        %2623 = vmatprep.subr.mxu0 0.0
        %2624 = vmatpush1.msra.mxu0 0.0
        %2625 = vmatprep.subr.mxu0 0.0
        %2626 = vmatpush1.msra.mxu0 0.0
        %2627 = vmatprep.mubr.f32.mxu0 0.0
        %2628 = vmatmul.mubr.f32.gmra.mrb[0].mxu0 %v2555
        %v2629 = vpop.f32.mrb[0].mxu0
        %v2630 = vadd.f32 0.0, %v2629
        %v2631 = vpop.f32.mrb[0].mxu0
        %2632 = vmatprep.mubr.f32.mxu0 0.0
        %2633 = vmatmul.mubr.f32.gmra.mrb[0].mxu0 %v2558
        %v2634 = vpop.f32.mrb[0].mxu0
        %v2635 = vadd.f32 0.0, %v2634
        %v2636 = vpop.f32.mrb[0].mxu0
        %2637 = vdwg.mxu0
        %s2638 = scalar_lea.vmem [#allocation7], 112
        %v2639 = vld [vmem:[%s2638] sm:$0xff]
        %v2640 = vld [vmem:[%s2638 + $0x8] sm:$0xff]
        %v2641 = vmul.f32 %v2639, %v2438
        %v2642 = vmul.f32 %v2640, %v2439
        %v2643 = vadd.f32 %v2641, %v2630
        %v2644 = vadd.f32 %v2642, %v2635
        %v2646 = vsel %vm762, %v2519, 0
        %2648 = vmatprep.subr.mxu0 0.0
        %2649 = vmatpush1.msra.mxu0 %v2643
        %2650 = vmatprep.subr.mxu0 0.0
        %2651 = vmatpush1.msra.mxu0 %v2644
        %2652 = vmatprep.subr.mxu0 0.0
        %2653 = vmatpush1.msra.mxu0 0.0
        %2654 = vmatprep.subr.mxu0 0.0
        %2655 = vmatpush1.msra.mxu0 0.0
        %2656 = vmatprep.subr.mxu0 0.0
        %2657 = vmatpush1.msra.mxu0 0.0
        %2658 = vmatprep.subr.mxu0 0.0
        %2659 = vmatpush1.msra.mxu0 0.0
        %2660 = vmatprep.subr.mxu0 0.0
        %2661 = vmatpush1.msra.mxu0 0.0
        %2662 = vmatprep.subr.mxu0 0.0
        %2663 = vmatpush1.msra.mxu0 0.0
        %2664 = vmatprep.subr.mxu0 0.0
        %2665 = vmatpush1.msra.mxu0 0.0
        %2666 = vmatprep.subr.mxu0 0.0
        %2667 = vmatpush1.msra.mxu0 0.0
        %2668 = vmatprep.subr.mxu0 0.0
        %2669 = vmatpush1.msra.mxu0 0.0
        %2670 = vmatprep.subr.mxu0 0.0
        %2671 = vmatpush1.msra.mxu0 0.0
        %2672 = vmatprep.subr.mxu0 0.0
        %2673 = vmatpush1.msra.mxu0 0.0
        %2674 = vmatprep.subr.mxu0 0.0
        %2675 = vmatpush1.msra.mxu0 0.0
        %2676 = vmatprep.subr.mxu0 0.0
        %2677 = vmatpush1.msra.mxu0 0.0
        %2678 = vmatprep.subr.mxu0 0.0
        %2679 = vmatpush1.msra.mxu0 0.0
        %2680 = vmatprep.subr.mxu0 0.0
        %2681 = vmatpush1.msra.mxu0 0.0
        %2682 = vmatprep.subr.mxu0 0.0
        %2683 = vmatpush1.msra.mxu0 0.0
        %2684 = vmatprep.subr.mxu0 0.0
        %2685 = vmatpush1.msra.mxu0 0.0
        %2686 = vmatprep.subr.mxu0 0.0
        %2687 = vmatpush1.msra.mxu0 0.0
        %2688 = vmatprep.subr.mxu0 0.0
        %2689 = vmatpush1.msra.mxu0 0.0
        %2690 = vmatprep.subr.mxu0 0.0
        %2691 = vmatpush1.msra.mxu0 0.0
        %2692 = vmatprep.subr.mxu0 0.0
        %2693 = vmatpush1.msra.mxu0 0.0
        %2694 = vmatprep.subr.mxu0 0.0
        %2695 = vmatpush1.msra.mxu0 0.0
        %2696 = vmatprep.subr.mxu0 0.0
        %2697 = vmatpush1.msra.mxu0 0.0
        %2698 = vmatprep.subr.mxu0 0.0
        %2699 = vmatpush1.msra.mxu0 0.0
        %2700 = vmatprep.subr.mxu0 0.0
        %2701 = vmatpush1.msra.mxu0 0.0
        %2702 = vmatprep.subr.mxu0 0.0
        %2703 = vmatpush1.msra.mxu0 0.0
        %2704 = vmatprep.subr.mxu0 0.0
        %2705 = vmatpush1.msra.mxu0 0.0
        %2706 = vmatprep.subr.mxu0 0.0
        %2707 = vmatpush1.msra.mxu0 0.0
        %2708 = vmatprep.subr.mxu0 0.0
        %2709 = vmatpush1.msra.mxu0 0.0
        %2710 = vmatprep.subr.mxu0 0.0
        %2711 = vmatpush1.msra.mxu0 0.0
        %2712 = vmatprep.mubr.f32.mxu0 0.0
        %2713 = vmatmul.mubr.f32.gmra.mrb[0].mxu0 %v2646
        %v2714 = vpop.f32.mrb[0].mxu0
        %v2715 = vadd.f32 0.0, %v2714
        %v2716 = vpop.f32.mrb[0].mxu0
        %2717 = vdwg.mxu0
        %s2718 = scalar_lea.vmem [#allocation6], %s2515
        %2719 = vst [vmem:[%s2718] sm:$0x1] %v2715
      $region73: #{mamba_c_block_forward.10} parent=67 // loop_footer
        %s920 = sadd.s32 1, %s916
      $region74: #{mamba_c_block_forward.10} parent=67 // loop_footer_branch
        %915 = sbr.rel target = $region70
      $region75: #{mamba_c_block_forward.10} parent=67 // loop_exit
        _
      %v2720 = vld [vmem:[#allocation6] sm:$0xff]
      %v2721 = vld [vmem:[#allocation6 + $0x8] sm:$0xff]
      %v2722 = vld [vmem:[%s10] sm:$0x1]
      %v2724 = vlaneseq
      %v2725 = vshrl.u32 %v2724, 7
      %v2726 = vsub.s32 0, %v2725
      %v2727 = vrot.slane %v2722, %v2726
      %v2729 = vmul.f32 %v646, %v2727
      %v2730 = vmul.f32 %v647, %v2727
      %v2731 = vadd.f32 %v2720, %v2729
      %v2732 = vadd.f32 %v2721, %v2730
      %v2733 = vxor.u32 %v575, 2147483648
      %v2734 = vxor.u32 %v579, 2147483648
      %v2735 = vmul.f32 %v2733, 1.442695
      %v2736 = vpow.pop %v2735
      %v2737 = vmul.f32 %v2734, 1.442695
      %v2738 = vpow.pop %v2737
      %v2739 = vadd.f32 %v2736, 1.0
      %v2740 = vadd.f32 %v2738, 1.0
      %v2741 = vrcp.pop %v2739
      %v2742 = vmul.f32 1.0, %v2741
      %v2743 = vrcp.pop %v2740
      %v2744 = vmul.f32 1.0, %v2743
      %v2745 = vmul.f32 %v575, %v2742
      %v2746 = vmul.f32 %v579, %v2744
      %v2747 = vmul.f32 %v2731, %v2745
      %v2748 = vmul.f32 %v2732, %v2746
      %v2749 = vpack.c.bf16 %v2748, %v2747
      %v2750 = vld [vmem:[%s11] sm:$0xf]
      %v2751 = vld [vmem:[%s11 + $0x4] sm:$0xf]
      %v2752 = vld [vmem:[%s11 + $0x8] sm:$0xf]
      %v2753 = vld [vmem:[%s11 + $0xc] sm:$0xf]
      %v2754 = vld [vmem:[%s11 + $0x10] sm:$0xf]
      %v2755 = vld [vmem:[%s11 + $0x14] sm:$0xf]
      %v2756 = vld [vmem:[%s11 + $0x18] sm:$0xf]
      %v2757 = vld [vmem:[%s11 + $0x1c] sm:$0xf]
      %v2758 = vld [vmem:[%s11 + $0x20] sm:$0xf]
      %v2759 = vld [vmem:[%s11 + $0x24] sm:$0xf]
      %v2760 = vld [vmem:[%s11 + $0x28] sm:$0xf]
      %v2761 = vld [vmem:[%s11 + $0x2c] sm:$0xf]
      %v2762 = vld [vmem:[%s11 + $0x30] sm:$0xf]
      %v2763 = vld [vmem:[%s11 + $0x34] sm:$0xf]
      %v2764 = vld [vmem:[%s11 + $0x38] sm:$0xf]
      %v2765 = vld [vmem:[%s11 + $0x3c] sm:$0xf]
      %v2782 = vunpack.c.l.b16 %v2750
      %v2783 = vunpack.c.l.b16 %v2751
      %v2784 = vunpack.c.l.b16 %v2752
      %v2785 = vunpack.c.l.b16 %v2753
      %v2786 = vunpack.c.l.b16 %v2754
      %v2787 = vunpack.c.l.b16 %v2755
      %v2788 = vunpack.c.l.b16 %v2756
      %v2789 = vunpack.c.l.b16 %v2757
      %v2790 = vunpack.c.l.b16 %v2758
      %v2791 = vunpack.c.l.b16 %v2759
      %v2792 = vunpack.c.l.b16 %v2760
      %v2793 = vunpack.c.l.b16 %v2761
      %v2794 = vunpack.c.l.b16 %v2762
      %v2795 = vunpack.c.l.b16 %v2763
      %v2796 = vunpack.c.l.b16 %v2764
      %v2797 = vunpack.c.l.b16 %v2765
      %v2798 = vpack.c.b16 %v2783, %v2782
      %v2799 = vpack.c.b16 %v2785, %v2784
      %v2800 = vpack.c.b16 %v2787, %v2786
      %v2801 = vpack.c.b16 %v2789, %v2788
      %v2802 = vpack.c.b16 %v2791, %v2790
      %v2803 = vpack.c.b16 %v2793, %v2792
      %v2804 = vpack.c.b16 %v2795, %v2794
      %v2805 = vpack.c.b16 %v2797, %v2796
      %2814 = vmatprep.subr.bf16.mxu0 0
      %2815 = vmatpush1.bf16.msra.mxu0 %v2798
      %2816 = vmatprep.subr.bf16.mxu0 0
      %2817 = vmatpush1.bf16.msra.mxu0 %v2799
      %2818 = vmatprep.subr.bf16.mxu0 0
      %2819 = vmatpush1.bf16.msra.mxu0 %v2800
      %2820 = vmatprep.subr.bf16.mxu0 0
      %2821 = vmatpush1.bf16.msra.mxu0 %v2801
      %2822 = vmatprep.subr.bf16.mxu0 0
      %2823 = vmatpush1.bf16.msra.mxu0 %v2802
      %2824 = vmatprep.subr.bf16.mxu0 0
      %2825 = vmatpush1.bf16.msra.mxu0 %v2803
      %2826 = vmatprep.subr.bf16.mxu0 0
      %2827 = vmatpush1.bf16.msra.mxu0 %v2804
      %2828 = vmatprep.subr.bf16.mxu0 0
      %2829 = vmatpush1.bf16.msra.mxu0 %v2805
      %2830 = vmatprep.subr.bf16.mxu0 0
      %2831 = vmatpush1.bf16.msra.mxu0 0
      %2832 = vmatprep.subr.bf16.mxu0 0
      %2833 = vmatpush1.bf16.msra.mxu0 0
      %2834 = vmatprep.subr.bf16.mxu0 0
      %2835 = vmatpush1.bf16.msra.mxu0 0
      %2836 = vmatprep.subr.bf16.mxu0 0
      %2837 = vmatpush1.bf16.msra.mxu0 0
      %2838 = vmatprep.subr.bf16.mxu0 0
      %2839 = vmatpush1.bf16.msra.mxu0 0
      %2840 = vmatprep.subr.bf16.mxu0 0
      %2841 = vmatpush1.bf16.msra.mxu0 0
      %2842 = vmatprep.subr.bf16.mxu0 0
      %2843 = vmatpush1.bf16.msra.mxu0 0
      %2844 = vmatprep.subr.bf16.mxu0 0
      %2845 = vmatpush1.bf16.msra.mxu0 0
      %2846 = vmatprep.mubr.bf16.mxu0 0
      %2847 = vmatmul.mubr.bf16.gmra.mrb[0].mxu0 %v2749
      %v2848 = vpop.f32.mrb[0].mxu0
      %v2849 = vadd.f32 0.0, %v2848
      %v2850 = vpop.f32.mrb[0].mxu0
      %v2851 = vpop.f32.mrb[0].mxu0
      %v2852 = vadd.f32 0.0, %v2851
      %v2853 = vpop.f32.mrb[0].mxu0
      %2854 = vdwg.mxu0
      %2855 = vst.msk [vmem:[%s468] sm:$0xff] %vm481, %v2849
      %2856 = vst.msk [vmem:[%s468 + $0x8] sm:$0xff] %vm481, %v2852
      %p2857 = scmp.lt.s32.totalorder %s25, 1
      %s2858 = scalar_select %p2857, %s25, 1
      %s2859 = smul.addr %s2858, 2
      %s2860 = smul.addr %s2859, 8
      %s2861 = scalar_lea.vmem %s12, %s2860
      %p2862 = scmp.lt.s32.totalorder %s25, 1
      %s2863 = scalar_select %p2862, %s25, 1
      %s2864 = smul.addr %s2863, 2
      %s2865 = smul.addr %s2864, 8
      %s2866 = scalar_lea.vmem %s13, %s2865
      // Predicated region
      $region76: #{mamba_c_block_forward.10} parent=67 // pred_check
        %p2867 = pneg %p305
      $region77: #{mamba_c_block_forward.10} parent=67 // pred_check_branch
        %2869 = sbr.rel (%p2867) target = $region79
      $region78: #{mamba_c_block_forward.10} parent=67 // pred_region
        _
      $region79: #{mamba_c_block_forward.10} parent=67 // pred_fallthru
        _
      // Predicated region
      $region80: #{mamba_c_block_forward.10} parent=67 // pred_check
        %p2870 = pneg %p331
      $region81: #{mamba_c_block_forward.10} parent=67 // pred_check_branch
        %2872 = sbr.rel (%p2870) target = $region83
      $region82: #{mamba_c_block_forward.10} parent=67 // pred_region
        _
      $region83: #{mamba_c_block_forward.10} parent=67 // pred_fallthru
        _
    $region68: #{mamba_c_block_forward.10} parent=5 // pred_fallthru
      _
    %p2873 = scmp.le.s32.totalorder 2, %s20
    // Predicated region
    $region84: #{mamba_c_block_forward.10} parent=5 // pred_check
      %p2874 = pneg %p2873
    $region85: #{mamba_c_block_forward.10} parent=5 // pred_check_branch
      %2876 = sbr.rel (%p2874) target = $region87
    $region86: #{mamba_c_block_forward.10} parent=5 // pred_region
      %s2877 = ssub.s32 %s20, 2
      // Predicated region
      $region88: #{mamba_c_block_forward.10} parent=86 // pred_check
        %p2878 = pneg %p311
      $region89: #{mamba_c_block_forward.10} parent=86 // pred_check_branch
        %2880 = sbr.rel (%p2878) target = $region91
      $region90: #{mamba_c_block_forward.10} parent=86 // pred_region
        %p2881 = scmp.lt.s32.totalorder %s26, 1
        %s2882 = scalar_select %p2881, %s26, 1
        %s2883 = smul.addr %s2882, 2
        %s2884 = smul.addr %s2883, 8
        %s2885 = scalar_lea.vmem %s12, %s2884
      $region91: #{mamba_c_block_forward.10} parent=86 // pred_fallthru
        _
      // Predicated region
      $region92: #{mamba_c_block_forward.10} parent=86 // pred_check
        %p2886 = pneg %p337
      $region93: #{mamba_c_block_forward.10} parent=86 // pred_check_branch
        %2888 = sbr.rel (%p2886) target = $region95
      $region94: #{mamba_c_block_forward.10} parent=86 // pred_region
        %p2889 = scmp.lt.s32.totalorder %s26, 1
        %s2890 = scalar_select %p2889, %s26, 1
        %s2891 = smul.addr %s2890, 2
        %s2892 = smul.addr %s2891, 8
        %s2893 = scalar_lea.vmem %s13, %s2892
      $region95: #{mamba_c_block_forward.10} parent=86 // pred_fallthru
        _
    $region87: #{mamba_c_block_forward.10} parent=5 // pred_fallthru
      _
  $region6: #{mamba_c_block_forward.10} parent=0 // loop_footer
    %s24 = sadd.s32 1, %s20
  $region7: #{mamba_c_block_forward.10} parent=0 // loop_footer_branch
    %19 = sbr.rel target = $region3
  $region8: #{mamba_c_block_forward.10} parent=0 // loop_exit
    _

// kernel: mamba_c_block_forward.11
$region0: #{mamba_c_block_forward.11}
  #allocation0 [shape = 'u32[]', space=smem, size = 0x4, offset = 0x4, fixed_abs, tag = 'smem constant byte address 0x4 - core index']
  #allocation1 [shape = 'u32[144,128]{1,0:T(1,128)}', space=vmem, size = 0x12000, scoped, tag = 'internal scratch']
  #allocation2 [shape = 'f32[80,128]{1,0:T(8,128)}', space=vmem, size = 0xa000, scoped, tag = 'scratch operand']
  %s0 = inlined_call_operand.vmem [shape: bf16[80,256], index: 0, kind: input, shape index: {}]
  %s1 = inlined_call_operand.vmem [shape: bf16[256,128], index: 1, kind: input, shape index: {}]
  %s2 = inlined_call_operand.vmem [shape: f32[1,128], index: 2, kind: input, shape index: {}]
  %s3 = inlined_call_operand.vmem [shape: f32[1,128], index: 3, kind: input, shape index: {}]
  %s4 = inlined_call_operand.vmem [shape: f32[80,128], index: 4, kind: output, shape index: {}]
  %s5 = sld [smem:[#allocation0]]
  $region34: #{mamba_c_block_forward.11} parent=0
    _
  %s7 = ssub.s32 1, %s5
  %s8 = scalar_select 0, %s7, %s5
  // Predicated region
  $region2: #{mamba_c_block_forward.11} parent=0 // pred_check
    _
  $region3: #{mamba_c_block_forward.11} parent=0 // pred_check_branch
    %10 = sbr.rel (0) target = $region5
  $region4: #{mamba_c_block_forward.11} parent=0 // pred_region
    _
  $region5: #{mamba_c_block_forward.11} parent=0 // pred_fallthru
    _
  // Predicated region
  $region6: #{mamba_c_block_forward.11} parent=0 // pred_check
    _
  $region7: #{mamba_c_block_forward.11} parent=0 // pred_check_branch
    %12 = sbr.rel (0) target = $region9
  $region8: #{mamba_c_block_forward.11} parent=0 // pred_region
    _
  $region9: #{mamba_c_block_forward.11} parent=0 // pred_fallthru
    _
  // Predicated region
  $region10: #{mamba_c_block_forward.11} parent=0 // pred_check
    _
  $region11: #{mamba_c_block_forward.11} parent=0 // pred_check_branch
    %14 = sbr.rel (0) target = $region13
  $region12: #{mamba_c_block_forward.11} parent=0 // pred_region
    _
  $region13: #{mamba_c_block_forward.11} parent=0 // pred_fallthru
    _
  // Predicated region
  $region14: #{mamba_c_block_forward.11} parent=0 // pred_check
    _
  $region15: #{mamba_c_block_forward.11} parent=0 // pred_check_branch
    %16 = sbr.rel (0) target = $region17
  $region16: #{mamba_c_block_forward.11} parent=0 // pred_region
    _
  $region17: #{mamba_c_block_forward.11} parent=0 // pred_fallthru
    _
  %p18 = scmp.eq.s32.totalorder 0, 0
  // Predicated region
  $region18: #{mamba_c_block_forward.11} parent=0 // pred_check
    %p19 = pneg %p18
  $region19: #{mamba_c_block_forward.11} parent=0 // pred_check_branch
    %21 = sbr.rel (%p19) target = $region21
  $region20: #{mamba_c_block_forward.11} parent=0 // pred_region
    %22 = vst [vmem:[#allocation2] sm:$0xff] 0.0
    %23 = vst [vmem:[#allocation2 + $0x8] sm:$0xff] 0.0
    %24 = vst [vmem:[#allocation2 + $0x10] sm:$0xff] 0.0
    %25 = vst [vmem:[#allocation2 + $0x18] sm:$0xff] 0.0
    %26 = vst [vmem:[#allocation2 + $0x20] sm:$0xff] 0.0
    %27 = vst [vmem:[#allocation2 + $0x28] sm:$0xff] 0.0
    %28 = vst [vmem:[#allocation2 + $0x30] sm:$0xff] 0.0
    %29 = vst [vmem:[#allocation2 + $0x38] sm:$0xff] 0.0
    %30 = vst [vmem:[#allocation2 + $0x40] sm:$0xff] 0.0
    %31 = vst [vmem:[#allocation2 + $0x48] sm:$0xff] 0.0
  $region21: #{mamba_c_block_forward.11} parent=0 // pred_fallthru
    _
  %v32 = vld [vmem:[#allocation2] sm:$0xff]
  %v33 = vld [vmem:[#allocation2 + $0x8] sm:$0xff]
  %v34 = vld [vmem:[#allocation2 + $0x10] sm:$0xff]
  %v35 = vld [vmem:[#allocation2 + $0x18] sm:$0xff]
  %v36 = vld [vmem:[#allocation2 + $0x20] sm:$0xff]
  %v37 = vld [vmem:[#allocation2 + $0x28] sm:$0xff]
  %v38 = vld [vmem:[#allocation2 + $0x30] sm:$0xff]
  %v39 = vld [vmem:[#allocation2 + $0x38] sm:$0xff]
  %v40 = vld [vmem:[#allocation2 + $0x40] sm:$0xff]
  %v41 = vld [vmem:[#allocation2 + $0x48] sm:$0xff]
  %v42 = vld [vmem:[%s0] sm:$0xff]
  %v43 = vld [vmem:[%s0 + $0x8] sm:$0xff]
  %v44 = vld [vmem:[%s0 + $0x10] sm:$0xff]
  %v45 = vld [vmem:[%s0 + $0x18] sm:$0xff]
  %v46 = vld [vmem:[%s0 + $0x20] sm:$0xff]
  %v47 = vld [vmem:[%s0 + $0x28] sm:$0xff]
  %v48 = vld [vmem:[%s0 + $0x30] sm:$0xff]
  %v49 = vld [vmem:[%s0 + $0x38] sm:$0xff]
  %v50 = vld [vmem:[%s0 + $0x40] sm:$0xff]
  %v51 = vld [vmem:[%s0 + $0x48] sm:$0xff]
  %v52 = vld [vmem:[%s1] sm:$0xf]
  %v53 = vld [vmem:[%s1 + $0x4] sm:$0xf]
  %v54 = vld [vmem:[%s1 + $0x8] sm:$0xf]
  %v55 = vld [vmem:[%s1 + $0xc] sm:$0xf]
  %v56 = vld [vmem:[%s1 + $0x10] sm:$0xf]
  %v57 = vld [vmem:[%s1 + $0x14] sm:$0xf]
  %v58 = vld [vmem:[%s1 + $0x18] sm:$0xf]
  %v59 = vld [vmem:[%s1 + $0x1c] sm:$0xf]
  %v60 = vld [vmem:[%s1 + $0x20] sm:$0xf]
  %v61 = vld [vmem:[%s1 + $0x24] sm:$0xf]
  %v62 = vld [vmem:[%s1 + $0x28] sm:$0xf]
  %v63 = vld [vmem:[%s1 + $0x2c] sm:$0xf]
  %v64 = vld [vmem:[%s1 + $0x30] sm:$0xf]
  %v65 = vld [vmem:[%s1 + $0x34] sm:$0xf]
  %v66 = vld [vmem:[%s1 + $0x38] sm:$0xf]
  %v67 = vld [vmem:[%s1 + $0x3c] sm:$0xf]
  %v68 = vld [vmem:[%s1 + $0x40] sm:$0xf]
  %v69 = vld [vmem:[%s1 + $0x44] sm:$0xf]
  %v70 = vld [vmem:[%s1 + $0x48] sm:$0xf]
  %v71 = vld [vmem:[%s1 + $0x4c] sm:$0xf]
  %v72 = vld [vmem:[%s1 + $0x50] sm:$0xf]
  %v73 = vld [vmem:[%s1 + $0x54] sm:$0xf]
  %v74 = vld [vmem:[%s1 + $0x58] sm:$0xf]
  %v75 = vld [vmem:[%s1 + $0x5c] sm:$0xf]
  %v76 = vld [vmem:[%s1 + $0x60] sm:$0xf]
  %v77 = vld [vmem:[%s1 + $0x64] sm:$0xf]
  %v78 = vld [vmem:[%s1 + $0x68] sm:$0xf]
  %v79 = vld [vmem:[%s1 + $0x6c] sm:$0xf]
  %v80 = vld [vmem:[%s1 + $0x70] sm:$0xf]
  %v81 = vld [vmem:[%s1 + $0x74] sm:$0xf]
  %v82 = vld [vmem:[%s1 + $0x78] sm:$0xf]
  %v83 = vld [vmem:[%s1 + $0x7c] sm:$0xf]
  %v94 = vunpack.c.l.b16 %v42
  %v95 = vunpack.c.h.b16 %v42
  %v96 = vunpack.c.l.b16 %v43
  %v97 = vunpack.c.h.b16 %v43
  %v98 = vunpack.c.l.b16 %v44
  %v99 = vunpack.c.h.b16 %v44
  %v100 = vunpack.c.l.b16 %v45
  %v101 = vunpack.c.h.b16 %v45
  %v102 = vunpack.c.l.b16 %v46
  %v103 = vunpack.c.h.b16 %v46
  %v104 = vunpack.c.l.b16 %v47
  %v105 = vunpack.c.h.b16 %v47
  %v106 = vunpack.c.l.b16 %v48
  %v107 = vunpack.c.h.b16 %v48
  %v108 = vunpack.c.l.b16 %v49
  %v109 = vunpack.c.h.b16 %v49
  %v110 = vunpack.c.l.b16 %v50
  %v111 = vunpack.c.h.b16 %v50
  %v112 = vunpack.c.l.b16 %v51
  %v113 = vunpack.c.h.b16 %v51
  %v114 = vpack.c.b16 %v96, %v94
  %v115 = vpack.c.b16 %v97, %v95
  %v116 = vpack.c.b16 %v100, %v98
  %v117 = vpack.c.b16 %v101, %v99
  %v118 = vpack.c.b16 %v104, %v102
  %v119 = vpack.c.b16 %v105, %v103
  %v120 = vpack.c.b16 %v108, %v106
  %v121 = vpack.c.b16 %v109, %v107
  %v122 = vpack.c.b16 %v112, %v110
  %v123 = vpack.c.b16 %v113, %v111
  %v166 = vunpack.c.l.b16 %v52
  %v167 = vunpack.c.l.b16 %v53
  %v168 = vunpack.c.l.b16 %v54
  %v169 = vunpack.c.l.b16 %v55
  %v170 = vunpack.c.l.b16 %v56
  %v171 = vunpack.c.l.b16 %v57
  %v172 = vunpack.c.l.b16 %v58
  %v173 = vunpack.c.l.b16 %v59
  %v174 = vunpack.c.l.b16 %v60
  %v175 = vunpack.c.l.b16 %v61
  %v176 = vunpack.c.l.b16 %v62
  %v177 = vunpack.c.l.b16 %v63
  %v178 = vunpack.c.l.b16 %v64
  %v179 = vunpack.c.l.b16 %v65
  %v180 = vunpack.c.l.b16 %v66
  %v181 = vunpack.c.l.b16 %v67
  %v182 = vunpack.c.l.b16 %v68
  %v183 = vunpack.c.l.b16 %v69
  %v184 = vunpack.c.l.b16 %v70
  %v185 = vunpack.c.l.b16 %v71
  %v186 = vunpack.c.l.b16 %v72
  %v187 = vunpack.c.l.b16 %v73
  %v188 = vunpack.c.l.b16 %v74
  %v189 = vunpack.c.l.b16 %v75
  %v190 = vunpack.c.l.b16 %v76
  %v191 = vunpack.c.l.b16 %v77
  %v192 = vunpack.c.l.b16 %v78
  %v193 = vunpack.c.l.b16 %v79
  %v194 = vunpack.c.l.b16 %v80
  %v195 = vunpack.c.l.b16 %v81
  %v196 = vunpack.c.l.b16 %v82
  %v197 = vunpack.c.l.b16 %v83
  %v198 = vpack.c.b16 %v167, %v166
  %v199 = vpack.c.b16 %v169, %v168
  %v200 = vpack.c.b16 %v171, %v170
  %v201 = vpack.c.b16 %v173, %v172
  %v202 = vpack.c.b16 %v175, %v174
  %v203 = vpack.c.b16 %v177, %v176
  %v204 = vpack.c.b16 %v179, %v178
  %v205 = vpack.c.b16 %v181, %v180
  %v206 = vpack.c.b16 %v183, %v182
  %v207 = vpack.c.b16 %v185, %v184
  %v208 = vpack.c.b16 %v187, %v186
  %v209 = vpack.c.b16 %v189, %v188
  %v210 = vpack.c.b16 %v191, %v190
  %v211 = vpack.c.b16 %v193, %v192
  %v212 = vpack.c.b16 %v195, %v194
  %v213 = vpack.c.b16 %v197, %v196
  %230 = vmatprep.subr.bf16.mxu0 0
  %231 = vmatpush1.bf16.msra.mxu0 %v198
  %232 = vmatprep.subr.bf16.mxu0 0
  %233 = vmatpush1.bf16.msra.mxu0 %v199
  %234 = vmatprep.subr.bf16.mxu0 0
  %235 = vmatpush1.bf16.msra.mxu0 %v200
  %236 = vmatprep.subr.bf16.mxu0 0
  %237 = vmatpush1.bf16.msra.mxu0 %v201
  %238 = vmatprep.subr.bf16.mxu0 0
  %239 = vmatpush1.bf16.msra.mxu0 %v202
  %240 = vmatprep.subr.bf16.mxu0 0
  %241 = vmatpush1.bf16.msra.mxu0 %v203
  %242 = vmatprep.subr.bf16.mxu0 0
  %243 = vmatpush1.bf16.msra.mxu0 %v204
  %244 = vmatprep.subr.bf16.mxu0 0
  %245 = vmatpush1.bf16.msra.mxu0 %v205
  %246 = vmatprep.subr.bf16.mxu0 0
  %247 = vmatpush1.bf16.msra.mxu0 %v206
  %248 = vmatprep.subr.bf16.mxu0 0
  %249 = vmatpush1.bf16.msra.mxu0 %v207
  %250 = vmatprep.subr.bf16.mxu0 0
  %251 = vmatpush1.bf16.msra.mxu0 %v208
  %252 = vmatprep.subr.bf16.mxu0 0
  %253 = vmatpush1.bf16.msra.mxu0 %v209
  %254 = vmatprep.subr.bf16.mxu0 0
  %255 = vmatpush1.bf16.msra.mxu0 %v210
  %256 = vmatprep.subr.bf16.mxu0 0
  %257 = vmatpush1.bf16.msra.mxu0 %v211
  %258 = vmatprep.subr.bf16.mxu0 0
  %259 = vmatpush1.bf16.msra.mxu0 %v212
  %260 = vmatprep.subr.bf16.mxu0 0
  %261 = vmatpush1.bf16.msra.mxu0 %v213
  %262 = vmatprep.mubr.bf16.mxu0 %v115
  %263 = vmatmul.mubr.bf16.gmra.mrb[0].mxu0 %v114
  %v264 = vpop.f32.mrb[0].mxu0
  %v265 = vadd.f32 0.0, %v264
  %v266 = vpop.f32.mrb[0].mxu0
  %v267 = vpop.f32.mrb[0].mxu0
  %v268 = vadd.f32 0.0, %v267
  %v269 = vpop.f32.mrb[0].mxu0
  %270 = vmatprep.mubr.bf16.mxu0 %v117
  %271 = vmatmul.mubr.bf16.gmra.mrb[0].mxu0 %v116
  %v272 = vpop.f32.mrb[0].mxu0
  %v273 = vadd.f32 0.0, %v272
  %v274 = vpop.f32.mrb[0].mxu0
  %v275 = vpop.f32.mrb[0].mxu0
  %v276 = vadd.f32 0.0, %v275
  %v277 = vpop.f32.mrb[0].mxu0
  %278 = vmatprep.mubr.bf16.mxu0 %v119
  %279 = vmatmul.mubr.bf16.gmra.mrb[0].mxu0 %v118
  %v280 = vpop.f32.mrb[0].mxu0
  %v281 = vadd.f32 0.0, %v280
  %v282 = vpop.f32.mrb[0].mxu0
  %v283 = vpop.f32.mrb[0].mxu0
  %v284 = vadd.f32 0.0, %v283
  %v285 = vpop.f32.mrb[0].mxu0
  %286 = vmatprep.mubr.bf16.mxu0 %v121
  %287 = vmatmul.mubr.bf16.gmra.mrb[0].mxu0 %v120
  %v288 = vpop.f32.mrb[0].mxu0
  %v289 = vadd.f32 0.0, %v288
  %v290 = vpop.f32.mrb[0].mxu0
  %v291 = vpop.f32.mrb[0].mxu0
  %v292 = vadd.f32 0.0, %v291
  %v293 = vpop.f32.mrb[0].mxu0
  %294 = vmatprep.mubr.bf16.mxu0 %v123
  %295 = vmatmul.mubr.bf16.gmra.mrb[0].mxu0 %v122
  %v296 = vpop.f32.mrb[0].mxu0
  %v297 = vadd.f32 0.0, %v296
  %v298 = vpop.f32.mrb[0].mxu0
  %v299 = vpop.f32.mrb[0].mxu0
  %v300 = vadd.f32 0.0, %v299
  %v301 = vpop.f32.mrb[0].mxu0
  %302 = vdwg.mxu0
  %v303 = vadd.f32 %v32, %v265
  %v304 = vadd.f32 %v33, %v268
  %v305 = vadd.f32 %v34, %v273
  %v306 = vadd.f32 %v35, %v276
  %v307 = vadd.f32 %v36, %v281
  %v308 = vadd.f32 %v37, %v284
  %v309 = vadd.f32 %v38, %v289
  %v310 = vadd.f32 %v39, %v292
  %v311 = vadd.f32 %v40, %v297
  %v312 = vadd.f32 %v41, %v300
  %313 = vst [vmem:[#allocation2] sm:$0xff] %v303
  %314 = vst [vmem:[#allocation2 + $0x8] sm:$0xff] %v304
  %315 = vst [vmem:[#allocation2 + $0x10] sm:$0xff] %v305
  %316 = vst [vmem:[#allocation2 + $0x18] sm:$0xff] %v306
  %317 = vst [vmem:[#allocation2 + $0x20] sm:$0xff] %v307
  %318 = vst [vmem:[#allocation2 + $0x28] sm:$0xff] %v308
  %319 = vst [vmem:[#allocation2 + $0x30] sm:$0xff] %v309
  %320 = vst [vmem:[#allocation2 + $0x38] sm:$0xff] %v310
  %321 = vst [vmem:[#allocation2 + $0x40] sm:$0xff] %v311
  %322 = vst [vmem:[#allocation2 + $0x48] sm:$0xff] %v312
  // Predicated region
  $region22: #{mamba_c_block_forward.11} parent=0 // pred_check
    %p323 = pneg %p18
  $region23: #{mamba_c_block_forward.11} parent=0 // pred_check_branch
    %325 = sbr.rel (%p323) target = $region25
  $region24: #{mamba_c_block_forward.11} parent=0 // pred_region
    %v326 = vld [vmem:[#allocation2] sm:$0xff]
    %v327 = vld [vmem:[#allocation2 + $0x8] sm:$0xff]
    %v328 = vld [vmem:[#allocation2 + $0x10] sm:$0xff]
    %v329 = vld [vmem:[#allocation2 + $0x18] sm:$0xff]
    %v330 = vld [vmem:[#allocation2 + $0x20] sm:$0xff]
    %v331 = vld [vmem:[#allocation2 + $0x28] sm:$0xff]
    %v332 = vld [vmem:[#allocation2 + $0x30] sm:$0xff]
    %v333 = vld [vmem:[#allocation2 + $0x38] sm:$0xff]
    %v334 = vld [vmem:[#allocation2 + $0x40] sm:$0xff]
    %v335 = vld [vmem:[#allocation2 + $0x48] sm:$0xff]
    %v336 = vld [vmem:[%s2] sm:$0x1]
    %v338 = vlaneseq
    %v339 = vshrl.u32 %v338, 7
    %v340 = vsub.s32 0, %v339
    %v341 = vrot.slane %v336, %v340
    %v343 = vmul.f32 %v326, %v341
    %v344 = vmul.f32 %v327, %v341
    %v345 = vmul.f32 %v328, %v341
    %v346 = vmul.f32 %v329, %v341
    %v347 = vmul.f32 %v330, %v341
    %v348 = vmul.f32 %v331, %v341
    %v349 = vmul.f32 %v332, %v341
    %v350 = vmul.f32 %v333, %v341
    %v351 = vmul.f32 %v334, %v341
    %v352 = vmul.f32 %v335, %v341
    %v353 = vld [vmem:[%s3] sm:$0x1]
    %v355 = vlaneseq
    %v356 = vshrl.u32 %v355, 7
    %v357 = vsub.s32 0, %v356
    %v358 = vrot.slane %v353, %v357
    %v360 = vadd.f32 %v343, %v358
    %v361 = vadd.f32 %v344, %v358
    %v362 = vadd.f32 %v345, %v358
    %v363 = vadd.f32 %v346, %v358
    %v364 = vadd.f32 %v347, %v358
    %v365 = vadd.f32 %v348, %v358
    %v366 = vadd.f32 %v349, %v358
    %v367 = vadd.f32 %v350, %v358
    %v368 = vadd.f32 %v351, %v358
    %v369 = vadd.f32 %v352, %v358
    %v370 = vmax.f32 %v360, 0.0
    %v371 = vmax.f32 %v361, 0.0
    %v372 = vmax.f32 %v362, 0.0
    %v373 = vmax.f32 %v363, 0.0
    %v374 = vmax.f32 %v364, 0.0
    %v375 = vmax.f32 %v365, 0.0
    %v376 = vmax.f32 %v366, 0.0
    %v377 = vmax.f32 %v367, 0.0
    %v378 = vmax.f32 %v368, 0.0
    %v379 = vmax.f32 %v369, 0.0
    %380 = vst [vmem:[%s4] sm:$0xff] %v370
    %381 = vst [vmem:[%s4 + $0x8] sm:$0xff] %v371
    %382 = vst [vmem:[%s4 + $0x10] sm:$0xff] %v372
    %383 = vst [vmem:[%s4 + $0x18] sm:$0xff] %v373
    %384 = vst [vmem:[%s4 + $0x20] sm:$0xff] %v374
    %385 = vst [vmem:[%s4 + $0x28] sm:$0xff] %v375
    %386 = vst [vmem:[%s4 + $0x30] sm:$0xff] %v376
    %387 = vst [vmem:[%s4 + $0x38] sm:$0xff] %v377
    %388 = vst [vmem:[%s4 + $0x40] sm:$0xff] %v378
    %389 = vst [vmem:[%s4 + $0x48] sm:$0xff] %v379
  $region25: #{mamba_c_block_forward.11} parent=0 // pred_fallthru
    _
  // Predicated region
  $region26: #{mamba_c_block_forward.11} parent=0 // pred_check
    _
  $region27: #{mamba_c_block_forward.11} parent=0 // pred_check_branch
    %391 = sbr.rel (0) target = $region29
  $region28: #{mamba_c_block_forward.11} parent=0 // pred_region
    _
  $region29: #{mamba_c_block_forward.11} parent=0 // pred_fallthru
    _
  // Predicated region
  $region30: #{mamba_c_block_forward.11} parent=0 // pred_check
    _
  $region31: #{mamba_c_block_forward.11} parent=0 // pred_check_branch
    %393 = sbr.rel (0) target = $region33
  $region32: #{mamba_c_block_forward.11} parent=0 // pred_region
    _
  $region33: #{mamba_c_block_forward.11} parent=0 // pred_fallthru
    _

// kernel: mamba_c_block_forward.13
$region0: #{mamba_c_block_forward.13}
  #allocation0 [shape = 'u32[]', space=smem, size = 0x4, offset = 0x4, fixed_abs, tag = 'smem constant byte address 0x4 - core index']
  #allocation1 [shape = 'u32[144,128]{1,0:T(1,128)}', space=vmem, size = 0x12000, scoped, tag = 'internal scratch']
  #allocation2 [shape = 'f32[256,128]{1,0:T(8,128)}', space=vmem, size = 0x20000, scoped, tag = 'scratch operand']
  %s0 = inlined_call_operand.vmem [shape: bf16[1280,128], index: 0, kind: input, shape index: {}]
  %s1 = inlined_call_operand.vmem [shape: bf16[128,128], index: 1, kind: input, shape index: {}]
  %s2 = inlined_call_operand.vmem [shape: f32[1,128], index: 2, kind: input, shape index: {}]
  %s3 = inlined_call_operand.vmem [shape: f32[1,128], index: 3, kind: input, shape index: {}]
  %s4 = inlined_call_operand.vmem [shape: f32[1280,128], index: 4, kind: output, shape index: {}]
  %s5 = sld [smem:[#allocation0]]
  $region57: #{mamba_c_block_forward.13} parent=0
    _
  %s7 = ssub.s32 1, %s5
  %s8 = scalar_select 0, %s7, %s5
  loop: start=0, step=1, limit=7
  $region2: #{mamba_c_block_forward.13} parent=0 // loop_pre_header
    _
  $region3: #{mamba_c_block_forward.13} parent=0 // loop_header
    %s10 = sphi 0, %s14
    %p11 = scmp.ge.s32.totalorder %s10, 7
    %s17 = sphi 0, %s36
    %s18 = sphi 0, %s32
    %s19 = sphi 0, %s28
    %s20 = sphi 0, %s17
    %s21 = sphi 0, %s18
    %s22 = sphi 0, %s19
    %s23 = sphi 0, %s20
    %s24 = sphi 0, %s21
    %s25 = sphi 0, %s22
    %s41 = sphi 0, %s43
    %s44 = sphi 0, %s41
    %s45 = sphi 0, %s44
    %s61 = sphi 0, %s45
    %s69 = sphi 0, %s71
    %s72 = sphi 0, %s69
    %s73 = sphi 0, %s72
    %s89 = sphi 0, %s73
    %s95 = sphi 0, %s97
    %s98 = sphi 0, %s95
    %s99 = sphi 0, %s98
    %s115 = sphi 0, %s99
    %s121 = sphi 0, %s123
    %s124 = sphi 0, %s121
    %s125 = sphi 0, %s124
    %s141 = sphi 0, %s125
    %s149 = sphi 0, %s151
    %s152 = sphi 0, %s149
    %s153 = sphi 0, %s152
    %s169 = sphi 0, %s153
  $region4: #{mamba_c_block_forward.13} parent=0 // loop_header_branch
    %13 = sbr.rel (%p11) target = $region8
  $region5: #{mamba_c_block_forward.13} parent=0 // loop_body
    %s15 = ssub.s32 %s10, 1
    %s16 = ssub.s32 %s10, 2
    %s26 = sadd.s32 1, %s19
    %p27 = scmp.ge.s32.totalorder %s26, 1
    %s28 = scalar_select %p27, 0, %s26
    %s29 = sadd.s32 1, %s18
    %s30 = scalar_select %p27, %s29, %s18
    %p31 = scmp.ge.s32.totalorder %s30, 1
    %s32 = scalar_select %p31, 0, %s30
    %s33 = sadd.s32 1, %s17
    %s34 = scalar_select %p31, %s33, %s17
    %p35 = scmp.ge.s32.totalorder %s34, 5
    %s36 = scalar_select %p35, 0, %s34
    %s37 = ssub.s32 %s17, %s36
    %s38 = ssub.s32 %s19, %s28
    %s39 = sor.u32 %s37, %s38
    %p40 = scmp.eq.s32.totalorder %s39, 0
    %s42 = sadd.s32 %s41, 1
    %s43 = scalar_select %p40, %s41, %s42
    %p46 = pneg %p40
    %p47 = scmp.eq.s32.totalorder %s10, 4
    %p48 = por %p46, %p47
    %p49 = scmp.ne.s32.totalorder %s41, %s44
    %p50 = scmp.eq.s32.totalorder %s10, 0
    %p51 = por %p49, %p50
    %p52 = scmp.ne.s32.totalorder %s41, %s44
    %p53 = scmp.eq.s32.totalorder %s15, 4
    %p54 = por %p52, %p53
    %p55 = scmp.ne.s32.totalorder %s44, %s45
    %p56 = scmp.eq.s32.totalorder %s15, 0
    %p57 = por %p55, %p56
    %p58 = scmp.ne.s32.totalorder %s44, %s45
    %p59 = scmp.eq.s32.totalorder %s16, 4
    %p60 = por %p58, %p59
    %p62 = scmp.ne.s32.totalorder %s45, %s61
    %p63 = scmp.eq.s32.totalorder %s16, 0
    %p64 = por %p62, %p63
    %s65 = ssub.s32 %s19, %s28
    %s66 = ssub.s32 %s18, %s32
    %s67 = sor.u32 %s65, %s66
    %p68 = scmp.eq.s32.totalorder %s67, 0
    %s70 = sadd.s32 %s69, 1
    %s71 = scalar_select %p68, %s69, %s70
    %p74 = pneg %p68
    %p75 = scmp.eq.s32.totalorder %s10, 4
    %p76 = por %p74, %p75
    %p77 = scmp.ne.s32.totalorder %s69, %s72
    %p78 = scmp.eq.s32.totalorder %s10, 0
    %p79 = por %p77, %p78
    %p80 = scmp.ne.s32.totalorder %s69, %s72
    %p81 = scmp.eq.s32.totalorder %s15, 4
    %p82 = por %p80, %p81
    %p83 = scmp.ne.s32.totalorder %s72, %s73
    %p84 = scmp.eq.s32.totalorder %s15, 0
    %p85 = por %p83, %p84
    %p86 = scmp.ne.s32.totalorder %s72, %s73
    %p87 = scmp.eq.s32.totalorder %s16, 4
    %p88 = por %p86, %p87
    %p90 = scmp.ne.s32.totalorder %s73, %s89
    %p91 = scmp.eq.s32.totalorder %s16, 0
    %p92 = por %p90, %p91
    %s93 = ssub.s32 %s18, %s32
    %p94 = scmp.eq.s32.totalorder %s93, 0
    %s96 = sadd.s32 %s95, 1
    %s97 = scalar_select %p94, %s95, %s96
    %p100 = pneg %p94
    %p101 = scmp.eq.s32.totalorder %s10, 4
    %p102 = por %p100, %p101
    %p103 = scmp.ne.s32.totalorder %s95, %s98
    %p104 = scmp.eq.s32.totalorder %s10, 0
    %p105 = por %p103, %p104
    %p106 = scmp.ne.s32.totalorder %s95, %s98
    %p107 = scmp.eq.s32.totalorder %s15, 4
    %p108 = por %p106, %p107
    %p109 = scmp.ne.s32.totalorder %s98, %s99
    %p110 = scmp.eq.s32.totalorder %s15, 0
    %p111 = por %p109, %p110
    %p112 = scmp.ne.s32.totalorder %s98, %s99
    %p113 = scmp.eq.s32.totalorder %s16, 4
    %p114 = por %p112, %p113
    %p116 = scmp.ne.s32.totalorder %s99, %s115
    %p117 = scmp.eq.s32.totalorder %s16, 0
    %p118 = por %p116, %p117
    %s119 = ssub.s32 %s18, %s32
    %p120 = scmp.eq.s32.totalorder %s119, 0
    %s122 = sadd.s32 %s121, 1
    %s123 = scalar_select %p120, %s121, %s122
    %p126 = pneg %p120
    %p127 = scmp.eq.s32.totalorder %s10, 4
    %p128 = por %p126, %p127
    %p129 = scmp.ne.s32.totalorder %s121, %s124
    %p130 = scmp.eq.s32.totalorder %s10, 0
    %p131 = por %p129, %p130
    %p132 = scmp.ne.s32.totalorder %s121, %s124
    %p133 = scmp.eq.s32.totalorder %s15, 4
    %p134 = por %p132, %p133
    %p135 = scmp.ne.s32.totalorder %s124, %s125
    %p136 = scmp.eq.s32.totalorder %s15, 0
    %p137 = por %p135, %p136
    %p138 = scmp.ne.s32.totalorder %s124, %s125
    %p139 = scmp.eq.s32.totalorder %s16, 4
    %p140 = por %p138, %p139
    %p142 = scmp.ne.s32.totalorder %s125, %s141
    %p143 = scmp.eq.s32.totalorder %s16, 0
    %p144 = por %p142, %p143
    %s145 = ssub.s32 %s17, %s36
    %s146 = ssub.s32 %s18, %s32
    %s147 = sor.u32 %s145, %s146
    %p148 = scmp.eq.s32.totalorder %s147, 0
    %s150 = sadd.s32 %s149, 1
    %s151 = scalar_select %p148, %s149, %s150
    %p154 = pneg %p148
    %p155 = scmp.eq.s32.totalorder %s10, 4
    %p156 = por %p154, %p155
    %p157 = scmp.ne.s32.totalorder %s149, %s152
    %p158 = scmp.eq.s32.totalorder %s10, 0
    %p159 = por %p157, %p158
    %p160 = scmp.ne.s32.totalorder %s149, %s152
    %p161 = scmp.eq.s32.totalorder %s15, 4
    %p162 = por %p160, %p161
    %p163 = scmp.ne.s32.totalorder %s152, %s153
    %p164 = scmp.eq.s32.totalorder %s15, 0
    %p165 = por %p163, %p164
    %p166 = scmp.ne.s32.totalorder %s152, %s153
    %p167 = scmp.eq.s32.totalorder %s16, 4
    %p168 = por %p166, %p167
    %p170 = scmp.ne.s32.totalorder %s153, %s169
    %p171 = scmp.eq.s32.totalorder %s16, 0
    %p172 = por %p170, %p171
    %p173 = scmp.le.s32.totalorder 1, %s10
    %p174 = scmp.lt.s32.totalorder %s10, 6
    %p175 = pnand %p173, %p174
    %p176 = pneg %p175
    // Predicated region
    $region9: #{mamba_c_block_forward.13} parent=5 // pred_check
      _
    $region10: #{mamba_c_block_forward.13} parent=5 // pred_check_branch
      %178 = sbr.rel (%p175) target = $region12
    $region11: #{mamba_c_block_forward.13} parent=5 // pred_region
      %s179 = ssub.s32 %s10, 1
      // Predicated region
      $region13: #{mamba_c_block_forward.13} parent=11 // pred_check
        %p180 = pneg %p85
      $region14: #{mamba_c_block_forward.13} parent=11 // pred_check_branch
        %182 = sbr.rel (%p180) target = $region16
      $region15: #{mamba_c_block_forward.13} parent=11 // pred_region
        %s183 = smul.u32 16, %s22
        %p184 = scmp.lt.s32.totalorder %s183, 15
        %s185 = scalar_select %p184, %s183, 15
        %p186 = scmp.lt.s32.totalorder %s21, 0
        %s187 = scalar_select %p186, %s21, 0
        %s188 = sadd.s32 %s187, %s185
        %s189 = smul.addr %s188, 4
        %s190 = scalar_lea.vmem %s1, %s189
        %s191 = smul.u32 16, %s22
      $region16: #{mamba_c_block_forward.13} parent=11 // pred_fallthru
        _
      // Predicated region
      $region17: #{mamba_c_block_forward.13} parent=11 // pred_check
        %p192 = pneg %p111
      $region18: #{mamba_c_block_forward.13} parent=11 // pred_check_branch
        %194 = sbr.rel (%p192) target = $region20
      $region19: #{mamba_c_block_forward.13} parent=11 // pred_region
        %p195 = scmp.lt.s32.totalorder %s21, 0
        %s196 = scalar_select %p195, %s21, 0
        %s197 = scalar_lea.vmem %s2, %s196
      $region20: #{mamba_c_block_forward.13} parent=11 // pred_fallthru
        _
      // Predicated region
      $region21: #{mamba_c_block_forward.13} parent=11 // pred_check
        %p198 = pneg %p137
      $region22: #{mamba_c_block_forward.13} parent=11 // pred_check_branch
        %200 = sbr.rel (%p198) target = $region24
      $region23: #{mamba_c_block_forward.13} parent=11 // pred_region
        %p201 = scmp.lt.s32.totalorder %s21, 0
        %s202 = scalar_select %p201, %s21, 0
        %s203 = scalar_lea.vmem %s3, %s202
      $region24: #{mamba_c_block_forward.13} parent=11 // pred_fallthru
        _
    $region12: #{mamba_c_block_forward.13} parent=5 // pred_fallthru
      _
    %p204 = scmp.lt.s32.totalorder %s10, 5
    // Predicated region
    $region25: #{mamba_c_block_forward.13} parent=5 // pred_check
      %p205 = pneg %p204
    $region26: #{mamba_c_block_forward.13} parent=5 // pred_check_branch
      %207 = sbr.rel (%p205) target = $region28
    $region27: #{mamba_c_block_forward.13} parent=5 // pred_region
      // Predicated region
      $region29: #{mamba_c_block_forward.13} parent=27 // pred_check
        %p208 = pneg %p51
      $region30: #{mamba_c_block_forward.13} parent=27 // pred_check_branch
        %210 = sbr.rel (%p208) target = $region32
      $region31: #{mamba_c_block_forward.13} parent=27 // pred_region
        %s211 = smul.u32 32, %s17
        %p212 = scmp.lt.s32.totalorder %s211, 159
        %s213 = scalar_select %p212, %s211, 159
        %p214 = scmp.lt.s32.totalorder %s19, 0
        %s215 = scalar_select %p214, %s19, 0
        %s216 = sadd.s32 %s215, %s213
        %s217 = smul.addr %s216, 4
        %s218 = scalar_lea.vmem %s0, %s217
        %s219 = smul.u32 32, %s17
      $region32: #{mamba_c_block_forward.13} parent=27 // pred_fallthru
        _
    $region28: #{mamba_c_block_forward.13} parent=5 // pred_fallthru
      _
    %p220 = scmp.le.s32.totalorder 1, %s10
    %p221 = scmp.lt.s32.totalorder %s10, 6
    %p222 = pnand %p220, %p221
    %p223 = pneg %p222
    // Predicated region
    $region33: #{mamba_c_block_forward.13} parent=5 // pred_check
      _
    $region34: #{mamba_c_block_forward.13} parent=5 // pred_check_branch
      %225 = sbr.rel (%p222) target = $region36
    $region35: #{mamba_c_block_forward.13} parent=5 // pred_region
      %s226 = ssub.s32 %s10, 1
      %s227 = smul.u32 32, %s20
      %p228 = scmp.lt.s32.totalorder %s227, 159
      %s229 = scalar_select %p228, %s227, 159
      %p230 = scmp.lt.s32.totalorder %s22, 0
      %s231 = scalar_select %p230, %s22, 0
      %s232 = sadd.s32 %s231, %s229
      %s233 = smul.addr %s232, 4
      %s234 = scalar_lea.vmem %s0, %s233
      %p235 = pneg %p57
      %p236 = pneg %p54
      %s237 = smul.u32 16, %s22
      %p238 = scmp.lt.s32.totalorder %s237, 15
      %s239 = scalar_select %p238, %s237, 15
      %p240 = scmp.lt.s32.totalorder %s21, 0
      %s241 = scalar_select %p240, %s21, 0
      %s242 = sadd.s32 %s241, %s239
      %s243 = smul.addr %s242, 4
      %s244 = scalar_lea.vmem %s1, %s243
      %p245 = pneg %p85
      %p246 = pneg %p82
      %p247 = scmp.lt.s32.totalorder %s21, 0
      %s248 = scalar_select %p247, %s21, 0
      %s249 = scalar_lea.vmem %s2, %s248
      %p250 = pneg %p111
      %p251 = pneg %p108
      %p252 = scmp.lt.s32.totalorder %s21, 0
      %s253 = scalar_select %p252, %s21, 0
      %s254 = scalar_lea.vmem %s3, %s253
      %p255 = pneg %p137
      %p256 = pneg %p134
      %p257 = pneg %p165
      %p258 = pneg %p162
      %s259 = smul.u32 32, %s20
      %p260 = scmp.lt.s32.totalorder %s259, 159
      %s261 = scalar_select %p260, %s259, 159
      %p262 = scmp.lt.s32.totalorder %s21, 0
      %s263 = scalar_select %p262, %s21, 0
      %s264 = sadd.s32 %s263, %s261
      %s265 = smul.addr %s264, 8
      %s266 = scalar_lea.vmem %s4, %s265
      %s267 = smul.u32 32, %s20
      %p268 = scmp.lt.s32.totalorder %s267, 159
      %s269 = scalar_select %p268, %s267, 159
      %p270 = scmp.lt.s32.totalorder %s22, 0
      %s271 = scalar_select %p270, %s22, 0
      %s272 = sadd.s32 %s271, %s269
      %s273 = smul.addr %s272, 4
      %s274 = scalar_lea.vmem %s0, %s273
      %s275 = smul.u32 32, %s20
      %s276 = smul.u32 16, %s22
      %p277 = scmp.lt.s32.totalorder %s276, 15
      %s278 = scalar_select %p277, %s276, 15
      %p279 = scmp.lt.s32.totalorder %s21, 0
      %s280 = scalar_select %p279, %s21, 0
      %s281 = sadd.s32 %s280, %s278
      %s282 = smul.addr %s281, 4
      %s283 = scalar_lea.vmem %s1, %s282
      %s284 = smul.u32 16, %s22
      %p285 = scmp.lt.s32.totalorder %s21, 0
      %s286 = scalar_select %p285, %s21, 0
      %s287 = scalar_lea.vmem %s2, %s286
      %p288 = scmp.lt.s32.totalorder %s21, 0
      %s289 = scalar_select %p288, %s21, 0
      %s290 = scalar_lea.vmem %s3, %s289
      %s291 = smul.u32 32, %s20
      %p292 = scmp.lt.s32.totalorder %s291, 159
      %s293 = scalar_select %p292, %s291, 159
      %p294 = scmp.lt.s32.totalorder %s21, 0
      %s295 = scalar_select %p294, %s21, 0
      %s296 = sadd.s32 %s295, %s293
      %s297 = smul.addr %s296, 8
      %s298 = scalar_lea.vmem %s4, %s297
      %s299 = smul.u32 32, %s20
      %p301 = scmp.eq.s32.totalorder %s22, 0
      // Predicated region
      $region37: #{mamba_c_block_forward.13} parent=35 // pred_check
        %p302 = pneg %p301
      $region38: #{mamba_c_block_forward.13} parent=35 // pred_check_branch
        %304 = sbr.rel (%p302) target = $region40
      $region39: #{mamba_c_block_forward.13} parent=35 // pred_region
        %305 = vst [vmem:[#allocation2] sm:$0xff] 0.0
        %306 = vst [vmem:[#allocation2 + $0x8] sm:$0xff] 0.0
        %307 = vst [vmem:[#allocation2 + $0x10] sm:$0xff] 0.0
        %308 = vst [vmem:[#allocation2 + $0x18] sm:$0xff] 0.0
        %309 = vst [vmem:[#allocation2 + $0x20] sm:$0xff] 0.0
        %310 = vst [vmem:[#allocation2 + $0x28] sm:$0xff] 0.0
        %311 = vst [vmem:[#allocation2 + $0x30] sm:$0xff] 0.0
        %312 = vst [vmem:[#allocation2 + $0x38] sm:$0xff] 0.0
        %313 = vst [vmem:[#allocation2 + $0x40] sm:$0xff] 0.0
        %314 = vst [vmem:[#allocation2 + $0x48] sm:$0xff] 0.0
        %315 = vst [vmem:[#allocation2 + $0x50] sm:$0xff] 0.0
        %316 = vst [vmem:[#allocation2 + $0x58] sm:$0xff] 0.0
        %317 = vst [vmem:[#allocation2 + $0x60] sm:$0xff] 0.0
        %318 = vst [vmem:[#allocation2 + $0x68] sm:$0xff] 0.0
        %319 = vst [vmem:[#allocation2 + $0x70] sm:$0xff] 0.0
        %320 = vst [vmem:[#allocation2 + $0x78] sm:$0xff] 0.0
        %321 = vst [vmem:[#allocation2 + $0x80] sm:$0xff] 0.0
        %322 = vst [vmem:[#allocation2 + $0x88] sm:$0xff] 0.0
        %323 = vst [vmem:[#allocation2 + $0x90] sm:$0xff] 0.0
        %324 = vst [vmem:[#allocation2 + $0x98] sm:$0xff] 0.0
        %325 = vst [vmem:[#allocation2 + $0xa0] sm:$0xff] 0.0
        %326 = vst [vmem:[#allocation2 + $0xa8] sm:$0xff] 0.0
        %327 = vst [vmem:[#allocation2 + $0xb0] sm:$0xff] 0.0
        %328 = vst [vmem:[#allocation2 + $0xb8] sm:$0xff] 0.0
        %329 = vst [vmem:[#allocation2 + $0xc0] sm:$0xff] 0.0
        %330 = vst [vmem:[#allocation2 + $0xc8] sm:$0xff] 0.0
        %331 = vst [vmem:[#allocation2 + $0xd0] sm:$0xff] 0.0
        %332 = vst [vmem:[#allocation2 + $0xd8] sm:$0xff] 0.0
        %333 = vst [vmem:[#allocation2 + $0xe0] sm:$0xff] 0.0
        %334 = vst [vmem:[#allocation2 + $0xe8] sm:$0xff] 0.0
        %335 = vst [vmem:[#allocation2 + $0xf0] sm:$0xff] 0.0
        %336 = vst [vmem:[#allocation2 + $0xf8] sm:$0xff] 0.0
      $region40: #{mamba_c_block_forward.13} parent=35 // pred_fallthru
        _
      %v337 = vld [vmem:[#allocation2] sm:$0xff]
      %v338 = vld [vmem:[#allocation2 + $0x8] sm:$0xff]
      %v339 = vld [vmem:[#allocation2 + $0x10] sm:$0xff]
      %v340 = vld [vmem:[#allocation2 + $0x18] sm:$0xff]
      %v341 = vld [vmem:[#allocation2 + $0x20] sm:$0xff]
      %v342 = vld [vmem:[#allocation2 + $0x28] sm:$0xff]
      %v343 = vld [vmem:[#allocation2 + $0x30] sm:$0xff]
      %v344 = vld [vmem:[#allocation2 + $0x38] sm:$0xff]
      %v345 = vld [vmem:[#allocation2 + $0x40] sm:$0xff]
      %v346 = vld [vmem:[#allocation2 + $0x48] sm:$0xff]
      %v347 = vld [vmem:[#allocation2 + $0x50] sm:$0xff]
      %v348 = vld [vmem:[#allocation2 + $0x58] sm:$0xff]
      %v349 = vld [vmem:[#allocation2 + $0x60] sm:$0xff]
      %v350 = vld [vmem:[#allocation2 + $0x68] sm:$0xff]
      %v351 = vld [vmem:[#allocation2 + $0x70] sm:$0xff]
      %v352 = vld [vmem:[#allocation2 + $0x78] sm:$0xff]
      %v353 = vld [vmem:[#allocation2 + $0x80] sm:$0xff]
      %v354 = vld [vmem:[#allocation2 + $0x88] sm:$0xff]
      %v355 = vld [vmem:[#allocation2 + $0x90] sm:$0xff]
      %v356 = vld [vmem:[#allocation2 + $0x98] sm:$0xff]
      %v357 = vld [vmem:[#allocation2 + $0xa0] sm:$0xff]
      %v358 = vld [vmem:[#allocation2 + $0xa8] sm:$0xff]
      %v359 = vld [vmem:[#allocation2 + $0xb0] sm:$0xff]
      %v360 = vld [vmem:[#allocation2 + $0xb8] sm:$0xff]
      %v361 = vld [vmem:[#allocation2 + $0xc0] sm:$0xff]
      %v362 = vld [vmem:[#allocation2 + $0xc8] sm:$0xff]
      %v363 = vld [vmem:[#allocation2 + $0xd0] sm:$0xff]
      %v364 = vld [vmem:[#allocation2 + $0xd8] sm:$0xff]
      %v365 = vld [vmem:[#allocation2 + $0xe0] sm:$0xff]
      %v366 = vld [vmem:[#allocation2 + $0xe8] sm:$0xff]
      %v367 = vld [vmem:[#allocation2 + $0xf0] sm:$0xff]
      %v368 = vld [vmem:[#allocation2 + $0xf8] sm:$0xff]
      %v369 = vld [vmem:[%s274] sm:$0xf]
      %v370 = vld [vmem:[%s274 + $0x4] sm:$0xf]
      %v371 = vld [vmem:[%s274 + $0x8] sm:$0xf]
      %v372 = vld [vmem:[%s274 + $0xc] sm:$0xf]
      %v373 = vld [vmem:[%s274 + $0x10] sm:$0xf]
      %v374 = vld [vmem:[%s274 + $0x14] sm:$0xf]
      %v375 = vld [vmem:[%s274 + $0x18] sm:$0xf]
      %v376 = vld [vmem:[%s274 + $0x1c] sm:$0xf]
      %v377 = vld [vmem:[%s274 + $0x20] sm:$0xf]
      %v378 = vld [vmem:[%s274 + $0x24] sm:$0xf]
      %v379 = vld [vmem:[%s274 + $0x28] sm:$0xf]
      %v380 = vld [vmem:[%s274 + $0x2c] sm:$0xf]
      %v381 = vld [vmem:[%s274 + $0x30] sm:$0xf]
      %v382 = vld [vmem:[%s274 + $0x34] sm:$0xf]
      %v383 = vld [vmem:[%s274 + $0x38] sm:$0xf]
      %v384 = vld [vmem:[%s274 + $0x3c] sm:$0xf]
      %v385 = vld [vmem:[%s274 + $0x40] sm:$0xf]
      %v386 = vld [vmem:[%s274 + $0x44] sm:$0xf]
      %v387 = vld [vmem:[%s274 + $0x48] sm:$0xf]
      %v388 = vld [vmem:[%s274 + $0x4c] sm:$0xf]
      %v389 = vld [vmem:[%s274 + $0x50] sm:$0xf]
      %v390 = vld [vmem:[%s274 + $0x54] sm:$0xf]
      %v391 = vld [vmem:[%s274 + $0x58] sm:$0xf]
      %v392 = vld [vmem:[%s274 + $0x5c] sm:$0xf]
      %v393 = vld [vmem:[%s274 + $0x60] sm:$0xf]
      %v394 = vld [vmem:[%s274 + $0x64] sm:$0xf]
      %v395 = vld [vmem:[%s274 + $0x68] sm:$0xf]
      %v396 = vld [vmem:[%s274 + $0x6c] sm:$0xf]
      %v397 = vld [vmem:[%s274 + $0x70] sm:$0xf]
      %v398 = vld [vmem:[%s274 + $0x74] sm:$0xf]
      %v399 = vld [vmem:[%s274 + $0x78] sm:$0xf]
      %v400 = vld [vmem:[%s274 + $0x7c] sm:$0xf]
      %v401 = vld [vmem:[%s283] sm:$0xf]
      %v402 = vld [vmem:[%s283 + $0x4] sm:$0xf]
      %v403 = vld [vmem:[%s283 + $0x8] sm:$0xf]
      %v404 = vld [vmem:[%s283 + $0xc] sm:$0xf]
      %v405 = vld [vmem:[%s283 + $0x10] sm:$0xf]
      %v406 = vld [vmem:[%s283 + $0x14] sm:$0xf]
      %v407 = vld [vmem:[%s283 + $0x18] sm:$0xf]
      %v408 = vld [vmem:[%s283 + $0x1c] sm:$0xf]
      %v409 = vld [vmem:[%s283 + $0x20] sm:$0xf]
      %v410 = vld [vmem:[%s283 + $0x24] sm:$0xf]
      %v411 = vld [vmem:[%s283 + $0x28] sm:$0xf]
      %v412 = vld [vmem:[%s283 + $0x2c] sm:$0xf]
      %v413 = vld [vmem:[%s283 + $0x30] sm:$0xf]
      %v414 = vld [vmem:[%s283 + $0x34] sm:$0xf]
      %v415 = vld [vmem:[%s283 + $0x38] sm:$0xf]
      %v416 = vld [vmem:[%s283 + $0x3c] sm:$0xf]
      %v449 = vunpack.c.l.b16 %v369
      %v450 = vunpack.c.l.b16 %v370
      %v451 = vunpack.c.l.b16 %v371
      %v452 = vunpack.c.l.b16 %v372
      %v453 = vunpack.c.l.b16 %v373
      %v454 = vunpack.c.l.b16 %v374
      %v455 = vunpack.c.l.b16 %v375
      %v456 = vunpack.c.l.b16 %v376
      %v457 = vunpack.c.l.b16 %v377
      %v458 = vunpack.c.l.b16 %v378
      %v459 = vunpack.c.l.b16 %v379
      %v460 = vunpack.c.l.b16 %v380
      %v461 = vunpack.c.l.b16 %v381
      %v462 = vunpack.c.l.b16 %v382
      %v463 = vunpack.c.l.b16 %v383
      %v464 = vunpack.c.l.b16 %v384
      %v465 = vunpack.c.l.b16 %v385
      %v466 = vunpack.c.l.b16 %v386
      %v467 = vunpack.c.l.b16 %v387
      %v468 = vunpack.c.l.b16 %v388
      %v469 = vunpack.c.l.b16 %v389
      %v470 = vunpack.c.l.b16 %v390
      %v471 = vunpack.c.l.b16 %v391
      %v472 = vunpack.c.l.b16 %v392
      %v473 = vunpack.c.l.b16 %v393
      %v474 = vunpack.c.l.b16 %v394
      %v475 = vunpack.c.l.b16 %v395
      %v476 = vunpack.c.l.b16 %v396
      %v477 = vunpack.c.l.b16 %v397
      %v478 = vunpack.c.l.b16 %v398
      %v479 = vunpack.c.l.b16 %v399
      %v480 = vunpack.c.l.b16 %v400
      %v481 = vpack.c.b16 %v450, %v449
      %v482 = vpack.c.b16 %v452, %v451
      %v483 = vpack.c.b16 %v454, %v453
      %v484 = vpack.c.b16 %v456, %v455
      %v485 = vpack.c.b16 %v458, %v457
      %v486 = vpack.c.b16 %v460, %v459
      %v487 = vpack.c.b16 %v462, %v461
      %v488 = vpack.c.b16 %v464, %v463
      %v489 = vpack.c.b16 %v466, %v465
      %v490 = vpack.c.b16 %v468, %v467
      %v491 = vpack.c.b16 %v470, %v469
      %v492 = vpack.c.b16 %v472, %v471
      %v493 = vpack.c.b16 %v474, %v473
      %v494 = vpack.c.b16 %v476, %v475
      %v495 = vpack.c.b16 %v478, %v477
      %v496 = vpack.c.b16 %v480, %v479
      %v529 = vunpack.c.l.b16 %v401
      %v530 = vunpack.c.l.b16 %v402
      %v531 = vunpack.c.l.b16 %v403
      %v532 = vunpack.c.l.b16 %v404
      %v533 = vunpack.c.l.b16 %v405
      %v534 = vunpack.c.l.b16 %v406
      %v535 = vunpack.c.l.b16 %v407
      %v536 = vunpack.c.l.b16 %v408
      %v537 = vunpack.c.l.b16 %v409
      %v538 = vunpack.c.l.b16 %v410
      %v539 = vunpack.c.l.b16 %v411
      %v540 = vunpack.c.l.b16 %v412
      %v541 = vunpack.c.l.b16 %v413
      %v542 = vunpack.c.l.b16 %v414
      %v543 = vunpack.c.l.b16 %v415
      %v544 = vunpack.c.l.b16 %v416
      %v545 = vpack.c.b16 %v530, %v529
      %v546 = vpack.c.b16 %v532, %v531
      %v547 = vpack.c.b16 %v534, %v533
      %v548 = vpack.c.b16 %v536, %v535
      %v549 = vpack.c.b16 %v538, %v537
      %v550 = vpack.c.b16 %v540, %v539
      %v551 = vpack.c.b16 %v542, %v541
      %v552 = vpack.c.b16 %v544, %v543
      %561 = vmatprep.subr.bf16.mxu0 0
      %562 = vmatpush1.bf16.msra.mxu0 %v545
      %563 = vmatprep.subr.bf16.mxu0 0
      %564 = vmatpush1.bf16.msra.mxu0 %v546
      %565 = vmatprep.subr.bf16.mxu0 0
      %566 = vmatpush1.bf16.msra.mxu0 %v547
      %567 = vmatprep.subr.bf16.mxu0 0
      %568 = vmatpush1.bf16.msra.mxu0 %v548
      %569 = vmatprep.subr.bf16.mxu0 0
      %570 = vmatpush1.bf16.msra.mxu0 %v549
      %571 = vmatprep.subr.bf16.mxu0 0
      %572 = vmatpush1.bf16.msra.mxu0 %v550
      %573 = vmatprep.subr.bf16.mxu0 0
      %574 = vmatpush1.bf16.msra.mxu0 %v551
      %575 = vmatprep.subr.bf16.mxu0 0
      %576 = vmatpush1.bf16.msra.mxu0 %v552
      %577 = vmatprep.subr.bf16.mxu0 0
      %578 = vmatpush1.bf16.msra.mxu0 0
      %579 = vmatprep.subr.bf16.mxu0 0
      %580 = vmatpush1.bf16.msra.mxu0 0
      %581 = vmatprep.subr.bf16.mxu0 0
      %582 = vmatpush1.bf16.msra.mxu0 0
      %583 = vmatprep.subr.bf16.mxu0 0
      %584 = vmatpush1.bf16.msra.mxu0 0
      %585 = vmatprep.subr.bf16.mxu0 0
      %586 = vmatpush1.bf16.msra.mxu0 0
      %587 = vmatprep.subr.bf16.mxu0 0
      %588 = vmatpush1.bf16.msra.mxu0 0
      %589 = vmatprep.subr.bf16.mxu0 0
      %590 = vmatpush1.bf16.msra.mxu0 0
      %591 = vmatprep.subr.bf16.mxu0 0
      %592 = vmatpush1.bf16.msra.mxu0 0
      %593 = vmatprep.mubr.bf16.mxu0 0
      %594 = vmatmul.mubr.bf16.gmra.mrb[0].mxu0 %v481
      %v595 = vpop.f32.mrb[0].mxu0
      %v596 = vadd.f32 0.0, %v595
      %v597 = vpop.f32.mrb[0].mxu0
      %v598 = vpop.f32.mrb[0].mxu0
      %v599 = vadd.f32 0.0, %v598
      %v600 = vpop.f32.mrb[0].mxu0
      %601 = vmatprep.mubr.bf16.mxu0 0
      %602 = vmatmul.mubr.bf16.gmra.mrb[0].mxu0 %v482
      %v603 = vpop.f32.mrb[0].mxu0
      %v604 = vadd.f32 0.0, %v603
      %v605 = vpop.f32.mrb[0].mxu0
      %v606 = vpop.f32.mrb[0].mxu0
      %v607 = vadd.f32 0.0, %v606
      %v608 = vpop.f32.mrb[0].mxu0
      %609 = vmatprep.mubr.bf16.mxu0 0
      %610 = vmatmul.mubr.bf16.gmra.mrb[0].mxu0 %v483
      %v611 = vpop.f32.mrb[0].mxu0
      %v612 = vadd.f32 0.0, %v611
      %v613 = vpop.f32.mrb[0].mxu0
      %v614 = vpop.f32.mrb[0].mxu0
      %v615 = vadd.f32 0.0, %v614
      %v616 = vpop.f32.mrb[0].mxu0
      %617 = vmatprep.mubr.bf16.mxu0 0
      %618 = vmatmul.mubr.bf16.gmra.mrb[0].mxu0 %v484
      %v619 = vpop.f32.mrb[0].mxu0
      %v620 = vadd.f32 0.0, %v619
      %v621 = vpop.f32.mrb[0].mxu0
      %v622 = vpop.f32.mrb[0].mxu0
      %v623 = vadd.f32 0.0, %v622
      %v624 = vpop.f32.mrb[0].mxu0
      %625 = vmatprep.mubr.bf16.mxu0 0
      %626 = vmatmul.mubr.bf16.gmra.mrb[0].mxu0 %v485
      %v627 = vpop.f32.mrb[0].mxu0
      %v628 = vadd.f32 0.0, %v627
      %v629 = vpop.f32.mrb[0].mxu0
      %v630 = vpop.f32.mrb[0].mxu0
      %v631 = vadd.f32 0.0, %v630
      %v632 = vpop.f32.mrb[0].mxu0
      %633 = vmatprep.mubr.bf16.mxu0 0
      %634 = vmatmul.mubr.bf16.gmra.mrb[0].mxu0 %v486
      %v635 = vpop.f32.mrb[0].mxu0
      %v636 = vadd.f32 0.0, %v635
      %v637 = vpop.f32.mrb[0].mxu0
      %v638 = vpop.f32.mrb[0].mxu0
      %v639 = vadd.f32 0.0, %v638
      %v640 = vpop.f32.mrb[0].mxu0
      %641 = vmatprep.mubr.bf16.mxu0 0
      %642 = vmatmul.mubr.bf16.gmra.mrb[0].mxu0 %v487
      %v643 = vpop.f32.mrb[0].mxu0
      %v644 = vadd.f32 0.0, %v643
      %v645 = vpop.f32.mrb[0].mxu0
      %v646 = vpop.f32.mrb[0].mxu0
      %v647 = vadd.f32 0.0, %v646
      %v648 = vpop.f32.mrb[0].mxu0
      %649 = vmatprep.mubr.bf16.mxu0 0
      %650 = vmatmul.mubr.bf16.gmra.mrb[0].mxu0 %v488
      %v651 = vpop.f32.mrb[0].mxu0
      %v652 = vadd.f32 0.0, %v651
      %v653 = vpop.f32.mrb[0].mxu0
      %v654 = vpop.f32.mrb[0].mxu0
      %v655 = vadd.f32 0.0, %v654
      %v656 = vpop.f32.mrb[0].mxu0
      %657 = vmatprep.mubr.bf16.mxu0 0
      %658 = vmatmul.mubr.bf16.gmra.mrb[0].mxu0 %v489
      %v659 = vpop.f32.mrb[0].mxu0
      %v660 = vadd.f32 0.0, %v659
      %v661 = vpop.f32.mrb[0].mxu0
      %v662 = vpop.f32.mrb[0].mxu0
      %v663 = vadd.f32 0.0, %v662
      %v664 = vpop.f32.mrb[0].mxu0
      %665 = vmatprep.mubr.bf16.mxu0 0
      %666 = vmatmul.mubr.bf16.gmra.mrb[0].mxu0 %v490
      %v667 = vpop.f32.mrb[0].mxu0
      %v668 = vadd.f32 0.0, %v667
      %v669 = vpop.f32.mrb[0].mxu0
      %v670 = vpop.f32.mrb[0].mxu0
      %v671 = vadd.f32 0.0, %v670
      %v672 = vpop.f32.mrb[0].mxu0
      %673 = vmatprep.mubr.bf16.mxu0 0
      %674 = vmatmul.mubr.bf16.gmra.mrb[0].mxu0 %v491
      %v675 = vpop.f32.mrb[0].mxu0
      %v676 = vadd.f32 0.0, %v675
      %v677 = vpop.f32.mrb[0].mxu0
      %v678 = vpop.f32.mrb[0].mxu0
      %v679 = vadd.f32 0.0, %v678
      %v680 = vpop.f32.mrb[0].mxu0
      %681 = vmatprep.mubr.bf16.mxu0 0
      %682 = vmatmul.mubr.bf16.gmra.mrb[0].mxu0 %v492
      %v683 = vpop.f32.mrb[0].mxu0
      %v684 = vadd.f32 0.0, %v683
      %v685 = vpop.f32.mrb[0].mxu0
      %v686 = vpop.f32.mrb[0].mxu0
      %v687 = vadd.f32 0.0, %v686
      %v688 = vpop.f32.mrb[0].mxu0
      %689 = vmatprep.mubr.bf16.mxu0 0
      %690 = vmatmul.mubr.bf16.gmra.mrb[0].mxu0 %v493
      %v691 = vpop.f32.mrb[0].mxu0
      %v692 = vadd.f32 0.0, %v691
      %v693 = vpop.f32.mrb[0].mxu0
      %v694 = vpop.f32.mrb[0].mxu0
      %v695 = vadd.f32 0.0, %v694
      %v696 = vpop.f32.mrb[0].mxu0
      %697 = vmatprep.mubr.bf16.mxu0 0
      %698 = vmatmul.mubr.bf16.gmra.mrb[0].mxu0 %v494
      %v699 = vpop.f32.mrb[0].mxu0
      %v700 = vadd.f32 0.0, %v699
      %v701 = vpop.f32.mrb[0].mxu0
      %v702 = vpop.f32.mrb[0].mxu0
      %v703 = vadd.f32 0.0, %v702
      %v704 = vpop.f32.mrb[0].mxu0
      %705 = vmatprep.mubr.bf16.mxu0 0
      %706 = vmatmul.mubr.bf16.gmra.mrb[0].mxu0 %v495
      %v707 = vpop.f32.mrb[0].mxu0
      %v708 = vadd.f32 0.0, %v707
      %v709 = vpop.f32.mrb[0].mxu0
      %v710 = vpop.f32.mrb[0].mxu0
      %v711 = vadd.f32 0.0, %v710
      %v712 = vpop.f32.mrb[0].mxu0
      %713 = vmatprep.mubr.bf16.mxu0 0
      %714 = vmatmul.mubr.bf16.gmra.mrb[0].mxu0 %v496
      %v715 = vpop.f32.mrb[0].mxu0
      %v716 = vadd.f32 0.0, %v715
      %v717 = vpop.f32.mrb[0].mxu0
      %v718 = vpop.f32.mrb[0].mxu0
      %v719 = vadd.f32 0.0, %v718
      %v720 = vpop.f32.mrb[0].mxu0
      %721 = vdwg.mxu0
      %v722 = vadd.f32 %v337, %v596
      %v723 = vadd.f32 %v338, %v599
      %v724 = vadd.f32 %v339, %v604
      %v725 = vadd.f32 %v340, %v607
      %v726 = vadd.f32 %v341, %v612
      %v727 = vadd.f32 %v342, %v615
      %v728 = vadd.f32 %v343, %v620
      %v729 = vadd.f32 %v344, %v623
      %v730 = vadd.f32 %v345, %v628
      %v731 = vadd.f32 %v346, %v631
      %v732 = vadd.f32 %v347, %v636
      %v733 = vadd.f32 %v348, %v639
      %v734 = vadd.f32 %v349, %v644
      %v735 = vadd.f32 %v350, %v647
      %v736 = vadd.f32 %v351, %v652
      %v737 = vadd.f32 %v352, %v655
      %v738 = vadd.f32 %v353, %v660
      %v739 = vadd.f32 %v354, %v663
      %v740 = vadd.f32 %v355, %v668
      %v741 = vadd.f32 %v356, %v671
      %v742 = vadd.f32 %v357, %v676
      %v743 = vadd.f32 %v358, %v679
      %v744 = vadd.f32 %v359, %v684
      %v745 = vadd.f32 %v360, %v687
      %v746 = vadd.f32 %v361, %v692
      %v747 = vadd.f32 %v362, %v695
      %v748 = vadd.f32 %v363, %v700
      %v749 = vadd.f32 %v364, %v703
      %v750 = vadd.f32 %v365, %v708
      %v751 = vadd.f32 %v366, %v711
      %v752 = vadd.f32 %v367, %v716
      %v753 = vadd.f32 %v368, %v719
      %754 = vst [vmem:[#allocation2] sm:$0xff] %v722
      %755 = vst [vmem:[#allocation2 + $0x8] sm:$0xff] %v723
      %756 = vst [vmem:[#allocation2 + $0x10] sm:$0xff] %v724
      %757 = vst [vmem:[#allocation2 + $0x18] sm:$0xff] %v725
      %758 = vst [vmem:[#allocation2 + $0x20] sm:$0xff] %v726
      %759 = vst [vmem:[#allocation2 + $0x28] sm:$0xff] %v727
      %760 = vst [vmem:[#allocation2 + $0x30] sm:$0xff] %v728
      %761 = vst [vmem:[#allocation2 + $0x38] sm:$0xff] %v729
      %762 = vst [vmem:[#allocation2 + $0x40] sm:$0xff] %v730
      %763 = vst [vmem:[#allocation2 + $0x48] sm:$0xff] %v731
      %764 = vst [vmem:[#allocation2 + $0x50] sm:$0xff] %v732
      %765 = vst [vmem:[#allocation2 + $0x58] sm:$0xff] %v733
      %766 = vst [vmem:[#allocation2 + $0x60] sm:$0xff] %v734
      %767 = vst [vmem:[#allocation2 + $0x68] sm:$0xff] %v735
      %768 = vst [vmem:[#allocation2 + $0x70] sm:$0xff] %v736
      %769 = vst [vmem:[#allocation2 + $0x78] sm:$0xff] %v737
      %770 = vst [vmem:[#allocation2 + $0x80] sm:$0xff] %v738
      %771 = vst [vmem:[#allocation2 + $0x88] sm:$0xff] %v739
      %772 = vst [vmem:[#allocation2 + $0x90] sm:$0xff] %v740
      %773 = vst [vmem:[#allocation2 + $0x98] sm:$0xff] %v741
      %774 = vst [vmem:[#allocation2 + $0xa0] sm:$0xff] %v742
      %775 = vst [vmem:[#allocation2 + $0xa8] sm:$0xff] %v743
      %776 = vst [vmem:[#allocation2 + $0xb0] sm:$0xff] %v744
      %777 = vst [vmem:[#allocation2 + $0xb8] sm:$0xff] %v745
      %778 = vst [vmem:[#allocation2 + $0xc0] sm:$0xff] %v746
      %779 = vst [vmem:[#allocation2 + $0xc8] sm:$0xff] %v747
      %780 = vst [vmem:[#allocation2 + $0xd0] sm:$0xff] %v748
      %781 = vst [vmem:[#allocation2 + $0xd8] sm:$0xff] %v749
      %782 = vst [vmem:[#allocation2 + $0xe0] sm:$0xff] %v750
      %783 = vst [vmem:[#allocation2 + $0xe8] sm:$0xff] %v751
      %784 = vst [vmem:[#allocation2 + $0xf0] sm:$0xff] %v752
      %785 = vst [vmem:[#allocation2 + $0xf8] sm:$0xff] %v753
      // Predicated region
      $region41: #{mamba_c_block_forward.13} parent=35 // pred_check
        %p786 = pneg %p301
      $region42: #{mamba_c_block_forward.13} parent=35 // pred_check_branch
        %788 = sbr.rel (%p786) target = $region44
      $region43: #{mamba_c_block_forward.13} parent=35 // pred_region
        %v789 = vld [vmem:[#allocation2] sm:$0xff]
        %v790 = vld [vmem:[#allocation2 + $0x8] sm:$0xff]
        %v791 = vld [vmem:[#allocation2 + $0x10] sm:$0xff]
        %v792 = vld [vmem:[#allocation2 + $0x18] sm:$0xff]
        %v793 = vld [vmem:[#allocation2 + $0x20] sm:$0xff]
        %v794 = vld [vmem:[#allocation2 + $0x28] sm:$0xff]
        %v795 = vld [vmem:[#allocation2 + $0x30] sm:$0xff]
        %v796 = vld [vmem:[#allocation2 + $0x38] sm:$0xff]
        %v797 = vld [vmem:[#allocation2 + $0x40] sm:$0xff]
        %v798 = vld [vmem:[#allocation2 + $0x48] sm:$0xff]
        %v799 = vld [vmem:[#allocation2 + $0x50] sm:$0xff]
        %v800 = vld [vmem:[#allocation2 + $0x58] sm:$0xff]
        %v801 = vld [vmem:[#allocation2 + $0x60] sm:$0xff]
        %v802 = vld [vmem:[#allocation2 + $0x68] sm:$0xff]
        %v803 = vld [vmem:[#allocation2 + $0x70] sm:$0xff]
        %v804 = vld [vmem:[#allocation2 + $0x78] sm:$0xff]
        %v805 = vld [vmem:[#allocation2 + $0x80] sm:$0xff]
        %v806 = vld [vmem:[#allocation2 + $0x88] sm:$0xff]
        %v807 = vld [vmem:[#allocation2 + $0x90] sm:$0xff]
        %v808 = vld [vmem:[#allocation2 + $0x98] sm:$0xff]
        %v809 = vld [vmem:[#allocation2 + $0xa0] sm:$0xff]
        %v810 = vld [vmem:[#allocation2 + $0xa8] sm:$0xff]
        %v811 = vld [vmem:[#allocation2 + $0xb0] sm:$0xff]
        %v812 = vld [vmem:[#allocation2 + $0xb8] sm:$0xff]
        %v813 = vld [vmem:[#allocation2 + $0xc0] sm:$0xff]
        %v814 = vld [vmem:[#allocation2 + $0xc8] sm:$0xff]
        %v815 = vld [vmem:[#allocation2 + $0xd0] sm:$0xff]
        %v816 = vld [vmem:[#allocation2 + $0xd8] sm:$0xff]
        %v817 = vld [vmem:[#allocation2 + $0xe0] sm:$0xff]
        %v818 = vld [vmem:[#allocation2 + $0xe8] sm:$0xff]
        %v819 = vld [vmem:[#allocation2 + $0xf0] sm:$0xff]
        %v820 = vld [vmem:[#allocation2 + $0xf8] sm:$0xff]
        %v821 = vld [vmem:[%s287] sm:$0x1]
        %v823 = vlaneseq
        %v824 = vshrl.u32 %v823, 7
        %v825 = vsub.s32 0, %v824
        %v826 = vrot.slane %v821, %v825
        %v828 = vmul.f32 %v789, %v826
        %v829 = vmul.f32 %v790, %v826
        %v830 = vmul.f32 %v791, %v826
        %v831 = vmul.f32 %v792, %v826
        %v832 = vmul.f32 %v793, %v826
        %v833 = vmul.f32 %v794, %v826
        %v834 = vmul.f32 %v795, %v826
        %v835 = vmul.f32 %v796, %v826
        %v836 = vmul.f32 %v797, %v826
        %v837 = vmul.f32 %v798, %v826
        %v838 = vmul.f32 %v799, %v826
        %v839 = vmul.f32 %v800, %v826
        %v840 = vmul.f32 %v801, %v826
        %v841 = vmul.f32 %v802, %v826
        %v842 = vmul.f32 %v803, %v826
        %v843 = vmul.f32 %v804, %v826
        %v844 = vmul.f32 %v805, %v826
        %v845 = vmul.f32 %v806, %v826
        %v846 = vmul.f32 %v807, %v826
        %v847 = vmul.f32 %v808, %v826
        %v848 = vmul.f32 %v809, %v826
        %v849 = vmul.f32 %v810, %v826
        %v850 = vmul.f32 %v811, %v826
        %v851 = vmul.f32 %v812, %v826
        %v852 = vmul.f32 %v813, %v826
        %v853 = vmul.f32 %v814, %v826
        %v854 = vmul.f32 %v815, %v826
        %v855 = vmul.f32 %v816, %v826
        %v856 = vmul.f32 %v817, %v826
        %v857 = vmul.f32 %v818, %v826
        %v858 = vmul.f32 %v819, %v826
        %v859 = vmul.f32 %v820, %v826
        %v860 = vld [vmem:[%s290] sm:$0x1]
        %v862 = vlaneseq
        %v863 = vshrl.u32 %v862, 7
        %v864 = vsub.s32 0, %v863
        %v865 = vrot.slane %v860, %v864
        %v867 = vadd.f32 %v828, %v865
        %v868 = vadd.f32 %v829, %v865
        %v869 = vadd.f32 %v830, %v865
        %v870 = vadd.f32 %v831, %v865
        %v871 = vadd.f32 %v832, %v865
        %v872 = vadd.f32 %v833, %v865
        %v873 = vadd.f32 %v834, %v865
        %v874 = vadd.f32 %v835, %v865
        %v875 = vadd.f32 %v836, %v865
        %v876 = vadd.f32 %v837, %v865
        %v877 = vadd.f32 %v838, %v865
        %v878 = vadd.f32 %v839, %v865
        %v879 = vadd.f32 %v840, %v865
        %v880 = vadd.f32 %v841, %v865
        %v881 = vadd.f32 %v842, %v865
        %v882 = vadd.f32 %v843, %v865
        %v883 = vadd.f32 %v844, %v865
        %v884 = vadd.f32 %v845, %v865
        %v885 = vadd.f32 %v846, %v865
        %v886 = vadd.f32 %v847, %v865
        %v887 = vadd.f32 %v848, %v865
        %v888 = vadd.f32 %v849, %v865
        %v889 = vadd.f32 %v850, %v865
        %v890 = vadd.f32 %v851, %v865
        %v891 = vadd.f32 %v852, %v865
        %v892 = vadd.f32 %v853, %v865
        %v893 = vadd.f32 %v854, %v865
        %v894 = vadd.f32 %v855, %v865
        %v895 = vadd.f32 %v856, %v865
        %v896 = vadd.f32 %v857, %v865
        %v897 = vadd.f32 %v858, %v865
        %v898 = vadd.f32 %v859, %v865
        %899 = vst [vmem:[%s298] sm:$0xff] %v867
        %900 = vst [vmem:[%s298 + $0x8] sm:$0xff] %v868
        %901 = vst [vmem:[%s298 + $0x10] sm:$0xff] %v869
        %902 = vst [vmem:[%s298 + $0x18] sm:$0xff] %v870
        %903 = vst [vmem:[%s298 + $0x20] sm:$0xff] %v871
        %904 = vst [vmem:[%s298 + $0x28] sm:$0xff] %v872
        %905 = vst [vmem:[%s298 + $0x30] sm:$0xff] %v873
        %906 = vst [vmem:[%s298 + $0x38] sm:$0xff] %v874
        %907 = vst [vmem:[%s298 + $0x40] sm:$0xff] %v875
        %908 = vst [vmem:[%s298 + $0x48] sm:$0xff] %v876
        %909 = vst [vmem:[%s298 + $0x50] sm:$0xff] %v877
        %910 = vst [vmem:[%s298 + $0x58] sm:$0xff] %v878
        %911 = vst [vmem:[%s298 + $0x60] sm:$0xff] %v879
        %912 = vst [vmem:[%s298 + $0x68] sm:$0xff] %v880
        %913 = vst [vmem:[%s298 + $0x70] sm:$0xff] %v881
        %914 = vst [vmem:[%s298 + $0x78] sm:$0xff] %v882
        %915 = vst [vmem:[%s298 + $0x80] sm:$0xff] %v883
        %916 = vst [vmem:[%s298 + $0x88] sm:$0xff] %v884
        %917 = vst [vmem:[%s298 + $0x90] sm:$0xff] %v885
        %918 = vst [vmem:[%s298 + $0x98] sm:$0xff] %v886
        %919 = vst [vmem:[%s298 + $0xa0] sm:$0xff] %v887
        %920 = vst [vmem:[%s298 + $0xa8] sm:$0xff] %v888
        %921 = vst [vmem:[%s298 + $0xb0] sm:$0xff] %v889
        %922 = vst [vmem:[%s298 + $0xb8] sm:$0xff] %v890
        %923 = vst [vmem:[%s298 + $0xc0] sm:$0xff] %v891
        %924 = vst [vmem:[%s298 + $0xc8] sm:$0xff] %v892
        %925 = vst [vmem:[%s298 + $0xd0] sm:$0xff] %v893
        %926 = vst [vmem:[%s298 + $0xd8] sm:$0xff] %v894
        %927 = vst [vmem:[%s298 + $0xe0] sm:$0xff] %v895
        %928 = vst [vmem:[%s298 + $0xe8] sm:$0xff] %v896
        %929 = vst [vmem:[%s298 + $0xf0] sm:$0xff] %v897
        %930 = vst [vmem:[%s298 + $0xf8] sm:$0xff] %v898
      $region44: #{mamba_c_block_forward.13} parent=35 // pred_fallthru
        _
      %s931 = smul.u32 32, %s20
      %p932 = scmp.lt.s32.totalorder %s931, 159
      %s933 = scalar_select %p932, %s931, 159
      %p934 = scmp.lt.s32.totalorder %s21, 0
      %s935 = scalar_select %p934, %s21, 0
      %s936 = sadd.s32 %s935, %s933
      %s937 = smul.addr %s936, 8
      %s938 = scalar_lea.vmem %s4, %s937
      // Predicated region
      $region45: #{mamba_c_block_forward.13} parent=35 // pred_check
        %p939 = pneg %p162
      $region46: #{mamba_c_block_forward.13} parent=35 // pred_check_branch
        %941 = sbr.rel (%p939) target = $region48
      $region47: #{mamba_c_block_forward.13} parent=35 // pred_region
        %s942 = smul.u32 32, %s20
      $region48: #{mamba_c_block_forward.13} parent=35 // pred_fallthru
        _
    $region36: #{mamba_c_block_forward.13} parent=5 // pred_fallthru
      _
    %p943 = scmp.le.s32.totalorder 2, %s10
    // Predicated region
    $region49: #{mamba_c_block_forward.13} parent=5 // pred_check
      %p944 = pneg %p943
    $region50: #{mamba_c_block_forward.13} parent=5 // pred_check_branch
      %946 = sbr.rel (%p944) target = $region52
    $region51: #{mamba_c_block_forward.13} parent=5 // pred_region
      %s947 = ssub.s32 %s10, 2
      // Predicated region
      $region53: #{mamba_c_block_forward.13} parent=51 // pred_check
        %p948 = pneg %p168
      $region54: #{mamba_c_block_forward.13} parent=51 // pred_check_branch
        %950 = sbr.rel (%p948) target = $region56
      $region55: #{mamba_c_block_forward.13} parent=51 // pred_region
        %s951 = smul.u32 32, %s23
        %p952 = scmp.lt.s32.totalorder %s951, 159
        %s953 = scalar_select %p952, %s951, 159
        %p954 = scmp.lt.s32.totalorder %s24, 0
        %s955 = scalar_select %p954, %s24, 0
        %s956 = sadd.s32 %s955, %s953
        %s957 = smul.addr %s956, 8
        %s958 = scalar_lea.vmem %s4, %s957
      $region56: #{mamba_c_block_forward.13} parent=51 // pred_fallthru
        _
    $region52: #{mamba_c_block_forward.13} parent=5 // pred_fallthru
      _
  $region6: #{mamba_c_block_forward.13} parent=0 // loop_footer
    %s14 = sadd.s32 1, %s10
  $region7: #{mamba_c_block_forward.13} parent=0 // loop_footer_branch
    %9 = sbr.rel target = $region3
  $region8: #{mamba_c_block_forward.13} parent=0 // loop_exit
    _

</llo_original>
